<compile_context>
chip_gen: v6e
topology: v6e:2x2x1
jax: 0.10.0
libtpu: 0.0.40
codegen_flags: <defaults>
</compile_context>

<pallas_src>
import functools

import jax
import jax.numpy as jnp
import numpy as np
from jax.experimental import pallas as pl
from jax.experimental.pallas import tpu as pltpu


def _round_up(x, m):
    return ((x + m - 1) // m) * m


# ----------------------------------------------------------------------------
# Fused ASPP kernel: one grid step == TH output rows of one batch image.
# ----------------------------------------------------------------------------
def _make_aspp_kernel(H, W, Cin, Cout, rates, padH, padW, TH):
    M = TH * W
    R = len(rates)

    def kernel(x_ref, w0_ref, b0_ref, wa_ref, ba_ref,
               wpool_ref, bpool_ref, wproj_ref, bproj_ref, o_ref):
        h0 = pl.program_id(1) * TH          # first output row of this tile

        def window(dy, dx):
            # (TH, W, Cin) bf16 tap window for output rows [h0, h0+TH).
            # Row offset is a leading-dim (cheap) dynamic slice; the column
            # slice is static.  Reshape is layout-free (W % 8 == 0, lane dim
            # unchanged) and feeds the guaranteed 2-D MXU dot path.
            r0 = h0 + padH + dy
            c0 = padW + dx
            return x_ref[0, pl.ds(r0, TH), c0:c0 + W, :].reshape(M, Cin)

        # ---- branch 0: 1x1 conv + BN(folded) + ReLU, projected immediately --
        x0 = window(0, 0)                                         # bf16
        y0 = jnp.dot(x0, w0_ref[...], preferred_element_type=jnp.float32)
        y0 = jnp.maximum(y0 + b0_ref[...], 0.0)
        acc = jnp.dot(y0.astype(jnp.bfloat16), wproj_ref[0],
                      preferred_element_type=jnp.float32)         # (M, Cout)

        # ---- atrous 3x3 branches: 9 shifted "1x1" taps each, then project ---
        for bi, r in enumerate(rates):
            ybr = None
            for ky in range(3):
                for kx in range(3):
                    d = jnp.dot(window((ky - 1) * r, (kx - 1) * r),
                                wa_ref[bi, ky * 3 + kx],
                                preferred_element_type=jnp.float32)
                    ybr = d if ybr is None else ybr + d
            ybr = jnp.maximum(ybr + ba_ref[bi], 0.0)
            acc += jnp.dot(ybr.astype(jnp.bfloat16), wproj_ref[1 + bi],
                           preferred_element_type=jnp.float32)

        # ---- pooling branch: global mean -> 1x1 conv -> BN -> ReLU ----------
        # Bilinear upsample of a 1x1 map is an exact broadcast, so its
        # projection folds into the output bias row (no (M, Cout) extra pass).
        xc = x_ref[0, padH:padH + H, padW:padW + W, :].reshape(H * W, Cin)
        pooled = jnp.mean(xc.astype(jnp.float32), axis=0, keepdims=True)
        yp = jnp.dot(pooled.astype(jnp.bfloat16), wpool_ref[...],
                     preferred_element_type=jnp.float32)
        yp = jnp.maximum(yp + bpool_ref[...], 0.0)
        pool_row = jnp.dot(yp.astype(jnp.bfloat16), wproj_ref[1 + R],
                           preferred_element_type=jnp.float32)    # (1, Cout)

        # ---- projection bias + ReLU (Dropout(0.5): eval-mode identity) ------
        out = jnp.maximum(acc + (bproj_ref[...] + pool_row), 0.0)
        o_ref[0] = out.reshape(TH, W, Cout)

    return kernel


# ----------------------------------------------------------------------------
# ASPP forward
# ----------------------------------------------------------------------------
@functools.partial(jax.jit, static_argnames=("atrous_rates", "out_channels"))
def aspp_forward(x_nchw, params, atrous_rates, out_channels):
    rates = tuple(atrous_rates)
    assert rates, "ASPP needs at least one atrous rate"
    N, Cin, H, W = x_nchw.shape
    Cout = out_channels
    R = len(rates)
    nb = 2 + R
    rmax = max(rates)
    padH = rmax
    padW = _round_up(rmax, 8)            # sublane-aligned central window
    Hp, Wp = H + 2 * padH, W + 2 * padW
    TH = 8 if H % 8 == 0 else H          # output rows per grid step

    # NCHW -> NHWC, cast to bf16 ONCE, pad spatially ONCE (largest dilation).
    x_nhwc = jnp.transpose(x_nchw, (0, 2, 3, 1)).astype(jnp.bfloat16)
    x_pad = jnp.pad(x_nhwc, ((0, 0), (padH, padH), (padW, padW), (0, 0)))

    wproj = params["wproj"].reshape(nb, Cout, Cout)   # per-branch proj slices

    kernel = _make_aspp_kernel(H, W, Cin, Cout, rates, padH, padW, TH)

    # ---- VMEM limit: scale with the detected generation's capacity ----------
    try:
        info = pltpu.get_tpu_info()
        vmem_cap = int(getattr(info, "vmem_capacity_bytes", 64 * 1024 * 1024))
    except Exception:                                  # defensive fallback
        vmem_cap = 64 * 1024 * 1024                    # safe on every gen
    cap_budget = (vmem_cap * 4) // 5                   # compiler headroom

    in_blk = Hp * Wp * Cin * 2                         # bf16 input block
    out_blk = TH * W * Cout * 4                        # f32 output block
    w_bytes = ((2 + 9 * R) * Cin * Cout + nb * Cout * Cout) * 2 \
        + (3 + R) * Cout * 4                           # single-buffered
    live = (3 * TH * W * Cout * 4                      # acc / ybr / y0
            + 2 * TH * W * Cin * 2                     # tap windows
            + H * W * Cin * 4)                         # f32 global-mean temp
    est = 2 * in_blk + 2 * out_blk + w_bytes + live    # in/out double-buffered
    vmem_limit = int(min(cap_budget, max(32 * 1024 * 1024, est + est // 2)))

    const_vmem = pl.BlockSpec(memory_space=pltpu.MemorySpace.VMEM)

    out_nhwc = pl.pallas_call(
        kernel,
        out_shape=jax.ShapeDtypeStruct((N, H, W, Cout), jnp.float32),
        grid=(N, H // TH),
        in_specs=[
            # Padded activation plane of one image (pipelined, double-buffered;
            # block index ignores the h axis so it is DMA'd once per image).
            pl.BlockSpec((1, Hp, Wp, Cin), lambda n, h: (n, 0, 0, 0)),
            # Constant weights / biases: whole-array VMEM residents,
            # single-buffered, never re-DMA'd.
            const_vmem,   # w0
            const_vmem,   # b0
            const_vmem,   # wa
            const_vmem,   # ba
            const_vmem,   # wpool
            const_vmem,   # bpool
            const_vmem,   # wproj
            const_vmem,   # bproj
        ],
        out_specs=pl.BlockSpec((1, TH, W, Cout), lambda n, h: (n, h, 0, 0)),
        compiler_params=pltpu.CompilerParams(
            dimension_semantics=("parallel", "parallel"),   # N x H-tiles
            vmem_limit_bytes=vmem_limit,
        ),
    )(x_pad, params["w0"], params["b0"], params["wa"], params["ba"],
      params["wpool"], params["bpool"], wproj, params["bproj"])

    # Keep the module's NCHW output layout (one XLA transpose, noted).
    return jnp.transpose(out_nhwc, (0, 3, 1, 2))


# ----------------------------------------------------------------------------
# Parameters: synthetic conv weights + inference-mode BN, folded
# ----------------------------------------------------------------------------
def _fold_bn(w, gamma, beta, mean, var, eps=1e-5):
    scale = gamma / jnp.sqrt(var + eps)                  # (Cout,)
    w_eff = w * scale                                    # broadcast over Cout
    b_eff = (beta - mean * scale)[None, :]               # (1, Cout)
    return w_eff, b_eff


def make_params(key, in_channels, atrous_rates, out_channels):
    def bn_stats(k, c):
        k1, k2, k3, k4 = jax.random.split(k, 4)
        gamma = 1.0 + 0.1 * jax.random.normal(k1, (c,))
        beta = 0.1 * jax.random.normal(k2, (c,))
        mean = 0.1 * jax.random.normal(k3, (c,))
        var = jnp.abs(jax.random.normal(k4, (c,))) + 0.5
        return gamma, beta, mean, var

    n_branches = 2 + len(atrous_rates)
    keys = iter(jax.random.split(key, 2 * (n_branches + 1)))
    p = {}

    w0 = 0.1 * jax.random.normal(next(keys), (in_channels, out_channels))
    w0, b0 = _fold_bn(w0, *bn_stats(next(keys), out_channels))
    p["w0"], p["b0"] = w0.astype(jnp.bfloat16), b0.astype(jnp.float32)

    wa, ba = [], []
    for _ in atrous_rates:
        wk = 0.1 * jax.random.normal(
            next(keys), (3, 3, in_channels, out_channels))
        wk, bk = _fold_bn(wk, *bn_stats(next(keys), out_channels))
        wa.append(wk.reshape(9, in_channels, out_channels))
        ba.append(bk)
    p["wa"] = jnp.stack(wa).astype(jnp.bfloat16)          # (R, 9, Cin, Cout)
    p["ba"] = jnp.stack(ba).astype(jnp.float32)           # (R, 1, Cout)

    wp = 0.1 * jax.random.normal(next(keys), (in_channels, out_channels))
    wp, bp = _fold_bn(wp, *bn_stats(next(keys), out_channels))
    p["wpool"], p["bpool"] = wp.astype(jnp.bfloat16), bp.astype(jnp.float32)

    wpr = 0.1 * jax.random.normal(
        next(keys), (n_branches * out_channels, out_channels))
    wpr, bpr = _fold_bn(wpr, *bn_stats(next(keys), out_channels))
    p["wproj"], p["bproj"] = wpr.astype(jnp.bfloat16), bpr.astype(jnp.float32)
    return p


# ----------------------------------------------------------------------------
# Pure-JAX reference (mirrors the kernel's bf16 rounding points)
# ----------------------------------------------------------------------------
def aspp_reference(x_nchw, params, atrous_rates, out_channels):
    f32 = jnp.float32
    # Same one-time bf16 rounding of the activations as the kernel input path.
    x = jnp.transpose(x_nchw, (0, 2, 3, 1)).astype(jnp.bfloat16).astype(f32)
    N, H, W, Cin = x.shape
    dn = ("NHWC", "HWIO", "NHWC")
    outs = []

    w0 = params["w0"].astype(f32).reshape(1, 1, Cin, out_channels)
    y0 = jax.lax.conv_general_dilated(x, w0, (1, 1), "VALID",
                                      dimension_numbers=dn)
    outs.append(jnp.maximum(y0 + params["b0"].reshape(1, 1, 1, -1), 0.0))

    for i, r in enumerate(atrous_rates):
        wk = params["wa"][i].astype(f32).reshape(3, 3, Cin, out_channels)
        y = jax.lax.conv_general_dilated(x, wk, (1, 1), [(r, r), (r, r)],
                                         rhs_dilation=(r, r),
                                         dimension_numbers=dn)
        outs.append(jnp.maximum(y + params["ba"][i].reshape(1, 1, 1, -1), 0.0))

    pooled = jnp.mean(x, axis=(1, 2))
    pooled = pooled.astype(jnp.bfloat16).astype(f32)       # kernel rounds too
    yp = jnp.maximum(pooled @ params["wpool"].astype(f32) + params["bpool"],
                     0.0)
    outs.append(jnp.broadcast_to(yp[:, None, None, :],
                                 (N, H, W, out_channels)))

    # Kernel rounds each branch output to bf16 before the fused projection.
    cat = jnp.concatenate(outs, axis=-1).astype(jnp.bfloat16).astype(f32)
    cat = cat.reshape(N * H * W, -1)
    proj = jnp.maximum(cat @ params["wproj"].astype(f32) + params["bproj"], 0.0)
    return jnp.transpose(proj.reshape(N, H, W, out_channels), (0, 3, 1, 2))


# ----------------------------------------------------------------------------
if __name__ == "__main__":
    key = jax.random.PRNGKey(0)
    k_x, k_p = jax.random.split(key)

    # Small but lane-friendly demo shapes (production ASPP: Cin=2048, Cout=256).
    # Cin = Cout = 128 keeps every matmul K/N dim and every output store
    # lane-dense on all TPU generations.
    N, Cin, H, W = 2, 128, 16, 16
    atrous_rates = (2, 4, 6)
    out_channels = 128

    x = jax.random.normal(k_x, (N, Cin, H, W), dtype=jnp.float32)
    params = make_params(k_p, Cin, atrous_rates, out_channels)

    y = aspp_forward(x, params, atrous_rates, out_channels)
    jax.block_until_ready(y)

    assert y.shape == (N, out_channels, H, W), y.shape
    assert y.dtype == jnp.float32

    y_ref = aspp_reference(x, params, atrous_rates, out_channels)
    np.testing.assert_allclose(np.asarray(y), np.asarray(y_ref),
                               rtol=2e-2, atol=2e-2)

    print("KERNEL_OK")
</pallas_src>

<mosaic_0001>
module attributes {stable_mosaic.version = 11 : i64} {
  func.func @kernel(%arg0: i32, %arg1: i32, %arg2: memref<1x28x32x128xbf16, #tpu.memory_space<vmem>>, %arg3: memref<128x128xbf16, #tpu.memory_space<vmem>>, %arg4: memref<1x128xf32, #tpu.memory_space<vmem>>, %arg5: memref<3x9x128x128xbf16, #tpu.memory_space<vmem>>, %arg6: memref<3x1x128xf32, #tpu.memory_space<vmem>>, %arg7: memref<128x128xbf16, #tpu.memory_space<vmem>>, %arg8: memref<1x128xf32, #tpu.memory_space<vmem>>, %arg9: memref<5x128x128xbf16, #tpu.memory_space<vmem>>, %arg10: memref<1x128xf32, #tpu.memory_space<vmem>>, %arg11: memref<1x8x16x128xf32, #tpu.memory_space<vmem>>) attributes {dimension_semantics = [#tpu.dimension_semantics<parallel>, #tpu.dimension_semantics<parallel>], iteration_bounds = array<i64: 2, 2>, scalar_prefetch = 0 : i64, scratch_operands = 0 : i64, tpu.core_type = #tpu.core_type<tc>, window_params = [{transform_indices = @transform_0, window_bounds = array<i64: 1, 28, 32, 128>}, {pipeline_mode = #tpu.pipeline_mode<synchronous>, transform_indices = @transform_1, window_bounds = array<i64: 128, 128>}, {pipeline_mode = #tpu.pipeline_mode<synchronous>, transform_indices = @transform_2, window_bounds = array<i64: 1, 128>}, {pipeline_mode = #tpu.pipeline_mode<synchronous>, transform_indices = @transform_3, window_bounds = array<i64: 3, 9, 128, 128>}, {pipeline_mode = #tpu.pipeline_mode<synchronous>, transform_indices = @transform_4, window_bounds = array<i64: 3, 1, 128>}, {pipeline_mode = #tpu.pipeline_mode<synchronous>, transform_indices = @transform_5, window_bounds = array<i64: 128, 128>}, {pipeline_mode = #tpu.pipeline_mode<synchronous>, transform_indices = @transform_6, window_bounds = array<i64: 1, 128>}, {pipeline_mode = #tpu.pipeline_mode<synchronous>, transform_indices = @transform_7, window_bounds = array<i64: 5, 128, 128>}, {pipeline_mode = #tpu.pipeline_mode<synchronous>, transform_indices = @transform_8, window_bounds = array<i64: 1, 128>}, {transform_indices = @transform_9, window_bounds = array<i64: 1, 8, 16, 128>}]} {
    %c8_i32 = arith.constant 8 : i32
    %0 = arith.muli %arg1, %c8_i32 : i32
    %c6_i32 = arith.constant 6 : i32
    %1 = arith.addi %0, %c6_i32 : i32
    %c0_i32 = arith.constant 0 : i32
    %2 = arith.addi %1, %c0_i32 : i32
    %c0 = arith.constant 0 : index
    %3 = arith.index_cast %2 : i32 to index
    %c8 = arith.constant 8 : index
    %c0_0 = arith.constant 0 : index
    %4 = vector.load %arg2[%c0, %3, %c8, %c0_0] : memref<1x28x32x128xbf16, #tpu.memory_space<vmem>>, vector<1x8x16x128xbf16>
    %5 = vector.shape_cast %4 : vector<1x8x16x128xbf16> to vector<8x16x128xbf16>
    %6 = vector.shape_cast %5 : vector<8x16x128xbf16> to vector<128x128xbf16>
    %c0_1 = arith.constant 0 : index
    %c0_2 = arith.constant 0 : index
    %7 = vector.load %arg3[%c0_1, %c0_2] : memref<128x128xbf16, #tpu.memory_space<vmem>>, vector<128x128xbf16>
    %cst = arith.constant dense<0.000000e+00> : vector<128x128xf32>
    %8 = tpu.matmul %6, %7, %cst {dimension_numbers = #tpu.dot_dimension_numbers<[1], [0], [0], [1], [0, 0, 1, 1], [], []>} : vector<128x128xbf16>, vector<128x128xbf16>, vector<128x128xf32> -> vector<128x128xf32>
    %c0_3 = arith.constant 0 : index
    %c0_4 = arith.constant 0 : index
    %9 = vector.load %arg4[%c0_3, %c0_4] : memref<1x128xf32, #tpu.memory_space<vmem>>, vector<1x128xf32>
    %10 = vector.broadcast %9 : vector<1x128xf32> to vector<128x128xf32>
    %11 = arith.addf %8, %10 : vector<128x128xf32>
    %cst_5 = arith.constant 0.000000e+00 : f32
    %12 = vector.broadcast %cst_5 : f32 to vector<128x128xf32>
    %13 = arith.maximumf %11, %12 : vector<128x128xf32>
    %14 = arith.truncf %13 : vector<128x128xf32> to vector<128x128xbf16>
    %c0_6 = arith.constant 0 : index
    %c0_7 = arith.constant 0 : index
    %c0_8 = arith.constant 0 : index
    %15 = vector.load %arg9[%c0_6, %c0_7, %c0_8] : memref<5x128x128xbf16, #tpu.memory_space<vmem>>, vector<1x128x128xbf16>
    %16 = vector.shape_cast %15 : vector<1x128x128xbf16> to vector<128x128xbf16>
    %cst_9 = arith.constant dense<0.000000e+00> : vector<128x128xf32>
    %17 = tpu.matmul %14, %16, %cst_9 {dimension_numbers = #tpu.dot_dimension_numbers<[1], [0], [0], [1], [0, 0, 1, 1], [], []>} : vector<128x128xbf16>, vector<128x128xbf16>, vector<128x128xf32> -> vector<128x128xf32>
    %c6_i32_10 = arith.constant 6 : i32
    %18 = arith.addi %0, %c6_i32_10 : i32
    %c-2_i32 = arith.constant -2 : i32
    %19 = arith.addi %18, %c-2_i32 : i32
    %c0_11 = arith.constant 0 : index
    %20 = arith.index_cast %19 : i32 to index
    %c6 = arith.constant 6 : index
    %c0_12 = arith.constant 0 : index
    %21 = vector.load %arg2[%c0_11, %20, %c6, %c0_12] : memref<1x28x32x128xbf16, #tpu.memory_space<vmem>>, vector<1x8x16x128xbf16>
    %22 = vector.shape_cast %21 : vector<1x8x16x128xbf16> to vector<8x16x128xbf16>
    %23 = vector.shape_cast %22 : vector<8x16x128xbf16> to vector<128x128xbf16>
    %c0_13 = arith.constant 0 : index
    %c0_14 = arith.constant 0 : index
    %c0_15 = arith.constant 0 : index
    %c0_16 = arith.constant 0 : index
    %24 = vector.load %arg5[%c0_13, %c0_14, %c0_15, %c0_16] : memref<3x9x128x128xbf16, #tpu.memory_space<vmem>>, vector<1x1x128x128xbf16>
    %25 = vector.shape_cast %24 : vector<1x1x128x128xbf16> to vector<128x128xbf16>
    %cst_17 = arith.constant dense<0.000000e+00> : vector<128x128xf32>
    %26 = tpu.matmul %23, %25, %cst_17 {dimension_numbers = #tpu.dot_dimension_numbers<[1], [0], [0], [1], [0, 0, 1, 1], [], []>} : vector<128x128xbf16>, vector<128x128xbf16>, vector<128x128xf32> -> vector<128x128xf32>
    %c6_i32_18 = arith.constant 6 : i32
    %27 = arith.addi %0, %c6_i32_18 : i32
    %c-2_i32_19 = arith.constant -2 : i32
    %28 = arith.addi %27, %c-2_i32_19 : i32
    %c0_20 = arith.constant 0 : index
    %29 = arith.index_cast %28 : i32 to index
    %c8_21 = arith.constant 8 : index
    %c0_22 = arith.constant 0 : index
    %30 = vector.load %arg2[%c0_20, %29, %c8_21, %c0_22] : memref<1x28x32x128xbf16, #tpu.memory_space<vmem>>, vector<1x8x16x128xbf16>
    %31 = vector.shape_cast %30 : vector<1x8x16x128xbf16> to vector<8x16x128xbf16>
    %32 = vector.shape_cast %31 : vector<8x16x128xbf16> to vector<128x128xbf16>
    %c0_23 = arith.constant 0 : index
    %c1 = arith.constant 1 : index
    %c0_24 = arith.constant 0 : index
    %c0_25 = arith.constant 0 : index
    %33 = vector.load %arg5[%c0_23, %c1, %c0_24, %c0_25] : memref<3x9x128x128xbf16, #tpu.memory_space<vmem>>, vector<1x1x128x128xbf16>
    %34 = vector.shape_cast %33 : vector<1x1x128x128xbf16> to vector<128x128xbf16>
    %cst_26 = arith.constant dense<0.000000e+00> : vector<128x128xf32>
    %35 = tpu.matmul %32, %34, %cst_26 {dimension_numbers = #tpu.dot_dimension_numbers<[1], [0], [0], [1], [0, 0, 1, 1], [], []>} : vector<128x128xbf16>, vector<128x128xbf16>, vector<128x128xf32> -> vector<128x128xf32>
    %36 = arith.addf %26, %35 : vector<128x128xf32>
    %c6_i32_27 = arith.constant 6 : i32
    %37 = arith.addi %0, %c6_i32_27 : i32
    %c-2_i32_28 = arith.constant -2 : i32
    %38 = arith.addi %37, %c-2_i32_28 : i32
    %c0_29 = arith.constant 0 : index
    %39 = arith.index_cast %38 : i32 to index
    %c10 = arith.constant 10 : index
    %c0_30 = arith.constant 0 : index
    %40 = vector.load %arg2[%c0_29, %39, %c10, %c0_30] : memref<1x28x32x128xbf16, #tpu.memory_space<vmem>>, vector<1x8x16x128xbf16>
    %41 = vector.shape_cast %40 : vector<1x8x16x128xbf16> to vector<8x16x128xbf16>
    %42 = vector.shape_cast %41 : vector<8x16x128xbf16> to vector<128x128xbf16>
    %c0_31 = arith.constant 0 : index
    %c2 = arith.constant 2 : index
    %c0_32 = arith.constant 0 : index
    %c0_33 = arith.constant 0 : index
    %43 = vector.load %arg5[%c0_31, %c2, %c0_32, %c0_33] : memref<3x9x128x128xbf16, #tpu.memory_space<vmem>>, vector<1x1x128x128xbf16>
    %44 = vector.shape_cast %43 : vector<1x1x128x128xbf16> to vector<128x128xbf16>
    %cst_34 = arith.constant dense<0.000000e+00> : vector<128x128xf32>
    %45 = tpu.matmul %42, %44, %cst_34 {dimension_numbers = #tpu.dot_dimension_numbers<[1], [0], [0], [1], [0, 0, 1, 1], [], []>} : vector<128x128xbf16>, vector<128x128xbf16>, vector<128x128xf32> -> vector<128x128xf32>
    %46 = arith.addf %36, %45 : vector<128x128xf32>
    %c6_i32_35 = arith.constant 6 : i32
    %47 = arith.addi %0, %c6_i32_35 : i32
    %c0_i32_36 = arith.constant 0 : i32
    %48 = arith.addi %47, %c0_i32_36 : i32
    %c0_37 = arith.constant 0 : index
    %49 = arith.index_cast %48 : i32 to index
    %c6_38 = arith.constant 6 : index
    %c0_39 = arith.constant 0 : index
    %50 = vector.load %arg2[%c0_37, %49, %c6_38, %c0_39] : memref<1x28x32x128xbf16, #tpu.memory_space<vmem>>, vector<1x8x16x128xbf16>
    %51 = vector.shape_cast %50 : vector<1x8x16x128xbf16> to vector<8x16x128xbf16>
    %52 = vector.shape_cast %51 : vector<8x16x128xbf16> to vector<128x128xbf16>
    %c0_40 = arith.constant 0 : index
    %c3 = arith.constant 3 : index
    %c0_41 = arith.constant 0 : index
    %c0_42 = arith.constant 0 : index
    %53 = vector.load %arg5[%c0_40, %c3, %c0_41, %c0_42] : memref<3x9x128x128xbf16, #tpu.memory_space<vmem>>, vector<1x1x128x128xbf16>
    %54 = vector.shape_cast %53 : vector<1x1x128x128xbf16> to vector<128x128xbf16>
    %cst_43 = arith.constant dense<0.000000e+00> : vector<128x128xf32>
    %55 = tpu.matmul %52, %54, %cst_43 {dimension_numbers = #tpu.dot_dimension_numbers<[1], [0], [0], [1], [0, 0, 1, 1], [], []>} : vector<128x128xbf16>, vector<128x128xbf16>, vector<128x128xf32> -> vector<128x128xf32>
    %56 = arith.addf %46, %55 : vector<128x128xf32>
    %c6_i32_44 = arith.constant 6 : i32
    %57 = arith.addi %0, %c6_i32_44 : i32
    %c0_i32_45 = arith.constant 0 : i32
    %58 = arith.addi %57, %c0_i32_45 : i32
    %c0_46 = arith.constant 0 : index
    %59 = arith.index_cast %58 : i32 to index
    %c8_47 = arith.constant 8 : index
    %c0_48 = arith.constant 0 : index
    %60 = vector.load %arg2[%c0_46, %59, %c8_47, %c0_48] : memref<1x28x32x128xbf16, #tpu.memory_space<vmem>>, vector<1x8x16x128xbf16>
    %61 = vector.shape_cast %60 : vector<1x8x16x128xbf16> to vector<8x16x128xbf16>
    %62 = vector.shape_cast %61 : vector<8x16x128xbf16> to vector<128x128xbf16>
    %c0_49 = arith.constant 0 : index
    %c4 = arith.constant 4 : index
    %c0_50 = arith.constant 0 : index
    %c0_51 = arith.constant 0 : index
    %63 = vector.load %arg5[%c0_49, %c4, %c0_50, %c0_51] : memref<3x9x128x128xbf16, #tpu.memory_space<vmem>>, vector<1x1x128x128xbf16>
    %64 = vector.shape_cast %63 : vector<1x1x128x128xbf16> to vector<128x128xbf16>
    %cst_52 = arith.constant dense<0.000000e+00> : vector<128x128xf32>
    %65 = tpu.matmul %62, %64, %cst_52 {dimension_numbers = #tpu.dot_dimension_numbers<[1], [0], [0], [1], [0, 0, 1, 1], [], []>} : vector<128x128xbf16>, vector<128x128xbf16>, vector<128x128xf32> -> vector<128x128xf32>
    %66 = arith.addf %56, %65 : vector<128x128xf32>
    %c6_i32_53 = arith.constant 6 : i32
    %67 = arith.addi %0, %c6_i32_53 : i32
    %c0_i32_54 = arith.constant 0 : i32
    %68 = arith.addi %67, %c0_i32_54 : i32
    %c0_55 = arith.constant 0 : index
    %69 = arith.index_cast %68 : i32 to index
    %c10_56 = arith.constant 10 : index
    %c0_57 = arith.constant 0 : index
    %70 = vector.load %arg2[%c0_55, %69, %c10_56, %c0_57] : memref<1x28x32x128xbf16, #tpu.memory_space<vmem>>, vector<1x8x16x128xbf16>
    %71 = vector.shape_cast %70 : vector<1x8x16x128xbf16> to vector<8x16x128xbf16>
    %72 = vector.shape_cast %71 : vector<8x16x128xbf16> to vector<128x128xbf16>
    %c0_58 = arith.constant 0 : index
    %c5 = arith.constant 5 : index
    %c0_59 = arith.constant 0 : index
    %c0_60 = arith.constant 0 : index
    %73 = vector.load %arg5[%c0_58, %c5, %c0_59, %c0_60] : memref<3x9x128x128xbf16, #tpu.memory_space<vmem>>, vector<1x1x128x128xbf16>
    %74 = vector.shape_cast %73 : vector<1x1x128x128xbf16> to vector<128x128xbf16>
    %cst_61 = arith.constant dense<0.000000e+00> : vector<128x128xf32>
    %75 = tpu.matmul %72, %74, %cst_61 {dimension_numbers = #tpu.dot_dimension_numbers<[1], [0], [0], [1], [0, 0, 1, 1], [], []>} : vector<128x128xbf16>, vector<128x128xbf16>, vector<128x128xf32> -> vector<128x128xf32>
    %76 = arith.addf %66, %75 : vector<128x128xf32>
    %c6_i32_62 = arith.constant 6 : i32
    %77 = arith.addi %0, %c6_i32_62 : i32
    %c2_i32 = arith.constant 2 : i32
    %78 = arith.addi %77, %c2_i32 : i32
    %c0_63 = arith.constant 0 : index
    %79 = arith.index_cast %78 : i32 to index
    %c6_64 = arith.constant 6 : index
    %c0_65 = arith.constant 0 : index
    %80 = vector.load %arg2[%c0_63, %79, %c6_64, %c0_65] : memref<1x28x32x128xbf16, #tpu.memory_space<vmem>>, vector<1x8x16x128xbf16>
    %81 = vector.shape_cast %80 : vector<1x8x16x128xbf16> to vector<8x16x128xbf16>
    %82 = vector.shape_cast %81 : vector<8x16x128xbf16> to vector<128x128xbf16>
    %c0_66 = arith.constant 0 : index
    %c6_67 = arith.constant 6 : index
    %c0_68 = arith.constant 0 : index
    %c0_69 = arith.constant 0 : index
    %83 = vector.load %arg5[%c0_66, %c6_67, %c0_68, %c0_69] : memref<3x9x128x128xbf16, #tpu.memory_space<vmem>>, vector<1x1x128x128xbf16>
    %84 = vector.shape_cast %83 : vector<1x1x128x128xbf16> to vector<128x128xbf16>
    %cst_70 = arith.constant dense<0.000000e+00> : vector<128x128xf32>
    %85 = tpu.matmul %82, %84, %cst_70 {dimension_numbers = #tpu.dot_dimension_numbers<[1], [0], [0], [1], [0, 0, 1, 1], [], []>} : vector<128x128xbf16>, vector<128x128xbf16>, vector<128x128xf32> -> vector<128x128xf32>
    %86 = arith.addf %76, %85 : vector<128x128xf32>
    %c6_i32_71 = arith.constant 6 : i32
    %87 = arith.addi %0, %c6_i32_71 : i32
    %c2_i32_72 = arith.constant 2 : i32
    %88 = arith.addi %87, %c2_i32_72 : i32
    %c0_73 = arith.constant 0 : index
    %89 = arith.index_cast %88 : i32 to index
    %c8_74 = arith.constant 8 : index
    %c0_75 = arith.constant 0 : index
    %90 = vector.load %arg2[%c0_73, %89, %c8_74, %c0_75] : memref<1x28x32x128xbf16, #tpu.memory_space<vmem>>, vector<1x8x16x128xbf16>
    %91 = vector.shape_cast %90 : vector<1x8x16x128xbf16> to vector<8x16x128xbf16>
    %92 = vector.shape_cast %91 : vector<8x16x128xbf16> to vector<128x128xbf16>
    %c0_76 = arith.constant 0 : index
    %c7 = arith.constant 7 : index
    %c0_77 = arith.constant 0 : index
    %c0_78 = arith.constant 0 : index
    %93 = vector.load %arg5[%c0_76, %c7, %c0_77, %c0_78] : memref<3x9x128x128xbf16, #tpu.memory_space<vmem>>, vector<1x1x128x128xbf16>
    %94 = vector.shape_cast %93 : vector<1x1x128x128xbf16> to vector<128x128xbf16>
    %cst_79 = arith.constant dense<0.000000e+00> : vector<128x128xf32>
    %95 = tpu.matmul %92, %94, %cst_79 {dimension_numbers = #tpu.dot_dimension_numbers<[1], [0], [0], [1], [0, 0, 1, 1], [], []>} : vector<128x128xbf16>, vector<128x128xbf16>, vector<128x128xf32> -> vector<128x128xf32>
    %96 = arith.addf %86, %95 : vector<128x128xf32>
    %c6_i32_80 = arith.constant 6 : i32
    %97 = arith.addi %0, %c6_i32_80 : i32
    %c2_i32_81 = arith.constant 2 : i32
    %98 = arith.addi %97, %c2_i32_81 : i32
    %c0_82 = arith.constant 0 : index
    %99 = arith.index_cast %98 : i32 to index
    %c10_83 = arith.constant 10 : index
    %c0_84 = arith.constant 0 : index
    %100 = vector.load %arg2[%c0_82, %99, %c10_83, %c0_84] : memref<1x28x32x128xbf16, #tpu.memory_space<vmem>>, vector<1x8x16x128xbf16>
    %101 = vector.shape_cast %100 : vector<1x8x16x128xbf16> to vector<8x16x128xbf16>
    %102 = vector.shape_cast %101 : vector<8x16x128xbf16> to vector<128x128xbf16>
    %c0_85 = arith.constant 0 : index
    %c8_86 = arith.constant 8 : index
    %c0_87 = arith.constant 0 : index
    %c0_88 = arith.constant 0 : index
    %103 = vector.load %arg5[%c0_85, %c8_86, %c0_87, %c0_88] : memref<3x9x128x128xbf16, #tpu.memory_space<vmem>>, vector<1x1x128x128xbf16>
    %104 = vector.shape_cast %103 : vector<1x1x128x128xbf16> to vector<128x128xbf16>
    %cst_89 = arith.constant dense<0.000000e+00> : vector<128x128xf32>
    %105 = tpu.matmul %102, %104, %cst_89 {dimension_numbers = #tpu.dot_dimension_numbers<[1], [0], [0], [1], [0, 0, 1, 1], [], []>} : vector<128x128xbf16>, vector<128x128xbf16>, vector<128x128xf32> -> vector<128x128xf32>
    %106 = arith.addf %96, %105 : vector<128x128xf32>
    %c0_90 = arith.constant 0 : index
    %c0_91 = arith.constant 0 : index
    %c0_92 = arith.constant 0 : index
    %107 = vector.load %arg6[%c0_90, %c0_91, %c0_92] : memref<3x1x128xf32, #tpu.memory_space<vmem>>, vector<1x1x128xf32>
    %108 = vector.shape_cast %107 : vector<1x1x128xf32> to vector<1x128xf32>
    %109 = vector.broadcast %108 : vector<1x128xf32> to vector<128x128xf32>
    %110 = arith.addf %106, %109 : vector<128x128xf32>
    %cst_93 = arith.constant 0.000000e+00 : f32
    %111 = vector.broadcast %cst_93 : f32 to vector<128x128xf32>
    %112 = arith.maximumf %110, %111 : vector<128x128xf32>
    %113 = arith.truncf %112 : vector<128x128xf32> to vector<128x128xbf16>
    %c1_94 = arith.constant 1 : index
    %c0_95 = arith.constant 0 : index
    %c0_96 = arith.constant 0 : index
    %114 = vector.load %arg9[%c1_94, %c0_95, %c0_96] : memref<5x128x128xbf16, #tpu.memory_space<vmem>>, vector<1x128x128xbf16>
    %115 = vector.shape_cast %114 : vector<1x128x128xbf16> to vector<128x128xbf16>
    %cst_97 = arith.constant dense<0.000000e+00> : vector<128x128xf32>
    %116 = tpu.matmul %113, %115, %cst_97 {dimension_numbers = #tpu.dot_dimension_numbers<[1], [0], [0], [1], [0, 0, 1, 1], [], []>} : vector<128x128xbf16>, vector<128x128xbf16>, vector<128x128xf32> -> vector<128x128xf32>
    %117 = arith.addf %17, %116 : vector<128x128xf32>
    %c6_i32_98 = arith.constant 6 : i32
    %118 = arith.addi %0, %c6_i32_98 : i32
    %c-4_i32 = arith.constant -4 : i32
    %119 = arith.addi %118, %c-4_i32 : i32
    %c0_99 = arith.constant 0 : index
    %120 = arith.index_cast %119 : i32 to index
    %c4_100 = arith.constant 4 : index
    %c0_101 = arith.constant 0 : index
    %121 = vector.load %arg2[%c0_99, %120, %c4_100, %c0_101] : memref<1x28x32x128xbf16, #tpu.memory_space<vmem>>, vector<1x8x16x128xbf16>
    %122 = vector.shape_cast %121 : vector<1x8x16x128xbf16> to vector<8x16x128xbf16>
    %123 = vector.shape_cast %122 : vector<8x16x128xbf16> to vector<128x128xbf16>
    %c1_102 = arith.constant 1 : index
    %c0_103 = arith.constant 0 : index
    %c0_104 = arith.constant 0 : index
    %c0_105 = arith.constant 0 : index
    %124 = vector.load %arg5[%c1_102, %c0_103, %c0_104, %c0_105] : memref<3x9x128x128xbf16, #tpu.memory_space<vmem>>, vector<1x1x128x128xbf16>
    %125 = vector.shape_cast %124 : vector<1x1x128x128xbf16> to vector<128x128xbf16>
    %cst_106 = arith.constant dense<0.000000e+00> : vector<128x128xf32>
    %126 = tpu.matmul %123, %125, %cst_106 {dimension_numbers = #tpu.dot_dimension_numbers<[1], [0], [0], [1], [0, 0, 1, 1], [], []>} : vector<128x128xbf16>, vector<128x128xbf16>, vector<128x128xf32> -> vector<128x128xf32>
    %c6_i32_107 = arith.constant 6 : i32
    %127 = arith.addi %0, %c6_i32_107 : i32
    %c-4_i32_108 = arith.constant -4 : i32
    %128 = arith.addi %127, %c-4_i32_108 : i32
    %c0_109 = arith.constant 0 : index
    %129 = arith.index_cast %128 : i32 to index
    %c8_110 = arith.constant 8 : index
    %c0_111 = arith.constant 0 : index
    %130 = vector.load %arg2[%c0_109, %129, %c8_110, %c0_111] : memref<1x28x32x128xbf16, #tpu.memory_space<vmem>>, vector<1x8x16x128xbf16>
    %131 = vector.shape_cast %130 : vector<1x8x16x128xbf16> to vector<8x16x128xbf16>
    %132 = vector.shape_cast %131 : vector<8x16x128xbf16> to vector<128x128xbf16>
    %c1_112 = arith.constant 1 : index
    %c1_113 = arith.constant 1 : index
    %c0_114 = arith.constant 0 : index
    %c0_115 = arith.constant 0 : index
    %133 = vector.load %arg5[%c1_112, %c1_113, %c0_114, %c0_115] : memref<3x9x128x128xbf16, #tpu.memory_space<vmem>>, vector<1x1x128x128xbf16>
    %134 = vector.shape_cast %133 : vector<1x1x128x128xbf16> to vector<128x128xbf16>
    %cst_116 = arith.constant dense<0.000000e+00> : vector<128x128xf32>
    %135 = tpu.matmul %132, %134, %cst_116 {dimension_numbers = #tpu.dot_dimension_numbers<[1], [0], [0], [1], [0, 0, 1, 1], [], []>} : vector<128x128xbf16>, vector<128x128xbf16>, vector<128x128xf32> -> vector<128x128xf32>
    %136 = arith.addf %126, %135 : vector<128x128xf32>
    %c6_i32_117 = arith.constant 6 : i32
    %137 = arith.addi %0, %c6_i32_117 : i32
    %c-4_i32_118 = arith.constant -4 : i32
    %138 = arith.addi %137, %c-4_i32_118 : i32
    %c0_119 = arith.constant 0 : index
    %139 = arith.index_cast %138 : i32 to index
    %c12 = arith.constant 12 : index
    %c0_120 = arith.constant 0 : index
    %140 = vector.load %arg2[%c0_119, %139, %c12, %c0_120] : memref<1x28x32x128xbf16, #tpu.memory_space<vmem>>, vector<1x8x16x128xbf16>
    %141 = vector.shape_cast %140 : vector<1x8x16x128xbf16> to vector<8x16x128xbf16>
    %142 = vector.shape_cast %141 : vector<8x16x128xbf16> to vector<128x128xbf16>
    %c1_121 = arith.constant 1 : index
    %c2_122 = arith.constant 2 : index
    %c0_123 = arith.constant 0 : index
    %c0_124 = arith.constant 0 : index
    %143 = vector.load %arg5[%c1_121, %c2_122, %c0_123, %c0_124] : memref<3x9x128x128xbf16, #tpu.memory_space<vmem>>, vector<1x1x128x128xbf16>
    %144 = vector.shape_cast %143 : vector<1x1x128x128xbf16> to vector<128x128xbf16>
    %cst_125 = arith.constant dense<0.000000e+00> : vector<128x128xf32>
    %145 = tpu.matmul %142, %144, %cst_125 {dimension_numbers = #tpu.dot_dimension_numbers<[1], [0], [0], [1], [0, 0, 1, 1], [], []>} : vector<128x128xbf16>, vector<128x128xbf16>, vector<128x128xf32> -> vector<128x128xf32>
    %146 = arith.addf %136, %145 : vector<128x128xf32>
    %c6_i32_126 = arith.constant 6 : i32
    %147 = arith.addi %0, %c6_i32_126 : i32
    %c0_i32_127 = arith.constant 0 : i32
    %148 = arith.addi %147, %c0_i32_127 : i32
    %c0_128 = arith.constant 0 : index
    %149 = arith.index_cast %148 : i32 to index
    %c4_129 = arith.constant 4 : index
    %c0_130 = arith.constant 0 : index
    %150 = vector.load %arg2[%c0_128, %149, %c4_129, %c0_130] : memref<1x28x32x128xbf16, #tpu.memory_space<vmem>>, vector<1x8x16x128xbf16>
    %151 = vector.shape_cast %150 : vector<1x8x16x128xbf16> to vector<8x16x128xbf16>
    %152 = vector.shape_cast %151 : vector<8x16x128xbf16> to vector<128x128xbf16>
    %c1_131 = arith.constant 1 : index
    %c3_132 = arith.constant 3 : index
    %c0_133 = arith.constant 0 : index
    %c0_134 = arith.constant 0 : index
    %153 = vector.load %arg5[%c1_131, %c3_132, %c0_133, %c0_134] : memref<3x9x128x128xbf16, #tpu.memory_space<vmem>>, vector<1x1x128x128xbf16>
    %154 = vector.shape_cast %153 : vector<1x1x128x128xbf16> to vector<128x128xbf16>
    %cst_135 = arith.constant dense<0.000000e+00> : vector<128x128xf32>
    %155 = tpu.matmul %152, %154, %cst_135 {dimension_numbers = #tpu.dot_dimension_numbers<[1], [0], [0], [1], [0, 0, 1, 1], [], []>} : vector<128x128xbf16>, vector<128x128xbf16>, vector<128x128xf32> -> vector<128x128xf32>
    %156 = arith.addf %146, %155 : vector<128x128xf32>
    %c6_i32_136 = arith.constant 6 : i32
    %157 = arith.addi %0, %c6_i32_136 : i32
    %c0_i32_137 = arith.constant 0 : i32
    %158 = arith.addi %157, %c0_i32_137 : i32
    %c0_138 = arith.constant 0 : index
    %159 = arith.index_cast %158 : i32 to index
    %c8_139 = arith.constant 8 : index
    %c0_140 = arith.constant 0 : index
    %160 = vector.load %arg2[%c0_138, %159, %c8_139, %c0_140] : memref<1x28x32x128xbf16, #tpu.memory_space<vmem>>, vector<1x8x16x128xbf16>
    %161 = vector.shape_cast %160 : vector<1x8x16x128xbf16> to vector<8x16x128xbf16>
    %162 = vector.shape_cast %161 : vector<8x16x128xbf16> to vector<128x128xbf16>
    %c1_141 = arith.constant 1 : index
    %c4_142 = arith.constant 4 : index
    %c0_143 = arith.constant 0 : index
    %c0_144 = arith.constant 0 : index
    %163 = vector.load %arg5[%c1_141, %c4_142, %c0_143, %c0_144] : memref<3x9x128x128xbf16, #tpu.memory_space<vmem>>, vector<1x1x128x128xbf16>
    %164 = vector.shape_cast %163 : vector<1x1x128x128xbf16> to vector<128x128xbf16>
    %cst_145 = arith.constant dense<0.000000e+00> : vector<128x128xf32>
    %165 = tpu.matmul %162, %164, %cst_145 {dimension_numbers = #tpu.dot_dimension_numbers<[1], [0], [0], [1], [0, 0, 1, 1], [], []>} : vector<128x128xbf16>, vector<128x128xbf16>, vector<128x128xf32> -> vector<128x128xf32>
    %166 = arith.addf %156, %165 : vector<128x128xf32>
    %c6_i32_146 = arith.constant 6 : i32
    %167 = arith.addi %0, %c6_i32_146 : i32
    %c0_i32_147 = arith.constant 0 : i32
    %168 = arith.addi %167, %c0_i32_147 : i32
    %c0_148 = arith.constant 0 : index
    %169 = arith.index_cast %168 : i32 to index
    %c12_149 = arith.constant 12 : index
    %c0_150 = arith.constant 0 : index
    %170 = vector.load %arg2[%c0_148, %169, %c12_149, %c0_150] : memref<1x28x32x128xbf16, #tpu.memory_space<vmem>>, vector<1x8x16x128xbf16>
    %171 = vector.shape_cast %170 : vector<1x8x16x128xbf16> to vector<8x16x128xbf16>
    %172 = vector.shape_cast %171 : vector<8x16x128xbf16> to vector<128x128xbf16>
    %c1_151 = arith.constant 1 : index
    %c5_152 = arith.constant 5 : index
    %c0_153 = arith.constant 0 : index
    %c0_154 = arith.constant 0 : index
    %173 = vector.load %arg5[%c1_151, %c5_152, %c0_153, %c0_154] : memref<3x9x128x128xbf16, #tpu.memory_space<vmem>>, vector<1x1x128x128xbf16>
    %174 = vector.shape_cast %173 : vector<1x1x128x128xbf16> to vector<128x128xbf16>
    %cst_155 = arith.constant dense<0.000000e+00> : vector<128x128xf32>
    %175 = tpu.matmul %172, %174, %cst_155 {dimension_numbers = #tpu.dot_dimension_numbers<[1], [0], [0], [1], [0, 0, 1, 1], [], []>} : vector<128x128xbf16>, vector<128x128xbf16>, vector<128x128xf32> -> vector<128x128xf32>
    %176 = arith.addf %166, %175 : vector<128x128xf32>
    %c6_i32_156 = arith.constant 6 : i32
    %177 = arith.addi %0, %c6_i32_156 : i32
    %c4_i32 = arith.constant 4 : i32
    %178 = arith.addi %177, %c4_i32 : i32
    %c0_157 = arith.constant 0 : index
    %179 = arith.index_cast %178 : i32 to index
    %c4_158 = arith.constant 4 : index
    %c0_159 = arith.constant 0 : index
    %180 = vector.load %arg2[%c0_157, %179, %c4_158, %c0_159] : memref<1x28x32x128xbf16, #tpu.memory_space<vmem>>, vector<1x8x16x128xbf16>
    %181 = vector.shape_cast %180 : vector<1x8x16x128xbf16> to vector<8x16x128xbf16>
    %182 = vector.shape_cast %181 : vector<8x16x128xbf16> to vector<128x128xbf16>
    %c1_160 = arith.constant 1 : index
    %c6_161 = arith.constant 6 : index
    %c0_162 = arith.constant 0 : index
    %c0_163 = arith.constant 0 : index
    %183 = vector.load %arg5[%c1_160, %c6_161, %c0_162, %c0_163] : memref<3x9x128x128xbf16, #tpu.memory_space<vmem>>, vector<1x1x128x128xbf16>
    %184 = vector.shape_cast %183 : vector<1x1x128x128xbf16> to vector<128x128xbf16>
    %cst_164 = arith.constant dense<0.000000e+00> : vector<128x128xf32>
    %185 = tpu.matmul %182, %184, %cst_164 {dimension_numbers = #tpu.dot_dimension_numbers<[1], [0], [0], [1], [0, 0, 1, 1], [], []>} : vector<128x128xbf16>, vector<128x128xbf16>, vector<128x128xf32> -> vector<128x128xf32>
    %186 = arith.addf %176, %185 : vector<128x128xf32>
    %c6_i32_165 = arith.constant 6 : i32
    %187 = arith.addi %0, %c6_i32_165 : i32
    %c4_i32_166 = arith.constant 4 : i32
    %188 = arith.addi %187, %c4_i32_166 : i32
    %c0_167 = arith.constant 0 : index
    %189 = arith.index_cast %188 : i32 to index
    %c8_168 = arith.constant 8 : index
    %c0_169 = arith.constant 0 : index
    %190 = vector.load %arg2[%c0_167, %189, %c8_168, %c0_169] : memref<1x28x32x128xbf16, #tpu.memory_space<vmem>>, vector<1x8x16x128xbf16>
    %191 = vector.shape_cast %190 : vector<1x8x16x128xbf16> to vector<8x16x128xbf16>
    %192 = vector.shape_cast %191 : vector<8x16x128xbf16> to vector<128x128xbf16>
    %c1_170 = arith.constant 1 : index
    %c7_171 = arith.constant 7 : index
    %c0_172 = arith.constant 0 : index
    %c0_173 = arith.constant 0 : index
    %193 = vector.load %arg5[%c1_170, %c7_171, %c0_172, %c0_173] : memref<3x9x128x128xbf16, #tpu.memory_space<vmem>>, vector<1x1x128x128xbf16>
    %194 = vector.shape_cast %193 : vector<1x1x128x128xbf16> to vector<128x128xbf16>
    %cst_174 = arith.constant dense<0.000000e+00> : vector<128x128xf32>
    %195 = tpu.matmul %192, %194, %cst_174 {dimension_numbers = #tpu.dot_dimension_numbers<[1], [0], [0], [1], [0, 0, 1, 1], [], []>} : vector<128x128xbf16>, vector<128x128xbf16>, vector<128x128xf32> -> vector<128x128xf32>
    %196 = arith.addf %186, %195 : vector<128x128xf32>
    %c6_i32_175 = arith.constant 6 : i32
    %197 = arith.addi %0, %c6_i32_175 : i32
    %c4_i32_176 = arith.constant 4 : i32
    %198 = arith.addi %197, %c4_i32_176 : i32
    %c0_177 = arith.constant 0 : index
    %199 = arith.index_cast %198 : i32 to index
    %c12_178 = arith.constant 12 : index
    %c0_179 = arith.constant 0 : index
    %200 = vector.load %arg2[%c0_177, %199, %c12_178, %c0_179] : memref<1x28x32x128xbf16, #tpu.memory_space<vmem>>, vector<1x8x16x128xbf16>
    %201 = vector.shape_cast %200 : vector<1x8x16x128xbf16> to vector<8x16x128xbf16>
    %202 = vector.shape_cast %201 : vector<8x16x128xbf16> to vector<128x128xbf16>
    %c1_180 = arith.constant 1 : index
    %c8_181 = arith.constant 8 : index
    %c0_182 = arith.constant 0 : index
    %c0_183 = arith.constant 0 : index
    %203 = vector.load %arg5[%c1_180, %c8_181, %c0_182, %c0_183] : memref<3x9x128x128xbf16, #tpu.memory_space<vmem>>, vector<1x1x128x128xbf16>
    %204 = vector.shape_cast %203 : vector<1x1x128x128xbf16> to vector<128x128xbf16>
    %cst_184 = arith.constant dense<0.000000e+00> : vector<128x128xf32>
    %205 = tpu.matmul %202, %204, %cst_184 {dimension_numbers = #tpu.dot_dimension_numbers<[1], [0], [0], [1], [0, 0, 1, 1], [], []>} : vector<128x128xbf16>, vector<128x128xbf16>, vector<128x128xf32> -> vector<128x128xf32>
    %206 = arith.addf %196, %205 : vector<128x128xf32>
    %c1_185 = arith.constant 1 : index
    %c0_186 = arith.constant 0 : index
    %c0_187 = arith.constant 0 : index
    %207 = vector.load %arg6[%c1_185, %c0_186, %c0_187] : memref<3x1x128xf32, #tpu.memory_space<vmem>>, vector<1x1x128xf32>
    %208 = vector.shape_cast %207 : vector<1x1x128xf32> to vector<1x128xf32>
    %209 = vector.broadcast %208 : vector<1x128xf32> to vector<128x128xf32>
    %210 = arith.addf %206, %209 : vector<128x128xf32>
    %cst_188 = arith.constant 0.000000e+00 : f32
    %211 = vector.broadcast %cst_188 : f32 to vector<128x128xf32>
    %212 = arith.maximumf %210, %211 : vector<128x128xf32>
    %213 = arith.truncf %212 : vector<128x128xf32> to vector<128x128xbf16>
    %c2_189 = arith.constant 2 : index
    %c0_190 = arith.constant 0 : index
    %c0_191 = arith.constant 0 : index
    %214 = vector.load %arg9[%c2_189, %c0_190, %c0_191] : memref<5x128x128xbf16, #tpu.memory_space<vmem>>, vector<1x128x128xbf16>
    %215 = vector.shape_cast %214 : vector<1x128x128xbf16> to vector<128x128xbf16>
    %cst_192 = arith.constant dense<0.000000e+00> : vector<128x128xf32>
    %216 = tpu.matmul %213, %215, %cst_192 {dimension_numbers = #tpu.dot_dimension_numbers<[1], [0], [0], [1], [0, 0, 1, 1], [], []>} : vector<128x128xbf16>, vector<128x128xbf16>, vector<128x128xf32> -> vector<128x128xf32>
    %217 = arith.addf %117, %216 : vector<128x128xf32>
    %c6_i32_193 = arith.constant 6 : i32
    %218 = arith.addi %0, %c6_i32_193 : i32
    %c-6_i32 = arith.constant -6 : i32
    %219 = arith.addi %218, %c-6_i32 : i32
    %c0_194 = arith.constant 0 : index
    %220 = arith.index_cast %219 : i32 to index
    %c2_195 = arith.constant 2 : index
    %c0_196 = arith.constant 0 : index
    %221 = vector.load %arg2[%c0_194, %220, %c2_195, %c0_196] : memref<1x28x32x128xbf16, #tpu.memory_space<vmem>>, vector<1x8x16x128xbf16>
    %222 = vector.shape_cast %221 : vector<1x8x16x128xbf16> to vector<8x16x128xbf16>
    %223 = vector.shape_cast %222 : vector<8x16x128xbf16> to vector<128x128xbf16>
    %c2_197 = arith.constant 2 : index
    %c0_198 = arith.constant 0 : index
    %c0_199 = arith.constant 0 : index
    %c0_200 = arith.constant 0 : index
    %224 = vector.load %arg5[%c2_197, %c0_198, %c0_199, %c0_200] : memref<3x9x128x128xbf16, #tpu.memory_space<vmem>>, vector<1x1x128x128xbf16>
    %225 = vector.shape_cast %224 : vector<1x1x128x128xbf16> to vector<128x128xbf16>
    %cst_201 = arith.constant dense<0.000000e+00> : vector<128x128xf32>
    %226 = tpu.matmul %223, %225, %cst_201 {dimension_numbers = #tpu.dot_dimension_numbers<[1], [0], [0], [1], [0, 0, 1, 1], [], []>} : vector<128x128xbf16>, vector<128x128xbf16>, vector<128x128xf32> -> vector<128x128xf32>
    %c6_i32_202 = arith.constant 6 : i32
    %227 = arith.addi %0, %c6_i32_202 : i32
    %c-6_i32_203 = arith.constant -6 : i32
    %228 = arith.addi %227, %c-6_i32_203 : i32
    %c0_204 = arith.constant 0 : index
    %229 = arith.index_cast %228 : i32 to index
    %c8_205 = arith.constant 8 : index
    %c0_206 = arith.constant 0 : index
    %230 = vector.load %arg2[%c0_204, %229, %c8_205, %c0_206] : memref<1x28x32x128xbf16, #tpu.memory_space<vmem>>, vector<1x8x16x128xbf16>
    %231 = vector.shape_cast %230 : vector<1x8x16x128xbf16> to vector<8x16x128xbf16>
    %232 = vector.shape_cast %231 : vector<8x16x128xbf16> to vector<128x128xbf16>
    %c2_207 = arith.constant 2 : index
    %c1_208 = arith.constant 1 : index
    %c0_209 = arith.constant 0 : index
    %c0_210 = arith.constant 0 : index
    %233 = vector.load %arg5[%c2_207, %c1_208, %c0_209, %c0_210] : memref<3x9x128x128xbf16, #tpu.memory_space<vmem>>, vector<1x1x128x128xbf16>
    %234 = vector.shape_cast %233 : vector<1x1x128x128xbf16> to vector<128x128xbf16>
    %cst_211 = arith.constant dense<0.000000e+00> : vector<128x128xf32>
    %235 = tpu.matmul %232, %234, %cst_211 {dimension_numbers = #tpu.dot_dimension_numbers<[1], [0], [0], [1], [0, 0, 1, 1], [], []>} : vector<128x128xbf16>, vector<128x128xbf16>, vector<128x128xf32> -> vector<128x128xf32>
    %236 = arith.addf %226, %235 : vector<128x128xf32>
    %c6_i32_212 = arith.constant 6 : i32
    %237 = arith.addi %0, %c6_i32_212 : i32
    %c-6_i32_213 = arith.constant -6 : i32
    %238 = arith.addi %237, %c-6_i32_213 : i32
    %c0_214 = arith.constant 0 : index
    %239 = arith.index_cast %238 : i32 to index
    %c14 = arith.constant 14 : index
    %c0_215 = arith.constant 0 : index
    %240 = vector.load %arg2[%c0_214, %239, %c14, %c0_215] : memref<1x28x32x128xbf16, #tpu.memory_space<vmem>>, vector<1x8x16x128xbf16>
    %241 = vector.shape_cast %240 : vector<1x8x16x128xbf16> to vector<8x16x128xbf16>
    %242 = vector.shape_cast %241 : vector<8x16x128xbf16> to vector<128x128xbf16>
    %c2_216 = arith.constant 2 : index
    %c2_217 = arith.constant 2 : index
    %c0_218 = arith.constant 0 : index
    %c0_219 = arith.constant 0 : index
    %243 = vector.load %arg5[%c2_216, %c2_217, %c0_218, %c0_219] : memref<3x9x128x128xbf16, #tpu.memory_space<vmem>>, vector<1x1x128x128xbf16>
    %244 = vector.shape_cast %243 : vector<1x1x128x128xbf16> to vector<128x128xbf16>
    %cst_220 = arith.constant dense<0.000000e+00> : vector<128x128xf32>
    %245 = tpu.matmul %242, %244, %cst_220 {dimension_numbers = #tpu.dot_dimension_numbers<[1], [0], [0], [1], [0, 0, 1, 1], [], []>} : vector<128x128xbf16>, vector<128x128xbf16>, vector<128x128xf32> -> vector<128x128xf32>
    %246 = arith.addf %236, %245 : vector<128x128xf32>
    %c6_i32_221 = arith.constant 6 : i32
    %247 = arith.addi %0, %c6_i32_221 : i32
    %c0_i32_222 = arith.constant 0 : i32
    %248 = arith.addi %247, %c0_i32_222 : i32
    %c0_223 = arith.constant 0 : index
    %249 = arith.index_cast %248 : i32 to index
    %c2_224 = arith.constant 2 : index
    %c0_225 = arith.constant 0 : index
    %250 = vector.load %arg2[%c0_223, %249, %c2_224, %c0_225] : memref<1x28x32x128xbf16, #tpu.memory_space<vmem>>, vector<1x8x16x128xbf16>
    %251 = vector.shape_cast %250 : vector<1x8x16x128xbf16> to vector<8x16x128xbf16>
    %252 = vector.shape_cast %251 : vector<8x16x128xbf16> to vector<128x128xbf16>
    %c2_226 = arith.constant 2 : index
    %c3_227 = arith.constant 3 : index
    %c0_228 = arith.constant 0 : index
    %c0_229 = arith.constant 0 : index
    %253 = vector.load %arg5[%c2_226, %c3_227, %c0_228, %c0_229] : memref<3x9x128x128xbf16, #tpu.memory_space<vmem>>, vector<1x1x128x128xbf16>
    %254 = vector.shape_cast %253 : vector<1x1x128x128xbf16> to vector<128x128xbf16>
    %cst_230 = arith.constant dense<0.000000e+00> : vector<128x128xf32>
    %255 = tpu.matmul %252, %254, %cst_230 {dimension_numbers = #tpu.dot_dimension_numbers<[1], [0], [0], [1], [0, 0, 1, 1], [], []>} : vector<128x128xbf16>, vector<128x128xbf16>, vector<128x128xf32> -> vector<128x128xf32>
    %256 = arith.addf %246, %255 : vector<128x128xf32>
    %c6_i32_231 = arith.constant 6 : i32
    %257 = arith.addi %0, %c6_i32_231 : i32
    %c0_i32_232 = arith.constant 0 : i32
    %258 = arith.addi %257, %c0_i32_232 : i32
    %c0_233 = arith.constant 0 : index
    %259 = arith.index_cast %258 : i32 to index
    %c8_234 = arith.constant 8 : index
    %c0_235 = arith.constant 0 : index
    %260 = vector.load %arg2[%c0_233, %259, %c8_234, %c0_235] : memref<1x28x32x128xbf16, #tpu.memory_space<vmem>>, vector<1x8x16x128xbf16>
    %261 = vector.shape_cast %260 : vector<1x8x16x128xbf16> to vector<8x16x128xbf16>
    %262 = vector.shape_cast %261 : vector<8x16x128xbf16> to vector<128x128xbf16>
    %c2_236 = arith.constant 2 : index
    %c4_237 = arith.constant 4 : index
    %c0_238 = arith.constant 0 : index
    %c0_239 = arith.constant 0 : index
    %263 = vector.load %arg5[%c2_236, %c4_237, %c0_238, %c0_239] : memref<3x9x128x128xbf16, #tpu.memory_space<vmem>>, vector<1x1x128x128xbf16>
    %264 = vector.shape_cast %263 : vector<1x1x128x128xbf16> to vector<128x128xbf16>
    %cst_240 = arith.constant dense<0.000000e+00> : vector<128x128xf32>
    %265 = tpu.matmul %262, %264, %cst_240 {dimension_numbers = #tpu.dot_dimension_numbers<[1], [0], [0], [1], [0, 0, 1, 1], [], []>} : vector<128x128xbf16>, vector<128x128xbf16>, vector<128x128xf32> -> vector<128x128xf32>
    %266 = arith.addf %256, %265 : vector<128x128xf32>
    %c6_i32_241 = arith.constant 6 : i32
    %267 = arith.addi %0, %c6_i32_241 : i32
    %c0_i32_242 = arith.constant 0 : i32
    %268 = arith.addi %267, %c0_i32_242 : i32
    %c0_243 = arith.constant 0 : index
    %269 = arith.index_cast %268 : i32 to index
    %c14_244 = arith.constant 14 : index
    %c0_245 = arith.constant 0 : index
    %270 = vector.load %arg2[%c0_243, %269, %c14_244, %c0_245] : memref<1x28x32x128xbf16, #tpu.memory_space<vmem>>, vector<1x8x16x128xbf16>
    %271 = vector.shape_cast %270 : vector<1x8x16x128xbf16> to vector<8x16x128xbf16>
    %272 = vector.shape_cast %271 : vector<8x16x128xbf16> to vector<128x128xbf16>
    %c2_246 = arith.constant 2 : index
    %c5_247 = arith.constant 5 : index
    %c0_248 = arith.constant 0 : index
    %c0_249 = arith.constant 0 : index
    %273 = vector.load %arg5[%c2_246, %c5_247, %c0_248, %c0_249] : memref<3x9x128x128xbf16, #tpu.memory_space<vmem>>, vector<1x1x128x128xbf16>
    %274 = vector.shape_cast %273 : vector<1x1x128x128xbf16> to vector<128x128xbf16>
    %cst_250 = arith.constant dense<0.000000e+00> : vector<128x128xf32>
    %275 = tpu.matmul %272, %274, %cst_250 {dimension_numbers = #tpu.dot_dimension_numbers<[1], [0], [0], [1], [0, 0, 1, 1], [], []>} : vector<128x128xbf16>, vector<128x128xbf16>, vector<128x128xf32> -> vector<128x128xf32>
    %276 = arith.addf %266, %275 : vector<128x128xf32>
    %c6_i32_251 = arith.constant 6 : i32
    %277 = arith.addi %0, %c6_i32_251 : i32
    %c6_i32_252 = arith.constant 6 : i32
    %278 = arith.addi %277, %c6_i32_252 : i32
    %c0_253 = arith.constant 0 : index
    %279 = arith.index_cast %278 : i32 to index
    %c2_254 = arith.constant 2 : index
    %c0_255 = arith.constant 0 : index
    %280 = vector.load %arg2[%c0_253, %279, %c2_254, %c0_255] : memref<1x28x32x128xbf16, #tpu.memory_space<vmem>>, vector<1x8x16x128xbf16>
    %281 = vector.shape_cast %280 : vector<1x8x16x128xbf16> to vector<8x16x128xbf16>
    %282 = vector.shape_cast %281 : vector<8x16x128xbf16> to vector<128x128xbf16>
    %c2_256 = arith.constant 2 : index
    %c6_257 = arith.constant 6 : index
    %c0_258 = arith.constant 0 : index
    %c0_259 = arith.constant 0 : index
    %283 = vector.load %arg5[%c2_256, %c6_257, %c0_258, %c0_259] : memref<3x9x128x128xbf16, #tpu.memory_space<vmem>>, vector<1x1x128x128xbf16>
    %284 = vector.shape_cast %283 : vector<1x1x128x128xbf16> to vector<128x128xbf16>
    %cst_260 = arith.constant dense<0.000000e+00> : vector<128x128xf32>
    %285 = tpu.matmul %282, %284, %cst_260 {dimension_numbers = #tpu.dot_dimension_numbers<[1], [0], [0], [1], [0, 0, 1, 1], [], []>} : vector<128x128xbf16>, vector<128x128xbf16>, vector<128x128xf32> -> vector<128x128xf32>
    %286 = arith.addf %276, %285 : vector<128x128xf32>
    %c6_i32_261 = arith.constant 6 : i32
    %287 = arith.addi %0, %c6_i32_261 : i32
    %c6_i32_262 = arith.constant 6 : i32
    %288 = arith.addi %287, %c6_i32_262 : i32
    %c0_263 = arith.constant 0 : index
    %289 = arith.index_cast %288 : i32 to index
    %c8_264 = arith.constant 8 : index
    %c0_265 = arith.constant 0 : index
    %290 = vector.load %arg2[%c0_263, %289, %c8_264, %c0_265] : memref<1x28x32x128xbf16, #tpu.memory_space<vmem>>, vector<1x8x16x128xbf16>
    %291 = vector.shape_cast %290 : vector<1x8x16x128xbf16> to vector<8x16x128xbf16>
    %292 = vector.shape_cast %291 : vector<8x16x128xbf16> to vector<128x128xbf16>
    %c2_266 = arith.constant 2 : index
    %c7_267 = arith.constant 7 : index
    %c0_268 = arith.constant 0 : index
    %c0_269 = arith.constant 0 : index
    %293 = vector.load %arg5[%c2_266, %c7_267, %c0_268, %c0_269] : memref<3x9x128x128xbf16, #tpu.memory_space<vmem>>, vector<1x1x128x128xbf16>
    %294 = vector.shape_cast %293 : vector<1x1x128x128xbf16> to vector<128x128xbf16>
    %cst_270 = arith.constant dense<0.000000e+00> : vector<128x128xf32>
    %295 = tpu.matmul %292, %294, %cst_270 {dimension_numbers = #tpu.dot_dimension_numbers<[1], [0], [0], [1], [0, 0, 1, 1], [], []>} : vector<128x128xbf16>, vector<128x128xbf16>, vector<128x128xf32> -> vector<128x128xf32>
    %296 = arith.addf %286, %295 : vector<128x128xf32>
    %c6_i32_271 = arith.constant 6 : i32
    %297 = arith.addi %0, %c6_i32_271 : i32
    %c6_i32_272 = arith.constant 6 : i32
    %298 = arith.addi %297, %c6_i32_272 : i32
    %c0_273 = arith.constant 0 : index
    %299 = arith.index_cast %298 : i32 to index
    %c14_274 = arith.constant 14 : index
    %c0_275 = arith.constant 0 : index
    %300 = vector.load %arg2[%c0_273, %299, %c14_274, %c0_275] : memref<1x28x32x128xbf16, #tpu.memory_space<vmem>>, vector<1x8x16x128xbf16>
    %301 = vector.shape_cast %300 : vector<1x8x16x128xbf16> to vector<8x16x128xbf16>
    %302 = vector.shape_cast %301 : vector<8x16x128xbf16> to vector<128x128xbf16>
    %c2_276 = arith.constant 2 : index
    %c8_277 = arith.constant 8 : index
    %c0_278 = arith.constant 0 : index
    %c0_279 = arith.constant 0 : index
    %303 = vector.load %arg5[%c2_276, %c8_277, %c0_278, %c0_279] : memref<3x9x128x128xbf16, #tpu.memory_space<vmem>>, vector<1x1x128x128xbf16>
    %304 = vector.shape_cast %303 : vector<1x1x128x128xbf16> to vector<128x128xbf16>
    %cst_280 = arith.constant dense<0.000000e+00> : vector<128x128xf32>
    %305 = tpu.matmul %302, %304, %cst_280 {dimension_numbers = #tpu.dot_dimension_numbers<[1], [0], [0], [1], [0, 0, 1, 1], [], []>} : vector<128x128xbf16>, vector<128x128xbf16>, vector<128x128xf32> -> vector<128x128xf32>
    %306 = arith.addf %296, %305 : vector<128x128xf32>
    %c2_281 = arith.constant 2 : index
    %c0_282 = arith.constant 0 : index
    %c0_283 = arith.constant 0 : index
    %307 = vector.load %arg6[%c2_281, %c0_282, %c0_283] : memref<3x1x128xf32, #tpu.memory_space<vmem>>, vector<1x1x128xf32>
    %308 = vector.shape_cast %307 : vector<1x1x128xf32> to vector<1x128xf32>
    %309 = vector.broadcast %308 : vector<1x128xf32> to vector<128x128xf32>
    %310 = arith.addf %306, %309 : vector<128x128xf32>
    %cst_284 = arith.constant 0.000000e+00 : f32
    %311 = vector.broadcast %cst_284 : f32 to vector<128x128xf32>
    %312 = arith.maximumf %310, %311 : vector<128x128xf32>
    %313 = arith.truncf %312 : vector<128x128xf32> to vector<128x128xbf16>
    %c3_285 = arith.constant 3 : index
    %c0_286 = arith.constant 0 : index
    %c0_287 = arith.constant 0 : index
    %314 = vector.load %arg9[%c3_285, %c0_286, %c0_287] : memref<5x128x128xbf16, #tpu.memory_space<vmem>>, vector<1x128x128xbf16>
    %315 = vector.shape_cast %314 : vector<1x128x128xbf16> to vector<128x128xbf16>
    %cst_288 = arith.constant dense<0.000000e+00> : vector<128x128xf32>
    %316 = tpu.matmul %313, %315, %cst_288 {dimension_numbers = #tpu.dot_dimension_numbers<[1], [0], [0], [1], [0, 0, 1, 1], [], []>} : vector<128x128xbf16>, vector<128x128xbf16>, vector<128x128xf32> -> vector<128x128xf32>
    %317 = arith.addf %217, %316 : vector<128x128xf32>
    %c0_289 = arith.constant 0 : index
    %c6_290 = arith.constant 6 : index
    %c8_291 = arith.constant 8 : index
    %c0_292 = arith.constant 0 : index
    %318 = vector.load %arg2[%c0_289, %c6_290, %c8_291, %c0_292] : memref<1x28x32x128xbf16, #tpu.memory_space<vmem>>, vector<1x16x16x128xbf16>
    %319 = vector.shape_cast %318 : vector<1x16x16x128xbf16> to vector<16x16x128xbf16>
    %320 = vector.shape_cast %319 : vector<16x16x128xbf16> to vector<256x128xbf16>
    %321 = arith.extf %320 : vector<256x128xbf16> to vector<256x128xf32>
    %cst_293 = arith.constant dense<0.000000e+00> : vector<128xf32>
    %322 = vector.multi_reduction <add>, %321, %cst_293 [0] : vector<256x128xf32> to vector<128xf32>
    %323 = vector.shape_cast %322 : vector<128xf32> to vector<1x128xf32>
    %cst_294 = arith.constant 2.560000e+02 : f32
    %324 = vector.broadcast %cst_294 : f32 to vector<1x128xf32>
    %325 = arith.divf %323, %324 : vector<1x128xf32>
    %326 = arith.truncf %325 : vector<1x128xf32> to vector<1x128xbf16>
    %c0_295 = arith.constant 0 : index
    %c0_296 = arith.constant 0 : index
    %327 = vector.load %arg7[%c0_295, %c0_296] : memref<128x128xbf16, #tpu.memory_space<vmem>>, vector<128x128xbf16>
    %cst_297 = arith.constant dense<0.000000e+00> : vector<1x128xf32>
    %328 = tpu.matmul %326, %327, %cst_297 {dimension_numbers = #tpu.dot_dimension_numbers<[1], [0], [0], [1], [0, 0, 1, 1], [], []>} : vector<1x128xbf16>, vector<128x128xbf16>, vector<1x128xf32> -> vector<1x128xf32>
    %c0_298 = arith.constant 0 : index
    %c0_299 = arith.constant 0 : index
    %329 = vector.load %arg8[%c0_298, %c0_299] : memref<1x128xf32, #tpu.memory_space<vmem>>, vector<1x128xf32>
    %330 = arith.addf %328, %329 : vector<1x128xf32>
    %cst_300 = arith.constant 0.000000e+00 : f32
    %331 = vector.broadcast %cst_300 : f32 to vector<1x128xf32>
    %332 = arith.maximumf %330, %331 : vector<1x128xf32>
    %333 = arith.truncf %332 : vector<1x128xf32> to vector<1x128xbf16>
    %c4_301 = arith.constant 4 : index
    %c0_302 = arith.constant 0 : index
    %c0_303 = arith.constant 0 : index
    %334 = vector.load %arg9[%c4_301, %c0_302, %c0_303] : memref<5x128x128xbf16, #tpu.memory_space<vmem>>, vector<1x128x128xbf16>
    %335 = vector.shape_cast %334 : vector<1x128x128xbf16> to vector<128x128xbf16>
    %cst_304 = arith.constant dense<0.000000e+00> : vector<1x128xf32>
    %336 = tpu.matmul %333, %335, %cst_304 {dimension_numbers = #tpu.dot_dimension_numbers<[1], [0], [0], [1], [0, 0, 1, 1], [], []>} : vector<1x128xbf16>, vector<128x128xbf16>, vector<1x128xf32> -> vector<1x128xf32>
    %c0_305 = arith.constant 0 : index
    %c0_306 = arith.constant 0 : index
    %337 = vector.load %arg10[%c0_305, %c0_306] : memref<1x128xf32, #tpu.memory_space<vmem>>, vector<1x128xf32>
    %338 = arith.addf %337, %336 : vector<1x128xf32>
    %339 = vector.broadcast %338 : vector<1x128xf32> to vector<128x128xf32>
    %340 = arith.addf %317, %339 : vector<128x128xf32>
    %cst_307 = arith.constant 0.000000e+00 : f32
    %341 = vector.broadcast %cst_307 : f32 to vector<128x128xf32>
    %342 = arith.maximumf %340, %341 : vector<128x128xf32>
    %343 = vector.shape_cast %342 : vector<128x128xf32> to vector<8x16x128xf32>
    %c0_308 = arith.constant 0 : index
    %c0_309 = arith.constant 0 : index
    %c0_310 = arith.constant 0 : index
    %c0_311 = arith.constant 0 : index
    %344 = vector.load %arg11[%c0_308, %c0_309, %c0_310, %c0_311] : memref<1x8x16x128xf32, #tpu.memory_space<vmem>>, vector<1x8x16x128xf32>
    %345 = vector.shape_cast %344 : vector<1x8x16x128xf32> to vector<8x16x128xf32>
    %346 = vector.shape_cast %343 : vector<8x16x128xf32> to vector<1x8x16x128xf32>
    tpu.vector_store %arg11[%c0_308, %c0_309, %c0_310, %c0_311], %346 {strides = array<i32>} : memref<1x8x16x128xf32, #tpu.memory_space<vmem>>, vector<1x8x16x128xf32>,
    return
  }
  func.func @transform_0(%arg0: i32, %arg1: i32) -> (i32, i32, i32, i32) {
    %c0_i32 = arith.constant 0 : i32
    %c0_i32_0 = arith.constant 0 : i32
    %c0_i32_1 = arith.constant 0 : i32
    %c0_i32_2 = arith.constant 0 : i32
    return %arg0, %c0_i32, %c0_i32_0, %c0_i32_1 : i32, i32, i32, i32
  }
  func.func @transform_1(%arg0: i32, %arg1: i32) -> (i32, i32) {
    %c0_i32 = arith.constant 0 : i32
    %c0_i32_0 = arith.constant 0 : i32
    %c0_i32_1 = arith.constant 0 : i32
    return %c0_i32, %c0_i32_0 : i32, i32
  }
  func.func @transform_2(%arg0: i32, %arg1: i32) -> (i32, i32) {
    %c0_i32 = arith.constant 0 : i32
    %c0_i32_0 = arith.constant 0 : i32
    %c0_i32_1 = arith.constant 0 : i32
    return %c0_i32, %c0_i32_0 : i32, i32
  }
  func.func @transform_3(%arg0: i32, %arg1: i32) -> (i32, i32, i32, i32) {
    %c0_i32 = arith.constant 0 : i32
    %c0_i32_0 = arith.constant 0 : i32
    %c0_i32_1 = arith.constant 0 : i32
    %c0_i32_2 = arith.constant 0 : i32
    %c0_i32_3 = arith.constant 0 : i32
    return %c0_i32, %c0_i32_0, %c0_i32_1, %c0_i32_2 : i32, i32, i32, i32
  }
  func.func @transform_4(%arg0: i32, %arg1: i32) -> (i32, i32, i32) {
    %c0_i32 = arith.constant 0 : i32
    %c0_i32_0 = arith.constant 0 : i32
    %c0_i32_1 = arith.constant 0 : i32
    %c0_i32_2 = arith.constant 0 : i32
    return %c0_i32, %c0_i32_0, %c0_i32_1 : i32, i32, i32
  }
  func.func @transform_5(%arg0: i32, %arg1: i32) -> (i32, i32) {
    %c0_i32 = arith.constant 0 : i32
    %c0_i32_0 = arith.constant 0 : i32
    %c0_i32_1 = arith.constant 0 : i32
    return %c0_i32, %c0_i32_0 : i32, i32
  }
  func.func @transform_6(%arg0: i32, %arg1: i32) -> (i32, i32) {
    %c0_i32 = arith.constant 0 : i32
    %c0_i32_0 = arith.constant 0 : i32
    %c0_i32_1 = arith.constant 0 : i32
    return %c0_i32, %c0_i32_0 : i32, i32
  }
  func.func @transform_7(%arg0: i32, %arg1: i32) -> (i32, i32, i32) {
    %c0_i32 = arith.constant 0 : i32
    %c0_i32_0 = arith.constant 0 : i32
    %c0_i32_1 = arith.constant 0 : i32
    %c0_i32_2 = arith.constant 0 : i32
    return %c0_i32, %c0_i32_0, %c0_i32_1 : i32, i32, i32
  }
  func.func @transform_8(%arg0: i32, %arg1: i32) -> (i32, i32) {
    %c0_i32 = arith.constant 0 : i32
    %c0_i32_0 = arith.constant 0 : i32
    %c0_i32_1 = arith.constant 0 : i32
    return %c0_i32, %c0_i32_0 : i32, i32
  }
  func.func @transform_9(%arg0: i32, %arg1: i32) -> (i32, i32, i32, i32) {
    %c0_i32 = arith.constant 0 : i32
    %c0_i32_0 = arith.constant 0 : i32
    %c0_i32_1 = arith.constant 0 : i32
    return %arg0, %arg1, %c0_i32, %c0_i32_0 : i32, i32, i32, i32
  }
}

</mosaic_0001>

<llo_original>
// kernel: aspp_forward.1
$region0: #{aspp_forward.1}
  #allocation0 [shape = 'u32[]', space=smem, size = 0x4, offset = 0x4, fixed_abs, tag = 'smem constant byte address 0x4 - core index']
  #allocation1 [shape = 'u32[144,128]{1,0:T(1,128)}', space=vmem, size = 0x12000, scoped, tag = 'internal scratch']
  %s0 = inlined_call_operand.vmem [shape: bf16[2,28,32,128], index: 0, kind: input, shape index: {}]
  %s1 = inlined_call_operand.vmem [shape: bf16[128,128], index: 1, kind: input, shape index: {}]
  %s2 = inlined_call_operand.vmem [shape: f32[1,128], index: 2, kind: input, shape index: {}]
  %s3 = inlined_call_operand.vmem [shape: bf16[3,9,128,128], index: 3, kind: input, shape index: {}]
  %s4 = inlined_call_operand.vmem [shape: f32[3,1,128], index: 4, kind: input, shape index: {}]
  %s5 = inlined_call_operand.vmem [shape: bf16[128,128], index: 5, kind: input, shape index: {}]
  %s6 = inlined_call_operand.vmem [shape: f32[1,128], index: 6, kind: input, shape index: {}]
  %s7 = inlined_call_operand.hbm [shape: bf16[5,128,128], index: 7, kind: input, shape index: {}]
  %s8 = inlined_call_operand.vmem [shape: f32[1,128], index: 8, kind: input, shape index: {}]
  %s9 = inlined_call_operand.hbm [shape: f32[2,16,16,128], index: 9, kind: output, shape index: {}]
  %s10 = sld [smem:[#allocation0]]
  $region73: #{aspp_forward.1} parent=0
    _
  %s12 = ssub.s32 1, %s10
  %s13 = scalar_select 0, %s12, %s10
  $region1: #{aspp_forward.1} parent=0
    #allocation2 [shape = 'u8[163840]{0}', space=vmem, size = 0x28000, scoped, tag = 'input window, operand 7, single buffered']
    #allocation3 [shape = 's32[2]{0}', space=sflag, size = 0x8, scoped, tag = 'scoped memory for aspp_forward.1']
    #allocation4 [shape = 's32[2]{0}', space=sflag, size = 0x8, scoped, tag = 'scoped memory for aspp_forward.1']
    #allocation5 [shape = 'u8[131072]{0}', space=vmem, size = 0x20000, scoped, tag = 'output window, operand 0']
    %14 = vsyncpa [#allocation3], 0
    %15 = vsyncpa [#allocation4], 0
    %s16 = scalar_lea.sflag [#allocation4], 1
    %17 = vsyncpa %s16, 0
    loop: start=0, step=1, limit=6
    $region2: #{aspp_forward.1} parent=1 // loop_pre_header
      _
    $region3: #{aspp_forward.1} parent=1 // loop_header
      %s19 = sphi 0, %s23
      %p20 = scmp.ge.s32.totalorder %s19, 6
      %s26 = sphi 0, %s38
      %s27 = sphi 0, %s34
      %s28 = sphi 0, %s26
      %s29 = sphi 0, %s27
      %s30 = sphi 0, %s28
      %s31 = sphi 0, %s29
      %s41 = sphi 0, %s43
      %s44 = sphi 0, %s41
      %s45 = sphi 0, %s44
      %s61 = sphi 0, %s45
      %s65 = sphi 0, %s65
      %s67 = sphi 0, %s65
      %s68 = sphi 0, %s67
      %s82 = sphi 0, %s68
      %s86 = sphi 0, %s86
      %s88 = sphi 0, %s86
      %s89 = sphi 0, %s88
      %s103 = sphi 0, %s89
      %s107 = sphi 0, %s107
      %s109 = sphi 0, %s107
      %s110 = sphi 0, %s109
      %s124 = sphi 0, %s110
      %s128 = sphi 0, %s128
      %s130 = sphi 0, %s128
      %s131 = sphi 0, %s130
      %s145 = sphi 0, %s131
      %s149 = sphi 0, %s149
      %s151 = sphi 0, %s149
      %s152 = sphi 0, %s151
      %s166 = sphi 0, %s152
      %s170 = sphi 0, %s170
      %s172 = sphi 0, %s170
      %s173 = sphi 0, %s172
      %s187 = sphi 0, %s173
      %s191 = sphi 0, %s191
      %s193 = sphi 0, %s191
      %s194 = sphi 0, %s193
      %s208 = sphi 0, %s194
      %s212 = sphi 0, %s212
      %s214 = sphi 0, %s212
      %s215 = sphi 0, %s214
      %s229 = sphi 0, %s215
      %s237 = sphi 0, %s239
      %s240 = sphi 0, %s237
      %s241 = sphi 0, %s240
      %s257 = sphi 0, %s241
    $region4: #{aspp_forward.1} parent=1 // loop_header_branch
      %22 = sbr.rel (%p20) target = $region8
    $region5: #{aspp_forward.1} parent=1 // loop_body
      %s24 = ssub.s32 %s19, 1
      %s25 = ssub.s32 %s19, 2
      %s32 = sadd.s32 1, %s27
      %p33 = scmp.ge.s32.totalorder %s32, 2
      %s34 = scalar_select %p33, 0, %s32
      %s35 = sadd.s32 1, %s26
      %s36 = scalar_select %p33, %s35, %s26
      %p37 = scmp.ge.s32.totalorder %s36, 2
      %s38 = scalar_select %p37, 0, %s36
      %s39 = ssub.s32 %s26, %s38
      %p40 = scmp.eq.s32.totalorder %s39, 0
      %s42 = sadd.s32 %s41, 1
      %s43 = scalar_select %p40, %s41, %s42
      %p46 = pneg %p40
      %p47 = scmp.eq.s32.totalorder %s19, 3
      %p48 = por %p46, %p47
      %p49 = scmp.ne.s32.totalorder %s41, %s44
      %p50 = scmp.eq.s32.totalorder %s19, 0
      %p51 = por %p49, %p50
      %p52 = scmp.ne.s32.totalorder %s41, %s44
      %p53 = scmp.eq.s32.totalorder %s24, 3
      %p54 = por %p52, %p53
      %p55 = scmp.ne.s32.totalorder %s44, %s45
      %p56 = scmp.eq.s32.totalorder %s24, 0
      %p57 = por %p55, %p56
      %p58 = scmp.ne.s32.totalorder %s44, %s45
      %p59 = scmp.eq.s32.totalorder %s25, 3
      %p60 = por %p58, %p59
      %p62 = scmp.ne.s32.totalorder %s45, %s61
      %p63 = scmp.eq.s32.totalorder %s25, 0
      %p64 = por %p62, %p63
      %s66 = sadd.s32 %s65, 1
      %p69 = scmp.eq.s32.totalorder %s19, 3
      %p70 = scmp.ne.s32.totalorder %s65, %s67
      %p71 = scmp.eq.s32.totalorder %s19, 0
      %p72 = por %p70, %p71
      %p73 = scmp.ne.s32.totalorder %s65, %s67
      %p74 = scmp.eq.s32.totalorder %s24, 3
      %p75 = por %p73, %p74
      %p76 = scmp.ne.s32.totalorder %s67, %s68
      %p77 = scmp.eq.s32.totalorder %s24, 0
      %p78 = por %p76, %p77
      %p79 = scmp.ne.s32.totalorder %s67, %s68
      %p80 = scmp.eq.s32.totalorder %s25, 3
      %p81 = por %p79, %p80
      %p83 = scmp.ne.s32.totalorder %s68, %s82
      %p84 = scmp.eq.s32.totalorder %s25, 0
      %p85 = por %p83, %p84
      %s87 = sadd.s32 %s86, 1
      %p90 = scmp.eq.s32.totalorder %s19, 3
      %p91 = scmp.ne.s32.totalorder %s86, %s88
      %p92 = scmp.eq.s32.totalorder %s19, 0
      %p93 = por %p91, %p92
      %p94 = scmp.ne.s32.totalorder %s86, %s88
      %p95 = scmp.eq.s32.totalorder %s24, 3
      %p96 = por %p94, %p95
      %p97 = scmp.ne.s32.totalorder %s88, %s89
      %p98 = scmp.eq.s32.totalorder %s24, 0
      %p99 = por %p97, %p98
      %p100 = scmp.ne.s32.totalorder %s88, %s89
      %p101 = scmp.eq.s32.totalorder %s25, 3
      %p102 = por %p100, %p101
      %p104 = scmp.ne.s32.totalorder %s89, %s103
      %p105 = scmp.eq.s32.totalorder %s25, 0
      %p106 = por %p104, %p105
      %s108 = sadd.s32 %s107, 1
      %p111 = scmp.eq.s32.totalorder %s19, 3
      %p112 = scmp.ne.s32.totalorder %s107, %s109
      %p113 = scmp.eq.s32.totalorder %s19, 0
      %p114 = por %p112, %p113
      %p115 = scmp.ne.s32.totalorder %s107, %s109
      %p116 = scmp.eq.s32.totalorder %s24, 3
      %p117 = por %p115, %p116
      %p118 = scmp.ne.s32.totalorder %s109, %s110
      %p119 = scmp.eq.s32.totalorder %s24, 0
      %p120 = por %p118, %p119
      %p121 = scmp.ne.s32.totalorder %s109, %s110
      %p122 = scmp.eq.s32.totalorder %s25, 3
      %p123 = por %p121, %p122
      %p125 = scmp.ne.s32.totalorder %s110, %s124
      %p126 = scmp.eq.s32.totalorder %s25, 0
      %p127 = por %p125, %p126
      %s129 = sadd.s32 %s128, 1
      %p132 = scmp.eq.s32.totalorder %s19, 3
      %p133 = scmp.ne.s32.totalorder %s128, %s130
      %p134 = scmp.eq.s32.totalorder %s19, 0
      %p135 = por %p133, %p134
      %p136 = scmp.ne.s32.totalorder %s128, %s130
      %p137 = scmp.eq.s32.totalorder %s24, 3
      %p138 = por %p136, %p137
      %p139 = scmp.ne.s32.totalorder %s130, %s131
      %p140 = scmp.eq.s32.totalorder %s24, 0
      %p141 = por %p139, %p140
      %p142 = scmp.ne.s32.totalorder %s130, %s131
      %p143 = scmp.eq.s32.totalorder %s25, 3
      %p144 = por %p142, %p143
      %p146 = scmp.ne.s32.totalorder %s131, %s145
      %p147 = scmp.eq.s32.totalorder %s25, 0
      %p148 = por %p146, %p147
      %s150 = sadd.s32 %s149, 1
      %p153 = scmp.eq.s32.totalorder %s19, 3
      %p154 = scmp.ne.s32.totalorder %s149, %s151
      %p155 = scmp.eq.s32.totalorder %s19, 0
      %p156 = por %p154, %p155
      %p157 = scmp.ne.s32.totalorder %s149, %s151
      %p158 = scmp.eq.s32.totalorder %s24, 3
      %p159 = por %p157, %p158
      %p160 = scmp.ne.s32.totalorder %s151, %s152
      %p161 = scmp.eq.s32.totalorder %s24, 0
      %p162 = por %p160, %p161
      %p163 = scmp.ne.s32.totalorder %s151, %s152
      %p164 = scmp.eq.s32.totalorder %s25, 3
      %p165 = por %p163, %p164
      %p167 = scmp.ne.s32.totalorder %s152, %s166
      %p168 = scmp.eq.s32.totalorder %s25, 0
      %p169 = por %p167, %p168
      %s171 = sadd.s32 %s170, 1
      %p174 = scmp.eq.s32.totalorder %s19, 3
      %p175 = scmp.ne.s32.totalorder %s170, %s172
      %p176 = scmp.eq.s32.totalorder %s19, 0
      %p177 = por %p175, %p176
      %p178 = scmp.ne.s32.totalorder %s170, %s172
      %p179 = scmp.eq.s32.totalorder %s24, 3
      %p180 = por %p178, %p179
      %p181 = scmp.ne.s32.totalorder %s172, %s173
      %p182 = scmp.eq.s32.totalorder %s24, 0
      %p183 = por %p181, %p182
      %p184 = scmp.ne.s32.totalorder %s172, %s173
      %p185 = scmp.eq.s32.totalorder %s25, 3
      %p186 = por %p184, %p185
      %p188 = scmp.ne.s32.totalorder %s173, %s187
      %p189 = scmp.eq.s32.totalorder %s25, 0
      %p190 = por %p188, %p189
      %s192 = sadd.s32 %s191, 1
      %p195 = scmp.eq.s32.totalorder %s19, 3
      %p196 = scmp.ne.s32.totalorder %s191, %s193
      %p197 = scmp.eq.s32.totalorder %s19, 0
      %p198 = por %p196, %p197
      %p199 = scmp.ne.s32.totalorder %s191, %s193
      %p200 = scmp.eq.s32.totalorder %s24, 3
      %p201 = por %p199, %p200
      %p202 = scmp.ne.s32.totalorder %s193, %s194
      %p203 = scmp.eq.s32.totalorder %s24, 0
      %p204 = por %p202, %p203
      %p205 = scmp.ne.s32.totalorder %s193, %s194
      %p206 = scmp.eq.s32.totalorder %s25, 3
      %p207 = por %p205, %p206
      %p209 = scmp.ne.s32.totalorder %s194, %s208
      %p210 = scmp.eq.s32.totalorder %s25, 0
      %p211 = por %p209, %p210
      %s213 = sadd.s32 %s212, 1
      %p216 = scmp.eq.s32.totalorder %s19, 3
      %p217 = scmp.ne.s32.totalorder %s212, %s214
      %p218 = scmp.eq.s32.totalorder %s19, 0
      %p219 = por %p217, %p218
      %p220 = scmp.ne.s32.totalorder %s212, %s214
      %p221 = scmp.eq.s32.totalorder %s24, 3
      %p222 = por %p220, %p221
      %p223 = scmp.ne.s32.totalorder %s214, %s215
      %p224 = scmp.eq.s32.totalorder %s24, 0
      %p225 = por %p223, %p224
      %p226 = scmp.ne.s32.totalorder %s214, %s215
      %p227 = scmp.eq.s32.totalorder %s25, 3
      %p228 = por %p226, %p227
      %p230 = scmp.ne.s32.totalorder %s215, %s229
      %p231 = scmp.eq.s32.totalorder %s25, 0
      %p232 = por %p230, %p231
      %s233 = ssub.s32 %s26, %s38
      %s234 = ssub.s32 %s27, %s34
      %s235 = sor.u32 %s233, %s234
      %p236 = scmp.eq.s32.totalorder %s235, 0
      %s238 = sadd.s32 %s237, 1
      %s239 = scalar_select %p236, %s237, %s238
      %p242 = pneg %p236
      %p243 = scmp.eq.s32.totalorder %s19, 3
      %p244 = por %p242, %p243
      %p245 = scmp.ne.s32.totalorder %s237, %s240
      %p246 = scmp.eq.s32.totalorder %s19, 0
      %p247 = por %p245, %p246
      %p248 = scmp.ne.s32.totalorder %s237, %s240
      %p249 = scmp.eq.s32.totalorder %s24, 3
      %p250 = por %p248, %p249
      %p251 = scmp.ne.s32.totalorder %s240, %s241
      %p252 = scmp.eq.s32.totalorder %s24, 0
      %p253 = por %p251, %p252
      %p254 = scmp.ne.s32.totalorder %s240, %s241
      %p255 = scmp.eq.s32.totalorder %s25, 3
      %p256 = por %p254, %p255
      %p258 = scmp.ne.s32.totalorder %s241, %s257
      %p259 = scmp.eq.s32.totalorder %s25, 0
      %p260 = por %p258, %p259
      %p261 = scmp.le.s32.totalorder 1, %s19
      %p262 = scmp.lt.s32.totalorder %s19, 5
      %p263 = pnand %p261, %p262
      %p264 = pneg %p263
      // Predicated region
      $region9: #{aspp_forward.1} parent=5 // pred_check
        _
      $region10: #{aspp_forward.1} parent=5 // pred_check_branch
        %266 = sbr.rel (%p263) target = $region12
      $region11: #{aspp_forward.1} parent=5 // pred_region
        %s267 = ssub.s32 %s19, 1
        // Predicated region
        $region13: #{aspp_forward.1} parent=11 // pred_check
          %p268 = pneg %p78
        $region14: #{aspp_forward.1} parent=11 // pred_check_branch
          %270 = sbr.rel (%p268) target = $region16
        $region15: #{aspp_forward.1} parent=11 // pred_region
          _
        $region16: #{aspp_forward.1} parent=11 // pred_fallthru
          _
        // Predicated region
        $region17: #{aspp_forward.1} parent=11 // pred_check
          %p271 = pneg %p99
        $region18: #{aspp_forward.1} parent=11 // pred_check_branch
          %273 = sbr.rel (%p271) target = $region20
        $region19: #{aspp_forward.1} parent=11 // pred_region
          _
        $region20: #{aspp_forward.1} parent=11 // pred_fallthru
          _
        // Predicated region
        $region21: #{aspp_forward.1} parent=11 // pred_check
          %p274 = pneg %p120
        $region22: #{aspp_forward.1} parent=11 // pred_check_branch
          %276 = sbr.rel (%p274) target = $region24
        $region23: #{aspp_forward.1} parent=11 // pred_region
          _
        $region24: #{aspp_forward.1} parent=11 // pred_fallthru
          _
        // Predicated region
        $region25: #{aspp_forward.1} parent=11 // pred_check
          %p277 = pneg %p141
        $region26: #{aspp_forward.1} parent=11 // pred_check_branch
          %279 = sbr.rel (%p277) target = $region28
        $region27: #{aspp_forward.1} parent=11 // pred_region
          _
        $region28: #{aspp_forward.1} parent=11 // pred_fallthru
          _
        // Predicated region
        $region29: #{aspp_forward.1} parent=11 // pred_check
          %p280 = pneg %p162
        $region30: #{aspp_forward.1} parent=11 // pred_check_branch
          %282 = sbr.rel (%p280) target = $region32
        $region31: #{aspp_forward.1} parent=11 // pred_region
          _
        $region32: #{aspp_forward.1} parent=11 // pred_fallthru
          _
        // Predicated region
        $region33: #{aspp_forward.1} parent=11 // pred_check
          %p283 = pneg %p183
        $region34: #{aspp_forward.1} parent=11 // pred_check_branch
          %285 = sbr.rel (%p283) target = $region36
        $region35: #{aspp_forward.1} parent=11 // pred_region
          _
        $region36: #{aspp_forward.1} parent=11 // pred_fallthru
          _
        // Predicated region
        $region37: #{aspp_forward.1} parent=11 // pred_check
          %p286 = pneg %p204
        $region38: #{aspp_forward.1} parent=11 // pred_check_branch
          %288 = sbr.rel (%p286) target = $region40
        $region39: #{aspp_forward.1} parent=11 // pred_region
          %s290 = ssub.s32 5120, 5120
          %291 = vsyncadd [#allocation3], %s290
          %s292 = sshll.u32 [#allocation2], 4
          %s293 = int_to_ptr.vmem [resolvable:$true] %s292
          %298 = dma.hbm_to_vmem [thread:$0]  %s7, 5120, %s293, [#allocation3], 64, 64, 4
        $region40: #{aspp_forward.1} parent=11 // pred_fallthru
          _
        // Predicated region
        $region41: #{aspp_forward.1} parent=11 // pred_check
          %p299 = pneg %p225
        $region42: #{aspp_forward.1} parent=11 // pred_check_branch
          %301 = sbr.rel (%p299) target = $region44
        $region43: #{aspp_forward.1} parent=11 // pred_region
          _
        $region44: #{aspp_forward.1} parent=11 // pred_fallthru
          _
      $region12: #{aspp_forward.1} parent=5 // pred_fallthru
        _
      %p302 = scmp.lt.s32.totalorder %s19, 4
      // Predicated region
      $region45: #{aspp_forward.1} parent=5 // pred_check
        %p303 = pneg %p302
      $region46: #{aspp_forward.1} parent=5 // pred_check_branch
        %305 = sbr.rel (%p303) target = $region48
      $region47: #{aspp_forward.1} parent=5 // pred_region
        // Predicated region
        $region49: #{aspp_forward.1} parent=47 // pred_check
          %p306 = pneg %p51
        $region50: #{aspp_forward.1} parent=47 // pred_check_branch
          %308 = sbr.rel (%p306) target = $region52
        $region51: #{aspp_forward.1} parent=47 // pred_region
          %p309 = scmp.lt.s32.totalorder %s26, 1
          %s310 = scalar_select %p309, %s26, 1
          %s311 = smul.addr %s310, 112
          %s312 = smul.addr %s311, 4
          %s313 = scalar_lea.vmem %s0, %s312
        $region52: #{aspp_forward.1} parent=47 // pred_fallthru
          _
      $region48: #{aspp_forward.1} parent=5 // pred_fallthru
        _
      %p314 = scmp.le.s32.totalorder 1, %s19
      %p315 = scmp.lt.s32.totalorder %s19, 5
      %p316 = pnand %p314, %p315
      %p317 = pneg %p316
      // Predicated region
      $region53: #{aspp_forward.1} parent=5 // pred_check
        _
      $region54: #{aspp_forward.1} parent=5 // pred_check_branch
        %319 = sbr.rel (%p316) target = $region56
      $region55: #{aspp_forward.1} parent=5 // pred_region
        %s320 = ssub.s32 %s19, 1
        // Predicated region
        $region57: #{aspp_forward.1} parent=55 // pred_check
          %p321 = pneg %p204
        $region58: #{aspp_forward.1} parent=55 // pred_check_branch
          %323 = sbr.rel (%p321) target = $region60
        $region59: #{aspp_forward.1} parent=55 // pred_region
          %324 = dma.done [#allocation3], 5120
        $region60: #{aspp_forward.1} parent=55 // pred_fallthru
          _
        %p325 = scmp.lt.s32.totalorder %s28, 1
        %s326 = scalar_select %p325, %s28, 1
        %s327 = smul.addr %s326, 112
        %s328 = smul.addr %s327, 4
        %s329 = scalar_lea.vmem %s0, %s328
        %p330 = pneg %p57
        %p331 = pneg %p54
        %p332 = pneg %p78
        %p333 = pneg %p75
        %p334 = pneg %p99
        %p335 = pneg %p96
        %p336 = pneg %p120
        %p337 = pneg %p117
        %p338 = pneg %p141
        %p339 = pneg %p138
        %p340 = pneg %p162
        %p341 = pneg %p159
        %p342 = pneg %p183
        %p343 = pneg %p180
        %p344 = pneg %p204
        %p345 = pneg %p201
        %p346 = pneg %p225
        %p347 = pneg %p222
        %p348 = pneg %p253
        %p349 = pneg %p250
        %s350 = sand.u32 %s240, 1
        %s351 = scalar_lea.sflag [#allocation4], %s350
        %s352 = sand.u32 %s240, 1
        %s353 = smul.addr %s352, 128
        %s354 = scalar_lea.vmem [#allocation5], %s353
        %p355 = scmp.lt.s32.totalorder %s28, 1
        %s356 = scalar_select %p355, %s28, 1
        %s357 = smul.addr %s356, 112
        %s358 = smul.addr %s357, 4
        %s359 = scalar_lea.vmem %s0, %s358
        %s360 = smul.u32 8, %s29
        %s362 = smul.u32 %s29, 8
        %s363 = sadd.s32 %s362, 6
        %s364 = smul.u32 %s363, 4
        %s365 = smul.addr %s364, 4
        %s366 = scalar_lea.vmem %s359, %s365
        %v367 = vld [vmem:[%s366 + $0x4] sm:$0xf]
        %v368 = vld [vmem:[%s366 + $0x8] sm:$0xf]
        %v369 = vld [vmem:[%s366 + $0x14] sm:$0xf]
        %v370 = vld [vmem:[%s366 + $0x18] sm:$0xf]
        %v371 = vld [vmem:[%s366 + $0x24] sm:$0xf]
        %v372 = vld [vmem:[%s366 + $0x28] sm:$0xf]
        %v373 = vld [vmem:[%s366 + $0x34] sm:$0xf]
        %v374 = vld [vmem:[%s366 + $0x38] sm:$0xf]
        %v375 = vld [vmem:[%s366 + $0x44] sm:$0xf]
        %v376 = vld [vmem:[%s366 + $0x48] sm:$0xf]
        %v377 = vld [vmem:[%s366 + $0x54] sm:$0xf]
        %v378 = vld [vmem:[%s366 + $0x58] sm:$0xf]
        %v379 = vld [vmem:[%s366 + $0x64] sm:$0xf]
        %v380 = vld [vmem:[%s366 + $0x68] sm:$0xf]
        %v381 = vld [vmem:[%s366 + $0x74] sm:$0xf]
        %v382 = vld [vmem:[%s366 + $0x78] sm:$0xf]
        %v383 = vld [vmem:[%s1] sm:$0xf]
        %v384 = vld [vmem:[%s1 + $0x4] sm:$0xf]
        %v385 = vld [vmem:[%s1 + $0x8] sm:$0xf]
        %v386 = vld [vmem:[%s1 + $0xc] sm:$0xf]
        %v387 = vld [vmem:[%s1 + $0x10] sm:$0xf]
        %v388 = vld [vmem:[%s1 + $0x14] sm:$0xf]
        %v389 = vld [vmem:[%s1 + $0x18] sm:$0xf]
        %v390 = vld [vmem:[%s1 + $0x1c] sm:$0xf]
        %v391 = vld [vmem:[%s1 + $0x20] sm:$0xf]
        %v392 = vld [vmem:[%s1 + $0x24] sm:$0xf]
        %v393 = vld [vmem:[%s1 + $0x28] sm:$0xf]
        %v394 = vld [vmem:[%s1 + $0x2c] sm:$0xf]
        %v395 = vld [vmem:[%s1 + $0x30] sm:$0xf]
        %v396 = vld [vmem:[%s1 + $0x34] sm:$0xf]
        %v397 = vld [vmem:[%s1 + $0x38] sm:$0xf]
        %v398 = vld [vmem:[%s1 + $0x3c] sm:$0xf]
        %v399 = vld [vmem:[%s2] sm:$0x1]
        %v401 = vlaneseq
        %v402 = vshrl.u32 %v401, 7
        %v403 = vsub.s32 0, %v402
        %v404 = vrot.slane %v399, %v403
        %v422 = vunpack.c.l.b16 %v367
        %v423 = vunpack.c.l.b16 %v368
        %v424 = vunpack.c.l.b16 %v369
        %v425 = vunpack.c.l.b16 %v370
        %v426 = vunpack.c.l.b16 %v371
        %v427 = vunpack.c.l.b16 %v372
        %v428 = vunpack.c.l.b16 %v373
        %v429 = vunpack.c.l.b16 %v374
        %v430 = vunpack.c.l.b16 %v375
        %v431 = vunpack.c.l.b16 %v376
        %v432 = vunpack.c.l.b16 %v377
        %v433 = vunpack.c.l.b16 %v378
        %v434 = vunpack.c.l.b16 %v379
        %v435 = vunpack.c.l.b16 %v380
        %v436 = vunpack.c.l.b16 %v381
        %v437 = vunpack.c.l.b16 %v382
        %v438 = vpack.c.b16 %v423, %v422
        %v439 = vpack.c.b16 %v425, %v424
        %v440 = vpack.c.b16 %v427, %v426
        %v441 = vpack.c.b16 %v429, %v428
        %v442 = vpack.c.b16 %v431, %v430
        %v443 = vpack.c.b16 %v433, %v432
        %v444 = vpack.c.b16 %v435, %v434
        %v445 = vpack.c.b16 %v437, %v436
        %v470 = vunpack.c.l.b16 %v383
        %v471 = vunpack.c.l.b16 %v384
        %v472 = vunpack.c.l.b16 %v385
        %v473 = vunpack.c.l.b16 %v386
        %v474 = vunpack.c.l.b16 %v387
        %v475 = vunpack.c.l.b16 %v388
        %v476 = vunpack.c.l.b16 %v389
        %v477 = vunpack.c.l.b16 %v390
        %v478 = vunpack.c.l.b16 %v391
        %v479 = vunpack.c.l.b16 %v392
        %v480 = vunpack.c.l.b16 %v393
        %v481 = vunpack.c.l.b16 %v394
        %v482 = vunpack.c.l.b16 %v395
        %v483 = vunpack.c.l.b16 %v396
        %v484 = vunpack.c.l.b16 %v397
        %v485 = vunpack.c.l.b16 %v398
        %v486 = vpack.c.b16 %v471, %v470
        %v487 = vpack.c.b16 %v473, %v472
        %v488 = vpack.c.b16 %v475, %v474
        %v489 = vpack.c.b16 %v477, %v476
        %v490 = vpack.c.b16 %v479, %v478
        %v491 = vpack.c.b16 %v481, %v480
        %v492 = vpack.c.b16 %v483, %v482
        %v493 = vpack.c.b16 %v485, %v484
        %502 = vmatprep.subr.bf16.mxu0 0
        %503 = vmatpush1.bf16.msra.mxu0 %v493
        %504 = vmatprep.subr.bf16.mxu0 0
        %505 = vmatpush1.bf16.msra.mxu0 %v492
        %506 = vmatprep.subr.bf16.mxu0 0
        %507 = vmatpush1.bf16.msra.mxu0 %v491
        %508 = vmatprep.subr.bf16.mxu0 0
        %509 = vmatpush1.bf16.msra.mxu0 %v490
        %510 = vmatprep.subr.bf16.mxu0 0
        %511 = vmatpush1.bf16.msra.mxu0 %v489
        %512 = vmatprep.subr.bf16.mxu0 0
        %513 = vmatpush1.bf16.msra.mxu0 %v488
        %514 = vmatprep.subr.bf16.mxu0 0
        %515 = vmatpush1.bf16.msra.mxu0 %v487
        %516 = vmatprep.subr.bf16.mxu0 0
        %517 = vmatpush1.bf16.msra.mxu0 %v486
        %518 = vmatprep.subr.bf16.mxu0 0
        %519 = vmatpush2.bf16.msra.mxu0 0
        %520 = vmatprep.subr.bf16.mxu0 0
        %521 = vmatpush2.bf16.msra.mxu0 0
        %522 = vmatprep.subr.bf16.mxu0 0
        %523 = vmatpush2.bf16.msra.mxu0 0
        %524 = vmatprep.subr.bf16.mxu0 0
        %525 = vmatpush2.bf16.msra.mxu0 0
        %526 = vmatprep.subr.bf16.mxu0 0
        %527 = vmatpush2.bf16.msra.mxu0 0
        %528 = vmatprep.subr.bf16.mxu0 0
        %529 = vmatpush2.bf16.msra.mxu0 0
        %530 = vmatprep.subr.bf16.mxu0 0
        %531 = vmatpush2.bf16.msra.mxu0 0
        %532 = vmatprep.subr.bf16.mxu0 0
        %533 = vmatpush2.bf16.msra.mxu0 0
        %534 = vmatprep.mubr.bf16.mxu0 0
        %535 = vmatmul.mubr.bf16.gmra.mxu0 %v438
        %v536 = vpop.f32.mrf.mxu0
        %v537 = vadd.f32 %v404, %v536
        %v538 = vpop.f32.mrf.mxu0
        %v539 = vpop.f32.mrf.mxu0
        %v540 = vadd.f32 %v404, %v539
        %v541 = vpop.f32.mrf.mxu0
        %542 = vmatprep.mubr.bf16.mxu0 0
        %543 = vmatmul.mubr.bf16.gmra.mxu0 %v439
        %v544 = vpop.f32.mrf.mxu0
        %v545 = vadd.f32 %v404, %v544
        %v546 = vpop.f32.mrf.mxu0
        %v547 = vpop.f32.mrf.mxu0
        %v548 = vadd.f32 %v404, %v547
        %v549 = vpop.f32.mrf.mxu0
        %550 = vmatprep.mubr.bf16.mxu0 0
        %551 = vmatmul.mubr.bf16.gmra.mxu0 %v440
        %v552 = vpop.f32.mrf.mxu0
        %v553 = vadd.f32 %v404, %v552
        %v554 = vpop.f32.mrf.mxu0
        %v555 = vpop.f32.mrf.mxu0
        %v556 = vadd.f32 %v404, %v555
        %v557 = vpop.f32.mrf.mxu0
        %558 = vmatprep.mubr.bf16.mxu0 0
        %559 = vmatmul.mubr.bf16.gmra.mxu0 %v441
        %v560 = vpop.f32.mrf.mxu0
        %v561 = vadd.f32 %v404, %v560
        %v562 = vpop.f32.mrf.mxu0
        %v563 = vpop.f32.mrf.mxu0
        %v564 = vadd.f32 %v404, %v563
        %v565 = vpop.f32.mrf.mxu0
        %566 = vmatprep.mubr.bf16.mxu0 0
        %567 = vmatmul.mubr.bf16.gmra.mxu0 %v442
        %v568 = vpop.f32.mrf.mxu0
        %v569 = vadd.f32 %v404, %v568
        %v570 = vpop.f32.mrf.mxu0
        %v571 = vpop.f32.mrf.mxu0
        %v572 = vadd.f32 %v404, %v571
        %v573 = vpop.f32.mrf.mxu0
        %574 = vmatprep.mubr.bf16.mxu0 0
        %575 = vmatmul.mubr.bf16.gmra.mxu0 %v443
        %v576 = vpop.f32.mrf.mxu0
        %v577 = vadd.f32 %v404, %v576
        %v578 = vpop.f32.mrf.mxu0
        %v579 = vpop.f32.mrf.mxu0
        %v580 = vadd.f32 %v404, %v579
        %v581 = vpop.f32.mrf.mxu0
        %582 = vmatprep.mubr.bf16.mxu0 0
        %583 = vmatmul.mubr.bf16.gmra.mxu0 %v444
        %v584 = vpop.f32.mrf.mxu0
        %v585 = vadd.f32 %v404, %v584
        %v586 = vpop.f32.mrf.mxu0
        %v587 = vpop.f32.mrf.mxu0
        %v588 = vadd.f32 %v404, %v587
        %v589 = vpop.f32.mrf.mxu0
        %590 = vmatprep.mubr.bf16.mxu0 0
        %591 = vmatmul.mubr.bf16.gmra.mxu0 %v445
        %v592 = vpop.f32.mrf.mxu0
        %v593 = vadd.f32 %v404, %v592
        %v594 = vpop.f32.mrf.mxu0
        %v595 = vpop.f32.mrf.mxu0
        %v596 = vadd.f32 %v404, %v595
        %v597 = vpop.f32.mrf.mxu0
        %598 = vdwg.mxu0
        %v599 = vmax.f32 %v537, 0.0
        %v600 = vmax.f32 %v540, 0.0
        %v601 = vmax.f32 %v545, 0.0
        %v602 = vmax.f32 %v548, 0.0
        %v603 = vmax.f32 %v553, 0.0
        %v604 = vmax.f32 %v556, 0.0
        %v605 = vmax.f32 %v561, 0.0
        %v606 = vmax.f32 %v564, 0.0
        %v607 = vmax.f32 %v569, 0.0
        %v608 = vmax.f32 %v572, 0.0
        %v609 = vmax.f32 %v577, 0.0
        %v610 = vmax.f32 %v580, 0.0
        %v611 = vmax.f32 %v585, 0.0
        %v612 = vmax.f32 %v588, 0.0
        %v613 = vmax.f32 %v593, 0.0
        %v614 = vmax.f32 %v596, 0.0
        %v615 = vpack.c.bf16 %v600, %v599
        %v616 = vpack.c.bf16 %v602, %v601
        %v617 = vpack.c.bf16 %v604, %v603
        %v618 = vpack.c.bf16 %v606, %v605
        %v619 = vpack.c.bf16 %v608, %v607
        %v620 = vpack.c.bf16 %v610, %v609
        %v621 = vpack.c.bf16 %v612, %v611
        %v622 = vpack.c.bf16 %v614, %v613
        %v623 = vld [vmem:[#allocation2] sm:$0xf]
        %v624 = vld [vmem:[#allocation2 + $0x4] sm:$0xf]
        %v625 = vld [vmem:[#allocation2 + $0x8] sm:$0xf]
        %v626 = vld [vmem:[#allocation2 + $0xc] sm:$0xf]
        %v627 = vld [vmem:[#allocation2 + $0x10] sm:$0xf]
        %v628 = vld [vmem:[#allocation2 + $0x14] sm:$0xf]
        %v629 = vld [vmem:[#allocation2 + $0x18] sm:$0xf]
        %v630 = vld [vmem:[#allocation2 + $0x1c] sm:$0xf]
        %v631 = vld [vmem:[#allocation2 + $0x20] sm:$0xf]
        %v632 = vld [vmem:[#allocation2 + $0x24] sm:$0xf]
        %v633 = vld [vmem:[#allocation2 + $0x28] sm:$0xf]
        %v634 = vld [vmem:[#allocation2 + $0x2c] sm:$0xf]
        %v635 = vld [vmem:[#allocation2 + $0x30] sm:$0xf]
        %v636 = vld [vmem:[#allocation2 + $0x34] sm:$0xf]
        %v637 = vld [vmem:[#allocation2 + $0x38] sm:$0xf]
        %v638 = vld [vmem:[#allocation2 + $0x3c] sm:$0xf]
        %s639 = sadd.s32 %s362, 4
        %s640 = smul.u32 %s639, 4
        %s641 = smul.addr %s640, 4
        %s642 = scalar_lea.vmem %s359, %s641
        %v643 = vld [vmem:[%s642] sm:$0x8]
        %v644 = vld [vmem:[%s642 + $0x4] sm:$0xf]
        %v645 = vld [vmem:[%s642 + $0x8] sm:$0x7]
        %v646 = vld [vmem:[%s642 + $0x10] sm:$0x8]
        %v647 = vld [vmem:[%s642 + $0x14] sm:$0xf]
        %v648 = vld [vmem:[%s642 + $0x18] sm:$0x7]
        %v649 = vld [vmem:[%s642 + $0x20] sm:$0x8]
        %v650 = vld [vmem:[%s642 + $0x24] sm:$0xf]
        %v651 = vld [vmem:[%s642 + $0x28] sm:$0x7]
        %v652 = vld [vmem:[%s642 + $0x30] sm:$0x8]
        %v653 = vld [vmem:[%s642 + $0x34] sm:$0xf]
        %v654 = vld [vmem:[%s642 + $0x38] sm:$0x7]
        %v655 = vld [vmem:[%s642 + $0x40] sm:$0x8]
        %v656 = vld [vmem:[%s642 + $0x44] sm:$0xf]
        %v657 = vld [vmem:[%s642 + $0x48] sm:$0x7]
        %v658 = vld [vmem:[%s642 + $0x50] sm:$0x8]
        %v659 = vld [vmem:[%s642 + $0x54] sm:$0xf]
        %v660 = vld [vmem:[%s642 + $0x58] sm:$0x7]
        %v661 = vld [vmem:[%s642 + $0x60] sm:$0x8]
        %v662 = vld [vmem:[%s642 + $0x64] sm:$0xf]
        %v663 = vld [vmem:[%s642 + $0x68] sm:$0x7]
        %v664 = vld [vmem:[%s642 + $0x70] sm:$0x8]
        %v665 = vld [vmem:[%s642 + $0x74] sm:$0xf]
        %v666 = vld [vmem:[%s642 + $0x78] sm:$0x7]
        %vm691 = vcmask 1040384
        %vm692 = vcmask 1044484
        %vm693 = vmor %vm691, %vm692
        %v694 = vrot.slane %v643, 7
        %v695 = vrot.slane %v694, 4
        %v696 = vrot.slane %v644, 7
        %v697 = vsel %vm693, %v695, %v696
        %v698 = vrot.slane %v696, 4
        %v699 = vrot.slane %v645, 7
        %v700 = vsel %vm693, %v698, %v699
        %v701 = vrot.slane %v646, 7
        %v702 = vrot.slane %v701, 4
        %v703 = vrot.slane %v647, 7
        %v704 = vsel %vm693, %v702, %v703
        %v705 = vrot.slane %v703, 4
        %v706 = vrot.slane %v648, 7
        %v707 = vsel %vm693, %v705, %v706
        %v708 = vrot.slane %v649, 7
        %v709 = vrot.slane %v708, 4
        %v710 = vrot.slane %v650, 7
        %v711 = vsel %vm693, %v709, %v710
        %v712 = vrot.slane %v710, 4
        %v713 = vrot.slane %v651, 7
        %v714 = vsel %vm693, %v712, %v713
        %v715 = vrot.slane %v652, 7
        %v716 = vrot.slane %v715, 4
        %v717 = vrot.slane %v653, 7
        %v718 = vsel %vm693, %v716, %v717
        %v719 = vrot.slane %v717, 4
        %v720 = vrot.slane %v654, 7
        %v721 = vsel %vm693, %v719, %v720
        %v722 = vrot.slane %v655, 7
        %v723 = vrot.slane %v722, 4
        %v724 = vrot.slane %v656, 7
        %v725 = vsel %vm693, %v723, %v724
        %v726 = vrot.slane %v724, 4
        %v727 = vrot.slane %v657, 7
        %v728 = vsel %vm693, %v726, %v727
        %v729 = vrot.slane %v658, 7
        %v730 = vrot.slane %v729, 4
        %v731 = vrot.slane %v659, 7
        %v732 = vsel %vm693, %v730, %v731
        %v733 = vrot.slane %v731, 4
        %v734 = vrot.slane %v660, 7
        %v735 = vsel %vm693, %v733, %v734
        %v736 = vrot.slane %v661, 7
        %v737 = vrot.slane %v736, 4
        %v738 = vrot.slane %v662, 7
        %v739 = vsel %vm693, %v737, %v738
        %v740 = vrot.slane %v738, 4
        %v741 = vrot.slane %v663, 7
        %v742 = vsel %vm693, %v740, %v741
        %v743 = vrot.slane %v664, 7
        %v744 = vrot.slane %v743, 4
        %v745 = vrot.slane %v665, 7
        %v746 = vsel %vm693, %v744, %v745
        %v747 = vrot.slane %v745, 4
        %v748 = vrot.slane %v666, 7
        %v749 = vsel %vm693, %v747, %v748
        %v750 = vld [vmem:[%s3] sm:$0xf]
        %v751 = vld [vmem:[%s3 + $0x4] sm:$0xf]
        %v752 = vld [vmem:[%s3 + $0x8] sm:$0xf]
        %v753 = vld [vmem:[%s3 + $0xc] sm:$0xf]
        %v754 = vld [vmem:[%s3 + $0x10] sm:$0xf]
        %v755 = vld [vmem:[%s3 + $0x14] sm:$0xf]
        %v756 = vld [vmem:[%s3 + $0x18] sm:$0xf]
        %v757 = vld [vmem:[%s3 + $0x1c] sm:$0xf]
        %v758 = vld [vmem:[%s3 + $0x20] sm:$0xf]
        %v759 = vld [vmem:[%s3 + $0x24] sm:$0xf]
        %v760 = vld [vmem:[%s3 + $0x28] sm:$0xf]
        %v761 = vld [vmem:[%s3 + $0x2c] sm:$0xf]
        %v762 = vld [vmem:[%s3 + $0x30] sm:$0xf]
        %v763 = vld [vmem:[%s3 + $0x34] sm:$0xf]
        %v764 = vld [vmem:[%s3 + $0x38] sm:$0xf]
        %v765 = vld [vmem:[%s3 + $0x3c] sm:$0xf]
        %v766 = vld [vmem:[%s642 + $0x8] sm:$0xf]
        %v767 = vld [vmem:[%s642 + $0x18] sm:$0xf]
        %v768 = vld [vmem:[%s642 + $0x28] sm:$0xf]
        %v769 = vld [vmem:[%s642 + $0x38] sm:$0xf]
        %v770 = vld [vmem:[%s642 + $0x48] sm:$0xf]
        %v771 = vld [vmem:[%s642 + $0x58] sm:$0xf]
        %v772 = vld [vmem:[%s642 + $0x68] sm:$0xf]
        %v773 = vld [vmem:[%s642 + $0x78] sm:$0xf]
        %s774 = scalar_lea.vmem %s3, 64
        %v775 = vld [vmem:[%s774] sm:$0xf]
        %v776 = vld [vmem:[%s774 + $0x4] sm:$0xf]
        %v777 = vld [vmem:[%s774 + $0x8] sm:$0xf]
        %v778 = vld [vmem:[%s774 + $0xc] sm:$0xf]
        %v779 = vld [vmem:[%s774 + $0x10] sm:$0xf]
        %v780 = vld [vmem:[%s774 + $0x14] sm:$0xf]
        %v781 = vld [vmem:[%s774 + $0x18] sm:$0xf]
        %v782 = vld [vmem:[%s774 + $0x1c] sm:$0xf]
        %v783 = vld [vmem:[%s774 + $0x20] sm:$0xf]
        %v784 = vld [vmem:[%s774 + $0x24] sm:$0xf]
        %v785 = vld [vmem:[%s774 + $0x28] sm:$0xf]
        %v786 = vld [vmem:[%s774 + $0x2c] sm:$0xf]
        %v787 = vld [vmem:[%s774 + $0x30] sm:$0xf]
        %v788 = vld [vmem:[%s774 + $0x34] sm:$0xf]
        %v789 = vld [vmem:[%s774 + $0x38] sm:$0xf]
        %v790 = vld [vmem:[%s774 + $0x3c] sm:$0xf]
        %v799 = vunpack.c.l.b16 %v644
        %v800 = vunpack.c.l.b16 %v766
        %v801 = vunpack.c.l.b16 %v647
        %v802 = vunpack.c.l.b16 %v767
        %v803 = vunpack.c.l.b16 %v650
        %v804 = vunpack.c.l.b16 %v768
        %v805 = vunpack.c.l.b16 %v653
        %v806 = vunpack.c.l.b16 %v769
        %v807 = vunpack.c.l.b16 %v656
        %v808 = vunpack.c.l.b16 %v770
        %v809 = vunpack.c.l.b16 %v659
        %v810 = vunpack.c.l.b16 %v771
        %v811 = vunpack.c.l.b16 %v662
        %v812 = vunpack.c.l.b16 %v772
        %v813 = vunpack.c.l.b16 %v665
        %v814 = vunpack.c.l.b16 %v773
        %v815 = vpack.c.b16 %v800, %v799
        %v816 = vpack.c.b16 %v802, %v801
        %v817 = vpack.c.b16 %v804, %v803
        %v818 = vpack.c.b16 %v806, %v805
        %v819 = vpack.c.b16 %v808, %v807
        %v820 = vpack.c.b16 %v810, %v809
        %v821 = vpack.c.b16 %v812, %v811
        %v822 = vpack.c.b16 %v814, %v813
        %v847 = vunpack.c.l.b16 %v775
        %v848 = vunpack.c.l.b16 %v776
        %v849 = vunpack.c.l.b16 %v777
        %v850 = vunpack.c.l.b16 %v778
        %v851 = vunpack.c.l.b16 %v779
        %v852 = vunpack.c.l.b16 %v780
        %v853 = vunpack.c.l.b16 %v781
        %v854 = vunpack.c.l.b16 %v782
        %v855 = vunpack.c.l.b16 %v783
        %v856 = vunpack.c.l.b16 %v784
        %v857 = vunpack.c.l.b16 %v785
        %v858 = vunpack.c.l.b16 %v786
        %v859 = vunpack.c.l.b16 %v787
        %v860 = vunpack.c.l.b16 %v788
        %v861 = vunpack.c.l.b16 %v789
        %v862 = vunpack.c.l.b16 %v790
        %v863 = vpack.c.b16 %v848, %v847
        %v864 = vpack.c.b16 %v850, %v849
        %v865 = vpack.c.b16 %v852, %v851
        %v866 = vpack.c.b16 %v854, %v853
        %v867 = vpack.c.b16 %v856, %v855
        %v868 = vpack.c.b16 %v858, %v857
        %v869 = vpack.c.b16 %v860, %v859
        %v870 = vpack.c.b16 %v862, %v861
        %879 = vmatprep.subr.bf16.mxu0 0
        %880 = vmatpush1.bf16.msra.mxu0 %v870
        %881 = vmatprep.subr.bf16.mxu0 0
        %882 = vmatpush1.bf16.msra.mxu0 %v869
        %883 = vmatprep.subr.bf16.mxu0 0
        %884 = vmatpush1.bf16.msra.mxu0 %v868
        %885 = vmatprep.subr.bf16.mxu0 0
        %886 = vmatpush1.bf16.msra.mxu0 %v867
        %887 = vmatprep.subr.bf16.mxu0 0
        %888 = vmatpush1.bf16.msra.mxu0 %v866
        %889 = vmatprep.subr.bf16.mxu0 0
        %890 = vmatpush1.bf16.msra.mxu0 %v865
        %891 = vmatprep.subr.bf16.mxu0 0
        %892 = vmatpush1.bf16.msra.mxu0 %v864
        %893 = vmatprep.subr.bf16.mxu0 0
        %894 = vmatpush1.bf16.msra.mxu0 %v863
        %895 = vmatprep.subr.bf16.mxu0 0
        %896 = vmatpush2.bf16.msra.mxu0 0
        %897 = vmatprep.subr.bf16.mxu0 0
        %898 = vmatpush2.bf16.msra.mxu0 0
        %899 = vmatprep.subr.bf16.mxu0 0
        %900 = vmatpush2.bf16.msra.mxu0 0
        %901 = vmatprep.subr.bf16.mxu0 0
        %902 = vmatpush2.bf16.msra.mxu0 0
        %903 = vmatprep.subr.bf16.mxu0 0
        %904 = vmatpush2.bf16.msra.mxu0 0
        %905 = vmatprep.subr.bf16.mxu0 0
        %906 = vmatpush2.bf16.msra.mxu0 0
        %907 = vmatprep.subr.bf16.mxu0 0
        %908 = vmatpush2.bf16.msra.mxu0 0
        %909 = vmatprep.subr.bf16.mxu0 0
        %910 = vmatpush2.bf16.msra.mxu0 0
        %911 = vmatprep.mubr.bf16.mxu0 0
        %912 = vmatmul.mubr.bf16.gmra.mxu0 %v815
        %v913 = vpop.f32.mrf.mxu0
        %v914 = vadd.f32 0.0, %v913
        %v915 = vpop.f32.mrf.mxu0
        %v916 = vpop.f32.mrf.mxu0
        %v917 = vadd.f32 0.0, %v916
        %v918 = vpop.f32.mrf.mxu0
        %919 = vmatprep.mubr.bf16.mxu0 0
        %920 = vmatmul.mubr.bf16.gmra.mxu0 %v816
        %v921 = vpop.f32.mrf.mxu0
        %v922 = vadd.f32 0.0, %v921
        %v923 = vpop.f32.mrf.mxu0
        %v924 = vpop.f32.mrf.mxu0
        %v925 = vadd.f32 0.0, %v924
        %v926 = vpop.f32.mrf.mxu0
        %927 = vmatprep.mubr.bf16.mxu0 0
        %928 = vmatmul.mubr.bf16.gmra.mxu0 %v817
        %v929 = vpop.f32.mrf.mxu0
        %v930 = vadd.f32 0.0, %v929
        %v931 = vpop.f32.mrf.mxu0
        %v932 = vpop.f32.mrf.mxu0
        %v933 = vadd.f32 0.0, %v932
        %v934 = vpop.f32.mrf.mxu0
        %935 = vmatprep.mubr.bf16.mxu0 0
        %936 = vmatmul.mubr.bf16.gmra.mxu0 %v818
        %v937 = vpop.f32.mrf.mxu0
        %v938 = vadd.f32 0.0, %v937
        %v939 = vpop.f32.mrf.mxu0
        %v940 = vpop.f32.mrf.mxu0
        %v941 = vadd.f32 0.0, %v940
        %v942 = vpop.f32.mrf.mxu0
        %943 = vmatprep.mubr.bf16.mxu0 0
        %944 = vmatmul.mubr.bf16.gmra.mxu0 %v819
        %v945 = vpop.f32.mrf.mxu0
        %v946 = vadd.f32 0.0, %v945
        %v947 = vpop.f32.mrf.mxu0
        %v948 = vpop.f32.mrf.mxu0
        %v949 = vadd.f32 0.0, %v948
        %v950 = vpop.f32.mrf.mxu0
        %951 = vmatprep.mubr.bf16.mxu0 0
        %952 = vmatmul.mubr.bf16.gmra.mxu0 %v820
        %v953 = vpop.f32.mrf.mxu0
        %v954 = vadd.f32 0.0, %v953
        %v955 = vpop.f32.mrf.mxu0
        %v956 = vpop.f32.mrf.mxu0
        %v957 = vadd.f32 0.0, %v956
        %v958 = vpop.f32.mrf.mxu0
        %959 = vmatprep.mubr.bf16.mxu0 0
        %960 = vmatmul.mubr.bf16.gmra.mxu0 %v821
        %v961 = vpop.f32.mrf.mxu0
        %v962 = vadd.f32 0.0, %v961
        %v963 = vpop.f32.mrf.mxu0
        %v964 = vpop.f32.mrf.mxu0
        %v965 = vadd.f32 0.0, %v964
        %v966 = vpop.f32.mrf.mxu0
        %967 = vmatprep.mubr.bf16.mxu0 0
        %968 = vmatmul.mubr.bf16.gmra.mxu0 %v822
        %v969 = vpop.f32.mrf.mxu0
        %v970 = vadd.f32 0.0, %v969
        %v971 = vpop.f32.mrf.mxu0
        %v972 = vpop.f32.mrf.mxu0
        %v973 = vadd.f32 0.0, %v972
        %v974 = vpop.f32.mrf.mxu0
        %975 = vdwg.mxu0
        %v976 = vunpack.c.l.b16 %v697
        %v977 = vunpack.c.l.b16 %v700
        %v978 = vunpack.c.l.b16 %v704
        %v979 = vunpack.c.l.b16 %v707
        %v980 = vunpack.c.l.b16 %v711
        %v981 = vunpack.c.l.b16 %v714
        %v982 = vunpack.c.l.b16 %v718
        %v983 = vunpack.c.l.b16 %v721
        %v984 = vunpack.c.l.b16 %v725
        %v985 = vunpack.c.l.b16 %v728
        %v986 = vunpack.c.l.b16 %v732
        %v987 = vunpack.c.l.b16 %v735
        %v988 = vunpack.c.l.b16 %v739
        %v989 = vunpack.c.l.b16 %v742
        %v990 = vunpack.c.l.b16 %v746
        %v991 = vunpack.c.l.b16 %v749
        %v992 = vpack.c.b16 %v977, %v976
        %v993 = vpack.c.b16 %v979, %v978
        %v994 = vpack.c.b16 %v981, %v980
        %v995 = vpack.c.b16 %v983, %v982
        %v996 = vpack.c.b16 %v985, %v984
        %v997 = vpack.c.b16 %v987, %v986
        %v998 = vpack.c.b16 %v989, %v988
        %v999 = vpack.c.b16 %v991, %v990
        %v1024 = vunpack.c.l.b16 %v750
        %v1025 = vunpack.c.l.b16 %v751
        %v1026 = vunpack.c.l.b16 %v752
        %v1027 = vunpack.c.l.b16 %v753
        %v1028 = vunpack.c.l.b16 %v754
        %v1029 = vunpack.c.l.b16 %v755
        %v1030 = vunpack.c.l.b16 %v756
        %v1031 = vunpack.c.l.b16 %v757
        %v1032 = vunpack.c.l.b16 %v758
        %v1033 = vunpack.c.l.b16 %v759
        %v1034 = vunpack.c.l.b16 %v760
        %v1035 = vunpack.c.l.b16 %v761
        %v1036 = vunpack.c.l.b16 %v762
        %v1037 = vunpack.c.l.b16 %v763
        %v1038 = vunpack.c.l.b16 %v764
        %v1039 = vunpack.c.l.b16 %v765
        %v1040 = vpack.c.b16 %v1025, %v1024
        %v1041 = vpack.c.b16 %v1027, %v1026
        %v1042 = vpack.c.b16 %v1029, %v1028
        %v1043 = vpack.c.b16 %v1031, %v1030
        %v1044 = vpack.c.b16 %v1033, %v1032
        %v1045 = vpack.c.b16 %v1035, %v1034
        %v1046 = vpack.c.b16 %v1037, %v1036
        %v1047 = vpack.c.b16 %v1039, %v1038
        %1056 = vmatprep.subr.bf16.mxu0 0
        %1057 = vmatpush1.bf16.msra.mxu0 %v1047
        %1058 = vmatprep.subr.bf16.mxu0 0
        %1059 = vmatpush1.bf16.msra.mxu0 %v1046
        %1060 = vmatprep.subr.bf16.mxu0 0
        %1061 = vmatpush1.bf16.msra.mxu0 %v1045
        %1062 = vmatprep.subr.bf16.mxu0 0
        %1063 = vmatpush1.bf16.msra.mxu0 %v1044
        %1064 = vmatprep.subr.bf16.mxu0 0
        %1065 = vmatpush1.bf16.msra.mxu0 %v1043
        %1066 = vmatprep.subr.bf16.mxu0 0
        %1067 = vmatpush1.bf16.msra.mxu0 %v1042
        %1068 = vmatprep.subr.bf16.mxu0 0
        %1069 = vmatpush1.bf16.msra.mxu0 %v1041
        %1070 = vmatprep.subr.bf16.mxu0 0
        %1071 = vmatpush1.bf16.msra.mxu0 %v1040
        %1072 = vmatprep.subr.bf16.mxu0 0
        %1073 = vmatpush2.bf16.msra.mxu0 0
        %1074 = vmatprep.subr.bf16.mxu0 0
        %1075 = vmatpush2.bf16.msra.mxu0 0
        %1076 = vmatprep.subr.bf16.mxu0 0
        %1077 = vmatpush2.bf16.msra.mxu0 0
        %1078 = vmatprep.subr.bf16.mxu0 0
        %1079 = vmatpush2.bf16.msra.mxu0 0
        %1080 = vmatprep.subr.bf16.mxu0 0
        %1081 = vmatpush2.bf16.msra.mxu0 0
        %1082 = vmatprep.subr.bf16.mxu0 0
        %1083 = vmatpush2.bf16.msra.mxu0 0
        %1084 = vmatprep.subr.bf16.mxu0 0
        %1085 = vmatpush2.bf16.msra.mxu0 0
        %1086 = vmatprep.subr.bf16.mxu0 0
        %1087 = vmatpush2.bf16.msra.mxu0 0
        %1088 = vmatprep.mubr.bf16.mxu0 0
        %1089 = vmatmul.mubr.bf16.gmra.mxu0 %v992
        %v1090 = vpop.f32.mrf.mxu0
        %v1091 = vadd.f32 %v914, %v1090
        %v1092 = vpop.f32.mrf.mxu0
        %v1093 = vpop.f32.mrf.mxu0
        %v1094 = vadd.f32 %v917, %v1093
        %v1095 = vpop.f32.mrf.mxu0
        %1096 = vmatprep.mubr.bf16.mxu0 0
        %1097 = vmatmul.mubr.bf16.gmra.mxu0 %v993
        %v1098 = vpop.f32.mrf.mxu0
        %v1099 = vadd.f32 %v922, %v1098
        %v1100 = vpop.f32.mrf.mxu0
        %v1101 = vpop.f32.mrf.mxu0
        %v1102 = vadd.f32 %v925, %v1101
        %v1103 = vpop.f32.mrf.mxu0
        %1104 = vmatprep.mubr.bf16.mxu0 0
        %1105 = vmatmul.mubr.bf16.gmra.mxu0 %v994
        %v1106 = vpop.f32.mrf.mxu0
        %v1107 = vadd.f32 %v930, %v1106
        %v1108 = vpop.f32.mrf.mxu0
        %v1109 = vpop.f32.mrf.mxu0
        %v1110 = vadd.f32 %v933, %v1109
        %v1111 = vpop.f32.mrf.mxu0
        %1112 = vmatprep.mubr.bf16.mxu0 0
        %1113 = vmatmul.mubr.bf16.gmra.mxu0 %v995
        %v1114 = vpop.f32.mrf.mxu0
        %v1115 = vadd.f32 %v938, %v1114
        %v1116 = vpop.f32.mrf.mxu0
        %v1117 = vpop.f32.mrf.mxu0
        %v1118 = vadd.f32 %v941, %v1117
        %v1119 = vpop.f32.mrf.mxu0
        %1120 = vmatprep.mubr.bf16.mxu0 0
        %1121 = vmatmul.mubr.bf16.gmra.mxu0 %v996
        %v1122 = vpop.f32.mrf.mxu0
        %v1123 = vadd.f32 %v946, %v1122
        %v1124 = vpop.f32.mrf.mxu0
        %v1125 = vpop.f32.mrf.mxu0
        %v1126 = vadd.f32 %v949, %v1125
        %v1127 = vpop.f32.mrf.mxu0
        %1128 = vmatprep.mubr.bf16.mxu0 0
        %1129 = vmatmul.mubr.bf16.gmra.mxu0 %v997
        %v1130 = vpop.f32.mrf.mxu0
        %v1131 = vadd.f32 %v954, %v1130
        %v1132 = vpop.f32.mrf.mxu0
        %v1133 = vpop.f32.mrf.mxu0
        %v1134 = vadd.f32 %v957, %v1133
        %v1135 = vpop.f32.mrf.mxu0
        %1136 = vmatprep.mubr.bf16.mxu0 0
        %1137 = vmatmul.mubr.bf16.gmra.mxu0 %v998
        %v1138 = vpop.f32.mrf.mxu0
        %v1139 = vadd.f32 %v962, %v1138
        %v1140 = vpop.f32.mrf.mxu0
        %v1141 = vpop.f32.mrf.mxu0
        %v1142 = vadd.f32 %v965, %v1141
        %v1143 = vpop.f32.mrf.mxu0
        %1144 = vmatprep.mubr.bf16.mxu0 0
        %1145 = vmatmul.mubr.bf16.gmra.mxu0 %v999
        %v1146 = vpop.f32.mrf.mxu0
        %v1147 = vadd.f32 %v970, %v1146
        %v1148 = vpop.f32.mrf.mxu0
        %v1149 = vpop.f32.mrf.mxu0
        %v1150 = vadd.f32 %v973, %v1149
        %v1151 = vpop.f32.mrf.mxu0
        %1152 = vdwg.mxu0
        %v1153 = vld [vmem:[%s642 + $0x4] sm:$0xe]
        %v1154 = vld [vmem:[%s642 + $0x8] sm:$0xf]
        %v1155 = vld [vmem:[%s642 + $0xc] sm:$0x1]
        %v1156 = vld [vmem:[%s642 + $0x14] sm:$0xe]
        %v1157 = vld [vmem:[%s642 + $0x18] sm:$0xf]
        %v1158 = vld [vmem:[%s642 + $0x1c] sm:$0x1]
        %v1159 = vld [vmem:[%s642 + $0x24] sm:$0xe]
        %v1160 = vld [vmem:[%s642 + $0x28] sm:$0xf]
        %v1161 = vld [vmem:[%s642 + $0x2c] sm:$0x1]
        %v1162 = vld [vmem:[%s642 + $0x34] sm:$0xe]
        %v1163 = vld [vmem:[%s642 + $0x38] sm:$0xf]
        %v1164 = vld [vmem:[%s642 + $0x3c] sm:$0x1]
        %v1165 = vld [vmem:[%s642 + $0x44] sm:$0xe]
        %v1166 = vld [vmem:[%s642 + $0x48] sm:$0xf]
        %v1167 = vld [vmem:[%s642 + $0x4c] sm:$0x1]
        %v1168 = vld [vmem:[%s642 + $0x54] sm:$0xe]
        %v1169 = vld [vmem:[%s642 + $0x58] sm:$0xf]
        %v1170 = vld [vmem:[%s642 + $0x5c] sm:$0x1]
        %v1171 = vld [vmem:[%s642 + $0x64] sm:$0xe]
        %v1172 = vld [vmem:[%s642 + $0x68] sm:$0xf]
        %v1173 = vld [vmem:[%s642 + $0x6c] sm:$0x1]
        %v1174 = vld [vmem:[%s642 + $0x74] sm:$0xe]
        %v1175 = vld [vmem:[%s642 + $0x78] sm:$0xf]
        %v1176 = vld [vmem:[%s642 + $0x7c] sm:$0x1]
        %vm1201 = vcmask 1042432
        %vm1202 = vcmask 1046532
        %vm1203 = vmor %vm1201, %vm1202
        %v1204 = vrot.slane %v1153, 5
        %v1205 = vrot.slane %v1204, 4
        %v1206 = vrot.slane %v1154, 5
        %v1207 = vsel %vm1203, %v1205, %v1206
        %v1208 = vrot.slane %v1206, 4
        %v1209 = vrot.slane %v1155, 5
        %v1210 = vsel %vm1203, %v1208, %v1209
        %v1211 = vrot.slane %v1156, 5
        %v1212 = vrot.slane %v1211, 4
        %v1213 = vrot.slane %v1157, 5
        %v1214 = vsel %vm1203, %v1212, %v1213
        %v1215 = vrot.slane %v1213, 4
        %v1216 = vrot.slane %v1158, 5
        %v1217 = vsel %vm1203, %v1215, %v1216
        %v1218 = vrot.slane %v1159, 5
        %v1219 = vrot.slane %v1218, 4
        %v1220 = vrot.slane %v1160, 5
        %v1221 = vsel %vm1203, %v1219, %v1220
        %v1222 = vrot.slane %v1220, 4
        %v1223 = vrot.slane %v1161, 5
        %v1224 = vsel %vm1203, %v1222, %v1223
        %v1225 = vrot.slane %v1162, 5
        %v1226 = vrot.slane %v1225, 4
        %v1227 = vrot.slane %v1163, 5
        %v1228 = vsel %vm1203, %v1226, %v1227
        %v1229 = vrot.slane %v1227, 4
        %v1230 = vrot.slane %v1164, 5
        %v1231 = vsel %vm1203, %v1229, %v1230
        %v1232 = vrot.slane %v1165, 5
        %v1233 = vrot.slane %v1232, 4
        %v1234 = vrot.slane %v1166, 5
        %v1235 = vsel %vm1203, %v1233, %v1234
        %v1236 = vrot.slane %v1234, 4
        %v1237 = vrot.slane %v1167, 5
        %v1238 = vsel %vm1203, %v1236, %v1237
        %v1239 = vrot.slane %v1168, 5
        %v1240 = vrot.slane %v1239, 4
        %v1241 = vrot.slane %v1169, 5
        %v1242 = vsel %vm1203, %v1240, %v1241
        %v1243 = vrot.slane %v1241, 4
        %v1244 = vrot.slane %v1170, 5
        %v1245 = vsel %vm1203, %v1243, %v1244
        %v1246 = vrot.slane %v1171, 5
        %v1247 = vrot.slane %v1246, 4
        %v1248 = vrot.slane %v1172, 5
        %v1249 = vsel %vm1203, %v1247, %v1248
        %v1250 = vrot.slane %v1248, 4
        %v1251 = vrot.slane %v1173, 5
        %v1252 = vsel %vm1203, %v1250, %v1251
        %v1253 = vrot.slane %v1174, 5
        %v1254 = vrot.slane %v1253, 4
        %v1255 = vrot.slane %v1175, 5
        %v1256 = vsel %vm1203, %v1254, %v1255
        %v1257 = vrot.slane %v1255, 4
        %v1258 = vrot.slane %v1176, 5
        %v1259 = vsel %vm1203, %v1257, %v1258
        %s1260 = scalar_lea.vmem %s3, 128
        %v1261 = vld [vmem:[%s1260] sm:$0xf]
        %v1262 = vld [vmem:[%s1260 + $0x4] sm:$0xf]
        %v1263 = vld [vmem:[%s1260 + $0x8] sm:$0xf]
        %v1264 = vld [vmem:[%s1260 + $0xc] sm:$0xf]
        %v1265 = vld [vmem:[%s1260 + $0x10] sm:$0xf]
        %v1266 = vld [vmem:[%s1260 + $0x14] sm:$0xf]
        %v1267 = vld [vmem:[%s1260 + $0x18] sm:$0xf]
        %v1268 = vld [vmem:[%s1260 + $0x1c] sm:$0xf]
        %v1269 = vld [vmem:[%s1260 + $0x20] sm:$0xf]
        %v1270 = vld [vmem:[%s1260 + $0x24] sm:$0xf]
        %v1271 = vld [vmem:[%s1260 + $0x28] sm:$0xf]
        %v1272 = vld [vmem:[%s1260 + $0x2c] sm:$0xf]
        %v1273 = vld [vmem:[%s1260 + $0x30] sm:$0xf]
        %v1274 = vld [vmem:[%s1260 + $0x34] sm:$0xf]
        %v1275 = vld [vmem:[%s1260 + $0x38] sm:$0xf]
        %v1276 = vld [vmem:[%s1260 + $0x3c] sm:$0xf]
        %v1277 = vunpack.c.l.b16 %v1207
        %v1278 = vunpack.c.l.b16 %v1210
        %v1279 = vunpack.c.l.b16 %v1214
        %v1280 = vunpack.c.l.b16 %v1217
        %v1281 = vunpack.c.l.b16 %v1221
        %v1282 = vunpack.c.l.b16 %v1224
        %v1283 = vunpack.c.l.b16 %v1228
        %v1284 = vunpack.c.l.b16 %v1231
        %v1285 = vunpack.c.l.b16 %v1235
        %v1286 = vunpack.c.l.b16 %v1238
        %v1287 = vunpack.c.l.b16 %v1242
        %v1288 = vunpack.c.l.b16 %v1245
        %v1289 = vunpack.c.l.b16 %v1249
        %v1290 = vunpack.c.l.b16 %v1252
        %v1291 = vunpack.c.l.b16 %v1256
        %v1292 = vunpack.c.l.b16 %v1259
        %v1293 = vpack.c.b16 %v1278, %v1277
        %v1294 = vpack.c.b16 %v1280, %v1279
        %v1295 = vpack.c.b16 %v1282, %v1281
        %v1296 = vpack.c.b16 %v1284, %v1283
        %v1297 = vpack.c.b16 %v1286, %v1285
        %v1298 = vpack.c.b16 %v1288, %v1287
        %v1299 = vpack.c.b16 %v1290, %v1289
        %v1300 = vpack.c.b16 %v1292, %v1291
        %v1325 = vunpack.c.l.b16 %v1261
        %v1326 = vunpack.c.l.b16 %v1262
        %v1327 = vunpack.c.l.b16 %v1263
        %v1328 = vunpack.c.l.b16 %v1264
        %v1329 = vunpack.c.l.b16 %v1265
        %v1330 = vunpack.c.l.b16 %v1266
        %v1331 = vunpack.c.l.b16 %v1267
        %v1332 = vunpack.c.l.b16 %v1268
        %v1333 = vunpack.c.l.b16 %v1269
        %v1334 = vunpack.c.l.b16 %v1270
        %v1335 = vunpack.c.l.b16 %v1271
        %v1336 = vunpack.c.l.b16 %v1272
        %v1337 = vunpack.c.l.b16 %v1273
        %v1338 = vunpack.c.l.b16 %v1274
        %v1339 = vunpack.c.l.b16 %v1275
        %v1340 = vunpack.c.l.b16 %v1276
        %v1341 = vpack.c.b16 %v1326, %v1325
        %v1342 = vpack.c.b16 %v1328, %v1327
        %v1343 = vpack.c.b16 %v1330, %v1329
        %v1344 = vpack.c.b16 %v1332, %v1331
        %v1345 = vpack.c.b16 %v1334, %v1333
        %v1346 = vpack.c.b16 %v1336, %v1335
        %v1347 = vpack.c.b16 %v1338, %v1337
        %v1348 = vpack.c.b16 %v1340, %v1339
        %1357 = vmatprep.subr.bf16.mxu0 0
        %1358 = vmatpush1.bf16.msra.mxu0 %v1348
        %1359 = vmatprep.subr.bf16.mxu0 0
        %1360 = vmatpush1.bf16.msra.mxu0 %v1347
        %1361 = vmatprep.subr.bf16.mxu0 0
        %1362 = vmatpush1.bf16.msra.mxu0 %v1346
        %1363 = vmatprep.subr.bf16.mxu0 0
        %1364 = vmatpush1.bf16.msra.mxu0 %v1345
        %1365 = vmatprep.subr.bf16.mxu0 0
        %1366 = vmatpush1.bf16.msra.mxu0 %v1344
        %1367 = vmatprep.subr.bf16.mxu0 0
        %1368 = vmatpush1.bf16.msra.mxu0 %v1343
        %1369 = vmatprep.subr.bf16.mxu0 0
        %1370 = vmatpush1.bf16.msra.mxu0 %v1342
        %1371 = vmatprep.subr.bf16.mxu0 0
        %1372 = vmatpush1.bf16.msra.mxu0 %v1341
        %1373 = vmatprep.subr.bf16.mxu0 0
        %1374 = vmatpush2.bf16.msra.mxu0 0
        %1375 = vmatprep.subr.bf16.mxu0 0
        %1376 = vmatpush2.bf16.msra.mxu0 0
        %1377 = vmatprep.subr.bf16.mxu0 0
        %1378 = vmatpush2.bf16.msra.mxu0 0
        %1379 = vmatprep.subr.bf16.mxu0 0
        %1380 = vmatpush2.bf16.msra.mxu0 0
        %1381 = vmatprep.subr.bf16.mxu0 0
        %1382 = vmatpush2.bf16.msra.mxu0 0
        %1383 = vmatprep.subr.bf16.mxu0 0
        %1384 = vmatpush2.bf16.msra.mxu0 0
        %1385 = vmatprep.subr.bf16.mxu0 0
        %1386 = vmatpush2.bf16.msra.mxu0 0
        %1387 = vmatprep.subr.bf16.mxu0 0
        %1388 = vmatpush2.bf16.msra.mxu0 0
        %1389 = vmatprep.mubr.bf16.mxu0 0
        %1390 = vmatmul.mubr.bf16.gmra.mxu0 %v1293
        %v1391 = vpop.f32.mrf.mxu0
        %v1392 = vadd.f32 0.0, %v1391
        %v1393 = vpop.f32.mrf.mxu0
        %v1394 = vpop.f32.mrf.mxu0
        %v1395 = vadd.f32 0.0, %v1394
        %v1396 = vpop.f32.mrf.mxu0
        %1397 = vmatprep.mubr.bf16.mxu0 0
        %1398 = vmatmul.mubr.bf16.gmra.mxu0 %v1294
        %v1399 = vpop.f32.mrf.mxu0
        %v1400 = vadd.f32 0.0, %v1399
        %v1401 = vpop.f32.mrf.mxu0
        %v1402 = vpop.f32.mrf.mxu0
        %v1403 = vadd.f32 0.0, %v1402
        %v1404 = vpop.f32.mrf.mxu0
        %1405 = vmatprep.mubr.bf16.mxu0 0
        %1406 = vmatmul.mubr.bf16.gmra.mxu0 %v1295
        %v1407 = vpop.f32.mrf.mxu0
        %v1408 = vadd.f32 0.0, %v1407
        %v1409 = vpop.f32.mrf.mxu0
        %v1410 = vpop.f32.mrf.mxu0
        %v1411 = vadd.f32 0.0, %v1410
        %v1412 = vpop.f32.mrf.mxu0
        %1413 = vmatprep.mubr.bf16.mxu0 0
        %1414 = vmatmul.mubr.bf16.gmra.mxu0 %v1296
        %v1415 = vpop.f32.mrf.mxu0
        %v1416 = vadd.f32 0.0, %v1415
        %v1417 = vpop.f32.mrf.mxu0
        %v1418 = vpop.f32.mrf.mxu0
        %v1419 = vadd.f32 0.0, %v1418
        %v1420 = vpop.f32.mrf.mxu0
        %1421 = vmatprep.mubr.bf16.mxu0 0
        %1422 = vmatmul.mubr.bf16.gmra.mxu0 %v1297
        %v1423 = vpop.f32.mrf.mxu0
        %v1424 = vadd.f32 0.0, %v1423
        %v1425 = vpop.f32.mrf.mxu0
        %v1426 = vpop.f32.mrf.mxu0
        %v1427 = vadd.f32 0.0, %v1426
        %v1428 = vpop.f32.mrf.mxu0
        %1429 = vmatprep.mubr.bf16.mxu0 0
        %1430 = vmatmul.mubr.bf16.gmra.mxu0 %v1298
        %v1431 = vpop.f32.mrf.mxu0
        %v1432 = vadd.f32 0.0, %v1431
        %v1433 = vpop.f32.mrf.mxu0
        %v1434 = vpop.f32.mrf.mxu0
        %v1435 = vadd.f32 0.0, %v1434
        %v1436 = vpop.f32.mrf.mxu0
        %1437 = vmatprep.mubr.bf16.mxu0 0
        %1438 = vmatmul.mubr.bf16.gmra.mxu0 %v1299
        %v1439 = vpop.f32.mrf.mxu0
        %v1440 = vadd.f32 0.0, %v1439
        %v1441 = vpop.f32.mrf.mxu0
        %v1442 = vpop.f32.mrf.mxu0
        %v1443 = vadd.f32 0.0, %v1442
        %v1444 = vpop.f32.mrf.mxu0
        %1445 = vmatprep.mubr.bf16.mxu0 0
        %1446 = vmatmul.mubr.bf16.gmra.mxu0 %v1300
        %v1447 = vpop.f32.mrf.mxu0
        %v1448 = vadd.f32 0.0, %v1447
        %v1449 = vpop.f32.mrf.mxu0
        %v1450 = vpop.f32.mrf.mxu0
        %v1451 = vadd.f32 0.0, %v1450
        %v1452 = vpop.f32.mrf.mxu0
        %1453 = vdwg.mxu0
        %v1454 = vadd.f32 %v1091, %v1392
        %v1455 = vadd.f32 %v1094, %v1395
        %v1456 = vadd.f32 %v1099, %v1400
        %v1457 = vadd.f32 %v1102, %v1403
        %v1458 = vadd.f32 %v1107, %v1408
        %v1459 = vadd.f32 %v1110, %v1411
        %v1460 = vadd.f32 %v1115, %v1416
        %v1461 = vadd.f32 %v1118, %v1419
        %v1462 = vadd.f32 %v1123, %v1424
        %v1463 = vadd.f32 %v1126, %v1427
        %v1464 = vadd.f32 %v1131, %v1432
        %v1465 = vadd.f32 %v1134, %v1435
        %v1466 = vadd.f32 %v1139, %v1440
        %v1467 = vadd.f32 %v1142, %v1443
        %v1468 = vadd.f32 %v1147, %v1448
        %v1469 = vadd.f32 %v1150, %v1451
        %v1470 = vld [vmem:[%s366] sm:$0x8]
        %v1471 = vld [vmem:[%s366 + $0x8] sm:$0x7]
        %v1472 = vld [vmem:[%s366 + $0x10] sm:$0x8]
        %v1473 = vld [vmem:[%s366 + $0x18] sm:$0x7]
        %v1474 = vld [vmem:[%s366 + $0x20] sm:$0x8]
        %v1475 = vld [vmem:[%s366 + $0x28] sm:$0x7]
        %v1476 = vld [vmem:[%s366 + $0x30] sm:$0x8]
        %v1477 = vld [vmem:[%s366 + $0x38] sm:$0x7]
        %v1478 = vld [vmem:[%s366 + $0x40] sm:$0x8]
        %v1479 = vld [vmem:[%s366 + $0x48] sm:$0x7]
        %v1480 = vld [vmem:[%s366 + $0x50] sm:$0x8]
        %v1481 = vld [vmem:[%s366 + $0x58] sm:$0x7]
        %v1482 = vld [vmem:[%s366 + $0x60] sm:$0x8]
        %v1483 = vld [vmem:[%s366 + $0x68] sm:$0x7]
        %v1484 = vld [vmem:[%s366 + $0x70] sm:$0x8]
        %v1485 = vld [vmem:[%s366 + $0x78] sm:$0x7]
        %v1502 = vrot.slane %v1470, 7
        %v1503 = vrot.slane %v1502, 4
        %v1504 = vrot.slane %v367, 7
        %v1505 = vsel %vm693, %v1503, %v1504
        %v1506 = vrot.slane %v1504, 4
        %v1507 = vrot.slane %v1471, 7
        %v1508 = vsel %vm693, %v1506, %v1507
        %v1509 = vrot.slane %v1472, 7
        %v1510 = vrot.slane %v1509, 4
        %v1511 = vrot.slane %v369, 7
        %v1512 = vsel %vm693, %v1510, %v1511
        %v1513 = vrot.slane %v1511, 4
        %v1514 = vrot.slane %v1473, 7
        %v1515 = vsel %vm693, %v1513, %v1514
        %v1516 = vrot.slane %v1474, 7
        %v1517 = vrot.slane %v1516, 4
        %v1518 = vrot.slane %v371, 7
        %v1519 = vsel %vm693, %v1517, %v1518
        %v1520 = vrot.slane %v1518, 4
        %v1521 = vrot.slane %v1475, 7
        %v1522 = vsel %vm693, %v1520, %v1521
        %v1523 = vrot.slane %v1476, 7
        %v1524 = vrot.slane %v1523, 4
        %v1525 = vrot.slane %v373, 7
        %v1526 = vsel %vm693, %v1524, %v1525
        %v1527 = vrot.slane %v1525, 4
        %v1528 = vrot.slane %v1477, 7
        %v1529 = vsel %vm693, %v1527, %v1528
        %v1530 = vrot.slane %v1478, 7
        %v1531 = vrot.slane %v1530, 4
        %v1532 = vrot.slane %v375, 7
        %v1533 = vsel %vm693, %v1531, %v1532
        %v1534 = vrot.slane %v1532, 4
        %v1535 = vrot.slane %v1479, 7
        %v1536 = vsel %vm693, %v1534, %v1535
        %v1537 = vrot.slane %v1480, 7
        %v1538 = vrot.slane %v1537, 4
        %v1539 = vrot.slane %v377, 7
        %v1540 = vsel %vm693, %v1538, %v1539
        %v1541 = vrot.slane %v1539, 4
        %v1542 = vrot.slane %v1481, 7
        %v1543 = vsel %vm693, %v1541, %v1542
        %v1544 = vrot.slane %v1482, 7
        %v1545 = vrot.slane %v1544, 4
        %v1546 = vrot.slane %v379, 7
        %v1547 = vsel %vm693, %v1545, %v1546
        %v1548 = vrot.slane %v1546, 4
        %v1549 = vrot.slane %v1483, 7
        %v1550 = vsel %vm693, %v1548, %v1549
        %v1551 = vrot.slane %v1484, 7
        %v1552 = vrot.slane %v1551, 4
        %v1553 = vrot.slane %v381, 7
        %v1554 = vsel %vm693, %v1552, %v1553
        %v1555 = vrot.slane %v1553, 4
        %v1556 = vrot.slane %v1485, 7
        %v1557 = vsel %vm693, %v1555, %v1556
        %s1558 = scalar_lea.vmem %s3, 192
        %v1559 = vld [vmem:[%s1558] sm:$0xf]
        %v1560 = vld [vmem:[%s1558 + $0x4] sm:$0xf]
        %v1561 = vld [vmem:[%s1558 + $0x8] sm:$0xf]
        %v1562 = vld [vmem:[%s1558 + $0xc] sm:$0xf]
        %v1563 = vld [vmem:[%s1558 + $0x10] sm:$0xf]
        %v1564 = vld [vmem:[%s1558 + $0x14] sm:$0xf]
        %v1565 = vld [vmem:[%s1558 + $0x18] sm:$0xf]
        %v1566 = vld [vmem:[%s1558 + $0x1c] sm:$0xf]
        %v1567 = vld [vmem:[%s1558 + $0x20] sm:$0xf]
        %v1568 = vld [vmem:[%s1558 + $0x24] sm:$0xf]
        %v1569 = vld [vmem:[%s1558 + $0x28] sm:$0xf]
        %v1570 = vld [vmem:[%s1558 + $0x2c] sm:$0xf]
        %v1571 = vld [vmem:[%s1558 + $0x30] sm:$0xf]
        %v1572 = vld [vmem:[%s1558 + $0x34] sm:$0xf]
        %v1573 = vld [vmem:[%s1558 + $0x38] sm:$0xf]
        %v1574 = vld [vmem:[%s1558 + $0x3c] sm:$0xf]
        %v1575 = vunpack.c.l.b16 %v1505
        %v1576 = vunpack.c.l.b16 %v1508
        %v1577 = vunpack.c.l.b16 %v1512
        %v1578 = vunpack.c.l.b16 %v1515
        %v1579 = vunpack.c.l.b16 %v1519
        %v1580 = vunpack.c.l.b16 %v1522
        %v1581 = vunpack.c.l.b16 %v1526
        %v1582 = vunpack.c.l.b16 %v1529
        %v1583 = vunpack.c.l.b16 %v1533
        %v1584 = vunpack.c.l.b16 %v1536
        %v1585 = vunpack.c.l.b16 %v1540
        %v1586 = vunpack.c.l.b16 %v1543
        %v1587 = vunpack.c.l.b16 %v1547
        %v1588 = vunpack.c.l.b16 %v1550
        %v1589 = vunpack.c.l.b16 %v1554
        %v1590 = vunpack.c.l.b16 %v1557
        %v1591 = vpack.c.b16 %v1576, %v1575
        %v1592 = vpack.c.b16 %v1578, %v1577
        %v1593 = vpack.c.b16 %v1580, %v1579
        %v1594 = vpack.c.b16 %v1582, %v1581
        %v1595 = vpack.c.b16 %v1584, %v1583
        %v1596 = vpack.c.b16 %v1586, %v1585
        %v1597 = vpack.c.b16 %v1588, %v1587
        %v1598 = vpack.c.b16 %v1590, %v1589
        %v1623 = vunpack.c.l.b16 %v1559
        %v1624 = vunpack.c.l.b16 %v1560
        %v1625 = vunpack.c.l.b16 %v1561
        %v1626 = vunpack.c.l.b16 %v1562
        %v1627 = vunpack.c.l.b16 %v1563
        %v1628 = vunpack.c.l.b16 %v1564
        %v1629 = vunpack.c.l.b16 %v1565
        %v1630 = vunpack.c.l.b16 %v1566
        %v1631 = vunpack.c.l.b16 %v1567
        %v1632 = vunpack.c.l.b16 %v1568
        %v1633 = vunpack.c.l.b16 %v1569
        %v1634 = vunpack.c.l.b16 %v1570
        %v1635 = vunpack.c.l.b16 %v1571
        %v1636 = vunpack.c.l.b16 %v1572
        %v1637 = vunpack.c.l.b16 %v1573
        %v1638 = vunpack.c.l.b16 %v1574
        %v1639 = vpack.c.b16 %v1624, %v1623
        %v1640 = vpack.c.b16 %v1626, %v1625
        %v1641 = vpack.c.b16 %v1628, %v1627
        %v1642 = vpack.c.b16 %v1630, %v1629
        %v1643 = vpack.c.b16 %v1632, %v1631
        %v1644 = vpack.c.b16 %v1634, %v1633
        %v1645 = vpack.c.b16 %v1636, %v1635
        %v1646 = vpack.c.b16 %v1638, %v1637
        %1655 = vmatprep.subr.bf16.mxu0 0
        %1656 = vmatpush1.bf16.msra.mxu0 %v1646
        %1657 = vmatprep.subr.bf16.mxu0 0
        %1658 = vmatpush1.bf16.msra.mxu0 %v1645
        %1659 = vmatprep.subr.bf16.mxu0 0
        %1660 = vmatpush1.bf16.msra.mxu0 %v1644
        %1661 = vmatprep.subr.bf16.mxu0 0
        %1662 = vmatpush1.bf16.msra.mxu0 %v1643
        %1663 = vmatprep.subr.bf16.mxu0 0
        %1664 = vmatpush1.bf16.msra.mxu0 %v1642
        %1665 = vmatprep.subr.bf16.mxu0 0
        %1666 = vmatpush1.bf16.msra.mxu0 %v1641
        %1667 = vmatprep.subr.bf16.mxu0 0
        %1668 = vmatpush1.bf16.msra.mxu0 %v1640
        %1669 = vmatprep.subr.bf16.mxu0 0
        %1670 = vmatpush1.bf16.msra.mxu0 %v1639
        %1671 = vmatprep.subr.bf16.mxu0 0
        %1672 = vmatpush2.bf16.msra.mxu0 0
        %1673 = vmatprep.subr.bf16.mxu0 0
        %1674 = vmatpush2.bf16.msra.mxu0 0
        %1675 = vmatprep.subr.bf16.mxu0 0
        %1676 = vmatpush2.bf16.msra.mxu0 0
        %1677 = vmatprep.subr.bf16.mxu0 0
        %1678 = vmatpush2.bf16.msra.mxu0 0
        %1679 = vmatprep.subr.bf16.mxu0 0
        %1680 = vmatpush2.bf16.msra.mxu0 0
        %1681 = vmatprep.subr.bf16.mxu0 0
        %1682 = vmatpush2.bf16.msra.mxu0 0
        %1683 = vmatprep.subr.bf16.mxu0 0
        %1684 = vmatpush2.bf16.msra.mxu0 0
        %1685 = vmatprep.subr.bf16.mxu0 0
        %1686 = vmatpush2.bf16.msra.mxu0 0
        %1687 = vmatprep.mubr.bf16.mxu0 0
        %1688 = vmatmul.mubr.bf16.gmra.mxu0 %v1591
        %v1689 = vpop.f32.mrf.mxu0
        %v1690 = vadd.f32 0.0, %v1689
        %v1691 = vpop.f32.mrf.mxu0
        %v1692 = vpop.f32.mrf.mxu0
        %v1693 = vadd.f32 0.0, %v1692
        %v1694 = vpop.f32.mrf.mxu0
        %1695 = vmatprep.mubr.bf16.mxu0 0
        %1696 = vmatmul.mubr.bf16.gmra.mxu0 %v1592
        %v1697 = vpop.f32.mrf.mxu0
        %v1698 = vadd.f32 0.0, %v1697
        %v1699 = vpop.f32.mrf.mxu0
        %v1700 = vpop.f32.mrf.mxu0
        %v1701 = vadd.f32 0.0, %v1700
        %v1702 = vpop.f32.mrf.mxu0
        %1703 = vmatprep.mubr.bf16.mxu0 0
        %1704 = vmatmul.mubr.bf16.gmra.mxu0 %v1593
        %v1705 = vpop.f32.mrf.mxu0
        %v1706 = vadd.f32 0.0, %v1705
        %v1707 = vpop.f32.mrf.mxu0
        %v1708 = vpop.f32.mrf.mxu0
        %v1709 = vadd.f32 0.0, %v1708
        %v1710 = vpop.f32.mrf.mxu0
        %1711 = vmatprep.mubr.bf16.mxu0 0
        %1712 = vmatmul.mubr.bf16.gmra.mxu0 %v1594
        %v1713 = vpop.f32.mrf.mxu0
        %v1714 = vadd.f32 0.0, %v1713
        %v1715 = vpop.f32.mrf.mxu0
        %v1716 = vpop.f32.mrf.mxu0
        %v1717 = vadd.f32 0.0, %v1716
        %v1718 = vpop.f32.mrf.mxu0
        %1719 = vmatprep.mubr.bf16.mxu0 0
        %1720 = vmatmul.mubr.bf16.gmra.mxu0 %v1595
        %v1721 = vpop.f32.mrf.mxu0
        %v1722 = vadd.f32 0.0, %v1721
        %v1723 = vpop.f32.mrf.mxu0
        %v1724 = vpop.f32.mrf.mxu0
        %v1725 = vadd.f32 0.0, %v1724
        %v1726 = vpop.f32.mrf.mxu0
        %1727 = vmatprep.mubr.bf16.mxu0 0
        %1728 = vmatmul.mubr.bf16.gmra.mxu0 %v1596
        %v1729 = vpop.f32.mrf.mxu0
        %v1730 = vadd.f32 0.0, %v1729
        %v1731 = vpop.f32.mrf.mxu0
        %v1732 = vpop.f32.mrf.mxu0
        %v1733 = vadd.f32 0.0, %v1732
        %v1734 = vpop.f32.mrf.mxu0
        %1735 = vmatprep.mubr.bf16.mxu0 0
        %1736 = vmatmul.mubr.bf16.gmra.mxu0 %v1597
        %v1737 = vpop.f32.mrf.mxu0
        %v1738 = vadd.f32 0.0, %v1737
        %v1739 = vpop.f32.mrf.mxu0
        %v1740 = vpop.f32.mrf.mxu0
        %v1741 = vadd.f32 0.0, %v1740
        %v1742 = vpop.f32.mrf.mxu0
        %1743 = vmatprep.mubr.bf16.mxu0 0
        %1744 = vmatmul.mubr.bf16.gmra.mxu0 %v1598
        %v1745 = vpop.f32.mrf.mxu0
        %v1746 = vadd.f32 0.0, %v1745
        %v1747 = vpop.f32.mrf.mxu0
        %v1748 = vpop.f32.mrf.mxu0
        %v1749 = vadd.f32 0.0, %v1748
        %v1750 = vpop.f32.mrf.mxu0
        %1751 = vdwg.mxu0
        %v1752 = vadd.f32 %v1454, %v1690
        %v1753 = vadd.f32 %v1455, %v1693
        %v1754 = vadd.f32 %v1456, %v1698
        %v1755 = vadd.f32 %v1457, %v1701
        %v1756 = vadd.f32 %v1458, %v1706
        %v1757 = vadd.f32 %v1459, %v1709
        %v1758 = vadd.f32 %v1460, %v1714
        %v1759 = vadd.f32 %v1461, %v1717
        %v1760 = vadd.f32 %v1462, %v1722
        %v1761 = vadd.f32 %v1463, %v1725
        %v1762 = vadd.f32 %v1464, %v1730
        %v1763 = vadd.f32 %v1465, %v1733
        %v1764 = vadd.f32 %v1466, %v1738
        %v1765 = vadd.f32 %v1467, %v1741
        %v1766 = vadd.f32 %v1468, %v1746
        %v1767 = vadd.f32 %v1469, %v1749
        %s1768 = scalar_lea.vmem %s3, 256
        %v1769 = vld [vmem:[%s1768] sm:$0xf]
        %v1770 = vld [vmem:[%s1768 + $0x4] sm:$0xf]
        %v1771 = vld [vmem:[%s1768 + $0x8] sm:$0xf]
        %v1772 = vld [vmem:[%s1768 + $0xc] sm:$0xf]
        %v1773 = vld [vmem:[%s1768 + $0x10] sm:$0xf]
        %v1774 = vld [vmem:[%s1768 + $0x14] sm:$0xf]
        %v1775 = vld [vmem:[%s1768 + $0x18] sm:$0xf]
        %v1776 = vld [vmem:[%s1768 + $0x1c] sm:$0xf]
        %v1777 = vld [vmem:[%s1768 + $0x20] sm:$0xf]
        %v1778 = vld [vmem:[%s1768 + $0x24] sm:$0xf]
        %v1779 = vld [vmem:[%s1768 + $0x28] sm:$0xf]
        %v1780 = vld [vmem:[%s1768 + $0x2c] sm:$0xf]
        %v1781 = vld [vmem:[%s1768 + $0x30] sm:$0xf]
        %v1782 = vld [vmem:[%s1768 + $0x34] sm:$0xf]
        %v1783 = vld [vmem:[%s1768 + $0x38] sm:$0xf]
        %v1784 = vld [vmem:[%s1768 + $0x3c] sm:$0xf]
        %v1801 = vunpack.c.l.b16 %v1769
        %v1802 = vunpack.c.l.b16 %v1770
        %v1803 = vunpack.c.l.b16 %v1771
        %v1804 = vunpack.c.l.b16 %v1772
        %v1805 = vunpack.c.l.b16 %v1773
        %v1806 = vunpack.c.l.b16 %v1774
        %v1807 = vunpack.c.l.b16 %v1775
        %v1808 = vunpack.c.l.b16 %v1776
        %v1809 = vunpack.c.l.b16 %v1777
        %v1810 = vunpack.c.l.b16 %v1778
        %v1811 = vunpack.c.l.b16 %v1779
        %v1812 = vunpack.c.l.b16 %v1780
        %v1813 = vunpack.c.l.b16 %v1781
        %v1814 = vunpack.c.l.b16 %v1782
        %v1815 = vunpack.c.l.b16 %v1783
        %v1816 = vunpack.c.l.b16 %v1784
        %v1817 = vpack.c.b16 %v1802, %v1801
        %v1818 = vpack.c.b16 %v1804, %v1803
        %v1819 = vpack.c.b16 %v1806, %v1805
        %v1820 = vpack.c.b16 %v1808, %v1807
        %v1821 = vpack.c.b16 %v1810, %v1809
        %v1822 = vpack.c.b16 %v1812, %v1811
        %v1823 = vpack.c.b16 %v1814, %v1813
        %v1824 = vpack.c.b16 %v1816, %v1815
        %1833 = vmatprep.subr.bf16.mxu0 0
        %1834 = vmatpush1.bf16.msra.mxu0 %v1824
        %1835 = vmatprep.subr.bf16.mxu0 0
        %1836 = vmatpush1.bf16.msra.mxu0 %v1823
        %1837 = vmatprep.subr.bf16.mxu0 0
        %1838 = vmatpush1.bf16.msra.mxu0 %v1822
        %1839 = vmatprep.subr.bf16.mxu0 0
        %1840 = vmatpush1.bf16.msra.mxu0 %v1821
        %1841 = vmatprep.subr.bf16.mxu0 0
        %1842 = vmatpush1.bf16.msra.mxu0 %v1820
        %1843 = vmatprep.subr.bf16.mxu0 0
        %1844 = vmatpush1.bf16.msra.mxu0 %v1819
        %1845 = vmatprep.subr.bf16.mxu0 0
        %1846 = vmatpush1.bf16.msra.mxu0 %v1818
        %1847 = vmatprep.subr.bf16.mxu0 0
        %1848 = vmatpush1.bf16.msra.mxu0 %v1817
        %1849 = vmatprep.subr.bf16.mxu0 0
        %1850 = vmatpush2.bf16.msra.mxu0 0
        %1851 = vmatprep.subr.bf16.mxu0 0
        %1852 = vmatpush2.bf16.msra.mxu0 0
        %1853 = vmatprep.subr.bf16.mxu0 0
        %1854 = vmatpush2.bf16.msra.mxu0 0
        %1855 = vmatprep.subr.bf16.mxu0 0
        %1856 = vmatpush2.bf16.msra.mxu0 0
        %1857 = vmatprep.subr.bf16.mxu0 0
        %1858 = vmatpush2.bf16.msra.mxu0 0
        %1859 = vmatprep.subr.bf16.mxu0 0
        %1860 = vmatpush2.bf16.msra.mxu0 0
        %1861 = vmatprep.subr.bf16.mxu0 0
        %1862 = vmatpush2.bf16.msra.mxu0 0
        %1863 = vmatprep.subr.bf16.mxu0 0
        %1864 = vmatpush2.bf16.msra.mxu0 0
        %1865 = vmatprep.mubr.bf16.mxu0 0
        %1866 = vmatmul.mubr.bf16.gmra.mxu0 %v438
        %v1867 = vpop.f32.mrf.mxu0
        %v1868 = vadd.f32 0.0, %v1867
        %v1869 = vpop.f32.mrf.mxu0
        %v1870 = vpop.f32.mrf.mxu0
        %v1871 = vadd.f32 0.0, %v1870
        %v1872 = vpop.f32.mrf.mxu0
        %1873 = vmatprep.mubr.bf16.mxu0 0
        %1874 = vmatmul.mubr.bf16.gmra.mxu0 %v439
        %v1875 = vpop.f32.mrf.mxu0
        %v1876 = vadd.f32 0.0, %v1875
        %v1877 = vpop.f32.mrf.mxu0
        %v1878 = vpop.f32.mrf.mxu0
        %v1879 = vadd.f32 0.0, %v1878
        %v1880 = vpop.f32.mrf.mxu0
        %1881 = vmatprep.mubr.bf16.mxu0 0
        %1882 = vmatmul.mubr.bf16.gmra.mxu0 %v440
        %v1883 = vpop.f32.mrf.mxu0
        %v1884 = vadd.f32 0.0, %v1883
        %v1885 = vpop.f32.mrf.mxu0
        %v1886 = vpop.f32.mrf.mxu0
        %v1887 = vadd.f32 0.0, %v1886
        %v1888 = vpop.f32.mrf.mxu0
        %1889 = vmatprep.mubr.bf16.mxu0 0
        %1890 = vmatmul.mubr.bf16.gmra.mxu0 %v441
        %v1891 = vpop.f32.mrf.mxu0
        %v1892 = vadd.f32 0.0, %v1891
        %v1893 = vpop.f32.mrf.mxu0
        %v1894 = vpop.f32.mrf.mxu0
        %v1895 = vadd.f32 0.0, %v1894
        %v1896 = vpop.f32.mrf.mxu0
        %1897 = vmatprep.mubr.bf16.mxu0 0
        %1898 = vmatmul.mubr.bf16.gmra.mxu0 %v442
        %v1899 = vpop.f32.mrf.mxu0
        %v1900 = vadd.f32 0.0, %v1899
        %v1901 = vpop.f32.mrf.mxu0
        %v1902 = vpop.f32.mrf.mxu0
        %v1903 = vadd.f32 0.0, %v1902
        %v1904 = vpop.f32.mrf.mxu0
        %1905 = vmatprep.mubr.bf16.mxu0 0
        %1906 = vmatmul.mubr.bf16.gmra.mxu0 %v443
        %v1907 = vpop.f32.mrf.mxu0
        %v1908 = vadd.f32 0.0, %v1907
        %v1909 = vpop.f32.mrf.mxu0
        %v1910 = vpop.f32.mrf.mxu0
        %v1911 = vadd.f32 0.0, %v1910
        %v1912 = vpop.f32.mrf.mxu0
        %1913 = vmatprep.mubr.bf16.mxu0 0
        %1914 = vmatmul.mubr.bf16.gmra.mxu0 %v444
        %v1915 = vpop.f32.mrf.mxu0
        %v1916 = vadd.f32 0.0, %v1915
        %v1917 = vpop.f32.mrf.mxu0
        %v1918 = vpop.f32.mrf.mxu0
        %v1919 = vadd.f32 0.0, %v1918
        %v1920 = vpop.f32.mrf.mxu0
        %1921 = vmatprep.mubr.bf16.mxu0 0
        %1922 = vmatmul.mubr.bf16.gmra.mxu0 %v445
        %v1923 = vpop.f32.mrf.mxu0
        %v1924 = vadd.f32 0.0, %v1923
        %v1925 = vpop.f32.mrf.mxu0
        %v1926 = vpop.f32.mrf.mxu0
        %v1927 = vadd.f32 0.0, %v1926
        %v1928 = vpop.f32.mrf.mxu0
        %1929 = vdwg.mxu0
        %v1930 = vadd.f32 %v1752, %v1868
        %v1931 = vadd.f32 %v1753, %v1871
        %v1932 = vadd.f32 %v1754, %v1876
        %v1933 = vadd.f32 %v1755, %v1879
        %v1934 = vadd.f32 %v1756, %v1884
        %v1935 = vadd.f32 %v1757, %v1887
        %v1936 = vadd.f32 %v1758, %v1892
        %v1937 = vadd.f32 %v1759, %v1895
        %v1938 = vadd.f32 %v1760, %v1900
        %v1939 = vadd.f32 %v1761, %v1903
        %v1940 = vadd.f32 %v1762, %v1908
        %v1941 = vadd.f32 %v1763, %v1911
        %v1942 = vadd.f32 %v1764, %v1916
        %v1943 = vadd.f32 %v1765, %v1919
        %v1944 = vadd.f32 %v1766, %v1924
        %v1945 = vadd.f32 %v1767, %v1927
        %v1946 = vld [vmem:[%s366 + $0x4] sm:$0xe]
        %v1947 = vld [vmem:[%s366 + $0x8] sm:$0xf]
        %v1948 = vld [vmem:[%s366 + $0xc] sm:$0x1]
        %v1949 = vld [vmem:[%s366 + $0x14] sm:$0xe]
        %v1950 = vld [vmem:[%s366 + $0x18] sm:$0xf]
        %v1951 = vld [vmem:[%s366 + $0x1c] sm:$0x1]
        %v1952 = vld [vmem:[%s366 + $0x24] sm:$0xe]
        %v1953 = vld [vmem:[%s366 + $0x28] sm:$0xf]
        %v1954 = vld [vmem:[%s366 + $0x2c] sm:$0x1]
        %v1955 = vld [vmem:[%s366 + $0x34] sm:$0xe]
        %v1956 = vld [vmem:[%s366 + $0x38] sm:$0xf]
        %v1957 = vld [vmem:[%s366 + $0x3c] sm:$0x1]
        %v1958 = vld [vmem:[%s366 + $0x44] sm:$0xe]
        %v1959 = vld [vmem:[%s366 + $0x48] sm:$0xf]
        %v1960 = vld [vmem:[%s366 + $0x4c] sm:$0x1]
        %v1961 = vld [vmem:[%s366 + $0x54] sm:$0xe]
        %v1962 = vld [vmem:[%s366 + $0x58] sm:$0xf]
        %v1963 = vld [vmem:[%s366 + $0x5c] sm:$0x1]
        %v1964 = vld [vmem:[%s366 + $0x64] sm:$0xe]
        %v1965 = vld [vmem:[%s366 + $0x68] sm:$0xf]
        %v1966 = vld [vmem:[%s366 + $0x6c] sm:$0x1]
        %v1967 = vld [vmem:[%s366 + $0x74] sm:$0xe]
        %v1968 = vld [vmem:[%s366 + $0x78] sm:$0xf]
        %v1969 = vld [vmem:[%s366 + $0x7c] sm:$0x1]
        %v1994 = vrot.slane %v1946, 5
        %v1995 = vrot.slane %v1994, 4
        %v1996 = vrot.slane %v1947, 5
        %v1997 = vsel %vm1203, %v1995, %v1996
        %v1998 = vrot.slane %v1996, 4
        %v1999 = vrot.slane %v1948, 5
        %v2000 = vsel %vm1203, %v1998, %v1999
        %v2001 = vrot.slane %v1949, 5
        %v2002 = vrot.slane %v2001, 4
        %v2003 = vrot.slane %v1950, 5
        %v2004 = vsel %vm1203, %v2002, %v2003
        %v2005 = vrot.slane %v2003, 4
        %v2006 = vrot.slane %v1951, 5
        %v2007 = vsel %vm1203, %v2005, %v2006
        %v2008 = vrot.slane %v1952, 5
        %v2009 = vrot.slane %v2008, 4
        %v2010 = vrot.slane %v1953, 5
        %v2011 = vsel %vm1203, %v2009, %v2010
        %v2012 = vrot.slane %v2010, 4
        %v2013 = vrot.slane %v1954, 5
        %v2014 = vsel %vm1203, %v2012, %v2013
        %v2015 = vrot.slane %v1955, 5
        %v2016 = vrot.slane %v2015, 4
        %v2017 = vrot.slane %v1956, 5
        %v2018 = vsel %vm1203, %v2016, %v2017
        %v2019 = vrot.slane %v2017, 4
        %v2020 = vrot.slane %v1957, 5
        %v2021 = vsel %vm1203, %v2019, %v2020
        %v2022 = vrot.slane %v1958, 5
        %v2023 = vrot.slane %v2022, 4
        %v2024 = vrot.slane %v1959, 5
        %v2025 = vsel %vm1203, %v2023, %v2024
        %v2026 = vrot.slane %v2024, 4
        %v2027 = vrot.slane %v1960, 5
        %v2028 = vsel %vm1203, %v2026, %v2027
        %v2029 = vrot.slane %v1961, 5
        %v2030 = vrot.slane %v2029, 4
        %v2031 = vrot.slane %v1962, 5
        %v2032 = vsel %vm1203, %v2030, %v2031
        %v2033 = vrot.slane %v2031, 4
        %v2034 = vrot.slane %v1963, 5
        %v2035 = vsel %vm1203, %v2033, %v2034
        %v2036 = vrot.slane %v1964, 5
        %v2037 = vrot.slane %v2036, 4
        %v2038 = vrot.slane %v1965, 5
        %v2039 = vsel %vm1203, %v2037, %v2038
        %v2040 = vrot.slane %v2038, 4
        %v2041 = vrot.slane %v1966, 5
        %v2042 = vsel %vm1203, %v2040, %v2041
        %v2043 = vrot.slane %v1967, 5
        %v2044 = vrot.slane %v2043, 4
        %v2045 = vrot.slane %v1968, 5
        %v2046 = vsel %vm1203, %v2044, %v2045
        %v2047 = vrot.slane %v2045, 4
        %v2048 = vrot.slane %v1969, 5
        %v2049 = vsel %vm1203, %v2047, %v2048
        %s2050 = scalar_lea.vmem %s3, 320
        %v2051 = vld [vmem:[%s2050] sm:$0xf]
        %v2052 = vld [vmem:[%s2050 + $0x4] sm:$0xf]
        %v2053 = vld [vmem:[%s2050 + $0x8] sm:$0xf]
        %v2054 = vld [vmem:[%s2050 + $0xc] sm:$0xf]
        %v2055 = vld [vmem:[%s2050 + $0x10] sm:$0xf]
        %v2056 = vld [vmem:[%s2050 + $0x14] sm:$0xf]
        %v2057 = vld [vmem:[%s2050 + $0x18] sm:$0xf]
        %v2058 = vld [vmem:[%s2050 + $0x1c] sm:$0xf]
        %v2059 = vld [vmem:[%s2050 + $0x20] sm:$0xf]
        %v2060 = vld [vmem:[%s2050 + $0x24] sm:$0xf]
        %v2061 = vld [vmem:[%s2050 + $0x28] sm:$0xf]
        %v2062 = vld [vmem:[%s2050 + $0x2c] sm:$0xf]
        %v2063 = vld [vmem:[%s2050 + $0x30] sm:$0xf]
        %v2064 = vld [vmem:[%s2050 + $0x34] sm:$0xf]
        %v2065 = vld [vmem:[%s2050 + $0x38] sm:$0xf]
        %v2066 = vld [vmem:[%s2050 + $0x3c] sm:$0xf]
        %v2067 = vunpack.c.l.b16 %v1997
        %v2068 = vunpack.c.l.b16 %v2000
        %v2069 = vunpack.c.l.b16 %v2004
        %v2070 = vunpack.c.l.b16 %v2007
        %v2071 = vunpack.c.l.b16 %v2011
        %v2072 = vunpack.c.l.b16 %v2014
        %v2073 = vunpack.c.l.b16 %v2018
        %v2074 = vunpack.c.l.b16 %v2021
        %v2075 = vunpack.c.l.b16 %v2025
        %v2076 = vunpack.c.l.b16 %v2028
        %v2077 = vunpack.c.l.b16 %v2032
        %v2078 = vunpack.c.l.b16 %v2035
        %v2079 = vunpack.c.l.b16 %v2039
        %v2080 = vunpack.c.l.b16 %v2042
        %v2081 = vunpack.c.l.b16 %v2046
        %v2082 = vunpack.c.l.b16 %v2049
        %v2083 = vpack.c.b16 %v2068, %v2067
        %v2084 = vpack.c.b16 %v2070, %v2069
        %v2085 = vpack.c.b16 %v2072, %v2071
        %v2086 = vpack.c.b16 %v2074, %v2073
        %v2087 = vpack.c.b16 %v2076, %v2075
        %v2088 = vpack.c.b16 %v2078, %v2077
        %v2089 = vpack.c.b16 %v2080, %v2079
        %v2090 = vpack.c.b16 %v2082, %v2081
        %v2115 = vunpack.c.l.b16 %v2051
        %v2116 = vunpack.c.l.b16 %v2052
        %v2117 = vunpack.c.l.b16 %v2053
        %v2118 = vunpack.c.l.b16 %v2054
        %v2119 = vunpack.c.l.b16 %v2055
        %v2120 = vunpack.c.l.b16 %v2056
        %v2121 = vunpack.c.l.b16 %v2057
        %v2122 = vunpack.c.l.b16 %v2058
        %v2123 = vunpack.c.l.b16 %v2059
        %v2124 = vunpack.c.l.b16 %v2060
        %v2125 = vunpack.c.l.b16 %v2061
        %v2126 = vunpack.c.l.b16 %v2062
        %v2127 = vunpack.c.l.b16 %v2063
        %v2128 = vunpack.c.l.b16 %v2064
        %v2129 = vunpack.c.l.b16 %v2065
        %v2130 = vunpack.c.l.b16 %v2066
        %v2131 = vpack.c.b16 %v2116, %v2115
        %v2132 = vpack.c.b16 %v2118, %v2117
        %v2133 = vpack.c.b16 %v2120, %v2119
        %v2134 = vpack.c.b16 %v2122, %v2121
        %v2135 = vpack.c.b16 %v2124, %v2123
        %v2136 = vpack.c.b16 %v2126, %v2125
        %v2137 = vpack.c.b16 %v2128, %v2127
        %v2138 = vpack.c.b16 %v2130, %v2129
        %2147 = vmatprep.subr.bf16.mxu0 0
        %2148 = vmatpush1.bf16.msra.mxu0 %v2138
        %2149 = vmatprep.subr.bf16.mxu0 0
        %2150 = vmatpush1.bf16.msra.mxu0 %v2137
        %2151 = vmatprep.subr.bf16.mxu0 0
        %2152 = vmatpush1.bf16.msra.mxu0 %v2136
        %2153 = vmatprep.subr.bf16.mxu0 0
        %2154 = vmatpush1.bf16.msra.mxu0 %v2135
        %2155 = vmatprep.subr.bf16.mxu0 0
        %2156 = vmatpush1.bf16.msra.mxu0 %v2134
        %2157 = vmatprep.subr.bf16.mxu0 0
        %2158 = vmatpush1.bf16.msra.mxu0 %v2133
        %2159 = vmatprep.subr.bf16.mxu0 0
        %2160 = vmatpush1.bf16.msra.mxu0 %v2132
        %2161 = vmatprep.subr.bf16.mxu0 0
        %2162 = vmatpush1.bf16.msra.mxu0 %v2131
        %2163 = vmatprep.subr.bf16.mxu0 0
        %2164 = vmatpush2.bf16.msra.mxu0 0
        %2165 = vmatprep.subr.bf16.mxu0 0
        %2166 = vmatpush2.bf16.msra.mxu0 0
        %2167 = vmatprep.subr.bf16.mxu0 0
        %2168 = vmatpush2.bf16.msra.mxu0 0
        %2169 = vmatprep.subr.bf16.mxu0 0
        %2170 = vmatpush2.bf16.msra.mxu0 0
        %2171 = vmatprep.subr.bf16.mxu0 0
        %2172 = vmatpush2.bf16.msra.mxu0 0
        %2173 = vmatprep.subr.bf16.mxu0 0
        %2174 = vmatpush2.bf16.msra.mxu0 0
        %2175 = vmatprep.subr.bf16.mxu0 0
        %2176 = vmatpush2.bf16.msra.mxu0 0
        %2177 = vmatprep.subr.bf16.mxu0 0
        %2178 = vmatpush2.bf16.msra.mxu0 0
        %2179 = vmatprep.mubr.bf16.mxu0 0
        %2180 = vmatmul.mubr.bf16.gmra.mxu0 %v2083
        %v2181 = vpop.f32.mrf.mxu0
        %v2182 = vadd.f32 0.0, %v2181
        %v2183 = vpop.f32.mrf.mxu0
        %v2184 = vpop.f32.mrf.mxu0
        %v2185 = vadd.f32 0.0, %v2184
        %v2186 = vpop.f32.mrf.mxu0
        %2187 = vmatprep.mubr.bf16.mxu0 0
        %2188 = vmatmul.mubr.bf16.gmra.mxu0 %v2084
        %v2189 = vpop.f32.mrf.mxu0
        %v2190 = vadd.f32 0.0, %v2189
        %v2191 = vpop.f32.mrf.mxu0
        %v2192 = vpop.f32.mrf.mxu0
        %v2193 = vadd.f32 0.0, %v2192
        %v2194 = vpop.f32.mrf.mxu0
        %2195 = vmatprep.mubr.bf16.mxu0 0
        %2196 = vmatmul.mubr.bf16.gmra.mxu0 %v2085
        %v2197 = vpop.f32.mrf.mxu0
        %v2198 = vadd.f32 0.0, %v2197
        %v2199 = vpop.f32.mrf.mxu0
        %v2200 = vpop.f32.mrf.mxu0
        %v2201 = vadd.f32 0.0, %v2200
        %v2202 = vpop.f32.mrf.mxu0
        %2203 = vmatprep.mubr.bf16.mxu0 0
        %2204 = vmatmul.mubr.bf16.gmra.mxu0 %v2086
        %v2205 = vpop.f32.mrf.mxu0
        %v2206 = vadd.f32 0.0, %v2205
        %v2207 = vpop.f32.mrf.mxu0
        %v2208 = vpop.f32.mrf.mxu0
        %v2209 = vadd.f32 0.0, %v2208
        %v2210 = vpop.f32.mrf.mxu0
        %2211 = vmatprep.mubr.bf16.mxu0 0
        %2212 = vmatmul.mubr.bf16.gmra.mxu0 %v2087
        %v2213 = vpop.f32.mrf.mxu0
        %v2214 = vadd.f32 0.0, %v2213
        %v2215 = vpop.f32.mrf.mxu0
        %v2216 = vpop.f32.mrf.mxu0
        %v2217 = vadd.f32 0.0, %v2216
        %v2218 = vpop.f32.mrf.mxu0
        %2219 = vmatprep.mubr.bf16.mxu0 0
        %2220 = vmatmul.mubr.bf16.gmra.mxu0 %v2088
        %v2221 = vpop.f32.mrf.mxu0
        %v2222 = vadd.f32 0.0, %v2221
        %v2223 = vpop.f32.mrf.mxu0
        %v2224 = vpop.f32.mrf.mxu0
        %v2225 = vadd.f32 0.0, %v2224
        %v2226 = vpop.f32.mrf.mxu0
        %2227 = vmatprep.mubr.bf16.mxu0 0
        %2228 = vmatmul.mubr.bf16.gmra.mxu0 %v2089
        %v2229 = vpop.f32.mrf.mxu0
        %v2230 = vadd.f32 0.0, %v2229
        %v2231 = vpop.f32.mrf.mxu0
        %v2232 = vpop.f32.mrf.mxu0
        %v2233 = vadd.f32 0.0, %v2232
        %v2234 = vpop.f32.mrf.mxu0
        %2235 = vmatprep.mubr.bf16.mxu0 0
        %2236 = vmatmul.mubr.bf16.gmra.mxu0 %v2090
        %v2237 = vpop.f32.mrf.mxu0
        %v2238 = vadd.f32 0.0, %v2237
        %v2239 = vpop.f32.mrf.mxu0
        %v2240 = vpop.f32.mrf.mxu0
        %v2241 = vadd.f32 0.0, %v2240
        %v2242 = vpop.f32.mrf.mxu0
        %2243 = vdwg.mxu0
        %v2244 = vadd.f32 %v1930, %v2182
        %v2245 = vadd.f32 %v1931, %v2185
        %v2246 = vadd.f32 %v1932, %v2190
        %v2247 = vadd.f32 %v1933, %v2193
        %v2248 = vadd.f32 %v1934, %v2198
        %v2249 = vadd.f32 %v1935, %v2201
        %v2250 = vadd.f32 %v1936, %v2206
        %v2251 = vadd.f32 %v1937, %v2209
        %v2252 = vadd.f32 %v1938, %v2214
        %v2253 = vadd.f32 %v1939, %v2217
        %v2254 = vadd.f32 %v1940, %v2222
        %v2255 = vadd.f32 %v1941, %v2225
        %v2256 = vadd.f32 %v1942, %v2230
        %v2257 = vadd.f32 %v1943, %v2233
        %v2258 = vadd.f32 %v1944, %v2238
        %v2259 = vadd.f32 %v1945, %v2241
        %s2260 = sadd.s32 %s362, 8
        %s2261 = smul.u32 %s2260, 4
        %s2262 = smul.addr %s2261, 4
        %s2263 = scalar_lea.vmem %s359, %s2262
        %v2264 = vld [vmem:[%s2263] sm:$0x8]
        %v2265 = vld [vmem:[%s2263 + $0x4] sm:$0xf]
        %v2266 = vld [vmem:[%s2263 + $0x8] sm:$0x7]
        %v2267 = vld [vmem:[%s2263 + $0x10] sm:$0x8]
        %v2268 = vld [vmem:[%s2263 + $0x14] sm:$0xf]
        %v2269 = vld [vmem:[%s2263 + $0x18] sm:$0x7]
        %v2270 = vld [vmem:[%s2263 + $0x20] sm:$0x8]
        %v2271 = vld [vmem:[%s2263 + $0x24] sm:$0xf]
        %v2272 = vld [vmem:[%s2263 + $0x28] sm:$0x7]
        %v2273 = vld [vmem:[%s2263 + $0x30] sm:$0x8]
        %v2274 = vld [vmem:[%s2263 + $0x34] sm:$0xf]
        %v2275 = vld [vmem:[%s2263 + $0x38] sm:$0x7]
        %v2276 = vld [vmem:[%s2263 + $0x40] sm:$0x8]
        %v2277 = vld [vmem:[%s2263 + $0x44] sm:$0xf]
        %v2278 = vld [vmem:[%s2263 + $0x48] sm:$0x7]
        %v2279 = vld [vmem:[%s2263 + $0x50] sm:$0x8]
        %v2280 = vld [vmem:[%s2263 + $0x54] sm:$0xf]
        %v2281 = vld [vmem:[%s2263 + $0x58] sm:$0x7]
        %v2282 = vld [vmem:[%s2263 + $0x60] sm:$0x8]
        %v2283 = vld [vmem:[%s2263 + $0x64] sm:$0xf]
        %v2284 = vld [vmem:[%s2263 + $0x68] sm:$0x7]
        %v2285 = vld [vmem:[%s2263 + $0x70] sm:$0x8]
        %v2286 = vld [vmem:[%s2263 + $0x74] sm:$0xf]
        %v2287 = vld [vmem:[%s2263 + $0x78] sm:$0x7]
        %v2312 = vrot.slane %v2264, 7
        %v2313 = vrot.slane %v2312, 4
        %v2314 = vrot.slane %v2265, 7
        %v2315 = vsel %vm693, %v2313, %v2314
        %v2316 = vrot.slane %v2314, 4
        %v2317 = vrot.slane %v2266, 7
        %v2318 = vsel %vm693, %v2316, %v2317
        %v2319 = vrot.slane %v2267, 7
        %v2320 = vrot.slane %v2319, 4
        %v2321 = vrot.slane %v2268, 7
        %v2322 = vsel %vm693, %v2320, %v2321
        %v2323 = vrot.slane %v2321, 4
        %v2324 = vrot.slane %v2269, 7
        %v2325 = vsel %vm693, %v2323, %v2324
        %v2326 = vrot.slane %v2270, 7
        %v2327 = vrot.slane %v2326, 4
        %v2328 = vrot.slane %v2271, 7
        %v2329 = vsel %vm693, %v2327, %v2328
        %v2330 = vrot.slane %v2328, 4
        %v2331 = vrot.slane %v2272, 7
        %v2332 = vsel %vm693, %v2330, %v2331
        %v2333 = vrot.slane %v2273, 7
        %v2334 = vrot.slane %v2333, 4
        %v2335 = vrot.slane %v2274, 7
        %v2336 = vsel %vm693, %v2334, %v2335
        %v2337 = vrot.slane %v2335, 4
        %v2338 = vrot.slane %v2275, 7
        %v2339 = vsel %vm693, %v2337, %v2338
        %v2340 = vrot.slane %v2276, 7
        %v2341 = vrot.slane %v2340, 4
        %v2342 = vrot.slane %v2277, 7
        %v2343 = vsel %vm693, %v2341, %v2342
        %v2344 = vrot.slane %v2342, 4
        %v2345 = vrot.slane %v2278, 7
        %v2346 = vsel %vm693, %v2344, %v2345
        %v2347 = vrot.slane %v2279, 7
        %v2348 = vrot.slane %v2347, 4
        %v2349 = vrot.slane %v2280, 7
        %v2350 = vsel %vm693, %v2348, %v2349
        %v2351 = vrot.slane %v2349, 4
        %v2352 = vrot.slane %v2281, 7
        %v2353 = vsel %vm693, %v2351, %v2352
        %v2354 = vrot.slane %v2282, 7
        %v2355 = vrot.slane %v2354, 4
        %v2356 = vrot.slane %v2283, 7
        %v2357 = vsel %vm693, %v2355, %v2356
        %v2358 = vrot.slane %v2356, 4
        %v2359 = vrot.slane %v2284, 7
        %v2360 = vsel %vm693, %v2358, %v2359
        %v2361 = vrot.slane %v2285, 7
        %v2362 = vrot.slane %v2361, 4
        %v2363 = vrot.slane %v2286, 7
        %v2364 = vsel %vm693, %v2362, %v2363
        %v2365 = vrot.slane %v2363, 4
        %v2366 = vrot.slane %v2287, 7
        %v2367 = vsel %vm693, %v2365, %v2366
        %s2368 = scalar_lea.vmem %s3, 384
        %v2369 = vld [vmem:[%s2368] sm:$0xf]
        %v2370 = vld [vmem:[%s2368 + $0x4] sm:$0xf]
        %v2371 = vld [vmem:[%s2368 + $0x8] sm:$0xf]
        %v2372 = vld [vmem:[%s2368 + $0xc] sm:$0xf]
        %v2373 = vld [vmem:[%s2368 + $0x10] sm:$0xf]
        %v2374 = vld [vmem:[%s2368 + $0x14] sm:$0xf]
        %v2375 = vld [vmem:[%s2368 + $0x18] sm:$0xf]
        %v2376 = vld [vmem:[%s2368 + $0x1c] sm:$0xf]
        %v2377 = vld [vmem:[%s2368 + $0x20] sm:$0xf]
        %v2378 = vld [vmem:[%s2368 + $0x24] sm:$0xf]
        %v2379 = vld [vmem:[%s2368 + $0x28] sm:$0xf]
        %v2380 = vld [vmem:[%s2368 + $0x2c] sm:$0xf]
        %v2381 = vld [vmem:[%s2368 + $0x30] sm:$0xf]
        %v2382 = vld [vmem:[%s2368 + $0x34] sm:$0xf]
        %v2383 = vld [vmem:[%s2368 + $0x38] sm:$0xf]
        %v2384 = vld [vmem:[%s2368 + $0x3c] sm:$0xf]
        %v2385 = vunpack.c.l.b16 %v2315
        %v2386 = vunpack.c.l.b16 %v2318
        %v2387 = vunpack.c.l.b16 %v2322
        %v2388 = vunpack.c.l.b16 %v2325
        %v2389 = vunpack.c.l.b16 %v2329
        %v2390 = vunpack.c.l.b16 %v2332
        %v2391 = vunpack.c.l.b16 %v2336
        %v2392 = vunpack.c.l.b16 %v2339
        %v2393 = vunpack.c.l.b16 %v2343
        %v2394 = vunpack.c.l.b16 %v2346
        %v2395 = vunpack.c.l.b16 %v2350
        %v2396 = vunpack.c.l.b16 %v2353
        %v2397 = vunpack.c.l.b16 %v2357
        %v2398 = vunpack.c.l.b16 %v2360
        %v2399 = vunpack.c.l.b16 %v2364
        %v2400 = vunpack.c.l.b16 %v2367
        %v2401 = vpack.c.b16 %v2386, %v2385
        %v2402 = vpack.c.b16 %v2388, %v2387
        %v2403 = vpack.c.b16 %v2390, %v2389
        %v2404 = vpack.c.b16 %v2392, %v2391
        %v2405 = vpack.c.b16 %v2394, %v2393
        %v2406 = vpack.c.b16 %v2396, %v2395
        %v2407 = vpack.c.b16 %v2398, %v2397
        %v2408 = vpack.c.b16 %v2400, %v2399
        %v2433 = vunpack.c.l.b16 %v2369
        %v2434 = vunpack.c.l.b16 %v2370
        %v2435 = vunpack.c.l.b16 %v2371
        %v2436 = vunpack.c.l.b16 %v2372
        %v2437 = vunpack.c.l.b16 %v2373
        %v2438 = vunpack.c.l.b16 %v2374
        %v2439 = vunpack.c.l.b16 %v2375
        %v2440 = vunpack.c.l.b16 %v2376
        %v2441 = vunpack.c.l.b16 %v2377
        %v2442 = vunpack.c.l.b16 %v2378
        %v2443 = vunpack.c.l.b16 %v2379
        %v2444 = vunpack.c.l.b16 %v2380
        %v2445 = vunpack.c.l.b16 %v2381
        %v2446 = vunpack.c.l.b16 %v2382
        %v2447 = vunpack.c.l.b16 %v2383
        %v2448 = vunpack.c.l.b16 %v2384
        %v2449 = vpack.c.b16 %v2434, %v2433
        %v2450 = vpack.c.b16 %v2436, %v2435
        %v2451 = vpack.c.b16 %v2438, %v2437
        %v2452 = vpack.c.b16 %v2440, %v2439
        %v2453 = vpack.c.b16 %v2442, %v2441
        %v2454 = vpack.c.b16 %v2444, %v2443
        %v2455 = vpack.c.b16 %v2446, %v2445
        %v2456 = vpack.c.b16 %v2448, %v2447
        %2465 = vmatprep.subr.bf16.mxu0 0
        %2466 = vmatpush1.bf16.msra.mxu0 %v2456
        %2467 = vmatprep.subr.bf16.mxu0 0
        %2468 = vmatpush1.bf16.msra.mxu0 %v2455
        %2469 = vmatprep.subr.bf16.mxu0 0
        %2470 = vmatpush1.bf16.msra.mxu0 %v2454
        %2471 = vmatprep.subr.bf16.mxu0 0
        %2472 = vmatpush1.bf16.msra.mxu0 %v2453
        %2473 = vmatprep.subr.bf16.mxu0 0
        %2474 = vmatpush1.bf16.msra.mxu0 %v2452
        %2475 = vmatprep.subr.bf16.mxu0 0
        %2476 = vmatpush1.bf16.msra.mxu0 %v2451
        %2477 = vmatprep.subr.bf16.mxu0 0
        %2478 = vmatpush1.bf16.msra.mxu0 %v2450
        %2479 = vmatprep.subr.bf16.mxu0 0
        %2480 = vmatpush1.bf16.msra.mxu0 %v2449
        %2481 = vmatprep.subr.bf16.mxu0 0
        %2482 = vmatpush2.bf16.msra.mxu0 0
        %2483 = vmatprep.subr.bf16.mxu0 0
        %2484 = vmatpush2.bf16.msra.mxu0 0
        %2485 = vmatprep.subr.bf16.mxu0 0
        %2486 = vmatpush2.bf16.msra.mxu0 0
        %2487 = vmatprep.subr.bf16.mxu0 0
        %2488 = vmatpush2.bf16.msra.mxu0 0
        %2489 = vmatprep.subr.bf16.mxu0 0
        %2490 = vmatpush2.bf16.msra.mxu0 0
        %2491 = vmatprep.subr.bf16.mxu0 0
        %2492 = vmatpush2.bf16.msra.mxu0 0
        %2493 = vmatprep.subr.bf16.mxu0 0
        %2494 = vmatpush2.bf16.msra.mxu0 0
        %2495 = vmatprep.subr.bf16.mxu0 0
        %2496 = vmatpush2.bf16.msra.mxu0 0
        %2497 = vmatprep.mubr.bf16.mxu0 0
        %2498 = vmatmul.mubr.bf16.gmra.mxu0 %v2401
        %v2499 = vpop.f32.mrf.mxu0
        %v2500 = vadd.f32 0.0, %v2499
        %v2501 = vpop.f32.mrf.mxu0
        %v2502 = vpop.f32.mrf.mxu0
        %v2503 = vadd.f32 0.0, %v2502
        %v2504 = vpop.f32.mrf.mxu0
        %2505 = vmatprep.mubr.bf16.mxu0 0
        %2506 = vmatmul.mubr.bf16.gmra.mxu0 %v2402
        %v2507 = vpop.f32.mrf.mxu0
        %v2508 = vadd.f32 0.0, %v2507
        %v2509 = vpop.f32.mrf.mxu0
        %v2510 = vpop.f32.mrf.mxu0
        %v2511 = vadd.f32 0.0, %v2510
        %v2512 = vpop.f32.mrf.mxu0
        %2513 = vmatprep.mubr.bf16.mxu0 0
        %2514 = vmatmul.mubr.bf16.gmra.mxu0 %v2403
        %v2515 = vpop.f32.mrf.mxu0
        %v2516 = vadd.f32 0.0, %v2515
        %v2517 = vpop.f32.mrf.mxu0
        %v2518 = vpop.f32.mrf.mxu0
        %v2519 = vadd.f32 0.0, %v2518
        %v2520 = vpop.f32.mrf.mxu0
        %2521 = vmatprep.mubr.bf16.mxu0 0
        %2522 = vmatmul.mubr.bf16.gmra.mxu0 %v2404
        %v2523 = vpop.f32.mrf.mxu0
        %v2524 = vadd.f32 0.0, %v2523
        %v2525 = vpop.f32.mrf.mxu0
        %v2526 = vpop.f32.mrf.mxu0
        %v2527 = vadd.f32 0.0, %v2526
        %v2528 = vpop.f32.mrf.mxu0
        %2529 = vmatprep.mubr.bf16.mxu0 0
        %2530 = vmatmul.mubr.bf16.gmra.mxu0 %v2405
        %v2531 = vpop.f32.mrf.mxu0
        %v2532 = vadd.f32 0.0, %v2531
        %v2533 = vpop.f32.mrf.mxu0
        %v2534 = vpop.f32.mrf.mxu0
        %v2535 = vadd.f32 0.0, %v2534
        %v2536 = vpop.f32.mrf.mxu0
        %2537 = vmatprep.mubr.bf16.mxu0 0
        %2538 = vmatmul.mubr.bf16.gmra.mxu0 %v2406
        %v2539 = vpop.f32.mrf.mxu0
        %v2540 = vadd.f32 0.0, %v2539
        %v2541 = vpop.f32.mrf.mxu0
        %v2542 = vpop.f32.mrf.mxu0
        %v2543 = vadd.f32 0.0, %v2542
        %v2544 = vpop.f32.mrf.mxu0
        %2545 = vmatprep.mubr.bf16.mxu0 0
        %2546 = vmatmul.mubr.bf16.gmra.mxu0 %v2407
        %v2547 = vpop.f32.mrf.mxu0
        %v2548 = vadd.f32 0.0, %v2547
        %v2549 = vpop.f32.mrf.mxu0
        %v2550 = vpop.f32.mrf.mxu0
        %v2551 = vadd.f32 0.0, %v2550
        %v2552 = vpop.f32.mrf.mxu0
        %2553 = vmatprep.mubr.bf16.mxu0 0
        %2554 = vmatmul.mubr.bf16.gmra.mxu0 %v2408
        %v2555 = vpop.f32.mrf.mxu0
        %v2556 = vadd.f32 0.0, %v2555
        %v2557 = vpop.f32.mrf.mxu0
        %v2558 = vpop.f32.mrf.mxu0
        %v2559 = vadd.f32 0.0, %v2558
        %v2560 = vpop.f32.mrf.mxu0
        %2561 = vdwg.mxu0
        %v2562 = vadd.f32 %v2244, %v2500
        %v2563 = vadd.f32 %v2245, %v2503
        %v2564 = vadd.f32 %v2246, %v2508
        %v2565 = vadd.f32 %v2247, %v2511
        %v2566 = vadd.f32 %v2248, %v2516
        %v2567 = vadd.f32 %v2249, %v2519
        %v2568 = vadd.f32 %v2250, %v2524
        %v2569 = vadd.f32 %v2251, %v2527
        %v2570 = vadd.f32 %v2252, %v2532
        %v2571 = vadd.f32 %v2253, %v2535
        %v2572 = vadd.f32 %v2254, %v2540
        %v2573 = vadd.f32 %v2255, %v2543
        %v2574 = vadd.f32 %v2256, %v2548
        %v2575 = vadd.f32 %v2257, %v2551
        %v2576 = vadd.f32 %v2258, %v2556
        %v2577 = vadd.f32 %v2259, %v2559
        %v2578 = vld [vmem:[%s2263 + $0x8] sm:$0xf]
        %v2579 = vld [vmem:[%s2263 + $0x18] sm:$0xf]
        %v2580 = vld [vmem:[%s2263 + $0x28] sm:$0xf]
        %v2581 = vld [vmem:[%s2263 + $0x38] sm:$0xf]
        %v2582 = vld [vmem:[%s2263 + $0x48] sm:$0xf]
        %v2583 = vld [vmem:[%s2263 + $0x58] sm:$0xf]
        %v2584 = vld [vmem:[%s2263 + $0x68] sm:$0xf]
        %v2585 = vld [vmem:[%s2263 + $0x78] sm:$0xf]
        %s2586 = scalar_lea.vmem %s3, 448
        %v2587 = vld [vmem:[%s2586] sm:$0xf]
        %v2588 = vld [vmem:[%s2586 + $0x4] sm:$0xf]
        %v2589 = vld [vmem:[%s2586 + $0x8] sm:$0xf]
        %v2590 = vld [vmem:[%s2586 + $0xc] sm:$0xf]
        %v2591 = vld [vmem:[%s2586 + $0x10] sm:$0xf]
        %v2592 = vld [vmem:[%s2586 + $0x14] sm:$0xf]
        %v2593 = vld [vmem:[%s2586 + $0x18] sm:$0xf]
        %v2594 = vld [vmem:[%s2586 + $0x1c] sm:$0xf]
        %v2595 = vld [vmem:[%s2586 + $0x20] sm:$0xf]
        %v2596 = vld [vmem:[%s2586 + $0x24] sm:$0xf]
        %v2597 = vld [vmem:[%s2586 + $0x28] sm:$0xf]
        %v2598 = vld [vmem:[%s2586 + $0x2c] sm:$0xf]
        %v2599 = vld [vmem:[%s2586 + $0x30] sm:$0xf]
        %v2600 = vld [vmem:[%s2586 + $0x34] sm:$0xf]
        %v2601 = vld [vmem:[%s2586 + $0x38] sm:$0xf]
        %v2602 = vld [vmem:[%s2586 + $0x3c] sm:$0xf]
        %v2611 = vunpack.c.l.b16 %v2265
        %v2612 = vunpack.c.l.b16 %v2578
        %v2613 = vunpack.c.l.b16 %v2268
        %v2614 = vunpack.c.l.b16 %v2579
        %v2615 = vunpack.c.l.b16 %v2271
        %v2616 = vunpack.c.l.b16 %v2580
        %v2617 = vunpack.c.l.b16 %v2274
        %v2618 = vunpack.c.l.b16 %v2581
        %v2619 = vunpack.c.l.b16 %v2277
        %v2620 = vunpack.c.l.b16 %v2582
        %v2621 = vunpack.c.l.b16 %v2280
        %v2622 = vunpack.c.l.b16 %v2583
        %v2623 = vunpack.c.l.b16 %v2283
        %v2624 = vunpack.c.l.b16 %v2584
        %v2625 = vunpack.c.l.b16 %v2286
        %v2626 = vunpack.c.l.b16 %v2585
        %v2627 = vpack.c.b16 %v2612, %v2611
        %v2628 = vpack.c.b16 %v2614, %v2613
        %v2629 = vpack.c.b16 %v2616, %v2615
        %v2630 = vpack.c.b16 %v2618, %v2617
        %v2631 = vpack.c.b16 %v2620, %v2619
        %v2632 = vpack.c.b16 %v2622, %v2621
        %v2633 = vpack.c.b16 %v2624, %v2623
        %v2634 = vpack.c.b16 %v2626, %v2625
        %v2659 = vunpack.c.l.b16 %v2587
        %v2660 = vunpack.c.l.b16 %v2588
        %v2661 = vunpack.c.l.b16 %v2589
        %v2662 = vunpack.c.l.b16 %v2590
        %v2663 = vunpack.c.l.b16 %v2591
        %v2664 = vunpack.c.l.b16 %v2592
        %v2665 = vunpack.c.l.b16 %v2593
        %v2666 = vunpack.c.l.b16 %v2594
        %v2667 = vunpack.c.l.b16 %v2595
        %v2668 = vunpack.c.l.b16 %v2596
        %v2669 = vunpack.c.l.b16 %v2597
        %v2670 = vunpack.c.l.b16 %v2598
        %v2671 = vunpack.c.l.b16 %v2599
        %v2672 = vunpack.c.l.b16 %v2600
        %v2673 = vunpack.c.l.b16 %v2601
        %v2674 = vunpack.c.l.b16 %v2602
        %v2675 = vpack.c.b16 %v2660, %v2659
        %v2676 = vpack.c.b16 %v2662, %v2661
        %v2677 = vpack.c.b16 %v2664, %v2663
        %v2678 = vpack.c.b16 %v2666, %v2665
        %v2679 = vpack.c.b16 %v2668, %v2667
        %v2680 = vpack.c.b16 %v2670, %v2669
        %v2681 = vpack.c.b16 %v2672, %v2671
        %v2682 = vpack.c.b16 %v2674, %v2673
        %2691 = vmatprep.subr.bf16.mxu0 0
        %2692 = vmatpush1.bf16.msra.mxu0 %v2682
        %2693 = vmatprep.subr.bf16.mxu0 0
        %2694 = vmatpush1.bf16.msra.mxu0 %v2681
        %2695 = vmatprep.subr.bf16.mxu0 0
        %2696 = vmatpush1.bf16.msra.mxu0 %v2680
        %2697 = vmatprep.subr.bf16.mxu0 0
        %2698 = vmatpush1.bf16.msra.mxu0 %v2679
        %2699 = vmatprep.subr.bf16.mxu0 0
        %2700 = vmatpush1.bf16.msra.mxu0 %v2678
        %2701 = vmatprep.subr.bf16.mxu0 0
        %2702 = vmatpush1.bf16.msra.mxu0 %v2677
        %2703 = vmatprep.subr.bf16.mxu0 0
        %2704 = vmatpush1.bf16.msra.mxu0 %v2676
        %2705 = vmatprep.subr.bf16.mxu0 0
        %2706 = vmatpush1.bf16.msra.mxu0 %v2675
        %2707 = vmatprep.subr.bf16.mxu0 0
        %2708 = vmatpush2.bf16.msra.mxu0 0
        %2709 = vmatprep.subr.bf16.mxu0 0
        %2710 = vmatpush2.bf16.msra.mxu0 0
        %2711 = vmatprep.subr.bf16.mxu0 0
        %2712 = vmatpush2.bf16.msra.mxu0 0
        %2713 = vmatprep.subr.bf16.mxu0 0
        %2714 = vmatpush2.bf16.msra.mxu0 0
        %2715 = vmatprep.subr.bf16.mxu0 0
        %2716 = vmatpush2.bf16.msra.mxu0 0
        %2717 = vmatprep.subr.bf16.mxu0 0
        %2718 = vmatpush2.bf16.msra.mxu0 0
        %2719 = vmatprep.subr.bf16.mxu0 0
        %2720 = vmatpush2.bf16.msra.mxu0 0
        %2721 = vmatprep.subr.bf16.mxu0 0
        %2722 = vmatpush2.bf16.msra.mxu0 0
        %2723 = vmatprep.mubr.bf16.mxu0 0
        %2724 = vmatmul.mubr.bf16.gmra.mxu0 %v2627
        %v2725 = vpop.f32.mrf.mxu0
        %v2726 = vadd.f32 0.0, %v2725
        %v2727 = vpop.f32.mrf.mxu0
        %v2728 = vpop.f32.mrf.mxu0
        %v2729 = vadd.f32 0.0, %v2728
        %v2730 = vpop.f32.mrf.mxu0
        %2731 = vmatprep.mubr.bf16.mxu0 0
        %2732 = vmatmul.mubr.bf16.gmra.mxu0 %v2628
        %v2733 = vpop.f32.mrf.mxu0
        %v2734 = vadd.f32 0.0, %v2733
        %v2735 = vpop.f32.mrf.mxu0
        %v2736 = vpop.f32.mrf.mxu0
        %v2737 = vadd.f32 0.0, %v2736
        %v2738 = vpop.f32.mrf.mxu0
        %2739 = vmatprep.mubr.bf16.mxu0 0
        %2740 = vmatmul.mubr.bf16.gmra.mxu0 %v2629
        %v2741 = vpop.f32.mrf.mxu0
        %v2742 = vadd.f32 0.0, %v2741
        %v2743 = vpop.f32.mrf.mxu0
        %v2744 = vpop.f32.mrf.mxu0
        %v2745 = vadd.f32 0.0, %v2744
        %v2746 = vpop.f32.mrf.mxu0
        %2747 = vmatprep.mubr.bf16.mxu0 0
        %2748 = vmatmul.mubr.bf16.gmra.mxu0 %v2630
        %v2749 = vpop.f32.mrf.mxu0
        %v2750 = vadd.f32 0.0, %v2749
        %v2751 = vpop.f32.mrf.mxu0
        %v2752 = vpop.f32.mrf.mxu0
        %v2753 = vadd.f32 0.0, %v2752
        %v2754 = vpop.f32.mrf.mxu0
        %2755 = vmatprep.mubr.bf16.mxu0 0
        %2756 = vmatmul.mubr.bf16.gmra.mxu0 %v2631
        %v2757 = vpop.f32.mrf.mxu0
        %v2758 = vadd.f32 0.0, %v2757
        %v2759 = vpop.f32.mrf.mxu0
        %v2760 = vpop.f32.mrf.mxu0
        %v2761 = vadd.f32 0.0, %v2760
        %v2762 = vpop.f32.mrf.mxu0
        %2763 = vmatprep.mubr.bf16.mxu0 0
        %2764 = vmatmul.mubr.bf16.gmra.mxu0 %v2632
        %v2765 = vpop.f32.mrf.mxu0
        %v2766 = vadd.f32 0.0, %v2765
        %v2767 = vpop.f32.mrf.mxu0
        %v2768 = vpop.f32.mrf.mxu0
        %v2769 = vadd.f32 0.0, %v2768
        %v2770 = vpop.f32.mrf.mxu0
        %2771 = vmatprep.mubr.bf16.mxu0 0
        %2772 = vmatmul.mubr.bf16.gmra.mxu0 %v2633
        %v2773 = vpop.f32.mrf.mxu0
        %v2774 = vadd.f32 0.0, %v2773
        %v2775 = vpop.f32.mrf.mxu0
        %v2776 = vpop.f32.mrf.mxu0
        %v2777 = vadd.f32 0.0, %v2776
        %v2778 = vpop.f32.mrf.mxu0
        %2779 = vmatprep.mubr.bf16.mxu0 0
        %2780 = vmatmul.mubr.bf16.gmra.mxu0 %v2634
        %v2781 = vpop.f32.mrf.mxu0
        %v2782 = vadd.f32 0.0, %v2781
        %v2783 = vpop.f32.mrf.mxu0
        %v2784 = vpop.f32.mrf.mxu0
        %v2785 = vadd.f32 0.0, %v2784
        %v2786 = vpop.f32.mrf.mxu0
        %2787 = vdwg.mxu0
        %v2788 = vadd.f32 %v2562, %v2726
        %v2789 = vadd.f32 %v2563, %v2729
        %v2790 = vadd.f32 %v2564, %v2734
        %v2791 = vadd.f32 %v2565, %v2737
        %v2792 = vadd.f32 %v2566, %v2742
        %v2793 = vadd.f32 %v2567, %v2745
        %v2794 = vadd.f32 %v2568, %v2750
        %v2795 = vadd.f32 %v2569, %v2753
        %v2796 = vadd.f32 %v2570, %v2758
        %v2797 = vadd.f32 %v2571, %v2761
        %v2798 = vadd.f32 %v2572, %v2766
        %v2799 = vadd.f32 %v2573, %v2769
        %v2800 = vadd.f32 %v2574, %v2774
        %v2801 = vadd.f32 %v2575, %v2777
        %v2802 = vadd.f32 %v2576, %v2782
        %v2803 = vadd.f32 %v2577, %v2785
        %v2804 = vld [vmem:[%s2263 + $0x4] sm:$0xe]
        %v2805 = vld [vmem:[%s2263 + $0x8] sm:$0xf]
        %v2806 = vld [vmem:[%s2263 + $0xc] sm:$0x1]
        %v2807 = vld [vmem:[%s2263 + $0x14] sm:$0xe]
        %v2808 = vld [vmem:[%s2263 + $0x18] sm:$0xf]
        %v2809 = vld [vmem:[%s2263 + $0x1c] sm:$0x1]
        %v2810 = vld [vmem:[%s2263 + $0x24] sm:$0xe]
        %v2811 = vld [vmem:[%s2263 + $0x28] sm:$0xf]
        %v2812 = vld [vmem:[%s2263 + $0x2c] sm:$0x1]
        %v2813 = vld [vmem:[%s2263 + $0x34] sm:$0xe]
        %v2814 = vld [vmem:[%s2263 + $0x38] sm:$0xf]
        %v2815 = vld [vmem:[%s2263 + $0x3c] sm:$0x1]
        %v2816 = vld [vmem:[%s2263 + $0x44] sm:$0xe]
        %v2817 = vld [vmem:[%s2263 + $0x48] sm:$0xf]
        %v2818 = vld [vmem:[%s2263 + $0x4c] sm:$0x1]
        %v2819 = vld [vmem:[%s2263 + $0x54] sm:$0xe]
        %v2820 = vld [vmem:[%s2263 + $0x58] sm:$0xf]
        %v2821 = vld [vmem:[%s2263 + $0x5c] sm:$0x1]
        %v2822 = vld [vmem:[%s2263 + $0x64] sm:$0xe]
        %v2823 = vld [vmem:[%s2263 + $0x68] sm:$0xf]
        %v2824 = vld [vmem:[%s2263 + $0x6c] sm:$0x1]
        %v2825 = vld [vmem:[%s2263 + $0x74] sm:$0xe]
        %v2826 = vld [vmem:[%s2263 + $0x78] sm:$0xf]
        %v2827 = vld [vmem:[%s2263 + $0x7c] sm:$0x1]
        %v2852 = vrot.slane %v2804, 5
        %v2853 = vrot.slane %v2852, 4
        %v2854 = vrot.slane %v2805, 5
        %v2855 = vsel %vm1203, %v2853, %v2854
        %v2856 = vrot.slane %v2854, 4
        %v2857 = vrot.slane %v2806, 5
        %v2858 = vsel %vm1203, %v2856, %v2857
        %v2859 = vrot.slane %v2807, 5
        %v2860 = vrot.slane %v2859, 4
        %v2861 = vrot.slane %v2808, 5
        %v2862 = vsel %vm1203, %v2860, %v2861
        %v2863 = vrot.slane %v2861, 4
        %v2864 = vrot.slane %v2809, 5
        %v2865 = vsel %vm1203, %v2863, %v2864
        %v2866 = vrot.slane %v2810, 5
        %v2867 = vrot.slane %v2866, 4
        %v2868 = vrot.slane %v2811, 5
        %v2869 = vsel %vm1203, %v2867, %v2868
        %v2870 = vrot.slane %v2868, 4
        %v2871 = vrot.slane %v2812, 5
        %v2872 = vsel %vm1203, %v2870, %v2871
        %v2873 = vrot.slane %v2813, 5
        %v2874 = vrot.slane %v2873, 4
        %v2875 = vrot.slane %v2814, 5
        %v2876 = vsel %vm1203, %v2874, %v2875
        %v2877 = vrot.slane %v2875, 4
        %v2878 = vrot.slane %v2815, 5
        %v2879 = vsel %vm1203, %v2877, %v2878
        %v2880 = vrot.slane %v2816, 5
        %v2881 = vrot.slane %v2880, 4
        %v2882 = vrot.slane %v2817, 5
        %v2883 = vsel %vm1203, %v2881, %v2882
        %v2884 = vrot.slane %v2882, 4
        %v2885 = vrot.slane %v2818, 5
        %v2886 = vsel %vm1203, %v2884, %v2885
        %v2887 = vrot.slane %v2819, 5
        %v2888 = vrot.slane %v2887, 4
        %v2889 = vrot.slane %v2820, 5
        %v2890 = vsel %vm1203, %v2888, %v2889
        %v2891 = vrot.slane %v2889, 4
        %v2892 = vrot.slane %v2821, 5
        %v2893 = vsel %vm1203, %v2891, %v2892
        %v2894 = vrot.slane %v2822, 5
        %v2895 = vrot.slane %v2894, 4
        %v2896 = vrot.slane %v2823, 5
        %v2897 = vsel %vm1203, %v2895, %v2896
        %v2898 = vrot.slane %v2896, 4
        %v2899 = vrot.slane %v2824, 5
        %v2900 = vsel %vm1203, %v2898, %v2899
        %v2901 = vrot.slane %v2825, 5
        %v2902 = vrot.slane %v2901, 4
        %v2903 = vrot.slane %v2826, 5
        %v2904 = vsel %vm1203, %v2902, %v2903
        %v2905 = vrot.slane %v2903, 4
        %v2906 = vrot.slane %v2827, 5
        %v2907 = vsel %vm1203, %v2905, %v2906
        %s2908 = scalar_lea.vmem %s3, 512
        %v2909 = vld [vmem:[%s2908] sm:$0xf]
        %v2910 = vld [vmem:[%s2908 + $0x4] sm:$0xf]
        %v2911 = vld [vmem:[%s2908 + $0x8] sm:$0xf]
        %v2912 = vld [vmem:[%s2908 + $0xc] sm:$0xf]
        %v2913 = vld [vmem:[%s2908 + $0x10] sm:$0xf]
        %v2914 = vld [vmem:[%s2908 + $0x14] sm:$0xf]
        %v2915 = vld [vmem:[%s2908 + $0x18] sm:$0xf]
        %v2916 = vld [vmem:[%s2908 + $0x1c] sm:$0xf]
        %v2917 = vld [vmem:[%s2908 + $0x20] sm:$0xf]
        %v2918 = vld [vmem:[%s2908 + $0x24] sm:$0xf]
        %v2919 = vld [vmem:[%s2908 + $0x28] sm:$0xf]
        %v2920 = vld [vmem:[%s2908 + $0x2c] sm:$0xf]
        %v2921 = vld [vmem:[%s2908 + $0x30] sm:$0xf]
        %v2922 = vld [vmem:[%s2908 + $0x34] sm:$0xf]
        %v2923 = vld [vmem:[%s2908 + $0x38] sm:$0xf]
        %v2924 = vld [vmem:[%s2908 + $0x3c] sm:$0xf]
        %v2925 = vunpack.c.l.b16 %v2855
        %v2926 = vunpack.c.l.b16 %v2858
        %v2927 = vunpack.c.l.b16 %v2862
        %v2928 = vunpack.c.l.b16 %v2865
        %v2929 = vunpack.c.l.b16 %v2869
        %v2930 = vunpack.c.l.b16 %v2872
        %v2931 = vunpack.c.l.b16 %v2876
        %v2932 = vunpack.c.l.b16 %v2879
        %v2933 = vunpack.c.l.b16 %v2883
        %v2934 = vunpack.c.l.b16 %v2886
        %v2935 = vunpack.c.l.b16 %v2890
        %v2936 = vunpack.c.l.b16 %v2893
        %v2937 = vunpack.c.l.b16 %v2897
        %v2938 = vunpack.c.l.b16 %v2900
        %v2939 = vunpack.c.l.b16 %v2904
        %v2940 = vunpack.c.l.b16 %v2907
        %v2941 = vpack.c.b16 %v2926, %v2925
        %v2942 = vpack.c.b16 %v2928, %v2927
        %v2943 = vpack.c.b16 %v2930, %v2929
        %v2944 = vpack.c.b16 %v2932, %v2931
        %v2945 = vpack.c.b16 %v2934, %v2933
        %v2946 = vpack.c.b16 %v2936, %v2935
        %v2947 = vpack.c.b16 %v2938, %v2937
        %v2948 = vpack.c.b16 %v2940, %v2939
        %v2973 = vunpack.c.l.b16 %v2909
        %v2974 = vunpack.c.l.b16 %v2910
        %v2975 = vunpack.c.l.b16 %v2911
        %v2976 = vunpack.c.l.b16 %v2912
        %v2977 = vunpack.c.l.b16 %v2913
        %v2978 = vunpack.c.l.b16 %v2914
        %v2979 = vunpack.c.l.b16 %v2915
        %v2980 = vunpack.c.l.b16 %v2916
        %v2981 = vunpack.c.l.b16 %v2917
        %v2982 = vunpack.c.l.b16 %v2918
        %v2983 = vunpack.c.l.b16 %v2919
        %v2984 = vunpack.c.l.b16 %v2920
        %v2985 = vunpack.c.l.b16 %v2921
        %v2986 = vunpack.c.l.b16 %v2922
        %v2987 = vunpack.c.l.b16 %v2923
        %v2988 = vunpack.c.l.b16 %v2924
        %v2989 = vpack.c.b16 %v2974, %v2973
        %v2990 = vpack.c.b16 %v2976, %v2975
        %v2991 = vpack.c.b16 %v2978, %v2977
        %v2992 = vpack.c.b16 %v2980, %v2979
        %v2993 = vpack.c.b16 %v2982, %v2981
        %v2994 = vpack.c.b16 %v2984, %v2983
        %v2995 = vpack.c.b16 %v2986, %v2985
        %v2996 = vpack.c.b16 %v2988, %v2987
        %3005 = vmatprep.subr.bf16.mxu0 0
        %3006 = vmatpush1.bf16.msra.mxu0 %v2996
        %3007 = vmatprep.subr.bf16.mxu0 0
        %3008 = vmatpush1.bf16.msra.mxu0 %v2995
        %3009 = vmatprep.subr.bf16.mxu0 0
        %3010 = vmatpush1.bf16.msra.mxu0 %v2994
        %3011 = vmatprep.subr.bf16.mxu0 0
        %3012 = vmatpush1.bf16.msra.mxu0 %v2993
        %3013 = vmatprep.subr.bf16.mxu0 0
        %3014 = vmatpush1.bf16.msra.mxu0 %v2992
        %3015 = vmatprep.subr.bf16.mxu0 0
        %3016 = vmatpush1.bf16.msra.mxu0 %v2991
        %3017 = vmatprep.subr.bf16.mxu0 0
        %3018 = vmatpush1.bf16.msra.mxu0 %v2990
        %3019 = vmatprep.subr.bf16.mxu0 0
        %3020 = vmatpush1.bf16.msra.mxu0 %v2989
        %3021 = vmatprep.subr.bf16.mxu0 0
        %3022 = vmatpush2.bf16.msra.mxu0 0
        %3023 = vmatprep.subr.bf16.mxu0 0
        %3024 = vmatpush2.bf16.msra.mxu0 0
        %3025 = vmatprep.subr.bf16.mxu0 0
        %3026 = vmatpush2.bf16.msra.mxu0 0
        %3027 = vmatprep.subr.bf16.mxu0 0
        %3028 = vmatpush2.bf16.msra.mxu0 0
        %3029 = vmatprep.subr.bf16.mxu0 0
        %3030 = vmatpush2.bf16.msra.mxu0 0
        %3031 = vmatprep.subr.bf16.mxu0 0
        %3032 = vmatpush2.bf16.msra.mxu0 0
        %3033 = vmatprep.subr.bf16.mxu0 0
        %3034 = vmatpush2.bf16.msra.mxu0 0
        %3035 = vmatprep.subr.bf16.mxu0 0
        %3036 = vmatpush2.bf16.msra.mxu0 0
        %3037 = vmatprep.mubr.bf16.mxu0 0
        %3038 = vmatmul.mubr.bf16.gmra.mxu0 %v2941
        %v3039 = vpop.f32.mrf.mxu0
        %v3040 = vadd.f32 0.0, %v3039
        %v3041 = vpop.f32.mrf.mxu0
        %v3042 = vpop.f32.mrf.mxu0
        %v3043 = vadd.f32 0.0, %v3042
        %v3044 = vpop.f32.mrf.mxu0
        %3045 = vmatprep.mubr.bf16.mxu0 0
        %3046 = vmatmul.mubr.bf16.gmra.mxu0 %v2942
        %v3047 = vpop.f32.mrf.mxu0
        %v3048 = vadd.f32 0.0, %v3047
        %v3049 = vpop.f32.mrf.mxu0
        %v3050 = vpop.f32.mrf.mxu0
        %v3051 = vadd.f32 0.0, %v3050
        %v3052 = vpop.f32.mrf.mxu0
        %3053 = vmatprep.mubr.bf16.mxu0 0
        %3054 = vmatmul.mubr.bf16.gmra.mxu0 %v2943
        %v3055 = vpop.f32.mrf.mxu0
        %v3056 = vadd.f32 0.0, %v3055
        %v3057 = vpop.f32.mrf.mxu0
        %v3058 = vpop.f32.mrf.mxu0
        %v3059 = vadd.f32 0.0, %v3058
        %v3060 = vpop.f32.mrf.mxu0
        %3061 = vmatprep.mubr.bf16.mxu0 0
        %3062 = vmatmul.mubr.bf16.gmra.mxu0 %v2944
        %v3063 = vpop.f32.mrf.mxu0
        %v3064 = vadd.f32 0.0, %v3063
        %v3065 = vpop.f32.mrf.mxu0
        %v3066 = vpop.f32.mrf.mxu0
        %v3067 = vadd.f32 0.0, %v3066
        %v3068 = vpop.f32.mrf.mxu0
        %3069 = vmatprep.mubr.bf16.mxu0 0
        %3070 = vmatmul.mubr.bf16.gmra.mxu0 %v2945
        %v3071 = vpop.f32.mrf.mxu0
        %v3072 = vadd.f32 0.0, %v3071
        %v3073 = vpop.f32.mrf.mxu0
        %v3074 = vpop.f32.mrf.mxu0
        %v3075 = vadd.f32 0.0, %v3074
        %v3076 = vpop.f32.mrf.mxu0
        %3077 = vmatprep.mubr.bf16.mxu0 0
        %3078 = vmatmul.mubr.bf16.gmra.mxu0 %v2946
        %v3079 = vpop.f32.mrf.mxu0
        %v3080 = vadd.f32 0.0, %v3079
        %v3081 = vpop.f32.mrf.mxu0
        %v3082 = vpop.f32.mrf.mxu0
        %v3083 = vadd.f32 0.0, %v3082
        %v3084 = vpop.f32.mrf.mxu0
        %3085 = vmatprep.mubr.bf16.mxu0 0
        %3086 = vmatmul.mubr.bf16.gmra.mxu0 %v2947
        %v3087 = vpop.f32.mrf.mxu0
        %v3088 = vadd.f32 0.0, %v3087
        %v3089 = vpop.f32.mrf.mxu0
        %v3090 = vpop.f32.mrf.mxu0
        %v3091 = vadd.f32 0.0, %v3090
        %v3092 = vpop.f32.mrf.mxu0
        %3093 = vmatprep.mubr.bf16.mxu0 0
        %3094 = vmatmul.mubr.bf16.gmra.mxu0 %v2948
        %v3095 = vpop.f32.mrf.mxu0
        %v3096 = vadd.f32 0.0, %v3095
        %v3097 = vpop.f32.mrf.mxu0
        %v3098 = vpop.f32.mrf.mxu0
        %v3099 = vadd.f32 0.0, %v3098
        %v3100 = vpop.f32.mrf.mxu0
        %3101 = vdwg.mxu0
        %v3102 = vadd.f32 %v2788, %v3040
        %v3103 = vadd.f32 %v2789, %v3043
        %v3104 = vadd.f32 %v2790, %v3048
        %v3105 = vadd.f32 %v2791, %v3051
        %v3106 = vadd.f32 %v2792, %v3056
        %v3107 = vadd.f32 %v2793, %v3059
        %v3108 = vadd.f32 %v2794, %v3064
        %v3109 = vadd.f32 %v2795, %v3067
        %v3110 = vadd.f32 %v2796, %v3072
        %v3111 = vadd.f32 %v2797, %v3075
        %v3112 = vadd.f32 %v2798, %v3080
        %v3113 = vadd.f32 %v2799, %v3083
        %v3114 = vadd.f32 %v2800, %v3088
        %v3115 = vadd.f32 %v2801, %v3091
        %v3116 = vadd.f32 %v2802, %v3096
        %v3117 = vadd.f32 %v2803, %v3099
        %v3118 = vld [vmem:[%s4] sm:$0x1]
        %v3120 = vlaneseq
        %v3121 = vshrl.u32 %v3120, 7
        %v3122 = vsub.s32 0, %v3121
        %v3123 = vrot.slane %v3118, %v3122
        %v3125 = vadd.f32 %v3102, %v3123
        %v3126 = vadd.f32 %v3103, %v3123
        %v3127 = vadd.f32 %v3104, %v3123
        %v3128 = vadd.f32 %v3105, %v3123
        %v3129 = vadd.f32 %v3106, %v3123
        %v3130 = vadd.f32 %v3107, %v3123
        %v3131 = vadd.f32 %v3108, %v3123
        %v3132 = vadd.f32 %v3109, %v3123
        %v3133 = vadd.f32 %v3110, %v3123
        %v3134 = vadd.f32 %v3111, %v3123
        %v3135 = vadd.f32 %v3112, %v3123
        %v3136 = vadd.f32 %v3113, %v3123
        %v3137 = vadd.f32 %v3114, %v3123
        %v3138 = vadd.f32 %v3115, %v3123
        %v3139 = vadd.f32 %v3116, %v3123
        %v3140 = vadd.f32 %v3117, %v3123
        %v3141 = vmax.f32 %v3125, 0.0
        %v3142 = vmax.f32 %v3126, 0.0
        %v3143 = vmax.f32 %v3127, 0.0
        %v3144 = vmax.f32 %v3128, 0.0
        %v3145 = vmax.f32 %v3129, 0.0
        %v3146 = vmax.f32 %v3130, 0.0
        %v3147 = vmax.f32 %v3131, 0.0
        %v3148 = vmax.f32 %v3132, 0.0
        %v3149 = vmax.f32 %v3133, 0.0
        %v3150 = vmax.f32 %v3134, 0.0
        %v3151 = vmax.f32 %v3135, 0.0
        %v3152 = vmax.f32 %v3136, 0.0
        %v3153 = vmax.f32 %v3137, 0.0
        %v3154 = vmax.f32 %v3138, 0.0
        %v3155 = vmax.f32 %v3139, 0.0
        %v3156 = vmax.f32 %v3140, 0.0
        %v3157 = vpack.c.bf16 %v3142, %v3141
        %v3158 = vpack.c.bf16 %v3144, %v3143
        %v3159 = vpack.c.bf16 %v3146, %v3145
        %v3160 = vpack.c.bf16 %v3148, %v3147
        %v3161 = vpack.c.bf16 %v3150, %v3149
        %v3162 = vpack.c.bf16 %v3152, %v3151
        %v3163 = vpack.c.bf16 %v3154, %v3153
        %v3164 = vpack.c.bf16 %v3156, %v3155
        %s3165 = scalar_lea.vmem [#allocation2], 64
        %v3166 = vld [vmem:[%s3165] sm:$0xf]
        %v3167 = vld [vmem:[%s3165 + $0x4] sm:$0xf]
        %v3168 = vld [vmem:[%s3165 + $0x8] sm:$0xf]
        %v3169 = vld [vmem:[%s3165 + $0xc] sm:$0xf]
        %v3170 = vld [vmem:[%s3165 + $0x10] sm:$0xf]
        %v3171 = vld [vmem:[%s3165 + $0x14] sm:$0xf]
        %v3172 = vld [vmem:[%s3165 + $0x18] sm:$0xf]
        %v3173 = vld [vmem:[%s3165 + $0x1c] sm:$0xf]
        %v3174 = vld [vmem:[%s3165 + $0x20] sm:$0xf]
        %v3175 = vld [vmem:[%s3165 + $0x24] sm:$0xf]
        %v3176 = vld [vmem:[%s3165 + $0x28] sm:$0xf]
        %v3177 = vld [vmem:[%s3165 + $0x2c] sm:$0xf]
        %v3178 = vld [vmem:[%s3165 + $0x30] sm:$0xf]
        %v3179 = vld [vmem:[%s3165 + $0x34] sm:$0xf]
        %v3180 = vld [vmem:[%s3165 + $0x38] sm:$0xf]
        %v3181 = vld [vmem:[%s3165 + $0x3c] sm:$0xf]
        %v3198 = vunpack.c.l.b16 %v3166
        %v3199 = vunpack.c.l.b16 %v3167
        %v3200 = vunpack.c.l.b16 %v3168
        %v3201 = vunpack.c.l.b16 %v3169
        %v3202 = vunpack.c.l.b16 %v3170
        %v3203 = vunpack.c.l.b16 %v3171
        %v3204 = vunpack.c.l.b16 %v3172
        %v3205 = vunpack.c.l.b16 %v3173
        %v3206 = vunpack.c.l.b16 %v3174
        %v3207 = vunpack.c.l.b16 %v3175
        %v3208 = vunpack.c.l.b16 %v3176
        %v3209 = vunpack.c.l.b16 %v3177
        %v3210 = vunpack.c.l.b16 %v3178
        %v3211 = vunpack.c.l.b16 %v3179
        %v3212 = vunpack.c.l.b16 %v3180
        %v3213 = vunpack.c.l.b16 %v3181
        %v3214 = vpack.c.b16 %v3199, %v3198
        %v3215 = vpack.c.b16 %v3201, %v3200
        %v3216 = vpack.c.b16 %v3203, %v3202
        %v3217 = vpack.c.b16 %v3205, %v3204
        %v3218 = vpack.c.b16 %v3207, %v3206
        %v3219 = vpack.c.b16 %v3209, %v3208
        %v3220 = vpack.c.b16 %v3211, %v3210
        %v3221 = vpack.c.b16 %v3213, %v3212
        %3230 = vmatprep.subr.bf16.mxu0 0
        %3231 = vmatpush1.bf16.msra.mxu0 %v3221
        %3232 = vmatprep.subr.bf16.mxu0 0
        %3233 = vmatpush1.bf16.msra.mxu0 %v3220
        %3234 = vmatprep.subr.bf16.mxu0 0
        %3235 = vmatpush1.bf16.msra.mxu0 %v3219
        %3236 = vmatprep.subr.bf16.mxu0 0
        %3237 = vmatpush1.bf16.msra.mxu0 %v3218
        %3238 = vmatprep.subr.bf16.mxu0 0
        %3239 = vmatpush1.bf16.msra.mxu0 %v3217
        %3240 = vmatprep.subr.bf16.mxu0 0
        %3241 = vmatpush1.bf16.msra.mxu0 %v3216
        %3242 = vmatprep.subr.bf16.mxu0 0
        %3243 = vmatpush1.bf16.msra.mxu0 %v3215
        %3244 = vmatprep.subr.bf16.mxu0 0
        %3245 = vmatpush1.bf16.msra.mxu0 %v3214
        %3246 = vmatprep.subr.bf16.mxu0 0
        %3247 = vmatpush2.bf16.msra.mxu0 0
        %3248 = vmatprep.subr.bf16.mxu0 0
        %3249 = vmatpush2.bf16.msra.mxu0 0
        %3250 = vmatprep.subr.bf16.mxu0 0
        %3251 = vmatpush2.bf16.msra.mxu0 0
        %3252 = vmatprep.subr.bf16.mxu0 0
        %3253 = vmatpush2.bf16.msra.mxu0 0
        %3254 = vmatprep.subr.bf16.mxu0 0
        %3255 = vmatpush2.bf16.msra.mxu0 0
        %3256 = vmatprep.subr.bf16.mxu0 0
        %3257 = vmatpush2.bf16.msra.mxu0 0
        %3258 = vmatprep.subr.bf16.mxu0 0
        %3259 = vmatpush2.bf16.msra.mxu0 0
        %3260 = vmatprep.subr.bf16.mxu0 0
        %3261 = vmatpush2.bf16.msra.mxu0 0
        %3262 = vmatprep.mubr.bf16.mxu0 0
        %3263 = vmatmul.mubr.bf16.gmra.mxu0 %v3157
        %v3264 = vpop.f32.mrf.mxu0
        %v3265 = vadd.f32 0.0, %v3264
        %v3266 = vpop.f32.mrf.mxu0
        %v3267 = vpop.f32.mrf.mxu0
        %v3268 = vadd.f32 0.0, %v3267
        %v3269 = vpop.f32.mrf.mxu0
        %3270 = vmatprep.mubr.bf16.mxu0 0
        %3271 = vmatmul.mubr.bf16.gmra.mxu0 %v3158
        %v3272 = vpop.f32.mrf.mxu0
        %v3273 = vadd.f32 0.0, %v3272
        %v3274 = vpop.f32.mrf.mxu0
        %v3275 = vpop.f32.mrf.mxu0
        %v3276 = vadd.f32 0.0, %v3275
        %v3277 = vpop.f32.mrf.mxu0
        %3278 = vmatprep.mubr.bf16.mxu0 0
        %3279 = vmatmul.mubr.bf16.gmra.mxu0 %v3159
        %v3280 = vpop.f32.mrf.mxu0
        %v3281 = vadd.f32 0.0, %v3280
        %v3282 = vpop.f32.mrf.mxu0
        %v3283 = vpop.f32.mrf.mxu0
        %v3284 = vadd.f32 0.0, %v3283
        %v3285 = vpop.f32.mrf.mxu0
        %3286 = vmatprep.mubr.bf16.mxu0 0
        %3287 = vmatmul.mubr.bf16.gmra.mxu0 %v3160
        %v3288 = vpop.f32.mrf.mxu0
        %v3289 = vadd.f32 0.0, %v3288
        %v3290 = vpop.f32.mrf.mxu0
        %v3291 = vpop.f32.mrf.mxu0
        %v3292 = vadd.f32 0.0, %v3291
        %v3293 = vpop.f32.mrf.mxu0
        %3294 = vmatprep.mubr.bf16.mxu0 0
        %3295 = vmatmul.mubr.bf16.gmra.mxu0 %v3161
        %v3296 = vpop.f32.mrf.mxu0
        %v3297 = vadd.f32 0.0, %v3296
        %v3298 = vpop.f32.mrf.mxu0
        %v3299 = vpop.f32.mrf.mxu0
        %v3300 = vadd.f32 0.0, %v3299
        %v3301 = vpop.f32.mrf.mxu0
        %3302 = vmatprep.mubr.bf16.mxu0 0
        %3303 = vmatmul.mubr.bf16.gmra.mxu0 %v3162
        %v3304 = vpop.f32.mrf.mxu0
        %v3305 = vadd.f32 0.0, %v3304
        %v3306 = vpop.f32.mrf.mxu0
        %v3307 = vpop.f32.mrf.mxu0
        %v3308 = vadd.f32 0.0, %v3307
        %v3309 = vpop.f32.mrf.mxu0
        %3310 = vmatprep.mubr.bf16.mxu0 0
        %3311 = vmatmul.mubr.bf16.gmra.mxu0 %v3163
        %v3312 = vpop.f32.mrf.mxu0
        %v3313 = vadd.f32 0.0, %v3312
        %v3314 = vpop.f32.mrf.mxu0
        %v3315 = vpop.f32.mrf.mxu0
        %v3316 = vadd.f32 0.0, %v3315
        %v3317 = vpop.f32.mrf.mxu0
        %3318 = vmatprep.mubr.bf16.mxu0 0
        %3319 = vmatmul.mubr.bf16.gmra.mxu0 %v3164
        %v3320 = vpop.f32.mrf.mxu0
        %v3321 = vadd.f32 0.0, %v3320
        %v3322 = vpop.f32.mrf.mxu0
        %v3323 = vpop.f32.mrf.mxu0
        %v3324 = vadd.f32 0.0, %v3323
        %v3325 = vpop.f32.mrf.mxu0
        %3326 = vdwg.mxu0
        %v3343 = vunpack.c.l.b16 %v623
        %v3344 = vunpack.c.l.b16 %v624
        %v3345 = vunpack.c.l.b16 %v625
        %v3346 = vunpack.c.l.b16 %v626
        %v3347 = vunpack.c.l.b16 %v627
        %v3348 = vunpack.c.l.b16 %v628
        %v3349 = vunpack.c.l.b16 %v629
        %v3350 = vunpack.c.l.b16 %v630
        %v3351 = vunpack.c.l.b16 %v631
        %v3352 = vunpack.c.l.b16 %v632
        %v3353 = vunpack.c.l.b16 %v633
        %v3354 = vunpack.c.l.b16 %v634
        %v3355 = vunpack.c.l.b16 %v635
        %v3356 = vunpack.c.l.b16 %v636
        %v3357 = vunpack.c.l.b16 %v637
        %v3358 = vunpack.c.l.b16 %v638
        %v3359 = vpack.c.b16 %v3344, %v3343
        %v3360 = vpack.c.b16 %v3346, %v3345
        %v3361 = vpack.c.b16 %v3348, %v3347
        %v3362 = vpack.c.b16 %v3350, %v3349
        %v3363 = vpack.c.b16 %v3352, %v3351
        %v3364 = vpack.c.b16 %v3354, %v3353
        %v3365 = vpack.c.b16 %v3356, %v3355
        %v3366 = vpack.c.b16 %v3358, %v3357
        %3375 = vmatprep.subr.bf16.mxu0 0
        %3376 = vmatpush1.bf16.msra.mxu0 %v3366
        %3377 = vmatprep.subr.bf16.mxu0 0
        %3378 = vmatpush1.bf16.msra.mxu0 %v3365
        %3379 = vmatprep.subr.bf16.mxu0 0
        %3380 = vmatpush1.bf16.msra.mxu0 %v3364
        %3381 = vmatprep.subr.bf16.mxu0 0
        %3382 = vmatpush1.bf16.msra.mxu0 %v3363
        %3383 = vmatprep.subr.bf16.mxu0 0
        %3384 = vmatpush1.bf16.msra.mxu0 %v3362
        %3385 = vmatprep.subr.bf16.mxu0 0
        %3386 = vmatpush1.bf16.msra.mxu0 %v3361
        %3387 = vmatprep.subr.bf16.mxu0 0
        %3388 = vmatpush1.bf16.msra.mxu0 %v3360
        %3389 = vmatprep.subr.bf16.mxu0 0
        %3390 = vmatpush1.bf16.msra.mxu0 %v3359
        %3391 = vmatprep.subr.bf16.mxu0 0
        %3392 = vmatpush2.bf16.msra.mxu0 0
        %3393 = vmatprep.subr.bf16.mxu0 0
        %3394 = vmatpush2.bf16.msra.mxu0 0
        %3395 = vmatprep.subr.bf16.mxu0 0
        %3396 = vmatpush2.bf16.msra.mxu0 0
        %3397 = vmatprep.subr.bf16.mxu0 0
        %3398 = vmatpush2.bf16.msra.mxu0 0
        %3399 = vmatprep.subr.bf16.mxu0 0
        %3400 = vmatpush2.bf16.msra.mxu0 0
        %3401 = vmatprep.subr.bf16.mxu0 0
        %3402 = vmatpush2.bf16.msra.mxu0 0
        %3403 = vmatprep.subr.bf16.mxu0 0
        %3404 = vmatpush2.bf16.msra.mxu0 0
        %3405 = vmatprep.subr.bf16.mxu0 0
        %3406 = vmatpush2.bf16.msra.mxu0 0
        %3407 = vmatprep.mubr.bf16.mxu0 0
        %3408 = vmatmul.mubr.bf16.gmra.mxu0 %v615
        %v3409 = vpop.f32.mrf.mxu0
        %v3410 = vadd.f32 %v3265, %v3409
        %v3411 = vpop.f32.mrf.mxu0
        %v3412 = vpop.f32.mrf.mxu0
        %v3413 = vadd.f32 %v3268, %v3412
        %v3414 = vpop.f32.mrf.mxu0
        %3415 = vmatprep.mubr.bf16.mxu0 0
        %3416 = vmatmul.mubr.bf16.gmra.mxu0 %v616
        %v3417 = vpop.f32.mrf.mxu0
        %v3418 = vadd.f32 %v3273, %v3417
        %v3419 = vpop.f32.mrf.mxu0
        %v3420 = vpop.f32.mrf.mxu0
        %v3421 = vadd.f32 %v3276, %v3420
        %v3422 = vpop.f32.mrf.mxu0
        %3423 = vmatprep.mubr.bf16.mxu0 0
        %3424 = vmatmul.mubr.bf16.gmra.mxu0 %v617
        %v3425 = vpop.f32.mrf.mxu0
        %v3426 = vadd.f32 %v3281, %v3425
        %v3427 = vpop.f32.mrf.mxu0
        %v3428 = vpop.f32.mrf.mxu0
        %v3429 = vadd.f32 %v3284, %v3428
        %v3430 = vpop.f32.mrf.mxu0
        %3431 = vmatprep.mubr.bf16.mxu0 0
        %3432 = vmatmul.mubr.bf16.gmra.mxu0 %v618
        %v3433 = vpop.f32.mrf.mxu0
        %v3434 = vadd.f32 %v3289, %v3433
        %v3435 = vpop.f32.mrf.mxu0
        %v3436 = vpop.f32.mrf.mxu0
        %v3437 = vadd.f32 %v3292, %v3436
        %v3438 = vpop.f32.mrf.mxu0
        %3439 = vmatprep.mubr.bf16.mxu0 0
        %3440 = vmatmul.mubr.bf16.gmra.mxu0 %v619
        %v3441 = vpop.f32.mrf.mxu0
        %v3442 = vadd.f32 %v3297, %v3441
        %v3443 = vpop.f32.mrf.mxu0
        %v3444 = vpop.f32.mrf.mxu0
        %v3445 = vadd.f32 %v3300, %v3444
        %v3446 = vpop.f32.mrf.mxu0
        %3447 = vmatprep.mubr.bf16.mxu0 0
        %3448 = vmatmul.mubr.bf16.gmra.mxu0 %v620
        %v3449 = vpop.f32.mrf.mxu0
        %v3450 = vadd.f32 %v3305, %v3449
        %v3451 = vpop.f32.mrf.mxu0
        %v3452 = vpop.f32.mrf.mxu0
        %v3453 = vadd.f32 %v3308, %v3452
        %v3454 = vpop.f32.mrf.mxu0
        %3455 = vmatprep.mubr.bf16.mxu0 0
        %3456 = vmatmul.mubr.bf16.gmra.mxu0 %v621
        %v3457 = vpop.f32.mrf.mxu0
        %v3458 = vadd.f32 %v3313, %v3457
        %v3459 = vpop.f32.mrf.mxu0
        %v3460 = vpop.f32.mrf.mxu0
        %v3461 = vadd.f32 %v3316, %v3460
        %v3462 = vpop.f32.mrf.mxu0
        %3463 = vmatprep.mubr.bf16.mxu0 0
        %3464 = vmatmul.mubr.bf16.gmra.mxu0 %v622
        %v3465 = vpop.f32.mrf.mxu0
        %v3466 = vadd.f32 %v3321, %v3465
        %v3467 = vpop.f32.mrf.mxu0
        %v3468 = vpop.f32.mrf.mxu0
        %v3469 = vadd.f32 %v3324, %v3468
        %v3470 = vpop.f32.mrf.mxu0
        %3471 = vdwg.mxu0
        %s3472 = sadd.s32 %s362, 2
        %s3473 = smul.u32 %s3472, 4
        %s3474 = smul.addr %s3473, 4
        %s3475 = scalar_lea.vmem %s359, %s3474
        %v3476 = vld [vmem:[%s3475] sm:$0xc]
        %v3477 = vld [vmem:[%s3475 + $0x4] sm:$0xf]
        %v3478 = vld [vmem:[%s3475 + $0x8] sm:$0x3]
        %v3479 = vld [vmem:[%s3475 + $0x10] sm:$0xc]
        %v3480 = vld [vmem:[%s3475 + $0x14] sm:$0xf]
        %v3481 = vld [vmem:[%s3475 + $0x18] sm:$0x3]
        %v3482 = vld [vmem:[%s3475 + $0x20] sm:$0xc]
        %v3483 = vld [vmem:[%s3475 + $0x24] sm:$0xf]
        %v3484 = vld [vmem:[%s3475 + $0x28] sm:$0x3]
        %v3485 = vld [vmem:[%s3475 + $0x30] sm:$0xc]
        %v3486 = vld [vmem:[%s3475 + $0x34] sm:$0xf]
        %v3487 = vld [vmem:[%s3475 + $0x38] sm:$0x3]
        %v3488 = vld [vmem:[%s3475 + $0x40] sm:$0xc]
        %v3489 = vld [vmem:[%s3475 + $0x44] sm:$0xf]
        %v3490 = vld [vmem:[%s3475 + $0x48] sm:$0x3]
        %v3491 = vld [vmem:[%s3475 + $0x50] sm:$0xc]
        %v3492 = vld [vmem:[%s3475 + $0x54] sm:$0xf]
        %v3493 = vld [vmem:[%s3475 + $0x58] sm:$0x3]
        %v3494 = vld [vmem:[%s3475 + $0x60] sm:$0xc]
        %v3495 = vld [vmem:[%s3475 + $0x64] sm:$0xf]
        %v3496 = vld [vmem:[%s3475 + $0x68] sm:$0x3]
        %v3497 = vld [vmem:[%s3475 + $0x70] sm:$0xc]
        %v3498 = vld [vmem:[%s3475 + $0x74] sm:$0xf]
        %v3499 = vld [vmem:[%s3475 + $0x78] sm:$0x3]
        %vm3524 = vcmask 1041408
        %vm3525 = vcmask 1045508
        %vm3526 = vmor %vm3524, %vm3525
        %v3527 = vrot.slane %v3476, 6
        %v3528 = vrot.slane %v3527, 4
        %v3529 = vrot.slane %v3477, 6
        %v3530 = vsel %vm3526, %v3528, %v3529
        %v3531 = vrot.slane %v3529, 4
        %v3532 = vrot.slane %v3478, 6
        %v3533 = vsel %vm3526, %v3531, %v3532
        %v3534 = vrot.slane %v3479, 6
        %v3535 = vrot.slane %v3534, 4
        %v3536 = vrot.slane %v3480, 6
        %v3537 = vsel %vm3526, %v3535, %v3536
        %v3538 = vrot.slane %v3536, 4
        %v3539 = vrot.slane %v3481, 6
        %v3540 = vsel %vm3526, %v3538, %v3539
        %v3541 = vrot.slane %v3482, 6
        %v3542 = vrot.slane %v3541, 4
        %v3543 = vrot.slane %v3483, 6
        %v3544 = vsel %vm3526, %v3542, %v3543
        %v3545 = vrot.slane %v3543, 4
        %v3546 = vrot.slane %v3484, 6
        %v3547 = vsel %vm3526, %v3545, %v3546
        %v3548 = vrot.slane %v3485, 6
        %v3549 = vrot.slane %v3548, 4
        %v3550 = vrot.slane %v3486, 6
        %v3551 = vsel %vm3526, %v3549, %v3550
        %v3552 = vrot.slane %v3550, 4
        %v3553 = vrot.slane %v3487, 6
        %v3554 = vsel %vm3526, %v3552, %v3553
        %v3555 = vrot.slane %v3488, 6
        %v3556 = vrot.slane %v3555, 4
        %v3557 = vrot.slane %v3489, 6
        %v3558 = vsel %vm3526, %v3556, %v3557
        %v3559 = vrot.slane %v3557, 4
        %v3560 = vrot.slane %v3490, 6
        %v3561 = vsel %vm3526, %v3559, %v3560
        %v3562 = vrot.slane %v3491, 6
        %v3563 = vrot.slane %v3562, 4
        %v3564 = vrot.slane %v3492, 6
        %v3565 = vsel %vm3526, %v3563, %v3564
        %v3566 = vrot.slane %v3564, 4
        %v3567 = vrot.slane %v3493, 6
        %v3568 = vsel %vm3526, %v3566, %v3567
        %v3569 = vrot.slane %v3494, 6
        %v3570 = vrot.slane %v3569, 4
        %v3571 = vrot.slane %v3495, 6
        %v3572 = vsel %vm3526, %v3570, %v3571
        %v3573 = vrot.slane %v3571, 4
        %v3574 = vrot.slane %v3496, 6
        %v3575 = vsel %vm3526, %v3573, %v3574
        %v3576 = vrot.slane %v3497, 6
        %v3577 = vrot.slane %v3576, 4
        %v3578 = vrot.slane %v3498, 6
        %v3579 = vsel %vm3526, %v3577, %v3578
        %v3580 = vrot.slane %v3578, 4
        %v3581 = vrot.slane %v3499, 6
        %v3582 = vsel %vm3526, %v3580, %v3581
        %s3583 = scalar_lea.vmem %s3, 576
        %v3584 = vld [vmem:[%s3583] sm:$0xf]
        %v3585 = vld [vmem:[%s3583 + $0x4] sm:$0xf]
        %v3586 = vld [vmem:[%s3583 + $0x8] sm:$0xf]
        %v3587 = vld [vmem:[%s3583 + $0xc] sm:$0xf]
        %v3588 = vld [vmem:[%s3583 + $0x10] sm:$0xf]
        %v3589 = vld [vmem:[%s3583 + $0x14] sm:$0xf]
        %v3590 = vld [vmem:[%s3583 + $0x18] sm:$0xf]
        %v3591 = vld [vmem:[%s3583 + $0x1c] sm:$0xf]
        %v3592 = vld [vmem:[%s3583 + $0x20] sm:$0xf]
        %v3593 = vld [vmem:[%s3583 + $0x24] sm:$0xf]
        %v3594 = vld [vmem:[%s3583 + $0x28] sm:$0xf]
        %v3595 = vld [vmem:[%s3583 + $0x2c] sm:$0xf]
        %v3596 = vld [vmem:[%s3583 + $0x30] sm:$0xf]
        %v3597 = vld [vmem:[%s3583 + $0x34] sm:$0xf]
        %v3598 = vld [vmem:[%s3583 + $0x38] sm:$0xf]
        %v3599 = vld [vmem:[%s3583 + $0x3c] sm:$0xf]
        %v3600 = vld [vmem:[%s3475 + $0x8] sm:$0xf]
        %v3601 = vld [vmem:[%s3475 + $0x18] sm:$0xf]
        %v3602 = vld [vmem:[%s3475 + $0x28] sm:$0xf]
        %v3603 = vld [vmem:[%s3475 + $0x38] sm:$0xf]
        %v3604 = vld [vmem:[%s3475 + $0x48] sm:$0xf]
        %v3605 = vld [vmem:[%s3475 + $0x58] sm:$0xf]
        %v3606 = vld [vmem:[%s3475 + $0x68] sm:$0xf]
        %v3607 = vld [vmem:[%s3475 + $0x78] sm:$0xf]
        %s3608 = scalar_lea.vmem %s3, 640
        %v3609 = vld [vmem:[%s3608] sm:$0xf]
        %v3610 = vld [vmem:[%s3608 + $0x4] sm:$0xf]
        %v3611 = vld [vmem:[%s3608 + $0x8] sm:$0xf]
        %v3612 = vld [vmem:[%s3608 + $0xc] sm:$0xf]
        %v3613 = vld [vmem:[%s3608 + $0x10] sm:$0xf]
        %v3614 = vld [vmem:[%s3608 + $0x14] sm:$0xf]
        %v3615 = vld [vmem:[%s3608 + $0x18] sm:$0xf]
        %v3616 = vld [vmem:[%s3608 + $0x1c] sm:$0xf]
        %v3617 = vld [vmem:[%s3608 + $0x20] sm:$0xf]
        %v3618 = vld [vmem:[%s3608 + $0x24] sm:$0xf]
        %v3619 = vld [vmem:[%s3608 + $0x28] sm:$0xf]
        %v3620 = vld [vmem:[%s3608 + $0x2c] sm:$0xf]
        %v3621 = vld [vmem:[%s3608 + $0x30] sm:$0xf]
        %v3622 = vld [vmem:[%s3608 + $0x34] sm:$0xf]
        %v3623 = vld [vmem:[%s3608 + $0x38] sm:$0xf]
        %v3624 = vld [vmem:[%s3608 + $0x3c] sm:$0xf]
        %v3633 = vunpack.c.l.b16 %v3477
        %v3634 = vunpack.c.l.b16 %v3600
        %v3635 = vunpack.c.l.b16 %v3480
        %v3636 = vunpack.c.l.b16 %v3601
        %v3637 = vunpack.c.l.b16 %v3483
        %v3638 = vunpack.c.l.b16 %v3602
        %v3639 = vunpack.c.l.b16 %v3486
        %v3640 = vunpack.c.l.b16 %v3603
        %v3641 = vunpack.c.l.b16 %v3489
        %v3642 = vunpack.c.l.b16 %v3604
        %v3643 = vunpack.c.l.b16 %v3492
        %v3644 = vunpack.c.l.b16 %v3605
        %v3645 = vunpack.c.l.b16 %v3495
        %v3646 = vunpack.c.l.b16 %v3606
        %v3647 = vunpack.c.l.b16 %v3498
        %v3648 = vunpack.c.l.b16 %v3607
        %v3649 = vpack.c.b16 %v3634, %v3633
        %v3650 = vpack.c.b16 %v3636, %v3635
        %v3651 = vpack.c.b16 %v3638, %v3637
        %v3652 = vpack.c.b16 %v3640, %v3639
        %v3653 = vpack.c.b16 %v3642, %v3641
        %v3654 = vpack.c.b16 %v3644, %v3643
        %v3655 = vpack.c.b16 %v3646, %v3645
        %v3656 = vpack.c.b16 %v3648, %v3647
        %v3681 = vunpack.c.l.b16 %v3609
        %v3682 = vunpack.c.l.b16 %v3610
        %v3683 = vunpack.c.l.b16 %v3611
        %v3684 = vunpack.c.l.b16 %v3612
        %v3685 = vunpack.c.l.b16 %v3613
        %v3686 = vunpack.c.l.b16 %v3614
        %v3687 = vunpack.c.l.b16 %v3615
        %v3688 = vunpack.c.l.b16 %v3616
        %v3689 = vunpack.c.l.b16 %v3617
        %v3690 = vunpack.c.l.b16 %v3618
        %v3691 = vunpack.c.l.b16 %v3619
        %v3692 = vunpack.c.l.b16 %v3620
        %v3693 = vunpack.c.l.b16 %v3621
        %v3694 = vunpack.c.l.b16 %v3622
        %v3695 = vunpack.c.l.b16 %v3623
        %v3696 = vunpack.c.l.b16 %v3624
        %v3697 = vpack.c.b16 %v3682, %v3681
        %v3698 = vpack.c.b16 %v3684, %v3683
        %v3699 = vpack.c.b16 %v3686, %v3685
        %v3700 = vpack.c.b16 %v3688, %v3687
        %v3701 = vpack.c.b16 %v3690, %v3689
        %v3702 = vpack.c.b16 %v3692, %v3691
        %v3703 = vpack.c.b16 %v3694, %v3693
        %v3704 = vpack.c.b16 %v3696, %v3695
        %3713 = vmatprep.subr.bf16.mxu0 0
        %3714 = vmatpush1.bf16.msra.mxu0 %v3704
        %3715 = vmatprep.subr.bf16.mxu0 0
        %3716 = vmatpush1.bf16.msra.mxu0 %v3703
        %3717 = vmatprep.subr.bf16.mxu0 0
        %3718 = vmatpush1.bf16.msra.mxu0 %v3702
        %3719 = vmatprep.subr.bf16.mxu0 0
        %3720 = vmatpush1.bf16.msra.mxu0 %v3701
        %3721 = vmatprep.subr.bf16.mxu0 0
        %3722 = vmatpush1.bf16.msra.mxu0 %v3700
        %3723 = vmatprep.subr.bf16.mxu0 0
        %3724 = vmatpush1.bf16.msra.mxu0 %v3699
        %3725 = vmatprep.subr.bf16.mxu0 0
        %3726 = vmatpush1.bf16.msra.mxu0 %v3698
        %3727 = vmatprep.subr.bf16.mxu0 0
        %3728 = vmatpush1.bf16.msra.mxu0 %v3697
        %3729 = vmatprep.subr.bf16.mxu0 0
        %3730 = vmatpush2.bf16.msra.mxu0 0
        %3731 = vmatprep.subr.bf16.mxu0 0
        %3732 = vmatpush2.bf16.msra.mxu0 0
        %3733 = vmatprep.subr.bf16.mxu0 0
        %3734 = vmatpush2.bf16.msra.mxu0 0
        %3735 = vmatprep.subr.bf16.mxu0 0
        %3736 = vmatpush2.bf16.msra.mxu0 0
        %3737 = vmatprep.subr.bf16.mxu0 0
        %3738 = vmatpush2.bf16.msra.mxu0 0
        %3739 = vmatprep.subr.bf16.mxu0 0
        %3740 = vmatpush2.bf16.msra.mxu0 0
        %3741 = vmatprep.subr.bf16.mxu0 0
        %3742 = vmatpush2.bf16.msra.mxu0 0
        %3743 = vmatprep.subr.bf16.mxu0 0
        %3744 = vmatpush2.bf16.msra.mxu0 0
        %3745 = vmatprep.mubr.bf16.mxu0 0
        %3746 = vmatmul.mubr.bf16.gmra.mxu0 %v3649
        %v3747 = vpop.f32.mrf.mxu0
        %v3748 = vadd.f32 0.0, %v3747
        %v3749 = vpop.f32.mrf.mxu0
        %v3750 = vpop.f32.mrf.mxu0
        %v3751 = vadd.f32 0.0, %v3750
        %v3752 = vpop.f32.mrf.mxu0
        %3753 = vmatprep.mubr.bf16.mxu0 0
        %3754 = vmatmul.mubr.bf16.gmra.mxu0 %v3650
        %v3755 = vpop.f32.mrf.mxu0
        %v3756 = vadd.f32 0.0, %v3755
        %v3757 = vpop.f32.mrf.mxu0
        %v3758 = vpop.f32.mrf.mxu0
        %v3759 = vadd.f32 0.0, %v3758
        %v3760 = vpop.f32.mrf.mxu0
        %3761 = vmatprep.mubr.bf16.mxu0 0
        %3762 = vmatmul.mubr.bf16.gmra.mxu0 %v3651
        %v3763 = vpop.f32.mrf.mxu0
        %v3764 = vadd.f32 0.0, %v3763
        %v3765 = vpop.f32.mrf.mxu0
        %v3766 = vpop.f32.mrf.mxu0
        %v3767 = vadd.f32 0.0, %v3766
        %v3768 = vpop.f32.mrf.mxu0
        %3769 = vmatprep.mubr.bf16.mxu0 0
        %3770 = vmatmul.mubr.bf16.gmra.mxu0 %v3652
        %v3771 = vpop.f32.mrf.mxu0
        %v3772 = vadd.f32 0.0, %v3771
        %v3773 = vpop.f32.mrf.mxu0
        %v3774 = vpop.f32.mrf.mxu0
        %v3775 = vadd.f32 0.0, %v3774
        %v3776 = vpop.f32.mrf.mxu0
        %3777 = vmatprep.mubr.bf16.mxu0 0
        %3778 = vmatmul.mubr.bf16.gmra.mxu0 %v3653
        %v3779 = vpop.f32.mrf.mxu0
        %v3780 = vadd.f32 0.0, %v3779
        %v3781 = vpop.f32.mrf.mxu0
        %v3782 = vpop.f32.mrf.mxu0
        %v3783 = vadd.f32 0.0, %v3782
        %v3784 = vpop.f32.mrf.mxu0
        %3785 = vmatprep.mubr.bf16.mxu0 0
        %3786 = vmatmul.mubr.bf16.gmra.mxu0 %v3654
        %v3787 = vpop.f32.mrf.mxu0
        %v3788 = vadd.f32 0.0, %v3787
        %v3789 = vpop.f32.mrf.mxu0
        %v3790 = vpop.f32.mrf.mxu0
        %v3791 = vadd.f32 0.0, %v3790
        %v3792 = vpop.f32.mrf.mxu0
        %3793 = vmatprep.mubr.bf16.mxu0 0
        %3794 = vmatmul.mubr.bf16.gmra.mxu0 %v3655
        %v3795 = vpop.f32.mrf.mxu0
        %v3796 = vadd.f32 0.0, %v3795
        %v3797 = vpop.f32.mrf.mxu0
        %v3798 = vpop.f32.mrf.mxu0
        %v3799 = vadd.f32 0.0, %v3798
        %v3800 = vpop.f32.mrf.mxu0
        %3801 = vmatprep.mubr.bf16.mxu0 0
        %3802 = vmatmul.mubr.bf16.gmra.mxu0 %v3656
        %v3803 = vpop.f32.mrf.mxu0
        %v3804 = vadd.f32 0.0, %v3803
        %v3805 = vpop.f32.mrf.mxu0
        %v3806 = vpop.f32.mrf.mxu0
        %v3807 = vadd.f32 0.0, %v3806
        %v3808 = vpop.f32.mrf.mxu0
        %3809 = vdwg.mxu0
        %v3810 = vunpack.c.l.b16 %v3530
        %v3811 = vunpack.c.l.b16 %v3533
        %v3812 = vunpack.c.l.b16 %v3537
        %v3813 = vunpack.c.l.b16 %v3540
        %v3814 = vunpack.c.l.b16 %v3544
        %v3815 = vunpack.c.l.b16 %v3547
        %v3816 = vunpack.c.l.b16 %v3551
        %v3817 = vunpack.c.l.b16 %v3554
        %v3818 = vunpack.c.l.b16 %v3558
        %v3819 = vunpack.c.l.b16 %v3561
        %v3820 = vunpack.c.l.b16 %v3565
        %v3821 = vunpack.c.l.b16 %v3568
        %v3822 = vunpack.c.l.b16 %v3572
        %v3823 = vunpack.c.l.b16 %v3575
        %v3824 = vunpack.c.l.b16 %v3579
        %v3825 = vunpack.c.l.b16 %v3582
        %v3826 = vpack.c.b16 %v3811, %v3810
        %v3827 = vpack.c.b16 %v3813, %v3812
        %v3828 = vpack.c.b16 %v3815, %v3814
        %v3829 = vpack.c.b16 %v3817, %v3816
        %v3830 = vpack.c.b16 %v3819, %v3818
        %v3831 = vpack.c.b16 %v3821, %v3820
        %v3832 = vpack.c.b16 %v3823, %v3822
        %v3833 = vpack.c.b16 %v3825, %v3824
        %v3858 = vunpack.c.l.b16 %v3584
        %v3859 = vunpack.c.l.b16 %v3585
        %v3860 = vunpack.c.l.b16 %v3586
        %v3861 = vunpack.c.l.b16 %v3587
        %v3862 = vunpack.c.l.b16 %v3588
        %v3863 = vunpack.c.l.b16 %v3589
        %v3864 = vunpack.c.l.b16 %v3590
        %v3865 = vunpack.c.l.b16 %v3591
        %v3866 = vunpack.c.l.b16 %v3592
        %v3867 = vunpack.c.l.b16 %v3593
        %v3868 = vunpack.c.l.b16 %v3594
        %v3869 = vunpack.c.l.b16 %v3595
        %v3870 = vunpack.c.l.b16 %v3596
        %v3871 = vunpack.c.l.b16 %v3597
        %v3872 = vunpack.c.l.b16 %v3598
        %v3873 = vunpack.c.l.b16 %v3599
        %v3874 = vpack.c.b16 %v3859, %v3858
        %v3875 = vpack.c.b16 %v3861, %v3860
        %v3876 = vpack.c.b16 %v3863, %v3862
        %v3877 = vpack.c.b16 %v3865, %v3864
        %v3878 = vpack.c.b16 %v3867, %v3866
        %v3879 = vpack.c.b16 %v3869, %v3868
        %v3880 = vpack.c.b16 %v3871, %v3870
        %v3881 = vpack.c.b16 %v3873, %v3872
        %3890 = vmatprep.subr.bf16.mxu0 0
        %3891 = vmatpush1.bf16.msra.mxu0 %v3881
        %3892 = vmatprep.subr.bf16.mxu0 0
        %3893 = vmatpush1.bf16.msra.mxu0 %v3880
        %3894 = vmatprep.subr.bf16.mxu0 0
        %3895 = vmatpush1.bf16.msra.mxu0 %v3879
        %3896 = vmatprep.subr.bf16.mxu0 0
        %3897 = vmatpush1.bf16.msra.mxu0 %v3878
        %3898 = vmatprep.subr.bf16.mxu0 0
        %3899 = vmatpush1.bf16.msra.mxu0 %v3877
        %3900 = vmatprep.subr.bf16.mxu0 0
        %3901 = vmatpush1.bf16.msra.mxu0 %v3876
        %3902 = vmatprep.subr.bf16.mxu0 0
        %3903 = vmatpush1.bf16.msra.mxu0 %v3875
        %3904 = vmatprep.subr.bf16.mxu0 0
        %3905 = vmatpush1.bf16.msra.mxu0 %v3874
        %3906 = vmatprep.subr.bf16.mxu0 0
        %3907 = vmatpush2.bf16.msra.mxu0 0
        %3908 = vmatprep.subr.bf16.mxu0 0
        %3909 = vmatpush2.bf16.msra.mxu0 0
        %3910 = vmatprep.subr.bf16.mxu0 0
        %3911 = vmatpush2.bf16.msra.mxu0 0
        %3912 = vmatprep.subr.bf16.mxu0 0
        %3913 = vmatpush2.bf16.msra.mxu0 0
        %3914 = vmatprep.subr.bf16.mxu0 0
        %3915 = vmatpush2.bf16.msra.mxu0 0
        %3916 = vmatprep.subr.bf16.mxu0 0
        %3917 = vmatpush2.bf16.msra.mxu0 0
        %3918 = vmatprep.subr.bf16.mxu0 0
        %3919 = vmatpush2.bf16.msra.mxu0 0
        %3920 = vmatprep.subr.bf16.mxu0 0
        %3921 = vmatpush2.bf16.msra.mxu0 0
        %3922 = vmatprep.mubr.bf16.mxu0 0
        %3923 = vmatmul.mubr.bf16.gmra.mxu0 %v3826
        %v3924 = vpop.f32.mrf.mxu0
        %v3925 = vadd.f32 %v3748, %v3924
        %v3926 = vpop.f32.mrf.mxu0
        %v3927 = vpop.f32.mrf.mxu0
        %v3928 = vadd.f32 %v3751, %v3927
        %v3929 = vpop.f32.mrf.mxu0
        %3930 = vmatprep.mubr.bf16.mxu0 0
        %3931 = vmatmul.mubr.bf16.gmra.mxu0 %v3827
        %v3932 = vpop.f32.mrf.mxu0
        %v3933 = vadd.f32 %v3756, %v3932
        %v3934 = vpop.f32.mrf.mxu0
        %v3935 = vpop.f32.mrf.mxu0
        %v3936 = vadd.f32 %v3759, %v3935
        %v3937 = vpop.f32.mrf.mxu0
        %3938 = vmatprep.mubr.bf16.mxu0 0
        %3939 = vmatmul.mubr.bf16.gmra.mxu0 %v3828
        %v3940 = vpop.f32.mrf.mxu0
        %v3941 = vadd.f32 %v3764, %v3940
        %v3942 = vpop.f32.mrf.mxu0
        %v3943 = vpop.f32.mrf.mxu0
        %v3944 = vadd.f32 %v3767, %v3943
        %v3945 = vpop.f32.mrf.mxu0
        %3946 = vmatprep.mubr.bf16.mxu0 0
        %3947 = vmatmul.mubr.bf16.gmra.mxu0 %v3829
        %v3948 = vpop.f32.mrf.mxu0
        %v3949 = vadd.f32 %v3772, %v3948
        %v3950 = vpop.f32.mrf.mxu0
        %v3951 = vpop.f32.mrf.mxu0
        %v3952 = vadd.f32 %v3775, %v3951
        %v3953 = vpop.f32.mrf.mxu0
        %3954 = vmatprep.mubr.bf16.mxu0 0
        %3955 = vmatmul.mubr.bf16.gmra.mxu0 %v3830
        %v3956 = vpop.f32.mrf.mxu0
        %v3957 = vadd.f32 %v3780, %v3956
        %v3958 = vpop.f32.mrf.mxu0
        %v3959 = vpop.f32.mrf.mxu0
        %v3960 = vadd.f32 %v3783, %v3959
        %v3961 = vpop.f32.mrf.mxu0
        %3962 = vmatprep.mubr.bf16.mxu0 0
        %3963 = vmatmul.mubr.bf16.gmra.mxu0 %v3831
        %v3964 = vpop.f32.mrf.mxu0
        %v3965 = vadd.f32 %v3788, %v3964
        %v3966 = vpop.f32.mrf.mxu0
        %v3967 = vpop.f32.mrf.mxu0
        %v3968 = vadd.f32 %v3791, %v3967
        %v3969 = vpop.f32.mrf.mxu0
        %3970 = vmatprep.mubr.bf16.mxu0 0
        %3971 = vmatmul.mubr.bf16.gmra.mxu0 %v3832
        %v3972 = vpop.f32.mrf.mxu0
        %v3973 = vadd.f32 %v3796, %v3972
        %v3974 = vpop.f32.mrf.mxu0
        %v3975 = vpop.f32.mrf.mxu0
        %v3976 = vadd.f32 %v3799, %v3975
        %v3977 = vpop.f32.mrf.mxu0
        %3978 = vmatprep.mubr.bf16.mxu0 0
        %3979 = vmatmul.mubr.bf16.gmra.mxu0 %v3833
        %v3980 = vpop.f32.mrf.mxu0
        %v3981 = vadd.f32 %v3804, %v3980
        %v3982 = vpop.f32.mrf.mxu0
        %v3983 = vpop.f32.mrf.mxu0
        %v3984 = vadd.f32 %v3807, %v3983
        %v3985 = vpop.f32.mrf.mxu0
        %3986 = vdwg.mxu0
        %v3987 = vld [vmem:[%s3475 + $0x4] sm:$0xc]
        %v3988 = vld [vmem:[%s3475 + $0x8] sm:$0xf]
        %v3989 = vld [vmem:[%s3475 + $0xc] sm:$0x3]
        %v3990 = vld [vmem:[%s3475 + $0x14] sm:$0xc]
        %v3991 = vld [vmem:[%s3475 + $0x18] sm:$0xf]
        %v3992 = vld [vmem:[%s3475 + $0x1c] sm:$0x3]
        %v3993 = vld [vmem:[%s3475 + $0x24] sm:$0xc]
        %v3994 = vld [vmem:[%s3475 + $0x28] sm:$0xf]
        %v3995 = vld [vmem:[%s3475 + $0x2c] sm:$0x3]
        %v3996 = vld [vmem:[%s3475 + $0x34] sm:$0xc]
        %v3997 = vld [vmem:[%s3475 + $0x38] sm:$0xf]
        %v3998 = vld [vmem:[%s3475 + $0x3c] sm:$0x3]
        %v3999 = vld [vmem:[%s3475 + $0x44] sm:$0xc]
        %v4000 = vld [vmem:[%s3475 + $0x48] sm:$0xf]
        %v4001 = vld [vmem:[%s3475 + $0x4c] sm:$0x3]
        %v4002 = vld [vmem:[%s3475 + $0x54] sm:$0xc]
        %v4003 = vld [vmem:[%s3475 + $0x58] sm:$0xf]
        %v4004 = vld [vmem:[%s3475 + $0x5c] sm:$0x3]
        %v4005 = vld [vmem:[%s3475 + $0x64] sm:$0xc]
        %v4006 = vld [vmem:[%s3475 + $0x68] sm:$0xf]
        %v4007 = vld [vmem:[%s3475 + $0x6c] sm:$0x3]
        %v4008 = vld [vmem:[%s3475 + $0x74] sm:$0xc]
        %v4009 = vld [vmem:[%s3475 + $0x78] sm:$0xf]
        %v4010 = vld [vmem:[%s3475 + $0x7c] sm:$0x3]
        %v4035 = vrot.slane %v3987, 6
        %v4036 = vrot.slane %v4035, 4
        %v4037 = vrot.slane %v3988, 6
        %v4038 = vsel %vm3526, %v4036, %v4037
        %v4039 = vrot.slane %v4037, 4
        %v4040 = vrot.slane %v3989, 6
        %v4041 = vsel %vm3526, %v4039, %v4040
        %v4042 = vrot.slane %v3990, 6
        %v4043 = vrot.slane %v4042, 4
        %v4044 = vrot.slane %v3991, 6
        %v4045 = vsel %vm3526, %v4043, %v4044
        %v4046 = vrot.slane %v4044, 4
        %v4047 = vrot.slane %v3992, 6
        %v4048 = vsel %vm3526, %v4046, %v4047
        %v4049 = vrot.slane %v3993, 6
        %v4050 = vrot.slane %v4049, 4
        %v4051 = vrot.slane %v3994, 6
        %v4052 = vsel %vm3526, %v4050, %v4051
        %v4053 = vrot.slane %v4051, 4
        %v4054 = vrot.slane %v3995, 6
        %v4055 = vsel %vm3526, %v4053, %v4054
        %v4056 = vrot.slane %v3996, 6
        %v4057 = vrot.slane %v4056, 4
        %v4058 = vrot.slane %v3997, 6
        %v4059 = vsel %vm3526, %v4057, %v4058
        %v4060 = vrot.slane %v4058, 4
        %v4061 = vrot.slane %v3998, 6
        %v4062 = vsel %vm3526, %v4060, %v4061
        %v4063 = vrot.slane %v3999, 6
        %v4064 = vrot.slane %v4063, 4
        %v4065 = vrot.slane %v4000, 6
        %v4066 = vsel %vm3526, %v4064, %v4065
        %v4067 = vrot.slane %v4065, 4
        %v4068 = vrot.slane %v4001, 6
        %v4069 = vsel %vm3526, %v4067, %v4068
        %v4070 = vrot.slane %v4002, 6
        %v4071 = vrot.slane %v4070, 4
        %v4072 = vrot.slane %v4003, 6
        %v4073 = vsel %vm3526, %v4071, %v4072
        %v4074 = vrot.slane %v4072, 4
        %v4075 = vrot.slane %v4004, 6
        %v4076 = vsel %vm3526, %v4074, %v4075
        %v4077 = vrot.slane %v4005, 6
        %v4078 = vrot.slane %v4077, 4
        %v4079 = vrot.slane %v4006, 6
        %v4080 = vsel %vm3526, %v4078, %v4079
        %v4081 = vrot.slane %v4079, 4
        %v4082 = vrot.slane %v4007, 6
        %v4083 = vsel %vm3526, %v4081, %v4082
        %v4084 = vrot.slane %v4008, 6
        %v4085 = vrot.slane %v4084, 4
        %v4086 = vrot.slane %v4009, 6
        %v4087 = vsel %vm3526, %v4085, %v4086
        %v4088 = vrot.slane %v4086, 4
        %v4089 = vrot.slane %v4010, 6
        %v4090 = vsel %vm3526, %v4088, %v4089
        %s4091 = scalar_lea.vmem %s3, 704
        %v4092 = vld [vmem:[%s4091] sm:$0xf]
        %v4093 = vld [vmem:[%s4091 + $0x4] sm:$0xf]
        %v4094 = vld [vmem:[%s4091 + $0x8] sm:$0xf]
        %v4095 = vld [vmem:[%s4091 + $0xc] sm:$0xf]
        %v4096 = vld [vmem:[%s4091 + $0x10] sm:$0xf]
        %v4097 = vld [vmem:[%s4091 + $0x14] sm:$0xf]
        %v4098 = vld [vmem:[%s4091 + $0x18] sm:$0xf]
        %v4099 = vld [vmem:[%s4091 + $0x1c] sm:$0xf]
        %v4100 = vld [vmem:[%s4091 + $0x20] sm:$0xf]
        %v4101 = vld [vmem:[%s4091 + $0x24] sm:$0xf]
        %v4102 = vld [vmem:[%s4091 + $0x28] sm:$0xf]
        %v4103 = vld [vmem:[%s4091 + $0x2c] sm:$0xf]
        %v4104 = vld [vmem:[%s4091 + $0x30] sm:$0xf]
        %v4105 = vld [vmem:[%s4091 + $0x34] sm:$0xf]
        %v4106 = vld [vmem:[%s4091 + $0x38] sm:$0xf]
        %v4107 = vld [vmem:[%s4091 + $0x3c] sm:$0xf]
        %v4108 = vunpack.c.l.b16 %v4038
        %v4109 = vunpack.c.l.b16 %v4041
        %v4110 = vunpack.c.l.b16 %v4045
        %v4111 = vunpack.c.l.b16 %v4048
        %v4112 = vunpack.c.l.b16 %v4052
        %v4113 = vunpack.c.l.b16 %v4055
        %v4114 = vunpack.c.l.b16 %v4059
        %v4115 = vunpack.c.l.b16 %v4062
        %v4116 = vunpack.c.l.b16 %v4066
        %v4117 = vunpack.c.l.b16 %v4069
        %v4118 = vunpack.c.l.b16 %v4073
        %v4119 = vunpack.c.l.b16 %v4076
        %v4120 = vunpack.c.l.b16 %v4080
        %v4121 = vunpack.c.l.b16 %v4083
        %v4122 = vunpack.c.l.b16 %v4087
        %v4123 = vunpack.c.l.b16 %v4090
        %v4124 = vpack.c.b16 %v4109, %v4108
        %v4125 = vpack.c.b16 %v4111, %v4110
        %v4126 = vpack.c.b16 %v4113, %v4112
        %v4127 = vpack.c.b16 %v4115, %v4114
        %v4128 = vpack.c.b16 %v4117, %v4116
        %v4129 = vpack.c.b16 %v4119, %v4118
        %v4130 = vpack.c.b16 %v4121, %v4120
        %v4131 = vpack.c.b16 %v4123, %v4122
        %v4156 = vunpack.c.l.b16 %v4092
        %v4157 = vunpack.c.l.b16 %v4093
        %v4158 = vunpack.c.l.b16 %v4094
        %v4159 = vunpack.c.l.b16 %v4095
        %v4160 = vunpack.c.l.b16 %v4096
        %v4161 = vunpack.c.l.b16 %v4097
        %v4162 = vunpack.c.l.b16 %v4098
        %v4163 = vunpack.c.l.b16 %v4099
        %v4164 = vunpack.c.l.b16 %v4100
        %v4165 = vunpack.c.l.b16 %v4101
        %v4166 = vunpack.c.l.b16 %v4102
        %v4167 = vunpack.c.l.b16 %v4103
        %v4168 = vunpack.c.l.b16 %v4104
        %v4169 = vunpack.c.l.b16 %v4105
        %v4170 = vunpack.c.l.b16 %v4106
        %v4171 = vunpack.c.l.b16 %v4107
        %v4172 = vpack.c.b16 %v4157, %v4156
        %v4173 = vpack.c.b16 %v4159, %v4158
        %v4174 = vpack.c.b16 %v4161, %v4160
        %v4175 = vpack.c.b16 %v4163, %v4162
        %v4176 = vpack.c.b16 %v4165, %v4164
        %v4177 = vpack.c.b16 %v4167, %v4166
        %v4178 = vpack.c.b16 %v4169, %v4168
        %v4179 = vpack.c.b16 %v4171, %v4170
        %4188 = vmatprep.subr.bf16.mxu0 0
        %4189 = vmatpush1.bf16.msra.mxu0 %v4179
        %4190 = vmatprep.subr.bf16.mxu0 0
        %4191 = vmatpush1.bf16.msra.mxu0 %v4178
        %4192 = vmatprep.subr.bf16.mxu0 0
        %4193 = vmatpush1.bf16.msra.mxu0 %v4177
        %4194 = vmatprep.subr.bf16.mxu0 0
        %4195 = vmatpush1.bf16.msra.mxu0 %v4176
        %4196 = vmatprep.subr.bf16.mxu0 0
        %4197 = vmatpush1.bf16.msra.mxu0 %v4175
        %4198 = vmatprep.subr.bf16.mxu0 0
        %4199 = vmatpush1.bf16.msra.mxu0 %v4174
        %4200 = vmatprep.subr.bf16.mxu0 0
        %4201 = vmatpush1.bf16.msra.mxu0 %v4173
        %4202 = vmatprep.subr.bf16.mxu0 0
        %4203 = vmatpush1.bf16.msra.mxu0 %v4172
        %4204 = vmatprep.subr.bf16.mxu0 0
        %4205 = vmatpush2.bf16.msra.mxu0 0
        %4206 = vmatprep.subr.bf16.mxu0 0
        %4207 = vmatpush2.bf16.msra.mxu0 0
        %4208 = vmatprep.subr.bf16.mxu0 0
        %4209 = vmatpush2.bf16.msra.mxu0 0
        %4210 = vmatprep.subr.bf16.mxu0 0
        %4211 = vmatpush2.bf16.msra.mxu0 0
        %4212 = vmatprep.subr.bf16.mxu0 0
        %4213 = vmatpush2.bf16.msra.mxu0 0
        %4214 = vmatprep.subr.bf16.mxu0 0
        %4215 = vmatpush2.bf16.msra.mxu0 0
        %4216 = vmatprep.subr.bf16.mxu0 0
        %4217 = vmatpush2.bf16.msra.mxu0 0
        %4218 = vmatprep.subr.bf16.mxu0 0
        %4219 = vmatpush2.bf16.msra.mxu0 0
        %4220 = vmatprep.mubr.bf16.mxu0 0
        %4221 = vmatmul.mubr.bf16.gmra.mxu0 %v4124
        %v4222 = vpop.f32.mrf.mxu0
        %v4223 = vadd.f32 0.0, %v4222
        %v4224 = vpop.f32.mrf.mxu0
        %v4225 = vpop.f32.mrf.mxu0
        %v4226 = vadd.f32 0.0, %v4225
        %v4227 = vpop.f32.mrf.mxu0
        %4228 = vmatprep.mubr.bf16.mxu0 0
        %4229 = vmatmul.mubr.bf16.gmra.mxu0 %v4125
        %v4230 = vpop.f32.mrf.mxu0
        %v4231 = vadd.f32 0.0, %v4230
        %v4232 = vpop.f32.mrf.mxu0
        %v4233 = vpop.f32.mrf.mxu0
        %v4234 = vadd.f32 0.0, %v4233
        %v4235 = vpop.f32.mrf.mxu0
        %4236 = vmatprep.mubr.bf16.mxu0 0
        %4237 = vmatmul.mubr.bf16.gmra.mxu0 %v4126
        %v4238 = vpop.f32.mrf.mxu0
        %v4239 = vadd.f32 0.0, %v4238
        %v4240 = vpop.f32.mrf.mxu0
        %v4241 = vpop.f32.mrf.mxu0
        %v4242 = vadd.f32 0.0, %v4241
        %v4243 = vpop.f32.mrf.mxu0
        %4244 = vmatprep.mubr.bf16.mxu0 0
        %4245 = vmatmul.mubr.bf16.gmra.mxu0 %v4127
        %v4246 = vpop.f32.mrf.mxu0
        %v4247 = vadd.f32 0.0, %v4246
        %v4248 = vpop.f32.mrf.mxu0
        %v4249 = vpop.f32.mrf.mxu0
        %v4250 = vadd.f32 0.0, %v4249
        %v4251 = vpop.f32.mrf.mxu0
        %4252 = vmatprep.mubr.bf16.mxu0 0
        %4253 = vmatmul.mubr.bf16.gmra.mxu0 %v4128
        %v4254 = vpop.f32.mrf.mxu0
        %v4255 = vadd.f32 0.0, %v4254
        %v4256 = vpop.f32.mrf.mxu0
        %v4257 = vpop.f32.mrf.mxu0
        %v4258 = vadd.f32 0.0, %v4257
        %v4259 = vpop.f32.mrf.mxu0
        %4260 = vmatprep.mubr.bf16.mxu0 0
        %4261 = vmatmul.mubr.bf16.gmra.mxu0 %v4129
        %v4262 = vpop.f32.mrf.mxu0
        %v4263 = vadd.f32 0.0, %v4262
        %v4264 = vpop.f32.mrf.mxu0
        %v4265 = vpop.f32.mrf.mxu0
        %v4266 = vadd.f32 0.0, %v4265
        %v4267 = vpop.f32.mrf.mxu0
        %4268 = vmatprep.mubr.bf16.mxu0 0
        %4269 = vmatmul.mubr.bf16.gmra.mxu0 %v4130
        %v4270 = vpop.f32.mrf.mxu0
        %v4271 = vadd.f32 0.0, %v4270
        %v4272 = vpop.f32.mrf.mxu0
        %v4273 = vpop.f32.mrf.mxu0
        %v4274 = vadd.f32 0.0, %v4273
        %v4275 = vpop.f32.mrf.mxu0
        %4276 = vmatprep.mubr.bf16.mxu0 0
        %4277 = vmatmul.mubr.bf16.gmra.mxu0 %v4131
        %v4278 = vpop.f32.mrf.mxu0
        %v4279 = vadd.f32 0.0, %v4278
        %v4280 = vpop.f32.mrf.mxu0
        %v4281 = vpop.f32.mrf.mxu0
        %v4282 = vadd.f32 0.0, %v4281
        %v4283 = vpop.f32.mrf.mxu0
        %4284 = vdwg.mxu0
        %v4285 = vadd.f32 %v3925, %v4223
        %v4286 = vadd.f32 %v3928, %v4226
        %v4287 = vadd.f32 %v3933, %v4231
        %v4288 = vadd.f32 %v3936, %v4234
        %v4289 = vadd.f32 %v3941, %v4239
        %v4290 = vadd.f32 %v3944, %v4242
        %v4291 = vadd.f32 %v3949, %v4247
        %v4292 = vadd.f32 %v3952, %v4250
        %v4293 = vadd.f32 %v3957, %v4255
        %v4294 = vadd.f32 %v3960, %v4258
        %v4295 = vadd.f32 %v3965, %v4263
        %v4296 = vadd.f32 %v3968, %v4266
        %v4297 = vadd.f32 %v3973, %v4271
        %v4298 = vadd.f32 %v3976, %v4274
        %v4299 = vadd.f32 %v3981, %v4279
        %v4300 = vadd.f32 %v3984, %v4282
        %v4301 = vld [vmem:[%s366] sm:$0xc]
        %v4302 = vld [vmem:[%s366 + $0x8] sm:$0x3]
        %v4303 = vld [vmem:[%s366 + $0x10] sm:$0xc]
        %v4304 = vld [vmem:[%s366 + $0x18] sm:$0x3]
        %v4305 = vld [vmem:[%s366 + $0x20] sm:$0xc]
        %v4306 = vld [vmem:[%s366 + $0x28] sm:$0x3]
        %v4307 = vld [vmem:[%s366 + $0x30] sm:$0xc]
        %v4308 = vld [vmem:[%s366 + $0x38] sm:$0x3]
        %v4309 = vld [vmem:[%s366 + $0x40] sm:$0xc]
        %v4310 = vld [vmem:[%s366 + $0x48] sm:$0x3]
        %v4311 = vld [vmem:[%s366 + $0x50] sm:$0xc]
        %v4312 = vld [vmem:[%s366 + $0x58] sm:$0x3]
        %v4313 = vld [vmem:[%s366 + $0x60] sm:$0xc]
        %v4314 = vld [vmem:[%s366 + $0x68] sm:$0x3]
        %v4315 = vld [vmem:[%s366 + $0x70] sm:$0xc]
        %v4316 = vld [vmem:[%s366 + $0x78] sm:$0x3]
        %v4333 = vrot.slane %v4301, 6
        %v4334 = vrot.slane %v4333, 4
        %v4335 = vrot.slane %v367, 6
        %v4336 = vsel %vm3526, %v4334, %v4335
        %v4337 = vrot.slane %v4335, 4
        %v4338 = vrot.slane %v4302, 6
        %v4339 = vsel %vm3526, %v4337, %v4338
        %v4340 = vrot.slane %v4303, 6
        %v4341 = vrot.slane %v4340, 4
        %v4342 = vrot.slane %v369, 6
        %v4343 = vsel %vm3526, %v4341, %v4342
        %v4344 = vrot.slane %v4342, 4
        %v4345 = vrot.slane %v4304, 6
        %v4346 = vsel %vm3526, %v4344, %v4345
        %v4347 = vrot.slane %v4305, 6
        %v4348 = vrot.slane %v4347, 4
        %v4349 = vrot.slane %v371, 6
        %v4350 = vsel %vm3526, %v4348, %v4349
        %v4351 = vrot.slane %v4349, 4
        %v4352 = vrot.slane %v4306, 6
        %v4353 = vsel %vm3526, %v4351, %v4352
        %v4354 = vrot.slane %v4307, 6
        %v4355 = vrot.slane %v4354, 4
        %v4356 = vrot.slane %v373, 6
        %v4357 = vsel %vm3526, %v4355, %v4356
        %v4358 = vrot.slane %v4356, 4
        %v4359 = vrot.slane %v4308, 6
        %v4360 = vsel %vm3526, %v4358, %v4359
        %v4361 = vrot.slane %v4309, 6
        %v4362 = vrot.slane %v4361, 4
        %v4363 = vrot.slane %v375, 6
        %v4364 = vsel %vm3526, %v4362, %v4363
        %v4365 = vrot.slane %v4363, 4
        %v4366 = vrot.slane %v4310, 6
        %v4367 = vsel %vm3526, %v4365, %v4366
        %v4368 = vrot.slane %v4311, 6
        %v4369 = vrot.slane %v4368, 4
        %v4370 = vrot.slane %v377, 6
        %v4371 = vsel %vm3526, %v4369, %v4370
        %v4372 = vrot.slane %v4370, 4
        %v4373 = vrot.slane %v4312, 6
        %v4374 = vsel %vm3526, %v4372, %v4373
        %v4375 = vrot.slane %v4313, 6
        %v4376 = vrot.slane %v4375, 4
        %v4377 = vrot.slane %v379, 6
        %v4378 = vsel %vm3526, %v4376, %v4377
        %v4379 = vrot.slane %v4377, 4
        %v4380 = vrot.slane %v4314, 6
        %v4381 = vsel %vm3526, %v4379, %v4380
        %v4382 = vrot.slane %v4315, 6
        %v4383 = vrot.slane %v4382, 4
        %v4384 = vrot.slane %v381, 6
        %v4385 = vsel %vm3526, %v4383, %v4384
        %v4386 = vrot.slane %v4384, 4
        %v4387 = vrot.slane %v4316, 6
        %v4388 = vsel %vm3526, %v4386, %v4387
        %s4389 = scalar_lea.vmem %s3, 768
        %v4390 = vld [vmem:[%s4389] sm:$0xf]
        %v4391 = vld [vmem:[%s4389 + $0x4] sm:$0xf]
        %v4392 = vld [vmem:[%s4389 + $0x8] sm:$0xf]
        %v4393 = vld [vmem:[%s4389 + $0xc] sm:$0xf]
        %v4394 = vld [vmem:[%s4389 + $0x10] sm:$0xf]
        %v4395 = vld [vmem:[%s4389 + $0x14] sm:$0xf]
        %v4396 = vld [vmem:[%s4389 + $0x18] sm:$0xf]
        %v4397 = vld [vmem:[%s4389 + $0x1c] sm:$0xf]
        %v4398 = vld [vmem:[%s4389 + $0x20] sm:$0xf]
        %v4399 = vld [vmem:[%s4389 + $0x24] sm:$0xf]
        %v4400 = vld [vmem:[%s4389 + $0x28] sm:$0xf]
        %v4401 = vld [vmem:[%s4389 + $0x2c] sm:$0xf]
        %v4402 = vld [vmem:[%s4389 + $0x30] sm:$0xf]
        %v4403 = vld [vmem:[%s4389 + $0x34] sm:$0xf]
        %v4404 = vld [vmem:[%s4389 + $0x38] sm:$0xf]
        %v4405 = vld [vmem:[%s4389 + $0x3c] sm:$0xf]
        %v4406 = vunpack.c.l.b16 %v4336
        %v4407 = vunpack.c.l.b16 %v4339
        %v4408 = vunpack.c.l.b16 %v4343
        %v4409 = vunpack.c.l.b16 %v4346
        %v4410 = vunpack.c.l.b16 %v4350
        %v4411 = vunpack.c.l.b16 %v4353
        %v4412 = vunpack.c.l.b16 %v4357
        %v4413 = vunpack.c.l.b16 %v4360
        %v4414 = vunpack.c.l.b16 %v4364
        %v4415 = vunpack.c.l.b16 %v4367
        %v4416 = vunpack.c.l.b16 %v4371
        %v4417 = vunpack.c.l.b16 %v4374
        %v4418 = vunpack.c.l.b16 %v4378
        %v4419 = vunpack.c.l.b16 %v4381
        %v4420 = vunpack.c.l.b16 %v4385
        %v4421 = vunpack.c.l.b16 %v4388
        %v4422 = vpack.c.b16 %v4407, %v4406
        %v4423 = vpack.c.b16 %v4409, %v4408
        %v4424 = vpack.c.b16 %v4411, %v4410
        %v4425 = vpack.c.b16 %v4413, %v4412
        %v4426 = vpack.c.b16 %v4415, %v4414
        %v4427 = vpack.c.b16 %v4417, %v4416
        %v4428 = vpack.c.b16 %v4419, %v4418
        %v4429 = vpack.c.b16 %v4421, %v4420
        %v4454 = vunpack.c.l.b16 %v4390
        %v4455 = vunpack.c.l.b16 %v4391
        %v4456 = vunpack.c.l.b16 %v4392
        %v4457 = vunpack.c.l.b16 %v4393
        %v4458 = vunpack.c.l.b16 %v4394
        %v4459 = vunpack.c.l.b16 %v4395
        %v4460 = vunpack.c.l.b16 %v4396
        %v4461 = vunpack.c.l.b16 %v4397
        %v4462 = vunpack.c.l.b16 %v4398
        %v4463 = vunpack.c.l.b16 %v4399
        %v4464 = vunpack.c.l.b16 %v4400
        %v4465 = vunpack.c.l.b16 %v4401
        %v4466 = vunpack.c.l.b16 %v4402
        %v4467 = vunpack.c.l.b16 %v4403
        %v4468 = vunpack.c.l.b16 %v4404
        %v4469 = vunpack.c.l.b16 %v4405
        %v4470 = vpack.c.b16 %v4455, %v4454
        %v4471 = vpack.c.b16 %v4457, %v4456
        %v4472 = vpack.c.b16 %v4459, %v4458
        %v4473 = vpack.c.b16 %v4461, %v4460
        %v4474 = vpack.c.b16 %v4463, %v4462
        %v4475 = vpack.c.b16 %v4465, %v4464
        %v4476 = vpack.c.b16 %v4467, %v4466
        %v4477 = vpack.c.b16 %v4469, %v4468
        %4486 = vmatprep.subr.bf16.mxu0 0
        %4487 = vmatpush1.bf16.msra.mxu0 %v4477
        %4488 = vmatprep.subr.bf16.mxu0 0
        %4489 = vmatpush1.bf16.msra.mxu0 %v4476
        %4490 = vmatprep.subr.bf16.mxu0 0
        %4491 = vmatpush1.bf16.msra.mxu0 %v4475
        %4492 = vmatprep.subr.bf16.mxu0 0
        %4493 = vmatpush1.bf16.msra.mxu0 %v4474
        %4494 = vmatprep.subr.bf16.mxu0 0
        %4495 = vmatpush1.bf16.msra.mxu0 %v4473
        %4496 = vmatprep.subr.bf16.mxu0 0
        %4497 = vmatpush1.bf16.msra.mxu0 %v4472
        %4498 = vmatprep.subr.bf16.mxu0 0
        %4499 = vmatpush1.bf16.msra.mxu0 %v4471
        %4500 = vmatprep.subr.bf16.mxu0 0
        %4501 = vmatpush1.bf16.msra.mxu0 %v4470
        %4502 = vmatprep.subr.bf16.mxu0 0
        %4503 = vmatpush2.bf16.msra.mxu0 0
        %4504 = vmatprep.subr.bf16.mxu0 0
        %4505 = vmatpush2.bf16.msra.mxu0 0
        %4506 = vmatprep.subr.bf16.mxu0 0
        %4507 = vmatpush2.bf16.msra.mxu0 0
        %4508 = vmatprep.subr.bf16.mxu0 0
        %4509 = vmatpush2.bf16.msra.mxu0 0
        %4510 = vmatprep.subr.bf16.mxu0 0
        %4511 = vmatpush2.bf16.msra.mxu0 0
        %4512 = vmatprep.subr.bf16.mxu0 0
        %4513 = vmatpush2.bf16.msra.mxu0 0
        %4514 = vmatprep.subr.bf16.mxu0 0
        %4515 = vmatpush2.bf16.msra.mxu0 0
        %4516 = vmatprep.subr.bf16.mxu0 0
        %4517 = vmatpush2.bf16.msra.mxu0 0
        %4518 = vmatprep.mubr.bf16.mxu0 0
        %4519 = vmatmul.mubr.bf16.gmra.mxu0 %v4422
        %v4520 = vpop.f32.mrf.mxu0
        %v4521 = vadd.f32 0.0, %v4520
        %v4522 = vpop.f32.mrf.mxu0
        %v4523 = vpop.f32.mrf.mxu0
        %v4524 = vadd.f32 0.0, %v4523
        %v4525 = vpop.f32.mrf.mxu0
        %4526 = vmatprep.mubr.bf16.mxu0 0
        %4527 = vmatmul.mubr.bf16.gmra.mxu0 %v4423
        %v4528 = vpop.f32.mrf.mxu0
        %v4529 = vadd.f32 0.0, %v4528
        %v4530 = vpop.f32.mrf.mxu0
        %v4531 = vpop.f32.mrf.mxu0
        %v4532 = vadd.f32 0.0, %v4531
        %v4533 = vpop.f32.mrf.mxu0
        %4534 = vmatprep.mubr.bf16.mxu0 0
        %4535 = vmatmul.mubr.bf16.gmra.mxu0 %v4424
        %v4536 = vpop.f32.mrf.mxu0
        %v4537 = vadd.f32 0.0, %v4536
        %v4538 = vpop.f32.mrf.mxu0
        %v4539 = vpop.f32.mrf.mxu0
        %v4540 = vadd.f32 0.0, %v4539
        %v4541 = vpop.f32.mrf.mxu0
        %4542 = vmatprep.mubr.bf16.mxu0 0
        %4543 = vmatmul.mubr.bf16.gmra.mxu0 %v4425
        %v4544 = vpop.f32.mrf.mxu0
        %v4545 = vadd.f32 0.0, %v4544
        %v4546 = vpop.f32.mrf.mxu0
        %v4547 = vpop.f32.mrf.mxu0
        %v4548 = vadd.f32 0.0, %v4547
        %v4549 = vpop.f32.mrf.mxu0
        %4550 = vmatprep.mubr.bf16.mxu0 0
        %4551 = vmatmul.mubr.bf16.gmra.mxu0 %v4426
        %v4552 = vpop.f32.mrf.mxu0
        %v4553 = vadd.f32 0.0, %v4552
        %v4554 = vpop.f32.mrf.mxu0
        %v4555 = vpop.f32.mrf.mxu0
        %v4556 = vadd.f32 0.0, %v4555
        %v4557 = vpop.f32.mrf.mxu0
        %4558 = vmatprep.mubr.bf16.mxu0 0
        %4559 = vmatmul.mubr.bf16.gmra.mxu0 %v4427
        %v4560 = vpop.f32.mrf.mxu0
        %v4561 = vadd.f32 0.0, %v4560
        %v4562 = vpop.f32.mrf.mxu0
        %v4563 = vpop.f32.mrf.mxu0
        %v4564 = vadd.f32 0.0, %v4563
        %v4565 = vpop.f32.mrf.mxu0
        %4566 = vmatprep.mubr.bf16.mxu0 0
        %4567 = vmatmul.mubr.bf16.gmra.mxu0 %v4428
        %v4568 = vpop.f32.mrf.mxu0
        %v4569 = vadd.f32 0.0, %v4568
        %v4570 = vpop.f32.mrf.mxu0
        %v4571 = vpop.f32.mrf.mxu0
        %v4572 = vadd.f32 0.0, %v4571
        %v4573 = vpop.f32.mrf.mxu0
        %4574 = vmatprep.mubr.bf16.mxu0 0
        %4575 = vmatmul.mubr.bf16.gmra.mxu0 %v4429
        %v4576 = vpop.f32.mrf.mxu0
        %v4577 = vadd.f32 0.0, %v4576
        %v4578 = vpop.f32.mrf.mxu0
        %v4579 = vpop.f32.mrf.mxu0
        %v4580 = vadd.f32 0.0, %v4579
        %v4581 = vpop.f32.mrf.mxu0
        %4582 = vdwg.mxu0
        %v4583 = vadd.f32 %v4285, %v4521
        %v4584 = vadd.f32 %v4286, %v4524
        %v4585 = vadd.f32 %v4287, %v4529
        %v4586 = vadd.f32 %v4288, %v4532
        %v4587 = vadd.f32 %v4289, %v4537
        %v4588 = vadd.f32 %v4290, %v4540
        %v4589 = vadd.f32 %v4291, %v4545
        %v4590 = vadd.f32 %v4292, %v4548
        %v4591 = vadd.f32 %v4293, %v4553
        %v4592 = vadd.f32 %v4294, %v4556
        %v4593 = vadd.f32 %v4295, %v4561
        %v4594 = vadd.f32 %v4296, %v4564
        %v4595 = vadd.f32 %v4297, %v4569
        %v4596 = vadd.f32 %v4298, %v4572
        %v4597 = vadd.f32 %v4299, %v4577
        %v4598 = vadd.f32 %v4300, %v4580
        %s4599 = scalar_lea.vmem %s3, 832
        %v4600 = vld [vmem:[%s4599] sm:$0xf]
        %v4601 = vld [vmem:[%s4599 + $0x4] sm:$0xf]
        %v4602 = vld [vmem:[%s4599 + $0x8] sm:$0xf]
        %v4603 = vld [vmem:[%s4599 + $0xc] sm:$0xf]
        %v4604 = vld [vmem:[%s4599 + $0x10] sm:$0xf]
        %v4605 = vld [vmem:[%s4599 + $0x14] sm:$0xf]
        %v4606 = vld [vmem:[%s4599 + $0x18] sm:$0xf]
        %v4607 = vld [vmem:[%s4599 + $0x1c] sm:$0xf]
        %v4608 = vld [vmem:[%s4599 + $0x20] sm:$0xf]
        %v4609 = vld [vmem:[%s4599 + $0x24] sm:$0xf]
        %v4610 = vld [vmem:[%s4599 + $0x28] sm:$0xf]
        %v4611 = vld [vmem:[%s4599 + $0x2c] sm:$0xf]
        %v4612 = vld [vmem:[%s4599 + $0x30] sm:$0xf]
        %v4613 = vld [vmem:[%s4599 + $0x34] sm:$0xf]
        %v4614 = vld [vmem:[%s4599 + $0x38] sm:$0xf]
        %v4615 = vld [vmem:[%s4599 + $0x3c] sm:$0xf]
        %v4632 = vunpack.c.l.b16 %v4600
        %v4633 = vunpack.c.l.b16 %v4601
        %v4634 = vunpack.c.l.b16 %v4602
        %v4635 = vunpack.c.l.b16 %v4603
        %v4636 = vunpack.c.l.b16 %v4604
        %v4637 = vunpack.c.l.b16 %v4605
        %v4638 = vunpack.c.l.b16 %v4606
        %v4639 = vunpack.c.l.b16 %v4607
        %v4640 = vunpack.c.l.b16 %v4608
        %v4641 = vunpack.c.l.b16 %v4609
        %v4642 = vunpack.c.l.b16 %v4610
        %v4643 = vunpack.c.l.b16 %v4611
        %v4644 = vunpack.c.l.b16 %v4612
        %v4645 = vunpack.c.l.b16 %v4613
        %v4646 = vunpack.c.l.b16 %v4614
        %v4647 = vunpack.c.l.b16 %v4615
        %v4648 = vpack.c.b16 %v4633, %v4632
        %v4649 = vpack.c.b16 %v4635, %v4634
        %v4650 = vpack.c.b16 %v4637, %v4636
        %v4651 = vpack.c.b16 %v4639, %v4638
        %v4652 = vpack.c.b16 %v4641, %v4640
        %v4653 = vpack.c.b16 %v4643, %v4642
        %v4654 = vpack.c.b16 %v4645, %v4644
        %v4655 = vpack.c.b16 %v4647, %v4646
        %4664 = vmatprep.subr.bf16.mxu0 0
        %4665 = vmatpush1.bf16.msra.mxu0 %v4655
        %4666 = vmatprep.subr.bf16.mxu0 0
        %4667 = vmatpush1.bf16.msra.mxu0 %v4654
        %4668 = vmatprep.subr.bf16.mxu0 0
        %4669 = vmatpush1.bf16.msra.mxu0 %v4653
        %4670 = vmatprep.subr.bf16.mxu0 0
        %4671 = vmatpush1.bf16.msra.mxu0 %v4652
        %4672 = vmatprep.subr.bf16.mxu0 0
        %4673 = vmatpush1.bf16.msra.mxu0 %v4651
        %4674 = vmatprep.subr.bf16.mxu0 0
        %4675 = vmatpush1.bf16.msra.mxu0 %v4650
        %4676 = vmatprep.subr.bf16.mxu0 0
        %4677 = vmatpush1.bf16.msra.mxu0 %v4649
        %4678 = vmatprep.subr.bf16.mxu0 0
        %4679 = vmatpush1.bf16.msra.mxu0 %v4648
        %4680 = vmatprep.subr.bf16.mxu0 0
        %4681 = vmatpush2.bf16.msra.mxu0 0
        %4682 = vmatprep.subr.bf16.mxu0 0
        %4683 = vmatpush2.bf16.msra.mxu0 0
        %4684 = vmatprep.subr.bf16.mxu0 0
        %4685 = vmatpush2.bf16.msra.mxu0 0
        %4686 = vmatprep.subr.bf16.mxu0 0
        %4687 = vmatpush2.bf16.msra.mxu0 0
        %4688 = vmatprep.subr.bf16.mxu0 0
        %4689 = vmatpush2.bf16.msra.mxu0 0
        %4690 = vmatprep.subr.bf16.mxu0 0
        %4691 = vmatpush2.bf16.msra.mxu0 0
        %4692 = vmatprep.subr.bf16.mxu0 0
        %4693 = vmatpush2.bf16.msra.mxu0 0
        %4694 = vmatprep.subr.bf16.mxu0 0
        %4695 = vmatpush2.bf16.msra.mxu0 0
        %4696 = vmatprep.mubr.bf16.mxu0 0
        %4697 = vmatmul.mubr.bf16.gmra.mxu0 %v438
        %v4698 = vpop.f32.mrf.mxu0
        %v4699 = vadd.f32 0.0, %v4698
        %v4700 = vpop.f32.mrf.mxu0
        %v4701 = vpop.f32.mrf.mxu0
        %v4702 = vadd.f32 0.0, %v4701
        %v4703 = vpop.f32.mrf.mxu0
        %4704 = vmatprep.mubr.bf16.mxu0 0
        %4705 = vmatmul.mubr.bf16.gmra.mxu0 %v439
        %v4706 = vpop.f32.mrf.mxu0
        %v4707 = vadd.f32 0.0, %v4706
        %v4708 = vpop.f32.mrf.mxu0
        %v4709 = vpop.f32.mrf.mxu0
        %v4710 = vadd.f32 0.0, %v4709
        %v4711 = vpop.f32.mrf.mxu0
        %4712 = vmatprep.mubr.bf16.mxu0 0
        %4713 = vmatmul.mubr.bf16.gmra.mxu0 %v440
        %v4714 = vpop.f32.mrf.mxu0
        %v4715 = vadd.f32 0.0, %v4714
        %v4716 = vpop.f32.mrf.mxu0
        %v4717 = vpop.f32.mrf.mxu0
        %v4718 = vadd.f32 0.0, %v4717
        %v4719 = vpop.f32.mrf.mxu0
        %4720 = vmatprep.mubr.bf16.mxu0 0
        %4721 = vmatmul.mubr.bf16.gmra.mxu0 %v441
        %v4722 = vpop.f32.mrf.mxu0
        %v4723 = vadd.f32 0.0, %v4722
        %v4724 = vpop.f32.mrf.mxu0
        %v4725 = vpop.f32.mrf.mxu0
        %v4726 = vadd.f32 0.0, %v4725
        %v4727 = vpop.f32.mrf.mxu0
        %4728 = vmatprep.mubr.bf16.mxu0 0
        %4729 = vmatmul.mubr.bf16.gmra.mxu0 %v442
        %v4730 = vpop.f32.mrf.mxu0
        %v4731 = vadd.f32 0.0, %v4730
        %v4732 = vpop.f32.mrf.mxu0
        %v4733 = vpop.f32.mrf.mxu0
        %v4734 = vadd.f32 0.0, %v4733
        %v4735 = vpop.f32.mrf.mxu0
        %4736 = vmatprep.mubr.bf16.mxu0 0
        %4737 = vmatmul.mubr.bf16.gmra.mxu0 %v443
        %v4738 = vpop.f32.mrf.mxu0
        %v4739 = vadd.f32 0.0, %v4738
        %v4740 = vpop.f32.mrf.mxu0
        %v4741 = vpop.f32.mrf.mxu0
        %v4742 = vadd.f32 0.0, %v4741
        %v4743 = vpop.f32.mrf.mxu0
        %4744 = vmatprep.mubr.bf16.mxu0 0
        %4745 = vmatmul.mubr.bf16.gmra.mxu0 %v444
        %v4746 = vpop.f32.mrf.mxu0
        %v4747 = vadd.f32 0.0, %v4746
        %v4748 = vpop.f32.mrf.mxu0
        %v4749 = vpop.f32.mrf.mxu0
        %v4750 = vadd.f32 0.0, %v4749
        %v4751 = vpop.f32.mrf.mxu0
        %4752 = vmatprep.mubr.bf16.mxu0 0
        %4753 = vmatmul.mubr.bf16.gmra.mxu0 %v445
        %v4754 = vpop.f32.mrf.mxu0
        %v4755 = vadd.f32 0.0, %v4754
        %v4756 = vpop.f32.mrf.mxu0
        %v4757 = vpop.f32.mrf.mxu0
        %v4758 = vadd.f32 0.0, %v4757
        %v4759 = vpop.f32.mrf.mxu0
        %4760 = vdwg.mxu0
        %v4761 = vadd.f32 %v4583, %v4699
        %v4762 = vadd.f32 %v4584, %v4702
        %v4763 = vadd.f32 %v4585, %v4707
        %v4764 = vadd.f32 %v4586, %v4710
        %v4765 = vadd.f32 %v4587, %v4715
        %v4766 = vadd.f32 %v4588, %v4718
        %v4767 = vadd.f32 %v4589, %v4723
        %v4768 = vadd.f32 %v4590, %v4726
        %v4769 = vadd.f32 %v4591, %v4731
        %v4770 = vadd.f32 %v4592, %v4734
        %v4771 = vadd.f32 %v4593, %v4739
        %v4772 = vadd.f32 %v4594, %v4742
        %v4773 = vadd.f32 %v4595, %v4747
        %v4774 = vadd.f32 %v4596, %v4750
        %v4775 = vadd.f32 %v4597, %v4755
        %v4776 = vadd.f32 %v4598, %v4758
        %v4777 = vld [vmem:[%s366 + $0x4] sm:$0xc]
        %v4778 = vld [vmem:[%s366 + $0xc] sm:$0x3]
        %v4779 = vld [vmem:[%s366 + $0x14] sm:$0xc]
        %v4780 = vld [vmem:[%s366 + $0x1c] sm:$0x3]
        %v4781 = vld [vmem:[%s366 + $0x24] sm:$0xc]
        %v4782 = vld [vmem:[%s366 + $0x2c] sm:$0x3]
        %v4783 = vld [vmem:[%s366 + $0x34] sm:$0xc]
        %v4784 = vld [vmem:[%s366 + $0x3c] sm:$0x3]
        %v4785 = vld [vmem:[%s366 + $0x44] sm:$0xc]
        %v4786 = vld [vmem:[%s366 + $0x4c] sm:$0x3]
        %v4787 = vld [vmem:[%s366 + $0x54] sm:$0xc]
        %v4788 = vld [vmem:[%s366 + $0x5c] sm:$0x3]
        %v4789 = vld [vmem:[%s366 + $0x64] sm:$0xc]
        %v4790 = vld [vmem:[%s366 + $0x6c] sm:$0x3]
        %v4791 = vld [vmem:[%s366 + $0x74] sm:$0xc]
        %v4792 = vld [vmem:[%s366 + $0x7c] sm:$0x3]
        %v4809 = vrot.slane %v4777, 6
        %v4810 = vrot.slane %v4809, 4
        %v4811 = vrot.slane %v1947, 6
        %v4812 = vsel %vm3526, %v4810, %v4811
        %v4813 = vrot.slane %v4811, 4
        %v4814 = vrot.slane %v4778, 6
        %v4815 = vsel %vm3526, %v4813, %v4814
        %v4816 = vrot.slane %v4779, 6
        %v4817 = vrot.slane %v4816, 4
        %v4818 = vrot.slane %v1950, 6
        %v4819 = vsel %vm3526, %v4817, %v4818
        %v4820 = vrot.slane %v4818, 4
        %v4821 = vrot.slane %v4780, 6
        %v4822 = vsel %vm3526, %v4820, %v4821
        %v4823 = vrot.slane %v4781, 6
        %v4824 = vrot.slane %v4823, 4
        %v4825 = vrot.slane %v1953, 6
        %v4826 = vsel %vm3526, %v4824, %v4825
        %v4827 = vrot.slane %v4825, 4
        %v4828 = vrot.slane %v4782, 6
        %v4829 = vsel %vm3526, %v4827, %v4828
        %v4830 = vrot.slane %v4783, 6
        %v4831 = vrot.slane %v4830, 4
        %v4832 = vrot.slane %v1956, 6
        %v4833 = vsel %vm3526, %v4831, %v4832
        %v4834 = vrot.slane %v4832, 4
        %v4835 = vrot.slane %v4784, 6
        %v4836 = vsel %vm3526, %v4834, %v4835
        %v4837 = vrot.slane %v4785, 6
        %v4838 = vrot.slane %v4837, 4
        %v4839 = vrot.slane %v1959, 6
        %v4840 = vsel %vm3526, %v4838, %v4839
        %v4841 = vrot.slane %v4839, 4
        %v4842 = vrot.slane %v4786, 6
        %v4843 = vsel %vm3526, %v4841, %v4842
        %v4844 = vrot.slane %v4787, 6
        %v4845 = vrot.slane %v4844, 4
        %v4846 = vrot.slane %v1962, 6
        %v4847 = vsel %vm3526, %v4845, %v4846
        %v4848 = vrot.slane %v4846, 4
        %v4849 = vrot.slane %v4788, 6
        %v4850 = vsel %vm3526, %v4848, %v4849
        %v4851 = vrot.slane %v4789, 6
        %v4852 = vrot.slane %v4851, 4
        %v4853 = vrot.slane %v1965, 6
        %v4854 = vsel %vm3526, %v4852, %v4853
        %v4855 = vrot.slane %v4853, 4
        %v4856 = vrot.slane %v4790, 6
        %v4857 = vsel %vm3526, %v4855, %v4856
        %v4858 = vrot.slane %v4791, 6
        %v4859 = vrot.slane %v4858, 4
        %v4860 = vrot.slane %v1968, 6
        %v4861 = vsel %vm3526, %v4859, %v4860
        %v4862 = vrot.slane %v4860, 4
        %v4863 = vrot.slane %v4792, 6
        %v4864 = vsel %vm3526, %v4862, %v4863
        %s4865 = scalar_lea.vmem %s3, 896
        %v4866 = vld [vmem:[%s4865] sm:$0xf]
        %v4867 = vld [vmem:[%s4865 + $0x4] sm:$0xf]
        %v4868 = vld [vmem:[%s4865 + $0x8] sm:$0xf]
        %v4869 = vld [vmem:[%s4865 + $0xc] sm:$0xf]
        %v4870 = vld [vmem:[%s4865 + $0x10] sm:$0xf]
        %v4871 = vld [vmem:[%s4865 + $0x14] sm:$0xf]
        %v4872 = vld [vmem:[%s4865 + $0x18] sm:$0xf]
        %v4873 = vld [vmem:[%s4865 + $0x1c] sm:$0xf]
        %v4874 = vld [vmem:[%s4865 + $0x20] sm:$0xf]
        %v4875 = vld [vmem:[%s4865 + $0x24] sm:$0xf]
        %v4876 = vld [vmem:[%s4865 + $0x28] sm:$0xf]
        %v4877 = vld [vmem:[%s4865 + $0x2c] sm:$0xf]
        %v4878 = vld [vmem:[%s4865 + $0x30] sm:$0xf]
        %v4879 = vld [vmem:[%s4865 + $0x34] sm:$0xf]
        %v4880 = vld [vmem:[%s4865 + $0x38] sm:$0xf]
        %v4881 = vld [vmem:[%s4865 + $0x3c] sm:$0xf]
        %v4882 = vunpack.c.l.b16 %v4812
        %v4883 = vunpack.c.l.b16 %v4815
        %v4884 = vunpack.c.l.b16 %v4819
        %v4885 = vunpack.c.l.b16 %v4822
        %v4886 = vunpack.c.l.b16 %v4826
        %v4887 = vunpack.c.l.b16 %v4829
        %v4888 = vunpack.c.l.b16 %v4833
        %v4889 = vunpack.c.l.b16 %v4836
        %v4890 = vunpack.c.l.b16 %v4840
        %v4891 = vunpack.c.l.b16 %v4843
        %v4892 = vunpack.c.l.b16 %v4847
        %v4893 = vunpack.c.l.b16 %v4850
        %v4894 = vunpack.c.l.b16 %v4854
        %v4895 = vunpack.c.l.b16 %v4857
        %v4896 = vunpack.c.l.b16 %v4861
        %v4897 = vunpack.c.l.b16 %v4864
        %v4898 = vpack.c.b16 %v4883, %v4882
        %v4899 = vpack.c.b16 %v4885, %v4884
        %v4900 = vpack.c.b16 %v4887, %v4886
        %v4901 = vpack.c.b16 %v4889, %v4888
        %v4902 = vpack.c.b16 %v4891, %v4890
        %v4903 = vpack.c.b16 %v4893, %v4892
        %v4904 = vpack.c.b16 %v4895, %v4894
        %v4905 = vpack.c.b16 %v4897, %v4896
        %v4930 = vunpack.c.l.b16 %v4866
        %v4931 = vunpack.c.l.b16 %v4867
        %v4932 = vunpack.c.l.b16 %v4868
        %v4933 = vunpack.c.l.b16 %v4869
        %v4934 = vunpack.c.l.b16 %v4870
        %v4935 = vunpack.c.l.b16 %v4871
        %v4936 = vunpack.c.l.b16 %v4872
        %v4937 = vunpack.c.l.b16 %v4873
        %v4938 = vunpack.c.l.b16 %v4874
        %v4939 = vunpack.c.l.b16 %v4875
        %v4940 = vunpack.c.l.b16 %v4876
        %v4941 = vunpack.c.l.b16 %v4877
        %v4942 = vunpack.c.l.b16 %v4878
        %v4943 = vunpack.c.l.b16 %v4879
        %v4944 = vunpack.c.l.b16 %v4880
        %v4945 = vunpack.c.l.b16 %v4881
        %v4946 = vpack.c.b16 %v4931, %v4930
        %v4947 = vpack.c.b16 %v4933, %v4932
        %v4948 = vpack.c.b16 %v4935, %v4934
        %v4949 = vpack.c.b16 %v4937, %v4936
        %v4950 = vpack.c.b16 %v4939, %v4938
        %v4951 = vpack.c.b16 %v4941, %v4940
        %v4952 = vpack.c.b16 %v4943, %v4942
        %v4953 = vpack.c.b16 %v4945, %v4944
        %4962 = vmatprep.subr.bf16.mxu0 0
        %4963 = vmatpush1.bf16.msra.mxu0 %v4953
        %4964 = vmatprep.subr.bf16.mxu0 0
        %4965 = vmatpush1.bf16.msra.mxu0 %v4952
        %4966 = vmatprep.subr.bf16.mxu0 0
        %4967 = vmatpush1.bf16.msra.mxu0 %v4951
        %4968 = vmatprep.subr.bf16.mxu0 0
        %4969 = vmatpush1.bf16.msra.mxu0 %v4950
        %4970 = vmatprep.subr.bf16.mxu0 0
        %4971 = vmatpush1.bf16.msra.mxu0 %v4949
        %4972 = vmatprep.subr.bf16.mxu0 0
        %4973 = vmatpush1.bf16.msra.mxu0 %v4948
        %4974 = vmatprep.subr.bf16.mxu0 0
        %4975 = vmatpush1.bf16.msra.mxu0 %v4947
        %4976 = vmatprep.subr.bf16.mxu0 0
        %4977 = vmatpush1.bf16.msra.mxu0 %v4946
        %4978 = vmatprep.subr.bf16.mxu0 0
        %4979 = vmatpush2.bf16.msra.mxu0 0
        %4980 = vmatprep.subr.bf16.mxu0 0
        %4981 = vmatpush2.bf16.msra.mxu0 0
        %4982 = vmatprep.subr.bf16.mxu0 0
        %4983 = vmatpush2.bf16.msra.mxu0 0
        %4984 = vmatprep.subr.bf16.mxu0 0
        %4985 = vmatpush2.bf16.msra.mxu0 0
        %4986 = vmatprep.subr.bf16.mxu0 0
        %4987 = vmatpush2.bf16.msra.mxu0 0
        %4988 = vmatprep.subr.bf16.mxu0 0
        %4989 = vmatpush2.bf16.msra.mxu0 0
        %4990 = vmatprep.subr.bf16.mxu0 0
        %4991 = vmatpush2.bf16.msra.mxu0 0
        %4992 = vmatprep.subr.bf16.mxu0 0
        %4993 = vmatpush2.bf16.msra.mxu0 0
        %4994 = vmatprep.mubr.bf16.mxu0 0
        %4995 = vmatmul.mubr.bf16.gmra.mxu0 %v4898
        %v4996 = vpop.f32.mrf.mxu0
        %v4997 = vadd.f32 0.0, %v4996
        %v4998 = vpop.f32.mrf.mxu0
        %v4999 = vpop.f32.mrf.mxu0
        %v5000 = vadd.f32 0.0, %v4999
        %v5001 = vpop.f32.mrf.mxu0
        %5002 = vmatprep.mubr.bf16.mxu0 0
        %5003 = vmatmul.mubr.bf16.gmra.mxu0 %v4899
        %v5004 = vpop.f32.mrf.mxu0
        %v5005 = vadd.f32 0.0, %v5004
        %v5006 = vpop.f32.mrf.mxu0
        %v5007 = vpop.f32.mrf.mxu0
        %v5008 = vadd.f32 0.0, %v5007
        %v5009 = vpop.f32.mrf.mxu0
        %5010 = vmatprep.mubr.bf16.mxu0 0
        %5011 = vmatmul.mubr.bf16.gmra.mxu0 %v4900
        %v5012 = vpop.f32.mrf.mxu0
        %v5013 = vadd.f32 0.0, %v5012
        %v5014 = vpop.f32.mrf.mxu0
        %v5015 = vpop.f32.mrf.mxu0
        %v5016 = vadd.f32 0.0, %v5015
        %v5017 = vpop.f32.mrf.mxu0
        %5018 = vmatprep.mubr.bf16.mxu0 0
        %5019 = vmatmul.mubr.bf16.gmra.mxu0 %v4901
        %v5020 = vpop.f32.mrf.mxu0
        %v5021 = vadd.f32 0.0, %v5020
        %v5022 = vpop.f32.mrf.mxu0
        %v5023 = vpop.f32.mrf.mxu0
        %v5024 = vadd.f32 0.0, %v5023
        %v5025 = vpop.f32.mrf.mxu0
        %5026 = vmatprep.mubr.bf16.mxu0 0
        %5027 = vmatmul.mubr.bf16.gmra.mxu0 %v4902
        %v5028 = vpop.f32.mrf.mxu0
        %v5029 = vadd.f32 0.0, %v5028
        %v5030 = vpop.f32.mrf.mxu0
        %v5031 = vpop.f32.mrf.mxu0
        %v5032 = vadd.f32 0.0, %v5031
        %v5033 = vpop.f32.mrf.mxu0
        %5034 = vmatprep.mubr.bf16.mxu0 0
        %5035 = vmatmul.mubr.bf16.gmra.mxu0 %v4903
        %v5036 = vpop.f32.mrf.mxu0
        %v5037 = vadd.f32 0.0, %v5036
        %v5038 = vpop.f32.mrf.mxu0
        %v5039 = vpop.f32.mrf.mxu0
        %v5040 = vadd.f32 0.0, %v5039
        %v5041 = vpop.f32.mrf.mxu0
        %5042 = vmatprep.mubr.bf16.mxu0 0
        %5043 = vmatmul.mubr.bf16.gmra.mxu0 %v4904
        %v5044 = vpop.f32.mrf.mxu0
        %v5045 = vadd.f32 0.0, %v5044
        %v5046 = vpop.f32.mrf.mxu0
        %v5047 = vpop.f32.mrf.mxu0
        %v5048 = vadd.f32 0.0, %v5047
        %v5049 = vpop.f32.mrf.mxu0
        %5050 = vmatprep.mubr.bf16.mxu0 0
        %5051 = vmatmul.mubr.bf16.gmra.mxu0 %v4905
        %v5052 = vpop.f32.mrf.mxu0
        %v5053 = vadd.f32 0.0, %v5052
        %v5054 = vpop.f32.mrf.mxu0
        %v5055 = vpop.f32.mrf.mxu0
        %v5056 = vadd.f32 0.0, %v5055
        %v5057 = vpop.f32.mrf.mxu0
        %5058 = vdwg.mxu0
        %v5059 = vadd.f32 %v4761, %v4997
        %v5060 = vadd.f32 %v4762, %v5000
        %v5061 = vadd.f32 %v4763, %v5005
        %v5062 = vadd.f32 %v4764, %v5008
        %v5063 = vadd.f32 %v4765, %v5013
        %v5064 = vadd.f32 %v4766, %v5016
        %v5065 = vadd.f32 %v4767, %v5021
        %v5066 = vadd.f32 %v4768, %v5024
        %v5067 = vadd.f32 %v4769, %v5029
        %v5068 = vadd.f32 %v4770, %v5032
        %v5069 = vadd.f32 %v4771, %v5037
        %v5070 = vadd.f32 %v4772, %v5040
        %v5071 = vadd.f32 %v4773, %v5045
        %v5072 = vadd.f32 %v4774, %v5048
        %v5073 = vadd.f32 %v4775, %v5053
        %v5074 = vadd.f32 %v4776, %v5056
        %s5075 = sadd.s32 %s362, 10
        %s5076 = smul.u32 %s5075, 4
        %s5077 = smul.addr %s5076, 4
        %s5078 = scalar_lea.vmem %s359, %s5077
        %v5079 = vld [vmem:[%s5078] sm:$0xc]
        %v5080 = vld [vmem:[%s5078 + $0x4] sm:$0xf]
        %v5081 = vld [vmem:[%s5078 + $0x8] sm:$0x3]
        %v5082 = vld [vmem:[%s5078 + $0x10] sm:$0xc]
        %v5083 = vld [vmem:[%s5078 + $0x14] sm:$0xf]
        %v5084 = vld [vmem:[%s5078 + $0x18] sm:$0x3]
        %v5085 = vld [vmem:[%s5078 + $0x20] sm:$0xc]
        %v5086 = vld [vmem:[%s5078 + $0x24] sm:$0xf]
        %v5087 = vld [vmem:[%s5078 + $0x28] sm:$0x3]
        %v5088 = vld [vmem:[%s5078 + $0x30] sm:$0xc]
        %v5089 = vld [vmem:[%s5078 + $0x34] sm:$0xf]
        %v5090 = vld [vmem:[%s5078 + $0x38] sm:$0x3]
        %v5091 = vld [vmem:[%s5078 + $0x40] sm:$0xc]
        %v5092 = vld [vmem:[%s5078 + $0x44] sm:$0xf]
        %v5093 = vld [vmem:[%s5078 + $0x48] sm:$0x3]
        %v5094 = vld [vmem:[%s5078 + $0x50] sm:$0xc]
        %v5095 = vld [vmem:[%s5078 + $0x54] sm:$0xf]
        %v5096 = vld [vmem:[%s5078 + $0x58] sm:$0x3]
        %v5097 = vld [vmem:[%s5078 + $0x60] sm:$0xc]
        %v5098 = vld [vmem:[%s5078 + $0x64] sm:$0xf]
        %v5099 = vld [vmem:[%s5078 + $0x68] sm:$0x3]
        %v5100 = vld [vmem:[%s5078 + $0x70] sm:$0xc]
        %v5101 = vld [vmem:[%s5078 + $0x74] sm:$0xf]
        %v5102 = vld [vmem:[%s5078 + $0x78] sm:$0x3]
        %v5127 = vrot.slane %v5079, 6
        %v5128 = vrot.slane %v5127, 4
        %v5129 = vrot.slane %v5080, 6
        %v5130 = vsel %vm3526, %v5128, %v5129
        %v5131 = vrot.slane %v5129, 4
        %v5132 = vrot.slane %v5081, 6
        %v5133 = vsel %vm3526, %v5131, %v5132
        %v5134 = vrot.slane %v5082, 6
        %v5135 = vrot.slane %v5134, 4
        %v5136 = vrot.slane %v5083, 6
        %v5137 = vsel %vm3526, %v5135, %v5136
        %v5138 = vrot.slane %v5136, 4
        %v5139 = vrot.slane %v5084, 6
        %v5140 = vsel %vm3526, %v5138, %v5139
        %v5141 = vrot.slane %v5085, 6
        %v5142 = vrot.slane %v5141, 4
        %v5143 = vrot.slane %v5086, 6
        %v5144 = vsel %vm3526, %v5142, %v5143
        %v5145 = vrot.slane %v5143, 4
        %v5146 = vrot.slane %v5087, 6
        %v5147 = vsel %vm3526, %v5145, %v5146
        %v5148 = vrot.slane %v5088, 6
        %v5149 = vrot.slane %v5148, 4
        %v5150 = vrot.slane %v5089, 6
        %v5151 = vsel %vm3526, %v5149, %v5150
        %v5152 = vrot.slane %v5150, 4
        %v5153 = vrot.slane %v5090, 6
        %v5154 = vsel %vm3526, %v5152, %v5153
        %v5155 = vrot.slane %v5091, 6
        %v5156 = vrot.slane %v5155, 4
        %v5157 = vrot.slane %v5092, 6
        %v5158 = vsel %vm3526, %v5156, %v5157
        %v5159 = vrot.slane %v5157, 4
        %v5160 = vrot.slane %v5093, 6
        %v5161 = vsel %vm3526, %v5159, %v5160
        %v5162 = vrot.slane %v5094, 6
        %v5163 = vrot.slane %v5162, 4
        %v5164 = vrot.slane %v5095, 6
        %v5165 = vsel %vm3526, %v5163, %v5164
        %v5166 = vrot.slane %v5164, 4
        %v5167 = vrot.slane %v5096, 6
        %v5168 = vsel %vm3526, %v5166, %v5167
        %v5169 = vrot.slane %v5097, 6
        %v5170 = vrot.slane %v5169, 4
        %v5171 = vrot.slane %v5098, 6
        %v5172 = vsel %vm3526, %v5170, %v5171
        %v5173 = vrot.slane %v5171, 4
        %v5174 = vrot.slane %v5099, 6
        %v5175 = vsel %vm3526, %v5173, %v5174
        %v5176 = vrot.slane %v5100, 6
        %v5177 = vrot.slane %v5176, 4
        %v5178 = vrot.slane %v5101, 6
        %v5179 = vsel %vm3526, %v5177, %v5178
        %v5180 = vrot.slane %v5178, 4
        %v5181 = vrot.slane %v5102, 6
        %v5182 = vsel %vm3526, %v5180, %v5181
        %s5183 = scalar_lea.vmem %s3, 960
        %v5184 = vld [vmem:[%s5183] sm:$0xf]
        %v5185 = vld [vmem:[%s5183 + $0x4] sm:$0xf]
        %v5186 = vld [vmem:[%s5183 + $0x8] sm:$0xf]
        %v5187 = vld [vmem:[%s5183 + $0xc] sm:$0xf]
        %v5188 = vld [vmem:[%s5183 + $0x10] sm:$0xf]
        %v5189 = vld [vmem:[%s5183 + $0x14] sm:$0xf]
        %v5190 = vld [vmem:[%s5183 + $0x18] sm:$0xf]
        %v5191 = vld [vmem:[%s5183 + $0x1c] sm:$0xf]
        %v5192 = vld [vmem:[%s5183 + $0x20] sm:$0xf]
        %v5193 = vld [vmem:[%s5183 + $0x24] sm:$0xf]
        %v5194 = vld [vmem:[%s5183 + $0x28] sm:$0xf]
        %v5195 = vld [vmem:[%s5183 + $0x2c] sm:$0xf]
        %v5196 = vld [vmem:[%s5183 + $0x30] sm:$0xf]
        %v5197 = vld [vmem:[%s5183 + $0x34] sm:$0xf]
        %v5198 = vld [vmem:[%s5183 + $0x38] sm:$0xf]
        %v5199 = vld [vmem:[%s5183 + $0x3c] sm:$0xf]
        %v5200 = vunpack.c.l.b16 %v5130
        %v5201 = vunpack.c.l.b16 %v5133
        %v5202 = vunpack.c.l.b16 %v5137
        %v5203 = vunpack.c.l.b16 %v5140
        %v5204 = vunpack.c.l.b16 %v5144
        %v5205 = vunpack.c.l.b16 %v5147
        %v5206 = vunpack.c.l.b16 %v5151
        %v5207 = vunpack.c.l.b16 %v5154
        %v5208 = vunpack.c.l.b16 %v5158
        %v5209 = vunpack.c.l.b16 %v5161
        %v5210 = vunpack.c.l.b16 %v5165
        %v5211 = vunpack.c.l.b16 %v5168
        %v5212 = vunpack.c.l.b16 %v5172
        %v5213 = vunpack.c.l.b16 %v5175
        %v5214 = vunpack.c.l.b16 %v5179
        %v5215 = vunpack.c.l.b16 %v5182
        %v5216 = vpack.c.b16 %v5201, %v5200
        %v5217 = vpack.c.b16 %v5203, %v5202
        %v5218 = vpack.c.b16 %v5205, %v5204
        %v5219 = vpack.c.b16 %v5207, %v5206
        %v5220 = vpack.c.b16 %v5209, %v5208
        %v5221 = vpack.c.b16 %v5211, %v5210
        %v5222 = vpack.c.b16 %v5213, %v5212
        %v5223 = vpack.c.b16 %v5215, %v5214
        %v5248 = vunpack.c.l.b16 %v5184
        %v5249 = vunpack.c.l.b16 %v5185
        %v5250 = vunpack.c.l.b16 %v5186
        %v5251 = vunpack.c.l.b16 %v5187
        %v5252 = vunpack.c.l.b16 %v5188
        %v5253 = vunpack.c.l.b16 %v5189
        %v5254 = vunpack.c.l.b16 %v5190
        %v5255 = vunpack.c.l.b16 %v5191
        %v5256 = vunpack.c.l.b16 %v5192
        %v5257 = vunpack.c.l.b16 %v5193
        %v5258 = vunpack.c.l.b16 %v5194
        %v5259 = vunpack.c.l.b16 %v5195
        %v5260 = vunpack.c.l.b16 %v5196
        %v5261 = vunpack.c.l.b16 %v5197
        %v5262 = vunpack.c.l.b16 %v5198
        %v5263 = vunpack.c.l.b16 %v5199
        %v5264 = vpack.c.b16 %v5249, %v5248
        %v5265 = vpack.c.b16 %v5251, %v5250
        %v5266 = vpack.c.b16 %v5253, %v5252
        %v5267 = vpack.c.b16 %v5255, %v5254
        %v5268 = vpack.c.b16 %v5257, %v5256
        %v5269 = vpack.c.b16 %v5259, %v5258
        %v5270 = vpack.c.b16 %v5261, %v5260
        %v5271 = vpack.c.b16 %v5263, %v5262
        %5280 = vmatprep.subr.bf16.mxu0 0
        %5281 = vmatpush1.bf16.msra.mxu0 %v5271
        %5282 = vmatprep.subr.bf16.mxu0 0
        %5283 = vmatpush1.bf16.msra.mxu0 %v5270
        %5284 = vmatprep.subr.bf16.mxu0 0
        %5285 = vmatpush1.bf16.msra.mxu0 %v5269
        %5286 = vmatprep.subr.bf16.mxu0 0
        %5287 = vmatpush1.bf16.msra.mxu0 %v5268
        %5288 = vmatprep.subr.bf16.mxu0 0
        %5289 = vmatpush1.bf16.msra.mxu0 %v5267
        %5290 = vmatprep.subr.bf16.mxu0 0
        %5291 = vmatpush1.bf16.msra.mxu0 %v5266
        %5292 = vmatprep.subr.bf16.mxu0 0
        %5293 = vmatpush1.bf16.msra.mxu0 %v5265
        %5294 = vmatprep.subr.bf16.mxu0 0
        %5295 = vmatpush1.bf16.msra.mxu0 %v5264
        %5296 = vmatprep.subr.bf16.mxu0 0
        %5297 = vmatpush2.bf16.msra.mxu0 0
        %5298 = vmatprep.subr.bf16.mxu0 0
        %5299 = vmatpush2.bf16.msra.mxu0 0
        %5300 = vmatprep.subr.bf16.mxu0 0
        %5301 = vmatpush2.bf16.msra.mxu0 0
        %5302 = vmatprep.subr.bf16.mxu0 0
        %5303 = vmatpush2.bf16.msra.mxu0 0
        %5304 = vmatprep.subr.bf16.mxu0 0
        %5305 = vmatpush2.bf16.msra.mxu0 0
        %5306 = vmatprep.subr.bf16.mxu0 0
        %5307 = vmatpush2.bf16.msra.mxu0 0
        %5308 = vmatprep.subr.bf16.mxu0 0
        %5309 = vmatpush2.bf16.msra.mxu0 0
        %5310 = vmatprep.subr.bf16.mxu0 0
        %5311 = vmatpush2.bf16.msra.mxu0 0
        %5312 = vmatprep.mubr.bf16.mxu0 0
        %5313 = vmatmul.mubr.bf16.gmra.mxu0 %v5216
        %v5314 = vpop.f32.mrf.mxu0
        %v5315 = vadd.f32 0.0, %v5314
        %v5316 = vpop.f32.mrf.mxu0
        %v5317 = vpop.f32.mrf.mxu0
        %v5318 = vadd.f32 0.0, %v5317
        %v5319 = vpop.f32.mrf.mxu0
        %5320 = vmatprep.mubr.bf16.mxu0 0
        %5321 = vmatmul.mubr.bf16.gmra.mxu0 %v5217
        %v5322 = vpop.f32.mrf.mxu0
        %v5323 = vadd.f32 0.0, %v5322
        %v5324 = vpop.f32.mrf.mxu0
        %v5325 = vpop.f32.mrf.mxu0
        %v5326 = vadd.f32 0.0, %v5325
        %v5327 = vpop.f32.mrf.mxu0
        %5328 = vmatprep.mubr.bf16.mxu0 0
        %5329 = vmatmul.mubr.bf16.gmra.mxu0 %v5218
        %v5330 = vpop.f32.mrf.mxu0
        %v5331 = vadd.f32 0.0, %v5330
        %v5332 = vpop.f32.mrf.mxu0
        %v5333 = vpop.f32.mrf.mxu0
        %v5334 = vadd.f32 0.0, %v5333
        %v5335 = vpop.f32.mrf.mxu0
        %5336 = vmatprep.mubr.bf16.mxu0 0
        %5337 = vmatmul.mubr.bf16.gmra.mxu0 %v5219
        %v5338 = vpop.f32.mrf.mxu0
        %v5339 = vadd.f32 0.0, %v5338
        %v5340 = vpop.f32.mrf.mxu0
        %v5341 = vpop.f32.mrf.mxu0
        %v5342 = vadd.f32 0.0, %v5341
        %v5343 = vpop.f32.mrf.mxu0
        %5344 = vmatprep.mubr.bf16.mxu0 0
        %5345 = vmatmul.mubr.bf16.gmra.mxu0 %v5220
        %v5346 = vpop.f32.mrf.mxu0
        %v5347 = vadd.f32 0.0, %v5346
        %v5348 = vpop.f32.mrf.mxu0
        %v5349 = vpop.f32.mrf.mxu0
        %v5350 = vadd.f32 0.0, %v5349
        %v5351 = vpop.f32.mrf.mxu0
        %5352 = vmatprep.mubr.bf16.mxu0 0
        %5353 = vmatmul.mubr.bf16.gmra.mxu0 %v5221
        %v5354 = vpop.f32.mrf.mxu0
        %v5355 = vadd.f32 0.0, %v5354
        %v5356 = vpop.f32.mrf.mxu0
        %v5357 = vpop.f32.mrf.mxu0
        %v5358 = vadd.f32 0.0, %v5357
        %v5359 = vpop.f32.mrf.mxu0
        %5360 = vmatprep.mubr.bf16.mxu0 0
        %5361 = vmatmul.mubr.bf16.gmra.mxu0 %v5222
        %v5362 = vpop.f32.mrf.mxu0
        %v5363 = vadd.f32 0.0, %v5362
        %v5364 = vpop.f32.mrf.mxu0
        %v5365 = vpop.f32.mrf.mxu0
        %v5366 = vadd.f32 0.0, %v5365
        %v5367 = vpop.f32.mrf.mxu0
        %5368 = vmatprep.mubr.bf16.mxu0 0
        %5369 = vmatmul.mubr.bf16.gmra.mxu0 %v5223
        %v5370 = vpop.f32.mrf.mxu0
        %v5371 = vadd.f32 0.0, %v5370
        %v5372 = vpop.f32.mrf.mxu0
        %v5373 = vpop.f32.mrf.mxu0
        %v5374 = vadd.f32 0.0, %v5373
        %v5375 = vpop.f32.mrf.mxu0
        %5376 = vdwg.mxu0
        %v5377 = vadd.f32 %v5059, %v5315
        %v5378 = vadd.f32 %v5060, %v5318
        %v5379 = vadd.f32 %v5061, %v5323
        %v5380 = vadd.f32 %v5062, %v5326
        %v5381 = vadd.f32 %v5063, %v5331
        %v5382 = vadd.f32 %v5064, %v5334
        %v5383 = vadd.f32 %v5065, %v5339
        %v5384 = vadd.f32 %v5066, %v5342
        %v5385 = vadd.f32 %v5067, %v5347
        %v5386 = vadd.f32 %v5068, %v5350
        %v5387 = vadd.f32 %v5069, %v5355
        %v5388 = vadd.f32 %v5070, %v5358
        %v5389 = vadd.f32 %v5071, %v5363
        %v5390 = vadd.f32 %v5072, %v5366
        %v5391 = vadd.f32 %v5073, %v5371
        %v5392 = vadd.f32 %v5074, %v5374
        %v5393 = vld [vmem:[%s5078 + $0x8] sm:$0xf]
        %v5394 = vld [vmem:[%s5078 + $0x18] sm:$0xf]
        %v5395 = vld [vmem:[%s5078 + $0x28] sm:$0xf]
        %v5396 = vld [vmem:[%s5078 + $0x38] sm:$0xf]
        %v5397 = vld [vmem:[%s5078 + $0x48] sm:$0xf]
        %v5398 = vld [vmem:[%s5078 + $0x58] sm:$0xf]
        %v5399 = vld [vmem:[%s5078 + $0x68] sm:$0xf]
        %v5400 = vld [vmem:[%s5078 + $0x78] sm:$0xf]
        %s5401 = scalar_lea.vmem %s3, 1024
        %v5402 = vld [vmem:[%s5401] sm:$0xf]
        %v5403 = vld [vmem:[%s5401 + $0x4] sm:$0xf]
        %v5404 = vld [vmem:[%s5401 + $0x8] sm:$0xf]
        %v5405 = vld [vmem:[%s5401 + $0xc] sm:$0xf]
        %v5406 = vld [vmem:[%s5401 + $0x10] sm:$0xf]
        %v5407 = vld [vmem:[%s5401 + $0x14] sm:$0xf]
        %v5408 = vld [vmem:[%s5401 + $0x18] sm:$0xf]
        %v5409 = vld [vmem:[%s5401 + $0x1c] sm:$0xf]
        %v5410 = vld [vmem:[%s5401 + $0x20] sm:$0xf]
        %v5411 = vld [vmem:[%s5401 + $0x24] sm:$0xf]
        %v5412 = vld [vmem:[%s5401 + $0x28] sm:$0xf]
        %v5413 = vld [vmem:[%s5401 + $0x2c] sm:$0xf]
        %v5414 = vld [vmem:[%s5401 + $0x30] sm:$0xf]
        %v5415 = vld [vmem:[%s5401 + $0x34] sm:$0xf]
        %v5416 = vld [vmem:[%s5401 + $0x38] sm:$0xf]
        %v5417 = vld [vmem:[%s5401 + $0x3c] sm:$0xf]
        %v5426 = vunpack.c.l.b16 %v5080
        %v5427 = vunpack.c.l.b16 %v5393
        %v5428 = vunpack.c.l.b16 %v5083
        %v5429 = vunpack.c.l.b16 %v5394
        %v5430 = vunpack.c.l.b16 %v5086
        %v5431 = vunpack.c.l.b16 %v5395
        %v5432 = vunpack.c.l.b16 %v5089
        %v5433 = vunpack.c.l.b16 %v5396
        %v5434 = vunpack.c.l.b16 %v5092
        %v5435 = vunpack.c.l.b16 %v5397
        %v5436 = vunpack.c.l.b16 %v5095
        %v5437 = vunpack.c.l.b16 %v5398
        %v5438 = vunpack.c.l.b16 %v5098
        %v5439 = vunpack.c.l.b16 %v5399
        %v5440 = vunpack.c.l.b16 %v5101
        %v5441 = vunpack.c.l.b16 %v5400
        %v5442 = vpack.c.b16 %v5427, %v5426
        %v5443 = vpack.c.b16 %v5429, %v5428
        %v5444 = vpack.c.b16 %v5431, %v5430
        %v5445 = vpack.c.b16 %v5433, %v5432
        %v5446 = vpack.c.b16 %v5435, %v5434
        %v5447 = vpack.c.b16 %v5437, %v5436
        %v5448 = vpack.c.b16 %v5439, %v5438
        %v5449 = vpack.c.b16 %v5441, %v5440
        %v5474 = vunpack.c.l.b16 %v5402
        %v5475 = vunpack.c.l.b16 %v5403
        %v5476 = vunpack.c.l.b16 %v5404
        %v5477 = vunpack.c.l.b16 %v5405
        %v5478 = vunpack.c.l.b16 %v5406
        %v5479 = vunpack.c.l.b16 %v5407
        %v5480 = vunpack.c.l.b16 %v5408
        %v5481 = vunpack.c.l.b16 %v5409
        %v5482 = vunpack.c.l.b16 %v5410
        %v5483 = vunpack.c.l.b16 %v5411
        %v5484 = vunpack.c.l.b16 %v5412
        %v5485 = vunpack.c.l.b16 %v5413
        %v5486 = vunpack.c.l.b16 %v5414
        %v5487 = vunpack.c.l.b16 %v5415
        %v5488 = vunpack.c.l.b16 %v5416
        %v5489 = vunpack.c.l.b16 %v5417
        %v5490 = vpack.c.b16 %v5475, %v5474
        %v5491 = vpack.c.b16 %v5477, %v5476
        %v5492 = vpack.c.b16 %v5479, %v5478
        %v5493 = vpack.c.b16 %v5481, %v5480
        %v5494 = vpack.c.b16 %v5483, %v5482
        %v5495 = vpack.c.b16 %v5485, %v5484
        %v5496 = vpack.c.b16 %v5487, %v5486
        %v5497 = vpack.c.b16 %v5489, %v5488
        %5506 = vmatprep.subr.bf16.mxu0 0
        %5507 = vmatpush1.bf16.msra.mxu0 %v5497
        %5508 = vmatprep.subr.bf16.mxu0 0
        %5509 = vmatpush1.bf16.msra.mxu0 %v5496
        %5510 = vmatprep.subr.bf16.mxu0 0
        %5511 = vmatpush1.bf16.msra.mxu0 %v5495
        %5512 = vmatprep.subr.bf16.mxu0 0
        %5513 = vmatpush1.bf16.msra.mxu0 %v5494
        %5514 = vmatprep.subr.bf16.mxu0 0
        %5515 = vmatpush1.bf16.msra.mxu0 %v5493
        %5516 = vmatprep.subr.bf16.mxu0 0
        %5517 = vmatpush1.bf16.msra.mxu0 %v5492
        %5518 = vmatprep.subr.bf16.mxu0 0
        %5519 = vmatpush1.bf16.msra.mxu0 %v5491
        %5520 = vmatprep.subr.bf16.mxu0 0
        %5521 = vmatpush1.bf16.msra.mxu0 %v5490
        %5522 = vmatprep.subr.bf16.mxu0 0
        %5523 = vmatpush2.bf16.msra.mxu0 0
        %5524 = vmatprep.subr.bf16.mxu0 0
        %5525 = vmatpush2.bf16.msra.mxu0 0
        %5526 = vmatprep.subr.bf16.mxu0 0
        %5527 = vmatpush2.bf16.msra.mxu0 0
        %5528 = vmatprep.subr.bf16.mxu0 0
        %5529 = vmatpush2.bf16.msra.mxu0 0
        %5530 = vmatprep.subr.bf16.mxu0 0
        %5531 = vmatpush2.bf16.msra.mxu0 0
        %5532 = vmatprep.subr.bf16.mxu0 0
        %5533 = vmatpush2.bf16.msra.mxu0 0
        %5534 = vmatprep.subr.bf16.mxu0 0
        %5535 = vmatpush2.bf16.msra.mxu0 0
        %5536 = vmatprep.subr.bf16.mxu0 0
        %5537 = vmatpush2.bf16.msra.mxu0 0
        %5538 = vmatprep.mubr.bf16.mxu0 0
        %5539 = vmatmul.mubr.bf16.gmra.mxu0 %v5442
        %v5540 = vpop.f32.mrf.mxu0
        %v5541 = vadd.f32 0.0, %v5540
        %v5542 = vpop.f32.mrf.mxu0
        %v5543 = vpop.f32.mrf.mxu0
        %v5544 = vadd.f32 0.0, %v5543
        %v5545 = vpop.f32.mrf.mxu0
        %5546 = vmatprep.mubr.bf16.mxu0 0
        %5547 = vmatmul.mubr.bf16.gmra.mxu0 %v5443
        %v5548 = vpop.f32.mrf.mxu0
        %v5549 = vadd.f32 0.0, %v5548
        %v5550 = vpop.f32.mrf.mxu0
        %v5551 = vpop.f32.mrf.mxu0
        %v5552 = vadd.f32 0.0, %v5551
        %v5553 = vpop.f32.mrf.mxu0
        %5554 = vmatprep.mubr.bf16.mxu0 0
        %5555 = vmatmul.mubr.bf16.gmra.mxu0 %v5444
        %v5556 = vpop.f32.mrf.mxu0
        %v5557 = vadd.f32 0.0, %v5556
        %v5558 = vpop.f32.mrf.mxu0
        %v5559 = vpop.f32.mrf.mxu0
        %v5560 = vadd.f32 0.0, %v5559
        %v5561 = vpop.f32.mrf.mxu0
        %5562 = vmatprep.mubr.bf16.mxu0 0
        %5563 = vmatmul.mubr.bf16.gmra.mxu0 %v5445
        %v5564 = vpop.f32.mrf.mxu0
        %v5565 = vadd.f32 0.0, %v5564
        %v5566 = vpop.f32.mrf.mxu0
        %v5567 = vpop.f32.mrf.mxu0
        %v5568 = vadd.f32 0.0, %v5567
        %v5569 = vpop.f32.mrf.mxu0
        %5570 = vmatprep.mubr.bf16.mxu0 0
        %5571 = vmatmul.mubr.bf16.gmra.mxu0 %v5446
        %v5572 = vpop.f32.mrf.mxu0
        %v5573 = vadd.f32 0.0, %v5572
        %v5574 = vpop.f32.mrf.mxu0
        %v5575 = vpop.f32.mrf.mxu0
        %v5576 = vadd.f32 0.0, %v5575
        %v5577 = vpop.f32.mrf.mxu0
        %5578 = vmatprep.mubr.bf16.mxu0 0
        %5579 = vmatmul.mubr.bf16.gmra.mxu0 %v5447
        %v5580 = vpop.f32.mrf.mxu0
        %v5581 = vadd.f32 0.0, %v5580
        %v5582 = vpop.f32.mrf.mxu0
        %v5583 = vpop.f32.mrf.mxu0
        %v5584 = vadd.f32 0.0, %v5583
        %v5585 = vpop.f32.mrf.mxu0
        %5586 = vmatprep.mubr.bf16.mxu0 0
        %5587 = vmatmul.mubr.bf16.gmra.mxu0 %v5448
        %v5588 = vpop.f32.mrf.mxu0
        %v5589 = vadd.f32 0.0, %v5588
        %v5590 = vpop.f32.mrf.mxu0
        %v5591 = vpop.f32.mrf.mxu0
        %v5592 = vadd.f32 0.0, %v5591
        %v5593 = vpop.f32.mrf.mxu0
        %5594 = vmatprep.mubr.bf16.mxu0 0
        %5595 = vmatmul.mubr.bf16.gmra.mxu0 %v5449
        %v5596 = vpop.f32.mrf.mxu0
        %v5597 = vadd.f32 0.0, %v5596
        %v5598 = vpop.f32.mrf.mxu0
        %v5599 = vpop.f32.mrf.mxu0
        %v5600 = vadd.f32 0.0, %v5599
        %v5601 = vpop.f32.mrf.mxu0
        %5602 = vdwg.mxu0
        %v5603 = vadd.f32 %v5377, %v5541
        %v5604 = vadd.f32 %v5378, %v5544
        %v5605 = vadd.f32 %v5379, %v5549
        %v5606 = vadd.f32 %v5380, %v5552
        %v5607 = vadd.f32 %v5381, %v5557
        %v5608 = vadd.f32 %v5382, %v5560
        %v5609 = vadd.f32 %v5383, %v5565
        %v5610 = vadd.f32 %v5384, %v5568
        %v5611 = vadd.f32 %v5385, %v5573
        %v5612 = vadd.f32 %v5386, %v5576
        %v5613 = vadd.f32 %v5387, %v5581
        %v5614 = vadd.f32 %v5388, %v5584
        %v5615 = vadd.f32 %v5389, %v5589
        %v5616 = vadd.f32 %v5390, %v5592
        %v5617 = vadd.f32 %v5391, %v5597
        %v5618 = vadd.f32 %v5392, %v5600
        %v5619 = vld [vmem:[%s5078 + $0x4] sm:$0xc]
        %v5620 = vld [vmem:[%s5078 + $0x8] sm:$0xf]
        %v5621 = vld [vmem:[%s5078 + $0xc] sm:$0x3]
        %v5622 = vld [vmem:[%s5078 + $0x14] sm:$0xc]
        %v5623 = vld [vmem:[%s5078 + $0x18] sm:$0xf]
        %v5624 = vld [vmem:[%s5078 + $0x1c] sm:$0x3]
        %v5625 = vld [vmem:[%s5078 + $0x24] sm:$0xc]
        %v5626 = vld [vmem:[%s5078 + $0x28] sm:$0xf]
        %v5627 = vld [vmem:[%s5078 + $0x2c] sm:$0x3]
        %v5628 = vld [vmem:[%s5078 + $0x34] sm:$0xc]
        %v5629 = vld [vmem:[%s5078 + $0x38] sm:$0xf]
        %v5630 = vld [vmem:[%s5078 + $0x3c] sm:$0x3]
        %v5631 = vld [vmem:[%s5078 + $0x44] sm:$0xc]
        %v5632 = vld [vmem:[%s5078 + $0x48] sm:$0xf]
        %v5633 = vld [vmem:[%s5078 + $0x4c] sm:$0x3]
        %v5634 = vld [vmem:[%s5078 + $0x54] sm:$0xc]
        %v5635 = vld [vmem:[%s5078 + $0x58] sm:$0xf]
        %v5636 = vld [vmem:[%s5078 + $0x5c] sm:$0x3]
        %v5637 = vld [vmem:[%s5078 + $0x64] sm:$0xc]
        %v5638 = vld [vmem:[%s5078 + $0x68] sm:$0xf]
        %v5639 = vld [vmem:[%s5078 + $0x6c] sm:$0x3]
        %v5640 = vld [vmem:[%s5078 + $0x74] sm:$0xc]
        %v5641 = vld [vmem:[%s5078 + $0x78] sm:$0xf]
        %v5642 = vld [vmem:[%s5078 + $0x7c] sm:$0x3]
        %v5667 = vrot.slane %v5619, 6
        %v5668 = vrot.slane %v5667, 4
        %v5669 = vrot.slane %v5620, 6
        %v5670 = vsel %vm3526, %v5668, %v5669
        %v5671 = vrot.slane %v5669, 4
        %v5672 = vrot.slane %v5621, 6
        %v5673 = vsel %vm3526, %v5671, %v5672
        %v5674 = vrot.slane %v5622, 6
        %v5675 = vrot.slane %v5674, 4
        %v5676 = vrot.slane %v5623, 6
        %v5677 = vsel %vm3526, %v5675, %v5676
        %v5678 = vrot.slane %v5676, 4
        %v5679 = vrot.slane %v5624, 6
        %v5680 = vsel %vm3526, %v5678, %v5679
        %v5681 = vrot.slane %v5625, 6
        %v5682 = vrot.slane %v5681, 4
        %v5683 = vrot.slane %v5626, 6
        %v5684 = vsel %vm3526, %v5682, %v5683
        %v5685 = vrot.slane %v5683, 4
        %v5686 = vrot.slane %v5627, 6
        %v5687 = vsel %vm3526, %v5685, %v5686
        %v5688 = vrot.slane %v5628, 6
        %v5689 = vrot.slane %v5688, 4
        %v5690 = vrot.slane %v5629, 6
        %v5691 = vsel %vm3526, %v5689, %v5690
        %v5692 = vrot.slane %v5690, 4
        %v5693 = vrot.slane %v5630, 6
        %v5694 = vsel %vm3526, %v5692, %v5693
        %v5695 = vrot.slane %v5631, 6
        %v5696 = vrot.slane %v5695, 4
        %v5697 = vrot.slane %v5632, 6
        %v5698 = vsel %vm3526, %v5696, %v5697
        %v5699 = vrot.slane %v5697, 4
        %v5700 = vrot.slane %v5633, 6
        %v5701 = vsel %vm3526, %v5699, %v5700
        %v5702 = vrot.slane %v5634, 6
        %v5703 = vrot.slane %v5702, 4
        %v5704 = vrot.slane %v5635, 6
        %v5705 = vsel %vm3526, %v5703, %v5704
        %v5706 = vrot.slane %v5704, 4
        %v5707 = vrot.slane %v5636, 6
        %v5708 = vsel %vm3526, %v5706, %v5707
        %v5709 = vrot.slane %v5637, 6
        %v5710 = vrot.slane %v5709, 4
        %v5711 = vrot.slane %v5638, 6
        %v5712 = vsel %vm3526, %v5710, %v5711
        %v5713 = vrot.slane %v5711, 4
        %v5714 = vrot.slane %v5639, 6
        %v5715 = vsel %vm3526, %v5713, %v5714
        %v5716 = vrot.slane %v5640, 6
        %v5717 = vrot.slane %v5716, 4
        %v5718 = vrot.slane %v5641, 6
        %v5719 = vsel %vm3526, %v5717, %v5718
        %v5720 = vrot.slane %v5718, 4
        %v5721 = vrot.slane %v5642, 6
        %v5722 = vsel %vm3526, %v5720, %v5721
        %s5723 = scalar_lea.vmem %s3, 1088
        %v5724 = vld [vmem:[%s5723] sm:$0xf]
        %v5725 = vld [vmem:[%s5723 + $0x4] sm:$0xf]
        %v5726 = vld [vmem:[%s5723 + $0x8] sm:$0xf]
        %v5727 = vld [vmem:[%s5723 + $0xc] sm:$0xf]
        %v5728 = vld [vmem:[%s5723 + $0x10] sm:$0xf]
        %v5729 = vld [vmem:[%s5723 + $0x14] sm:$0xf]
        %v5730 = vld [vmem:[%s5723 + $0x18] sm:$0xf]
        %v5731 = vld [vmem:[%s5723 + $0x1c] sm:$0xf]
        %v5732 = vld [vmem:[%s5723 + $0x20] sm:$0xf]
        %v5733 = vld [vmem:[%s5723 + $0x24] sm:$0xf]
        %v5734 = vld [vmem:[%s5723 + $0x28] sm:$0xf]
        %v5735 = vld [vmem:[%s5723 + $0x2c] sm:$0xf]
        %v5736 = vld [vmem:[%s5723 + $0x30] sm:$0xf]
        %v5737 = vld [vmem:[%s5723 + $0x34] sm:$0xf]
        %v5738 = vld [vmem:[%s5723 + $0x38] sm:$0xf]
        %v5739 = vld [vmem:[%s5723 + $0x3c] sm:$0xf]
        %v5740 = vunpack.c.l.b16 %v5670
        %v5741 = vunpack.c.l.b16 %v5673
        %v5742 = vunpack.c.l.b16 %v5677
        %v5743 = vunpack.c.l.b16 %v5680
        %v5744 = vunpack.c.l.b16 %v5684
        %v5745 = vunpack.c.l.b16 %v5687
        %v5746 = vunpack.c.l.b16 %v5691
        %v5747 = vunpack.c.l.b16 %v5694
        %v5748 = vunpack.c.l.b16 %v5698
        %v5749 = vunpack.c.l.b16 %v5701
        %v5750 = vunpack.c.l.b16 %v5705
        %v5751 = vunpack.c.l.b16 %v5708
        %v5752 = vunpack.c.l.b16 %v5712
        %v5753 = vunpack.c.l.b16 %v5715
        %v5754 = vunpack.c.l.b16 %v5719
        %v5755 = vunpack.c.l.b16 %v5722
        %v5756 = vpack.c.b16 %v5741, %v5740
        %v5757 = vpack.c.b16 %v5743, %v5742
        %v5758 = vpack.c.b16 %v5745, %v5744
        %v5759 = vpack.c.b16 %v5747, %v5746
        %v5760 = vpack.c.b16 %v5749, %v5748
        %v5761 = vpack.c.b16 %v5751, %v5750
        %v5762 = vpack.c.b16 %v5753, %v5752
        %v5763 = vpack.c.b16 %v5755, %v5754
        %v5788 = vunpack.c.l.b16 %v5724
        %v5789 = vunpack.c.l.b16 %v5725
        %v5790 = vunpack.c.l.b16 %v5726
        %v5791 = vunpack.c.l.b16 %v5727
        %v5792 = vunpack.c.l.b16 %v5728
        %v5793 = vunpack.c.l.b16 %v5729
        %v5794 = vunpack.c.l.b16 %v5730
        %v5795 = vunpack.c.l.b16 %v5731
        %v5796 = vunpack.c.l.b16 %v5732
        %v5797 = vunpack.c.l.b16 %v5733
        %v5798 = vunpack.c.l.b16 %v5734
        %v5799 = vunpack.c.l.b16 %v5735
        %v5800 = vunpack.c.l.b16 %v5736
        %v5801 = vunpack.c.l.b16 %v5737
        %v5802 = vunpack.c.l.b16 %v5738
        %v5803 = vunpack.c.l.b16 %v5739
        %v5804 = vpack.c.b16 %v5789, %v5788
        %v5805 = vpack.c.b16 %v5791, %v5790
        %v5806 = vpack.c.b16 %v5793, %v5792
        %v5807 = vpack.c.b16 %v5795, %v5794
        %v5808 = vpack.c.b16 %v5797, %v5796
        %v5809 = vpack.c.b16 %v5799, %v5798
        %v5810 = vpack.c.b16 %v5801, %v5800
        %v5811 = vpack.c.b16 %v5803, %v5802
        %5820 = vmatprep.subr.bf16.mxu0 0
        %5821 = vmatpush1.bf16.msra.mxu0 %v5811
        %5822 = vmatprep.subr.bf16.mxu0 0
        %5823 = vmatpush1.bf16.msra.mxu0 %v5810
        %5824 = vmatprep.subr.bf16.mxu0 0
        %5825 = vmatpush1.bf16.msra.mxu0 %v5809
        %5826 = vmatprep.subr.bf16.mxu0 0
        %5827 = vmatpush1.bf16.msra.mxu0 %v5808
        %5828 = vmatprep.subr.bf16.mxu0 0
        %5829 = vmatpush1.bf16.msra.mxu0 %v5807
        %5830 = vmatprep.subr.bf16.mxu0 0
        %5831 = vmatpush1.bf16.msra.mxu0 %v5806
        %5832 = vmatprep.subr.bf16.mxu0 0
        %5833 = vmatpush1.bf16.msra.mxu0 %v5805
        %5834 = vmatprep.subr.bf16.mxu0 0
        %5835 = vmatpush1.bf16.msra.mxu0 %v5804
        %5836 = vmatprep.subr.bf16.mxu0 0
        %5837 = vmatpush2.bf16.msra.mxu0 0
        %5838 = vmatprep.subr.bf16.mxu0 0
        %5839 = vmatpush2.bf16.msra.mxu0 0
        %5840 = vmatprep.subr.bf16.mxu0 0
        %5841 = vmatpush2.bf16.msra.mxu0 0
        %5842 = vmatprep.subr.bf16.mxu0 0
        %5843 = vmatpush2.bf16.msra.mxu0 0
        %5844 = vmatprep.subr.bf16.mxu0 0
        %5845 = vmatpush2.bf16.msra.mxu0 0
        %5846 = vmatprep.subr.bf16.mxu0 0
        %5847 = vmatpush2.bf16.msra.mxu0 0
        %5848 = vmatprep.subr.bf16.mxu0 0
        %5849 = vmatpush2.bf16.msra.mxu0 0
        %5850 = vmatprep.subr.bf16.mxu0 0
        %5851 = vmatpush2.bf16.msra.mxu0 0
        %5852 = vmatprep.mubr.bf16.mxu0 0
        %5853 = vmatmul.mubr.bf16.gmra.mxu0 %v5756
        %v5854 = vpop.f32.mrf.mxu0
        %v5855 = vadd.f32 0.0, %v5854
        %v5856 = vpop.f32.mrf.mxu0
        %v5857 = vpop.f32.mrf.mxu0
        %v5858 = vadd.f32 0.0, %v5857
        %v5859 = vpop.f32.mrf.mxu0
        %5860 = vmatprep.mubr.bf16.mxu0 0
        %5861 = vmatmul.mubr.bf16.gmra.mxu0 %v5757
        %v5862 = vpop.f32.mrf.mxu0
        %v5863 = vadd.f32 0.0, %v5862
        %v5864 = vpop.f32.mrf.mxu0
        %v5865 = vpop.f32.mrf.mxu0
        %v5866 = vadd.f32 0.0, %v5865
        %v5867 = vpop.f32.mrf.mxu0
        %5868 = vmatprep.mubr.bf16.mxu0 0
        %5869 = vmatmul.mubr.bf16.gmra.mxu0 %v5758
        %v5870 = vpop.f32.mrf.mxu0
        %v5871 = vadd.f32 0.0, %v5870
        %v5872 = vpop.f32.mrf.mxu0
        %v5873 = vpop.f32.mrf.mxu0
        %v5874 = vadd.f32 0.0, %v5873
        %v5875 = vpop.f32.mrf.mxu0
        %5876 = vmatprep.mubr.bf16.mxu0 0
        %5877 = vmatmul.mubr.bf16.gmra.mxu0 %v5759
        %v5878 = vpop.f32.mrf.mxu0
        %v5879 = vadd.f32 0.0, %v5878
        %v5880 = vpop.f32.mrf.mxu0
        %v5881 = vpop.f32.mrf.mxu0
        %v5882 = vadd.f32 0.0, %v5881
        %v5883 = vpop.f32.mrf.mxu0
        %5884 = vmatprep.mubr.bf16.mxu0 0
        %5885 = vmatmul.mubr.bf16.gmra.mxu0 %v5760
        %v5886 = vpop.f32.mrf.mxu0
        %v5887 = vadd.f32 0.0, %v5886
        %v5888 = vpop.f32.mrf.mxu0
        %v5889 = vpop.f32.mrf.mxu0
        %v5890 = vadd.f32 0.0, %v5889
        %v5891 = vpop.f32.mrf.mxu0
        %5892 = vmatprep.mubr.bf16.mxu0 0
        %5893 = vmatmul.mubr.bf16.gmra.mxu0 %v5761
        %v5894 = vpop.f32.mrf.mxu0
        %v5895 = vadd.f32 0.0, %v5894
        %v5896 = vpop.f32.mrf.mxu0
        %v5897 = vpop.f32.mrf.mxu0
        %v5898 = vadd.f32 0.0, %v5897
        %v5899 = vpop.f32.mrf.mxu0
        %5900 = vmatprep.mubr.bf16.mxu0 0
        %5901 = vmatmul.mubr.bf16.gmra.mxu0 %v5762
        %v5902 = vpop.f32.mrf.mxu0
        %v5903 = vadd.f32 0.0, %v5902
        %v5904 = vpop.f32.mrf.mxu0
        %v5905 = vpop.f32.mrf.mxu0
        %v5906 = vadd.f32 0.0, %v5905
        %v5907 = vpop.f32.mrf.mxu0
        %5908 = vmatprep.mubr.bf16.mxu0 0
        %5909 = vmatmul.mubr.bf16.gmra.mxu0 %v5763
        %v5910 = vpop.f32.mrf.mxu0
        %v5911 = vadd.f32 0.0, %v5910
        %v5912 = vpop.f32.mrf.mxu0
        %v5913 = vpop.f32.mrf.mxu0
        %v5914 = vadd.f32 0.0, %v5913
        %v5915 = vpop.f32.mrf.mxu0
        %5916 = vdwg.mxu0
        %v5917 = vadd.f32 %v5603, %v5855
        %v5918 = vadd.f32 %v5604, %v5858
        %v5919 = vadd.f32 %v5605, %v5863
        %v5920 = vadd.f32 %v5606, %v5866
        %v5921 = vadd.f32 %v5607, %v5871
        %v5922 = vadd.f32 %v5608, %v5874
        %v5923 = vadd.f32 %v5609, %v5879
        %v5924 = vadd.f32 %v5610, %v5882
        %v5925 = vadd.f32 %v5611, %v5887
        %v5926 = vadd.f32 %v5612, %v5890
        %v5927 = vadd.f32 %v5613, %v5895
        %v5928 = vadd.f32 %v5614, %v5898
        %v5929 = vadd.f32 %v5615, %v5903
        %v5930 = vadd.f32 %v5616, %v5906
        %v5931 = vadd.f32 %v5617, %v5911
        %v5932 = vadd.f32 %v5618, %v5914
        %s5933 = scalar_lea.vmem %s4, 1
        %v5934 = vld [vmem:[%s5933] sm:$0x1]
        %v5936 = vlaneseq
        %v5937 = vshrl.u32 %v5936, 7
        %v5938 = vsub.s32 0, %v5937
        %v5939 = vrot.slane %v5934, %v5938
        %v5941 = vadd.f32 %v5917, %v5939
        %v5942 = vadd.f32 %v5918, %v5939
        %v5943 = vadd.f32 %v5919, %v5939
        %v5944 = vadd.f32 %v5920, %v5939
        %v5945 = vadd.f32 %v5921, %v5939
        %v5946 = vadd.f32 %v5922, %v5939
        %v5947 = vadd.f32 %v5923, %v5939
        %v5948 = vadd.f32 %v5924, %v5939
        %v5949 = vadd.f32 %v5925, %v5939
        %v5950 = vadd.f32 %v5926, %v5939
        %v5951 = vadd.f32 %v5927, %v5939
        %v5952 = vadd.f32 %v5928, %v5939
        %v5953 = vadd.f32 %v5929, %v5939
        %v5954 = vadd.f32 %v5930, %v5939
        %v5955 = vadd.f32 %v5931, %v5939
        %v5956 = vadd.f32 %v5932, %v5939
        %v5957 = vmax.f32 %v5941, 0.0
        %v5958 = vmax.f32 %v5942, 0.0
        %v5959 = vmax.f32 %v5943, 0.0
        %v5960 = vmax.f32 %v5944, 0.0
        %v5961 = vmax.f32 %v5945, 0.0
        %v5962 = vmax.f32 %v5946, 0.0
        %v5963 = vmax.f32 %v5947, 0.0
        %v5964 = vmax.f32 %v5948, 0.0
        %v5965 = vmax.f32 %v5949, 0.0
        %v5966 = vmax.f32 %v5950, 0.0
        %v5967 = vmax.f32 %v5951, 0.0
        %v5968 = vmax.f32 %v5952, 0.0
        %v5969 = vmax.f32 %v5953, 0.0
        %v5970 = vmax.f32 %v5954, 0.0
        %v5971 = vmax.f32 %v5955, 0.0
        %v5972 = vmax.f32 %v5956, 0.0
        %v5973 = vpack.c.bf16 %v5958, %v5957
        %v5974 = vpack.c.bf16 %v5960, %v5959
        %v5975 = vpack.c.bf16 %v5962, %v5961
        %v5976 = vpack.c.bf16 %v5964, %v5963
        %v5977 = vpack.c.bf16 %v5966, %v5965
        %v5978 = vpack.c.bf16 %v5968, %v5967
        %v5979 = vpack.c.bf16 %v5970, %v5969
        %v5980 = vpack.c.bf16 %v5972, %v5971
        %s5981 = scalar_lea.vmem [#allocation2], 128
        %v5982 = vld [vmem:[%s5981] sm:$0xf]
        %v5983 = vld [vmem:[%s5981 + $0x4] sm:$0xf]
        %v5984 = vld [vmem:[%s5981 + $0x8] sm:$0xf]
        %v5985 = vld [vmem:[%s5981 + $0xc] sm:$0xf]
        %v5986 = vld [vmem:[%s5981 + $0x10] sm:$0xf]
        %v5987 = vld [vmem:[%s5981 + $0x14] sm:$0xf]
        %v5988 = vld [vmem:[%s5981 + $0x18] sm:$0xf]
        %v5989 = vld [vmem:[%s5981 + $0x1c] sm:$0xf]
        %v5990 = vld [vmem:[%s5981 + $0x20] sm:$0xf]
        %v5991 = vld [vmem:[%s5981 + $0x24] sm:$0xf]
        %v5992 = vld [vmem:[%s5981 + $0x28] sm:$0xf]
        %v5993 = vld [vmem:[%s5981 + $0x2c] sm:$0xf]
        %v5994 = vld [vmem:[%s5981 + $0x30] sm:$0xf]
        %v5995 = vld [vmem:[%s5981 + $0x34] sm:$0xf]
        %v5996 = vld [vmem:[%s5981 + $0x38] sm:$0xf]
        %v5997 = vld [vmem:[%s5981 + $0x3c] sm:$0xf]
        %v6014 = vunpack.c.l.b16 %v5982
        %v6015 = vunpack.c.l.b16 %v5983
        %v6016 = vunpack.c.l.b16 %v5984
        %v6017 = vunpack.c.l.b16 %v5985
        %v6018 = vunpack.c.l.b16 %v5986
        %v6019 = vunpack.c.l.b16 %v5987
        %v6020 = vunpack.c.l.b16 %v5988
        %v6021 = vunpack.c.l.b16 %v5989
        %v6022 = vunpack.c.l.b16 %v5990
        %v6023 = vunpack.c.l.b16 %v5991
        %v6024 = vunpack.c.l.b16 %v5992
        %v6025 = vunpack.c.l.b16 %v5993
        %v6026 = vunpack.c.l.b16 %v5994
        %v6027 = vunpack.c.l.b16 %v5995
        %v6028 = vunpack.c.l.b16 %v5996
        %v6029 = vunpack.c.l.b16 %v5997
        %v6030 = vpack.c.b16 %v6015, %v6014
        %v6031 = vpack.c.b16 %v6017, %v6016
        %v6032 = vpack.c.b16 %v6019, %v6018
        %v6033 = vpack.c.b16 %v6021, %v6020
        %v6034 = vpack.c.b16 %v6023, %v6022
        %v6035 = vpack.c.b16 %v6025, %v6024
        %v6036 = vpack.c.b16 %v6027, %v6026
        %v6037 = vpack.c.b16 %v6029, %v6028
        %6046 = vmatprep.subr.bf16.mxu0 0
        %6047 = vmatpush1.bf16.msra.mxu0 %v6037
        %6048 = vmatprep.subr.bf16.mxu0 0
        %6049 = vmatpush1.bf16.msra.mxu0 %v6036
        %6050 = vmatprep.subr.bf16.mxu0 0
        %6051 = vmatpush1.bf16.msra.mxu0 %v6035
        %6052 = vmatprep.subr.bf16.mxu0 0
        %6053 = vmatpush1.bf16.msra.mxu0 %v6034
        %6054 = vmatprep.subr.bf16.mxu0 0
        %6055 = vmatpush1.bf16.msra.mxu0 %v6033
        %6056 = vmatprep.subr.bf16.mxu0 0
        %6057 = vmatpush1.bf16.msra.mxu0 %v6032
        %6058 = vmatprep.subr.bf16.mxu0 0
        %6059 = vmatpush1.bf16.msra.mxu0 %v6031
        %6060 = vmatprep.subr.bf16.mxu0 0
        %6061 = vmatpush1.bf16.msra.mxu0 %v6030
        %6062 = vmatprep.subr.bf16.mxu0 0
        %6063 = vmatpush2.bf16.msra.mxu0 0
        %6064 = vmatprep.subr.bf16.mxu0 0
        %6065 = vmatpush2.bf16.msra.mxu0 0
        %6066 = vmatprep.subr.bf16.mxu0 0
        %6067 = vmatpush2.bf16.msra.mxu0 0
        %6068 = vmatprep.subr.bf16.mxu0 0
        %6069 = vmatpush2.bf16.msra.mxu0 0
        %6070 = vmatprep.subr.bf16.mxu0 0
        %6071 = vmatpush2.bf16.msra.mxu0 0
        %6072 = vmatprep.subr.bf16.mxu0 0
        %6073 = vmatpush2.bf16.msra.mxu0 0
        %6074 = vmatprep.subr.bf16.mxu0 0
        %6075 = vmatpush2.bf16.msra.mxu0 0
        %6076 = vmatprep.subr.bf16.mxu0 0
        %6077 = vmatpush2.bf16.msra.mxu0 0
        %6078 = vmatprep.mubr.bf16.mxu0 0
        %6079 = vmatmul.mubr.bf16.gmra.mxu0 %v5973
        %v6080 = vpop.f32.mrf.mxu0
        %v6081 = vadd.f32 0.0, %v6080
        %v6082 = vpop.f32.mrf.mxu0
        %v6083 = vpop.f32.mrf.mxu0
        %v6084 = vadd.f32 0.0, %v6083
        %v6085 = vpop.f32.mrf.mxu0
        %6086 = vmatprep.mubr.bf16.mxu0 0
        %6087 = vmatmul.mubr.bf16.gmra.mxu0 %v5974
        %v6088 = vpop.f32.mrf.mxu0
        %v6089 = vadd.f32 0.0, %v6088
        %v6090 = vpop.f32.mrf.mxu0
        %v6091 = vpop.f32.mrf.mxu0
        %v6092 = vadd.f32 0.0, %v6091
        %v6093 = vpop.f32.mrf.mxu0
        %6094 = vmatprep.mubr.bf16.mxu0 0
        %6095 = vmatmul.mubr.bf16.gmra.mxu0 %v5975
        %v6096 = vpop.f32.mrf.mxu0
        %v6097 = vadd.f32 0.0, %v6096
        %v6098 = vpop.f32.mrf.mxu0
        %v6099 = vpop.f32.mrf.mxu0
        %v6100 = vadd.f32 0.0, %v6099
        %v6101 = vpop.f32.mrf.mxu0
        %6102 = vmatprep.mubr.bf16.mxu0 0
        %6103 = vmatmul.mubr.bf16.gmra.mxu0 %v5976
        %v6104 = vpop.f32.mrf.mxu0
        %v6105 = vadd.f32 0.0, %v6104
        %v6106 = vpop.f32.mrf.mxu0
        %v6107 = vpop.f32.mrf.mxu0
        %v6108 = vadd.f32 0.0, %v6107
        %v6109 = vpop.f32.mrf.mxu0
        %6110 = vmatprep.mubr.bf16.mxu0 0
        %6111 = vmatmul.mubr.bf16.gmra.mxu0 %v5977
        %v6112 = vpop.f32.mrf.mxu0
        %v6113 = vadd.f32 0.0, %v6112
        %v6114 = vpop.f32.mrf.mxu0
        %v6115 = vpop.f32.mrf.mxu0
        %v6116 = vadd.f32 0.0, %v6115
        %v6117 = vpop.f32.mrf.mxu0
        %6118 = vmatprep.mubr.bf16.mxu0 0
        %6119 = vmatmul.mubr.bf16.gmra.mxu0 %v5978
        %v6120 = vpop.f32.mrf.mxu0
        %v6121 = vadd.f32 0.0, %v6120
        %v6122 = vpop.f32.mrf.mxu0
        %v6123 = vpop.f32.mrf.mxu0
        %v6124 = vadd.f32 0.0, %v6123
        %v6125 = vpop.f32.mrf.mxu0
        %6126 = vmatprep.mubr.bf16.mxu0 0
        %6127 = vmatmul.mubr.bf16.gmra.mxu0 %v5979
        %v6128 = vpop.f32.mrf.mxu0
        %v6129 = vadd.f32 0.0, %v6128
        %v6130 = vpop.f32.mrf.mxu0
        %v6131 = vpop.f32.mrf.mxu0
        %v6132 = vadd.f32 0.0, %v6131
        %v6133 = vpop.f32.mrf.mxu0
        %6134 = vmatprep.mubr.bf16.mxu0 0
        %6135 = vmatmul.mubr.bf16.gmra.mxu0 %v5980
        %v6136 = vpop.f32.mrf.mxu0
        %v6137 = vadd.f32 0.0, %v6136
        %v6138 = vpop.f32.mrf.mxu0
        %v6139 = vpop.f32.mrf.mxu0
        %v6140 = vadd.f32 0.0, %v6139
        %v6141 = vpop.f32.mrf.mxu0
        %6142 = vdwg.mxu0
        %v6143 = vadd.f32 %v3410, %v6081
        %v6144 = vadd.f32 %v3413, %v6084
        %v6145 = vadd.f32 %v3418, %v6089
        %v6146 = vadd.f32 %v3421, %v6092
        %v6147 = vadd.f32 %v3426, %v6097
        %v6148 = vadd.f32 %v3429, %v6100
        %v6149 = vadd.f32 %v3434, %v6105
        %v6150 = vadd.f32 %v3437, %v6108
        %v6151 = vadd.f32 %v3442, %v6113
        %v6152 = vadd.f32 %v3445, %v6116
        %v6153 = vadd.f32 %v3450, %v6121
        %v6154 = vadd.f32 %v3453, %v6124
        %v6155 = vadd.f32 %v3458, %v6129
        %v6156 = vadd.f32 %v3461, %v6132
        %v6157 = vadd.f32 %v3466, %v6137
        %v6158 = vadd.f32 %v3469, %v6140
        %s6159 = smul.u32 %s362, 4
        %s6160 = smul.addr %s6159, 4
        %s6161 = scalar_lea.vmem %s359, %s6160
        %v6162 = vld [vmem:[%s6161] sm:$0xe]
        %v6163 = vld [vmem:[%s6161 + $0x4] sm:$0xf]
        %v6164 = vld [vmem:[%s6161 + $0x8] sm:$0x1]
        %v6165 = vld [vmem:[%s6161 + $0x10] sm:$0xe]
        %v6166 = vld [vmem:[%s6161 + $0x14] sm:$0xf]
        %v6167 = vld [vmem:[%s6161 + $0x18] sm:$0x1]
        %v6168 = vld [vmem:[%s6161 + $0x20] sm:$0xe]
        %v6169 = vld [vmem:[%s6161 + $0x24] sm:$0xf]
        %v6170 = vld [vmem:[%s6161 + $0x28] sm:$0x1]
        %v6171 = vld [vmem:[%s6161 + $0x30] sm:$0xe]
        %v6172 = vld [vmem:[%s6161 + $0x34] sm:$0xf]
        %v6173 = vld [vmem:[%s6161 + $0x38] sm:$0x1]
        %v6174 = vld [vmem:[%s6161 + $0x40] sm:$0xe]
        %v6175 = vld [vmem:[%s6161 + $0x44] sm:$0xf]
        %v6176 = vld [vmem:[%s6161 + $0x48] sm:$0x1]
        %v6177 = vld [vmem:[%s6161 + $0x50] sm:$0xe]
        %v6178 = vld [vmem:[%s6161 + $0x54] sm:$0xf]
        %v6179 = vld [vmem:[%s6161 + $0x58] sm:$0x1]
        %v6180 = vld [vmem:[%s6161 + $0x60] sm:$0xe]
        %v6181 = vld [vmem:[%s6161 + $0x64] sm:$0xf]
        %v6182 = vld [vmem:[%s6161 + $0x68] sm:$0x1]
        %v6183 = vld [vmem:[%s6161 + $0x70] sm:$0xe]
        %v6184 = vld [vmem:[%s6161 + $0x74] sm:$0xf]
        %v6185 = vld [vmem:[%s6161 + $0x78] sm:$0x1]
        %v6210 = vrot.slane %v6162, 5
        %v6211 = vrot.slane %v6210, 4
        %v6212 = vrot.slane %v6163, 5
        %v6213 = vsel %vm1203, %v6211, %v6212
        %v6214 = vrot.slane %v6212, 4
        %v6215 = vrot.slane %v6164, 5
        %v6216 = vsel %vm1203, %v6214, %v6215
        %v6217 = vrot.slane %v6165, 5
        %v6218 = vrot.slane %v6217, 4
        %v6219 = vrot.slane %v6166, 5
        %v6220 = vsel %vm1203, %v6218, %v6219
        %v6221 = vrot.slane %v6219, 4
        %v6222 = vrot.slane %v6167, 5
        %v6223 = vsel %vm1203, %v6221, %v6222
        %v6224 = vrot.slane %v6168, 5
        %v6225 = vrot.slane %v6224, 4
        %v6226 = vrot.slane %v6169, 5
        %v6227 = vsel %vm1203, %v6225, %v6226
        %v6228 = vrot.slane %v6226, 4
        %v6229 = vrot.slane %v6170, 5
        %v6230 = vsel %vm1203, %v6228, %v6229
        %v6231 = vrot.slane %v6171, 5
        %v6232 = vrot.slane %v6231, 4
        %v6233 = vrot.slane %v6172, 5
        %v6234 = vsel %vm1203, %v6232, %v6233
        %v6235 = vrot.slane %v6233, 4
        %v6236 = vrot.slane %v6173, 5
        %v6237 = vsel %vm1203, %v6235, %v6236
        %v6238 = vrot.slane %v6174, 5
        %v6239 = vrot.slane %v6238, 4
        %v6240 = vrot.slane %v6175, 5
        %v6241 = vsel %vm1203, %v6239, %v6240
        %v6242 = vrot.slane %v6240, 4
        %v6243 = vrot.slane %v6176, 5
        %v6244 = vsel %vm1203, %v6242, %v6243
        %v6245 = vrot.slane %v6177, 5
        %v6246 = vrot.slane %v6245, 4
        %v6247 = vrot.slane %v6178, 5
        %v6248 = vsel %vm1203, %v6246, %v6247
        %v6249 = vrot.slane %v6247, 4
        %v6250 = vrot.slane %v6179, 5
        %v6251 = vsel %vm1203, %v6249, %v6250
        %v6252 = vrot.slane %v6180, 5
        %v6253 = vrot.slane %v6252, 4
        %v6254 = vrot.slane %v6181, 5
        %v6255 = vsel %vm1203, %v6253, %v6254
        %v6256 = vrot.slane %v6254, 4
        %v6257 = vrot.slane %v6182, 5
        %v6258 = vsel %vm1203, %v6256, %v6257
        %v6259 = vrot.slane %v6183, 5
        %v6260 = vrot.slane %v6259, 4
        %v6261 = vrot.slane %v6184, 5
        %v6262 = vsel %vm1203, %v6260, %v6261
        %v6263 = vrot.slane %v6261, 4
        %v6264 = vrot.slane %v6185, 5
        %v6265 = vsel %vm1203, %v6263, %v6264
        %s6266 = scalar_lea.vmem %s3, 1152
        %v6267 = vld [vmem:[%s6266] sm:$0xf]
        %v6268 = vld [vmem:[%s6266 + $0x4] sm:$0xf]
        %v6269 = vld [vmem:[%s6266 + $0x8] sm:$0xf]
        %v6270 = vld [vmem:[%s6266 + $0xc] sm:$0xf]
        %v6271 = vld [vmem:[%s6266 + $0x10] sm:$0xf]
        %v6272 = vld [vmem:[%s6266 + $0x14] sm:$0xf]
        %v6273 = vld [vmem:[%s6266 + $0x18] sm:$0xf]
        %v6274 = vld [vmem:[%s6266 + $0x1c] sm:$0xf]
        %v6275 = vld [vmem:[%s6266 + $0x20] sm:$0xf]
        %v6276 = vld [vmem:[%s6266 + $0x24] sm:$0xf]
        %v6277 = vld [vmem:[%s6266 + $0x28] sm:$0xf]
        %v6278 = vld [vmem:[%s6266 + $0x2c] sm:$0xf]
        %v6279 = vld [vmem:[%s6266 + $0x30] sm:$0xf]
        %v6280 = vld [vmem:[%s6266 + $0x34] sm:$0xf]
        %v6281 = vld [vmem:[%s6266 + $0x38] sm:$0xf]
        %v6282 = vld [vmem:[%s6266 + $0x3c] sm:$0xf]
        %v6283 = vld [vmem:[%s6161 + $0x8] sm:$0xf]
        %v6284 = vld [vmem:[%s6161 + $0x18] sm:$0xf]
        %v6285 = vld [vmem:[%s6161 + $0x28] sm:$0xf]
        %v6286 = vld [vmem:[%s6161 + $0x38] sm:$0xf]
        %v6287 = vld [vmem:[%s6161 + $0x48] sm:$0xf]
        %v6288 = vld [vmem:[%s6161 + $0x58] sm:$0xf]
        %v6289 = vld [vmem:[%s6161 + $0x68] sm:$0xf]
        %v6290 = vld [vmem:[%s6161 + $0x78] sm:$0xf]
        %s6291 = scalar_lea.vmem %s3, 1216
        %v6292 = vld [vmem:[%s6291] sm:$0xf]
        %v6293 = vld [vmem:[%s6291 + $0x4] sm:$0xf]
        %v6294 = vld [vmem:[%s6291 + $0x8] sm:$0xf]
        %v6295 = vld [vmem:[%s6291 + $0xc] sm:$0xf]
        %v6296 = vld [vmem:[%s6291 + $0x10] sm:$0xf]
        %v6297 = vld [vmem:[%s6291 + $0x14] sm:$0xf]
        %v6298 = vld [vmem:[%s6291 + $0x18] sm:$0xf]
        %v6299 = vld [vmem:[%s6291 + $0x1c] sm:$0xf]
        %v6300 = vld [vmem:[%s6291 + $0x20] sm:$0xf]
        %v6301 = vld [vmem:[%s6291 + $0x24] sm:$0xf]
        %v6302 = vld [vmem:[%s6291 + $0x28] sm:$0xf]
        %v6303 = vld [vmem:[%s6291 + $0x2c] sm:$0xf]
        %v6304 = vld [vmem:[%s6291 + $0x30] sm:$0xf]
        %v6305 = vld [vmem:[%s6291 + $0x34] sm:$0xf]
        %v6306 = vld [vmem:[%s6291 + $0x38] sm:$0xf]
        %v6307 = vld [vmem:[%s6291 + $0x3c] sm:$0xf]
        %v6316 = vunpack.c.l.b16 %v6163
        %v6317 = vunpack.c.l.b16 %v6283
        %v6318 = vunpack.c.l.b16 %v6166
        %v6319 = vunpack.c.l.b16 %v6284
        %v6320 = vunpack.c.l.b16 %v6169
        %v6321 = vunpack.c.l.b16 %v6285
        %v6322 = vunpack.c.l.b16 %v6172
        %v6323 = vunpack.c.l.b16 %v6286
        %v6324 = vunpack.c.l.b16 %v6175
        %v6325 = vunpack.c.l.b16 %v6287
        %v6326 = vunpack.c.l.b16 %v6178
        %v6327 = vunpack.c.l.b16 %v6288
        %v6328 = vunpack.c.l.b16 %v6181
        %v6329 = vunpack.c.l.b16 %v6289
        %v6330 = vunpack.c.l.b16 %v6184
        %v6331 = vunpack.c.l.b16 %v6290
        %v6332 = vpack.c.b16 %v6317, %v6316
        %v6333 = vpack.c.b16 %v6319, %v6318
        %v6334 = vpack.c.b16 %v6321, %v6320
        %v6335 = vpack.c.b16 %v6323, %v6322
        %v6336 = vpack.c.b16 %v6325, %v6324
        %v6337 = vpack.c.b16 %v6327, %v6326
        %v6338 = vpack.c.b16 %v6329, %v6328
        %v6339 = vpack.c.b16 %v6331, %v6330
        %v6364 = vunpack.c.l.b16 %v6292
        %v6365 = vunpack.c.l.b16 %v6293
        %v6366 = vunpack.c.l.b16 %v6294
        %v6367 = vunpack.c.l.b16 %v6295
        %v6368 = vunpack.c.l.b16 %v6296
        %v6369 = vunpack.c.l.b16 %v6297
        %v6370 = vunpack.c.l.b16 %v6298
        %v6371 = vunpack.c.l.b16 %v6299
        %v6372 = vunpack.c.l.b16 %v6300
        %v6373 = vunpack.c.l.b16 %v6301
        %v6374 = vunpack.c.l.b16 %v6302
        %v6375 = vunpack.c.l.b16 %v6303
        %v6376 = vunpack.c.l.b16 %v6304
        %v6377 = vunpack.c.l.b16 %v6305
        %v6378 = vunpack.c.l.b16 %v6306
        %v6379 = vunpack.c.l.b16 %v6307
        %v6380 = vpack.c.b16 %v6365, %v6364
        %v6381 = vpack.c.b16 %v6367, %v6366
        %v6382 = vpack.c.b16 %v6369, %v6368
        %v6383 = vpack.c.b16 %v6371, %v6370
        %v6384 = vpack.c.b16 %v6373, %v6372
        %v6385 = vpack.c.b16 %v6375, %v6374
        %v6386 = vpack.c.b16 %v6377, %v6376
        %v6387 = vpack.c.b16 %v6379, %v6378
        %6396 = vmatprep.subr.bf16.mxu0 0
        %6397 = vmatpush1.bf16.msra.mxu0 %v6387
        %6398 = vmatprep.subr.bf16.mxu0 0
        %6399 = vmatpush1.bf16.msra.mxu0 %v6386
        %6400 = vmatprep.subr.bf16.mxu0 0
        %6401 = vmatpush1.bf16.msra.mxu0 %v6385
        %6402 = vmatprep.subr.bf16.mxu0 0
        %6403 = vmatpush1.bf16.msra.mxu0 %v6384
        %6404 = vmatprep.subr.bf16.mxu0 0
        %6405 = vmatpush1.bf16.msra.mxu0 %v6383
        %6406 = vmatprep.subr.bf16.mxu0 0
        %6407 = vmatpush1.bf16.msra.mxu0 %v6382
        %6408 = vmatprep.subr.bf16.mxu0 0
        %6409 = vmatpush1.bf16.msra.mxu0 %v6381
        %6410 = vmatprep.subr.bf16.mxu0 0
        %6411 = vmatpush1.bf16.msra.mxu0 %v6380
        %6412 = vmatprep.subr.bf16.mxu0 0
        %6413 = vmatpush2.bf16.msra.mxu0 0
        %6414 = vmatprep.subr.bf16.mxu0 0
        %6415 = vmatpush2.bf16.msra.mxu0 0
        %6416 = vmatprep.subr.bf16.mxu0 0
        %6417 = vmatpush2.bf16.msra.mxu0 0
        %6418 = vmatprep.subr.bf16.mxu0 0
        %6419 = vmatpush2.bf16.msra.mxu0 0
        %6420 = vmatprep.subr.bf16.mxu0 0
        %6421 = vmatpush2.bf16.msra.mxu0 0
        %6422 = vmatprep.subr.bf16.mxu0 0
        %6423 = vmatpush2.bf16.msra.mxu0 0
        %6424 = vmatprep.subr.bf16.mxu0 0
        %6425 = vmatpush2.bf16.msra.mxu0 0
        %6426 = vmatprep.subr.bf16.mxu0 0
        %6427 = vmatpush2.bf16.msra.mxu0 0
        %6428 = vmatprep.mubr.bf16.mxu0 0
        %6429 = vmatmul.mubr.bf16.gmra.mxu0 %v6332
        %v6430 = vpop.f32.mrf.mxu0
        %v6431 = vadd.f32 0.0, %v6430
        %v6432 = vpop.f32.mrf.mxu0
        %v6433 = vpop.f32.mrf.mxu0
        %v6434 = vadd.f32 0.0, %v6433
        %v6435 = vpop.f32.mrf.mxu0
        %6436 = vmatprep.mubr.bf16.mxu0 0
        %6437 = vmatmul.mubr.bf16.gmra.mxu0 %v6333
        %v6438 = vpop.f32.mrf.mxu0
        %v6439 = vadd.f32 0.0, %v6438
        %v6440 = vpop.f32.mrf.mxu0
        %v6441 = vpop.f32.mrf.mxu0
        %v6442 = vadd.f32 0.0, %v6441
        %v6443 = vpop.f32.mrf.mxu0
        %6444 = vmatprep.mubr.bf16.mxu0 0
        %6445 = vmatmul.mubr.bf16.gmra.mxu0 %v6334
        %v6446 = vpop.f32.mrf.mxu0
        %v6447 = vadd.f32 0.0, %v6446
        %v6448 = vpop.f32.mrf.mxu0
        %v6449 = vpop.f32.mrf.mxu0
        %v6450 = vadd.f32 0.0, %v6449
        %v6451 = vpop.f32.mrf.mxu0
        %6452 = vmatprep.mubr.bf16.mxu0 0
        %6453 = vmatmul.mubr.bf16.gmra.mxu0 %v6335
        %v6454 = vpop.f32.mrf.mxu0
        %v6455 = vadd.f32 0.0, %v6454
        %v6456 = vpop.f32.mrf.mxu0
        %v6457 = vpop.f32.mrf.mxu0
        %v6458 = vadd.f32 0.0, %v6457
        %v6459 = vpop.f32.mrf.mxu0
        %6460 = vmatprep.mubr.bf16.mxu0 0
        %6461 = vmatmul.mubr.bf16.gmra.mxu0 %v6336
        %v6462 = vpop.f32.mrf.mxu0
        %v6463 = vadd.f32 0.0, %v6462
        %v6464 = vpop.f32.mrf.mxu0
        %v6465 = vpop.f32.mrf.mxu0
        %v6466 = vadd.f32 0.0, %v6465
        %v6467 = vpop.f32.mrf.mxu0
        %6468 = vmatprep.mubr.bf16.mxu0 0
        %6469 = vmatmul.mubr.bf16.gmra.mxu0 %v6337
        %v6470 = vpop.f32.mrf.mxu0
        %v6471 = vadd.f32 0.0, %v6470
        %v6472 = vpop.f32.mrf.mxu0
        %v6473 = vpop.f32.mrf.mxu0
        %v6474 = vadd.f32 0.0, %v6473
        %v6475 = vpop.f32.mrf.mxu0
        %6476 = vmatprep.mubr.bf16.mxu0 0
        %6477 = vmatmul.mubr.bf16.gmra.mxu0 %v6338
        %v6478 = vpop.f32.mrf.mxu0
        %v6479 = vadd.f32 0.0, %v6478
        %v6480 = vpop.f32.mrf.mxu0
        %v6481 = vpop.f32.mrf.mxu0
        %v6482 = vadd.f32 0.0, %v6481
        %v6483 = vpop.f32.mrf.mxu0
        %6484 = vmatprep.mubr.bf16.mxu0 0
        %6485 = vmatmul.mubr.bf16.gmra.mxu0 %v6339
        %v6486 = vpop.f32.mrf.mxu0
        %v6487 = vadd.f32 0.0, %v6486
        %v6488 = vpop.f32.mrf.mxu0
        %v6489 = vpop.f32.mrf.mxu0
        %v6490 = vadd.f32 0.0, %v6489
        %v6491 = vpop.f32.mrf.mxu0
        %6492 = vdwg.mxu0
        %v6493 = vunpack.c.l.b16 %v6213
        %v6494 = vunpack.c.l.b16 %v6216
        %v6495 = vunpack.c.l.b16 %v6220
        %v6496 = vunpack.c.l.b16 %v6223
        %v6497 = vunpack.c.l.b16 %v6227
        %v6498 = vunpack.c.l.b16 %v6230
        %v6499 = vunpack.c.l.b16 %v6234
        %v6500 = vunpack.c.l.b16 %v6237
        %v6501 = vunpack.c.l.b16 %v6241
        %v6502 = vunpack.c.l.b16 %v6244
        %v6503 = vunpack.c.l.b16 %v6248
        %v6504 = vunpack.c.l.b16 %v6251
        %v6505 = vunpack.c.l.b16 %v6255
        %v6506 = vunpack.c.l.b16 %v6258
        %v6507 = vunpack.c.l.b16 %v6262
        %v6508 = vunpack.c.l.b16 %v6265
        %v6509 = vpack.c.b16 %v6494, %v6493
        %v6510 = vpack.c.b16 %v6496, %v6495
        %v6511 = vpack.c.b16 %v6498, %v6497
        %v6512 = vpack.c.b16 %v6500, %v6499
        %v6513 = vpack.c.b16 %v6502, %v6501
        %v6514 = vpack.c.b16 %v6504, %v6503
        %v6515 = vpack.c.b16 %v6506, %v6505
        %v6516 = vpack.c.b16 %v6508, %v6507
        %v6541 = vunpack.c.l.b16 %v6267
        %v6542 = vunpack.c.l.b16 %v6268
        %v6543 = vunpack.c.l.b16 %v6269
        %v6544 = vunpack.c.l.b16 %v6270
        %v6545 = vunpack.c.l.b16 %v6271
        %v6546 = vunpack.c.l.b16 %v6272
        %v6547 = vunpack.c.l.b16 %v6273
        %v6548 = vunpack.c.l.b16 %v6274
        %v6549 = vunpack.c.l.b16 %v6275
        %v6550 = vunpack.c.l.b16 %v6276
        %v6551 = vunpack.c.l.b16 %v6277
        %v6552 = vunpack.c.l.b16 %v6278
        %v6553 = vunpack.c.l.b16 %v6279
        %v6554 = vunpack.c.l.b16 %v6280
        %v6555 = vunpack.c.l.b16 %v6281
        %v6556 = vunpack.c.l.b16 %v6282
        %v6557 = vpack.c.b16 %v6542, %v6541
        %v6558 = vpack.c.b16 %v6544, %v6543
        %v6559 = vpack.c.b16 %v6546, %v6545
        %v6560 = vpack.c.b16 %v6548, %v6547
        %v6561 = vpack.c.b16 %v6550, %v6549
        %v6562 = vpack.c.b16 %v6552, %v6551
        %v6563 = vpack.c.b16 %v6554, %v6553
        %v6564 = vpack.c.b16 %v6556, %v6555
        %6573 = vmatprep.subr.bf16.mxu0 0
        %6574 = vmatpush1.bf16.msra.mxu0 %v6564
        %6575 = vmatprep.subr.bf16.mxu0 0
        %6576 = vmatpush1.bf16.msra.mxu0 %v6563
        %6577 = vmatprep.subr.bf16.mxu0 0
        %6578 = vmatpush1.bf16.msra.mxu0 %v6562
        %6579 = vmatprep.subr.bf16.mxu0 0
        %6580 = vmatpush1.bf16.msra.mxu0 %v6561
        %6581 = vmatprep.subr.bf16.mxu0 0
        %6582 = vmatpush1.bf16.msra.mxu0 %v6560
        %6583 = vmatprep.subr.bf16.mxu0 0
        %6584 = vmatpush1.bf16.msra.mxu0 %v6559
        %6585 = vmatprep.subr.bf16.mxu0 0
        %6586 = vmatpush1.bf16.msra.mxu0 %v6558
        %6587 = vmatprep.subr.bf16.mxu0 0
        %6588 = vmatpush1.bf16.msra.mxu0 %v6557
        %6589 = vmatprep.subr.bf16.mxu0 0
        %6590 = vmatpush2.bf16.msra.mxu0 0
        %6591 = vmatprep.subr.bf16.mxu0 0
        %6592 = vmatpush2.bf16.msra.mxu0 0
        %6593 = vmatprep.subr.bf16.mxu0 0
        %6594 = vmatpush2.bf16.msra.mxu0 0
        %6595 = vmatprep.subr.bf16.mxu0 0
        %6596 = vmatpush2.bf16.msra.mxu0 0
        %6597 = vmatprep.subr.bf16.mxu0 0
        %6598 = vmatpush2.bf16.msra.mxu0 0
        %6599 = vmatprep.subr.bf16.mxu0 0
        %6600 = vmatpush2.bf16.msra.mxu0 0
        %6601 = vmatprep.subr.bf16.mxu0 0
        %6602 = vmatpush2.bf16.msra.mxu0 0
        %6603 = vmatprep.subr.bf16.mxu0 0
        %6604 = vmatpush2.bf16.msra.mxu0 0
        %6605 = vmatprep.mubr.bf16.mxu0 0
        %6606 = vmatmul.mubr.bf16.gmra.mxu0 %v6509
        %v6607 = vpop.f32.mrf.mxu0
        %v6608 = vadd.f32 %v6431, %v6607
        %v6609 = vpop.f32.mrf.mxu0
        %v6610 = vpop.f32.mrf.mxu0
        %v6611 = vadd.f32 %v6434, %v6610
        %v6612 = vpop.f32.mrf.mxu0
        %6613 = vmatprep.mubr.bf16.mxu0 0
        %6614 = vmatmul.mubr.bf16.gmra.mxu0 %v6510
        %v6615 = vpop.f32.mrf.mxu0
        %v6616 = vadd.f32 %v6439, %v6615
        %v6617 = vpop.f32.mrf.mxu0
        %v6618 = vpop.f32.mrf.mxu0
        %v6619 = vadd.f32 %v6442, %v6618
        %v6620 = vpop.f32.mrf.mxu0
        %6621 = vmatprep.mubr.bf16.mxu0 0
        %6622 = vmatmul.mubr.bf16.gmra.mxu0 %v6511
        %v6623 = vpop.f32.mrf.mxu0
        %v6624 = vadd.f32 %v6447, %v6623
        %v6625 = vpop.f32.mrf.mxu0
        %v6626 = vpop.f32.mrf.mxu0
        %v6627 = vadd.f32 %v6450, %v6626
        %v6628 = vpop.f32.mrf.mxu0
        %6629 = vmatprep.mubr.bf16.mxu0 0
        %6630 = vmatmul.mubr.bf16.gmra.mxu0 %v6512
        %v6631 = vpop.f32.mrf.mxu0
        %v6632 = vadd.f32 %v6455, %v6631
        %v6633 = vpop.f32.mrf.mxu0
        %v6634 = vpop.f32.mrf.mxu0
        %v6635 = vadd.f32 %v6458, %v6634
        %v6636 = vpop.f32.mrf.mxu0
        %6637 = vmatprep.mubr.bf16.mxu0 0
        %6638 = vmatmul.mubr.bf16.gmra.mxu0 %v6513
        %v6639 = vpop.f32.mrf.mxu0
        %v6640 = vadd.f32 %v6463, %v6639
        %v6641 = vpop.f32.mrf.mxu0
        %v6642 = vpop.f32.mrf.mxu0
        %v6643 = vadd.f32 %v6466, %v6642
        %v6644 = vpop.f32.mrf.mxu0
        %6645 = vmatprep.mubr.bf16.mxu0 0
        %6646 = vmatmul.mubr.bf16.gmra.mxu0 %v6514
        %v6647 = vpop.f32.mrf.mxu0
        %v6648 = vadd.f32 %v6471, %v6647
        %v6649 = vpop.f32.mrf.mxu0
        %v6650 = vpop.f32.mrf.mxu0
        %v6651 = vadd.f32 %v6474, %v6650
        %v6652 = vpop.f32.mrf.mxu0
        %6653 = vmatprep.mubr.bf16.mxu0 0
        %6654 = vmatmul.mubr.bf16.gmra.mxu0 %v6515
        %v6655 = vpop.f32.mrf.mxu0
        %v6656 = vadd.f32 %v6479, %v6655
        %v6657 = vpop.f32.mrf.mxu0
        %v6658 = vpop.f32.mrf.mxu0
        %v6659 = vadd.f32 %v6482, %v6658
        %v6660 = vpop.f32.mrf.mxu0
        %6661 = vmatprep.mubr.bf16.mxu0 0
        %6662 = vmatmul.mubr.bf16.gmra.mxu0 %v6516
        %v6663 = vpop.f32.mrf.mxu0
        %v6664 = vadd.f32 %v6487, %v6663
        %v6665 = vpop.f32.mrf.mxu0
        %v6666 = vpop.f32.mrf.mxu0
        %v6667 = vadd.f32 %v6490, %v6666
        %v6668 = vpop.f32.mrf.mxu0
        %6669 = vdwg.mxu0
        %v6670 = vld [vmem:[%s6161 + $0x4] sm:$0x8]
        %v6671 = vld [vmem:[%s6161 + $0x8] sm:$0xf]
        %v6672 = vld [vmem:[%s6161 + $0xc] sm:$0x7]
        %v6673 = vld [vmem:[%s6161 + $0x14] sm:$0x8]
        %v6674 = vld [vmem:[%s6161 + $0x18] sm:$0xf]
        %v6675 = vld [vmem:[%s6161 + $0x1c] sm:$0x7]
        %v6676 = vld [vmem:[%s6161 + $0x24] sm:$0x8]
        %v6677 = vld [vmem:[%s6161 + $0x28] sm:$0xf]
        %v6678 = vld [vmem:[%s6161 + $0x2c] sm:$0x7]
        %v6679 = vld [vmem:[%s6161 + $0x34] sm:$0x8]
        %v6680 = vld [vmem:[%s6161 + $0x38] sm:$0xf]
        %v6681 = vld [vmem:[%s6161 + $0x3c] sm:$0x7]
        %v6682 = vld [vmem:[%s6161 + $0x44] sm:$0x8]
        %v6683 = vld [vmem:[%s6161 + $0x48] sm:$0xf]
        %v6684 = vld [vmem:[%s6161 + $0x4c] sm:$0x7]
        %v6685 = vld [vmem:[%s6161 + $0x54] sm:$0x8]
        %v6686 = vld [vmem:[%s6161 + $0x58] sm:$0xf]
        %v6687 = vld [vmem:[%s6161 + $0x5c] sm:$0x7]
        %v6688 = vld [vmem:[%s6161 + $0x64] sm:$0x8]
        %v6689 = vld [vmem:[%s6161 + $0x68] sm:$0xf]
        %v6690 = vld [vmem:[%s6161 + $0x6c] sm:$0x7]
        %v6691 = vld [vmem:[%s6161 + $0x74] sm:$0x8]
        %v6692 = vld [vmem:[%s6161 + $0x78] sm:$0xf]
        %v6693 = vld [vmem:[%s6161 + $0x7c] sm:$0x7]
        %v6718 = vrot.slane %v6670, 7
        %v6719 = vrot.slane %v6718, 4
        %v6720 = vrot.slane %v6671, 7
        %v6721 = vsel %vm693, %v6719, %v6720
        %v6722 = vrot.slane %v6720, 4
        %v6723 = vrot.slane %v6672, 7
        %v6724 = vsel %vm693, %v6722, %v6723
        %v6725 = vrot.slane %v6673, 7
        %v6726 = vrot.slane %v6725, 4
        %v6727 = vrot.slane %v6674, 7
        %v6728 = vsel %vm693, %v6726, %v6727
        %v6729 = vrot.slane %v6727, 4
        %v6730 = vrot.slane %v6675, 7
        %v6731 = vsel %vm693, %v6729, %v6730
        %v6732 = vrot.slane %v6676, 7
        %v6733 = vrot.slane %v6732, 4
        %v6734 = vrot.slane %v6677, 7
        %v6735 = vsel %vm693, %v6733, %v6734
        %v6736 = vrot.slane %v6734, 4
        %v6737 = vrot.slane %v6678, 7
        %v6738 = vsel %vm693, %v6736, %v6737
        %v6739 = vrot.slane %v6679, 7
        %v6740 = vrot.slane %v6739, 4
        %v6741 = vrot.slane %v6680, 7
        %v6742 = vsel %vm693, %v6740, %v6741
        %v6743 = vrot.slane %v6741, 4
        %v6744 = vrot.slane %v6681, 7
        %v6745 = vsel %vm693, %v6743, %v6744
        %v6746 = vrot.slane %v6682, 7
        %v6747 = vrot.slane %v6746, 4
        %v6748 = vrot.slane %v6683, 7
        %v6749 = vsel %vm693, %v6747, %v6748
        %v6750 = vrot.slane %v6748, 4
        %v6751 = vrot.slane %v6684, 7
        %v6752 = vsel %vm693, %v6750, %v6751
        %v6753 = vrot.slane %v6685, 7
        %v6754 = vrot.slane %v6753, 4
        %v6755 = vrot.slane %v6686, 7
        %v6756 = vsel %vm693, %v6754, %v6755
        %v6757 = vrot.slane %v6755, 4
        %v6758 = vrot.slane %v6687, 7
        %v6759 = vsel %vm693, %v6757, %v6758
        %v6760 = vrot.slane %v6688, 7
        %v6761 = vrot.slane %v6760, 4
        %v6762 = vrot.slane %v6689, 7
        %v6763 = vsel %vm693, %v6761, %v6762
        %v6764 = vrot.slane %v6762, 4
        %v6765 = vrot.slane %v6690, 7
        %v6766 = vsel %vm693, %v6764, %v6765
        %v6767 = vrot.slane %v6691, 7
        %v6768 = vrot.slane %v6767, 4
        %v6769 = vrot.slane %v6692, 7
        %v6770 = vsel %vm693, %v6768, %v6769
        %v6771 = vrot.slane %v6769, 4
        %v6772 = vrot.slane %v6693, 7
        %v6773 = vsel %vm693, %v6771, %v6772
        %s6774 = scalar_lea.vmem %s3, 1280
        %v6775 = vld [vmem:[%s6774] sm:$0xf]
        %v6776 = vld [vmem:[%s6774 + $0x4] sm:$0xf]
        %v6777 = vld [vmem:[%s6774 + $0x8] sm:$0xf]
        %v6778 = vld [vmem:[%s6774 + $0xc] sm:$0xf]
        %v6779 = vld [vmem:[%s6774 + $0x10] sm:$0xf]
        %v6780 = vld [vmem:[%s6774 + $0x14] sm:$0xf]
        %v6781 = vld [vmem:[%s6774 + $0x18] sm:$0xf]
        %v6782 = vld [vmem:[%s6774 + $0x1c] sm:$0xf]
        %v6783 = vld [vmem:[%s6774 + $0x20] sm:$0xf]
        %v6784 = vld [vmem:[%s6774 + $0x24] sm:$0xf]
        %v6785 = vld [vmem:[%s6774 + $0x28] sm:$0xf]
        %v6786 = vld [vmem:[%s6774 + $0x2c] sm:$0xf]
        %v6787 = vld [vmem:[%s6774 + $0x30] sm:$0xf]
        %v6788 = vld [vmem:[%s6774 + $0x34] sm:$0xf]
        %v6789 = vld [vmem:[%s6774 + $0x38] sm:$0xf]
        %v6790 = vld [vmem:[%s6774 + $0x3c] sm:$0xf]
        %v6791 = vunpack.c.l.b16 %v6721
        %v6792 = vunpack.c.l.b16 %v6724
        %v6793 = vunpack.c.l.b16 %v6728
        %v6794 = vunpack.c.l.b16 %v6731
        %v6795 = vunpack.c.l.b16 %v6735
        %v6796 = vunpack.c.l.b16 %v6738
        %v6797 = vunpack.c.l.b16 %v6742
        %v6798 = vunpack.c.l.b16 %v6745
        %v6799 = vunpack.c.l.b16 %v6749
        %v6800 = vunpack.c.l.b16 %v6752
        %v6801 = vunpack.c.l.b16 %v6756
        %v6802 = vunpack.c.l.b16 %v6759
        %v6803 = vunpack.c.l.b16 %v6763
        %v6804 = vunpack.c.l.b16 %v6766
        %v6805 = vunpack.c.l.b16 %v6770
        %v6806 = vunpack.c.l.b16 %v6773
        %v6807 = vpack.c.b16 %v6792, %v6791
        %v6808 = vpack.c.b16 %v6794, %v6793
        %v6809 = vpack.c.b16 %v6796, %v6795
        %v6810 = vpack.c.b16 %v6798, %v6797
        %v6811 = vpack.c.b16 %v6800, %v6799
        %v6812 = vpack.c.b16 %v6802, %v6801
        %v6813 = vpack.c.b16 %v6804, %v6803
        %v6814 = vpack.c.b16 %v6806, %v6805
        %v6839 = vunpack.c.l.b16 %v6775
        %v6840 = vunpack.c.l.b16 %v6776
        %v6841 = vunpack.c.l.b16 %v6777
        %v6842 = vunpack.c.l.b16 %v6778
        %v6843 = vunpack.c.l.b16 %v6779
        %v6844 = vunpack.c.l.b16 %v6780
        %v6845 = vunpack.c.l.b16 %v6781
        %v6846 = vunpack.c.l.b16 %v6782
        %v6847 = vunpack.c.l.b16 %v6783
        %v6848 = vunpack.c.l.b16 %v6784
        %v6849 = vunpack.c.l.b16 %v6785
        %v6850 = vunpack.c.l.b16 %v6786
        %v6851 = vunpack.c.l.b16 %v6787
        %v6852 = vunpack.c.l.b16 %v6788
        %v6853 = vunpack.c.l.b16 %v6789
        %v6854 = vunpack.c.l.b16 %v6790
        %v6855 = vpack.c.b16 %v6840, %v6839
        %v6856 = vpack.c.b16 %v6842, %v6841
        %v6857 = vpack.c.b16 %v6844, %v6843
        %v6858 = vpack.c.b16 %v6846, %v6845
        %v6859 = vpack.c.b16 %v6848, %v6847
        %v6860 = vpack.c.b16 %v6850, %v6849
        %v6861 = vpack.c.b16 %v6852, %v6851
        %v6862 = vpack.c.b16 %v6854, %v6853
        %6871 = vmatprep.subr.bf16.mxu0 0
        %6872 = vmatpush1.bf16.msra.mxu0 %v6862
        %6873 = vmatprep.subr.bf16.mxu0 0
        %6874 = vmatpush1.bf16.msra.mxu0 %v6861
        %6875 = vmatprep.subr.bf16.mxu0 0
        %6876 = vmatpush1.bf16.msra.mxu0 %v6860
        %6877 = vmatprep.subr.bf16.mxu0 0
        %6878 = vmatpush1.bf16.msra.mxu0 %v6859
        %6879 = vmatprep.subr.bf16.mxu0 0
        %6880 = vmatpush1.bf16.msra.mxu0 %v6858
        %6881 = vmatprep.subr.bf16.mxu0 0
        %6882 = vmatpush1.bf16.msra.mxu0 %v6857
        %6883 = vmatprep.subr.bf16.mxu0 0
        %6884 = vmatpush1.bf16.msra.mxu0 %v6856
        %6885 = vmatprep.subr.bf16.mxu0 0
        %6886 = vmatpush1.bf16.msra.mxu0 %v6855
        %6887 = vmatprep.subr.bf16.mxu0 0
        %6888 = vmatpush2.bf16.msra.mxu0 0
        %6889 = vmatprep.subr.bf16.mxu0 0
        %6890 = vmatpush2.bf16.msra.mxu0 0
        %6891 = vmatprep.subr.bf16.mxu0 0
        %6892 = vmatpush2.bf16.msra.mxu0 0
        %6893 = vmatprep.subr.bf16.mxu0 0
        %6894 = vmatpush2.bf16.msra.mxu0 0
        %6895 = vmatprep.subr.bf16.mxu0 0
        %6896 = vmatpush2.bf16.msra.mxu0 0
        %6897 = vmatprep.subr.bf16.mxu0 0
        %6898 = vmatpush2.bf16.msra.mxu0 0
        %6899 = vmatprep.subr.bf16.mxu0 0
        %6900 = vmatpush2.bf16.msra.mxu0 0
        %6901 = vmatprep.subr.bf16.mxu0 0
        %6902 = vmatpush2.bf16.msra.mxu0 0
        %6903 = vmatprep.mubr.bf16.mxu0 0
        %6904 = vmatmul.mubr.bf16.gmra.mxu0 %v6807
        %v6905 = vpop.f32.mrf.mxu0
        %v6906 = vadd.f32 0.0, %v6905
        %v6907 = vpop.f32.mrf.mxu0
        %v6908 = vpop.f32.mrf.mxu0
        %v6909 = vadd.f32 0.0, %v6908
        %v6910 = vpop.f32.mrf.mxu0
        %6911 = vmatprep.mubr.bf16.mxu0 0
        %6912 = vmatmul.mubr.bf16.gmra.mxu0 %v6808
        %v6913 = vpop.f32.mrf.mxu0
        %v6914 = vadd.f32 0.0, %v6913
        %v6915 = vpop.f32.mrf.mxu0
        %v6916 = vpop.f32.mrf.mxu0
        %v6917 = vadd.f32 0.0, %v6916
        %v6918 = vpop.f32.mrf.mxu0
        %6919 = vmatprep.mubr.bf16.mxu0 0
        %6920 = vmatmul.mubr.bf16.gmra.mxu0 %v6809
        %v6921 = vpop.f32.mrf.mxu0
        %v6922 = vadd.f32 0.0, %v6921
        %v6923 = vpop.f32.mrf.mxu0
        %v6924 = vpop.f32.mrf.mxu0
        %v6925 = vadd.f32 0.0, %v6924
        %v6926 = vpop.f32.mrf.mxu0
        %6927 = vmatprep.mubr.bf16.mxu0 0
        %6928 = vmatmul.mubr.bf16.gmra.mxu0 %v6810
        %v6929 = vpop.f32.mrf.mxu0
        %v6930 = vadd.f32 0.0, %v6929
        %v6931 = vpop.f32.mrf.mxu0
        %v6932 = vpop.f32.mrf.mxu0
        %v6933 = vadd.f32 0.0, %v6932
        %v6934 = vpop.f32.mrf.mxu0
        %6935 = vmatprep.mubr.bf16.mxu0 0
        %6936 = vmatmul.mubr.bf16.gmra.mxu0 %v6811
        %v6937 = vpop.f32.mrf.mxu0
        %v6938 = vadd.f32 0.0, %v6937
        %v6939 = vpop.f32.mrf.mxu0
        %v6940 = vpop.f32.mrf.mxu0
        %v6941 = vadd.f32 0.0, %v6940
        %v6942 = vpop.f32.mrf.mxu0
        %6943 = vmatprep.mubr.bf16.mxu0 0
        %6944 = vmatmul.mubr.bf16.gmra.mxu0 %v6812
        %v6945 = vpop.f32.mrf.mxu0
        %v6946 = vadd.f32 0.0, %v6945
        %v6947 = vpop.f32.mrf.mxu0
        %v6948 = vpop.f32.mrf.mxu0
        %v6949 = vadd.f32 0.0, %v6948
        %v6950 = vpop.f32.mrf.mxu0
        %6951 = vmatprep.mubr.bf16.mxu0 0
        %6952 = vmatmul.mubr.bf16.gmra.mxu0 %v6813
        %v6953 = vpop.f32.mrf.mxu0
        %v6954 = vadd.f32 0.0, %v6953
        %v6955 = vpop.f32.mrf.mxu0
        %v6956 = vpop.f32.mrf.mxu0
        %v6957 = vadd.f32 0.0, %v6956
        %v6958 = vpop.f32.mrf.mxu0
        %6959 = vmatprep.mubr.bf16.mxu0 0
        %6960 = vmatmul.mubr.bf16.gmra.mxu0 %v6814
        %v6961 = vpop.f32.mrf.mxu0
        %v6962 = vadd.f32 0.0, %v6961
        %v6963 = vpop.f32.mrf.mxu0
        %v6964 = vpop.f32.mrf.mxu0
        %v6965 = vadd.f32 0.0, %v6964
        %v6966 = vpop.f32.mrf.mxu0
        %6967 = vdwg.mxu0
        %v6968 = vadd.f32 %v6608, %v6906
        %v6969 = vadd.f32 %v6611, %v6909
        %v6970 = vadd.f32 %v6616, %v6914
        %v6971 = vadd.f32 %v6619, %v6917
        %v6972 = vadd.f32 %v6624, %v6922
        %v6973 = vadd.f32 %v6627, %v6925
        %v6974 = vadd.f32 %v6632, %v6930
        %v6975 = vadd.f32 %v6635, %v6933
        %v6976 = vadd.f32 %v6640, %v6938
        %v6977 = vadd.f32 %v6643, %v6941
        %v6978 = vadd.f32 %v6648, %v6946
        %v6979 = vadd.f32 %v6651, %v6949
        %v6980 = vadd.f32 %v6656, %v6954
        %v6981 = vadd.f32 %v6659, %v6957
        %v6982 = vadd.f32 %v6664, %v6962
        %v6983 = vadd.f32 %v6667, %v6965
        %v6984 = vld [vmem:[%s366] sm:$0xe]
        %v6985 = vld [vmem:[%s366 + $0x8] sm:$0x1]
        %v6986 = vld [vmem:[%s366 + $0x10] sm:$0xe]
        %v6987 = vld [vmem:[%s366 + $0x18] sm:$0x1]
        %v6988 = vld [vmem:[%s366 + $0x20] sm:$0xe]
        %v6989 = vld [vmem:[%s366 + $0x28] sm:$0x1]
        %v6990 = vld [vmem:[%s366 + $0x30] sm:$0xe]
        %v6991 = vld [vmem:[%s366 + $0x38] sm:$0x1]
        %v6992 = vld [vmem:[%s366 + $0x40] sm:$0xe]
        %v6993 = vld [vmem:[%s366 + $0x48] sm:$0x1]
        %v6994 = vld [vmem:[%s366 + $0x50] sm:$0xe]
        %v6995 = vld [vmem:[%s366 + $0x58] sm:$0x1]
        %v6996 = vld [vmem:[%s366 + $0x60] sm:$0xe]
        %v6997 = vld [vmem:[%s366 + $0x68] sm:$0x1]
        %v6998 = vld [vmem:[%s366 + $0x70] sm:$0xe]
        %v6999 = vld [vmem:[%s366 + $0x78] sm:$0x1]
        %v7016 = vrot.slane %v6984, 5
        %v7017 = vrot.slane %v7016, 4
        %v7018 = vrot.slane %v367, 5
        %v7019 = vsel %vm1203, %v7017, %v7018
        %v7020 = vrot.slane %v7018, 4
        %v7021 = vrot.slane %v6985, 5
        %v7022 = vsel %vm1203, %v7020, %v7021
        %v7023 = vrot.slane %v6986, 5
        %v7024 = vrot.slane %v7023, 4
        %v7025 = vrot.slane %v369, 5
        %v7026 = vsel %vm1203, %v7024, %v7025
        %v7027 = vrot.slane %v7025, 4
        %v7028 = vrot.slane %v6987, 5
        %v7029 = vsel %vm1203, %v7027, %v7028
        %v7030 = vrot.slane %v6988, 5
        %v7031 = vrot.slane %v7030, 4
        %v7032 = vrot.slane %v371, 5
        %v7033 = vsel %vm1203, %v7031, %v7032
        %v7034 = vrot.slane %v7032, 4
        %v7035 = vrot.slane %v6989, 5
        %v7036 = vsel %vm1203, %v7034, %v7035
        %v7037 = vrot.slane %v6990, 5
        %v7038 = vrot.slane %v7037, 4
        %v7039 = vrot.slane %v373, 5
        %v7040 = vsel %vm1203, %v7038, %v7039
        %v7041 = vrot.slane %v7039, 4
        %v7042 = vrot.slane %v6991, 5
        %v7043 = vsel %vm1203, %v7041, %v7042
        %v7044 = vrot.slane %v6992, 5
        %v7045 = vrot.slane %v7044, 4
        %v7046 = vrot.slane %v375, 5
        %v7047 = vsel %vm1203, %v7045, %v7046
        %v7048 = vrot.slane %v7046, 4
        %v7049 = vrot.slane %v6993, 5
        %v7050 = vsel %vm1203, %v7048, %v7049
        %v7051 = vrot.slane %v6994, 5
        %v7052 = vrot.slane %v7051, 4
        %v7053 = vrot.slane %v377, 5
        %v7054 = vsel %vm1203, %v7052, %v7053
        %v7055 = vrot.slane %v7053, 4
        %v7056 = vrot.slane %v6995, 5
        %v7057 = vsel %vm1203, %v7055, %v7056
        %v7058 = vrot.slane %v6996, 5
        %v7059 = vrot.slane %v7058, 4
        %v7060 = vrot.slane %v379, 5
        %v7061 = vsel %vm1203, %v7059, %v7060
        %v7062 = vrot.slane %v7060, 4
        %v7063 = vrot.slane %v6997, 5
        %v7064 = vsel %vm1203, %v7062, %v7063
        %v7065 = vrot.slane %v6998, 5
        %v7066 = vrot.slane %v7065, 4
        %v7067 = vrot.slane %v381, 5
        %v7068 = vsel %vm1203, %v7066, %v7067
        %v7069 = vrot.slane %v7067, 4
        %v7070 = vrot.slane %v6999, 5
        %v7071 = vsel %vm1203, %v7069, %v7070
        %s7072 = scalar_lea.vmem %s3, 1344
        %v7073 = vld [vmem:[%s7072] sm:$0xf]
        %v7074 = vld [vmem:[%s7072 + $0x4] sm:$0xf]
        %v7075 = vld [vmem:[%s7072 + $0x8] sm:$0xf]
        %v7076 = vld [vmem:[%s7072 + $0xc] sm:$0xf]
        %v7077 = vld [vmem:[%s7072 + $0x10] sm:$0xf]
        %v7078 = vld [vmem:[%s7072 + $0x14] sm:$0xf]
        %v7079 = vld [vmem:[%s7072 + $0x18] sm:$0xf]
        %v7080 = vld [vmem:[%s7072 + $0x1c] sm:$0xf]
        %v7081 = vld [vmem:[%s7072 + $0x20] sm:$0xf]
        %v7082 = vld [vmem:[%s7072 + $0x24] sm:$0xf]
        %v7083 = vld [vmem:[%s7072 + $0x28] sm:$0xf]
        %v7084 = vld [vmem:[%s7072 + $0x2c] sm:$0xf]
        %v7085 = vld [vmem:[%s7072 + $0x30] sm:$0xf]
        %v7086 = vld [vmem:[%s7072 + $0x34] sm:$0xf]
        %v7087 = vld [vmem:[%s7072 + $0x38] sm:$0xf]
        %v7088 = vld [vmem:[%s7072 + $0x3c] sm:$0xf]
        %v7089 = vunpack.c.l.b16 %v7019
        %v7090 = vunpack.c.l.b16 %v7022
        %v7091 = vunpack.c.l.b16 %v7026
        %v7092 = vunpack.c.l.b16 %v7029
        %v7093 = vunpack.c.l.b16 %v7033
        %v7094 = vunpack.c.l.b16 %v7036
        %v7095 = vunpack.c.l.b16 %v7040
        %v7096 = vunpack.c.l.b16 %v7043
        %v7097 = vunpack.c.l.b16 %v7047
        %v7098 = vunpack.c.l.b16 %v7050
        %v7099 = vunpack.c.l.b16 %v7054
        %v7100 = vunpack.c.l.b16 %v7057
        %v7101 = vunpack.c.l.b16 %v7061
        %v7102 = vunpack.c.l.b16 %v7064
        %v7103 = vunpack.c.l.b16 %v7068
        %v7104 = vunpack.c.l.b16 %v7071
        %v7105 = vpack.c.b16 %v7090, %v7089
        %v7106 = vpack.c.b16 %v7092, %v7091
        %v7107 = vpack.c.b16 %v7094, %v7093
        %v7108 = vpack.c.b16 %v7096, %v7095
        %v7109 = vpack.c.b16 %v7098, %v7097
        %v7110 = vpack.c.b16 %v7100, %v7099
        %v7111 = vpack.c.b16 %v7102, %v7101
        %v7112 = vpack.c.b16 %v7104, %v7103
        %v7137 = vunpack.c.l.b16 %v7073
        %v7138 = vunpack.c.l.b16 %v7074
        %v7139 = vunpack.c.l.b16 %v7075
        %v7140 = vunpack.c.l.b16 %v7076
        %v7141 = vunpack.c.l.b16 %v7077
        %v7142 = vunpack.c.l.b16 %v7078
        %v7143 = vunpack.c.l.b16 %v7079
        %v7144 = vunpack.c.l.b16 %v7080
        %v7145 = vunpack.c.l.b16 %v7081
        %v7146 = vunpack.c.l.b16 %v7082
        %v7147 = vunpack.c.l.b16 %v7083
        %v7148 = vunpack.c.l.b16 %v7084
        %v7149 = vunpack.c.l.b16 %v7085
        %v7150 = vunpack.c.l.b16 %v7086
        %v7151 = vunpack.c.l.b16 %v7087
        %v7152 = vunpack.c.l.b16 %v7088
        %v7153 = vpack.c.b16 %v7138, %v7137
        %v7154 = vpack.c.b16 %v7140, %v7139
        %v7155 = vpack.c.b16 %v7142, %v7141
        %v7156 = vpack.c.b16 %v7144, %v7143
        %v7157 = vpack.c.b16 %v7146, %v7145
        %v7158 = vpack.c.b16 %v7148, %v7147
        %v7159 = vpack.c.b16 %v7150, %v7149
        %v7160 = vpack.c.b16 %v7152, %v7151
        %7169 = vmatprep.subr.bf16.mxu0 0
        %7170 = vmatpush1.bf16.msra.mxu0 %v7160
        %7171 = vmatprep.subr.bf16.mxu0 0
        %7172 = vmatpush1.bf16.msra.mxu0 %v7159
        %7173 = vmatprep.subr.bf16.mxu0 0
        %7174 = vmatpush1.bf16.msra.mxu0 %v7158
        %7175 = vmatprep.subr.bf16.mxu0 0
        %7176 = vmatpush1.bf16.msra.mxu0 %v7157
        %7177 = vmatprep.subr.bf16.mxu0 0
        %7178 = vmatpush1.bf16.msra.mxu0 %v7156
        %7179 = vmatprep.subr.bf16.mxu0 0
        %7180 = vmatpush1.bf16.msra.mxu0 %v7155
        %7181 = vmatprep.subr.bf16.mxu0 0
        %7182 = vmatpush1.bf16.msra.mxu0 %v7154
        %7183 = vmatprep.subr.bf16.mxu0 0
        %7184 = vmatpush1.bf16.msra.mxu0 %v7153
        %7185 = vmatprep.subr.bf16.mxu0 0
        %7186 = vmatpush2.bf16.msra.mxu0 0
        %7187 = vmatprep.subr.bf16.mxu0 0
        %7188 = vmatpush2.bf16.msra.mxu0 0
        %7189 = vmatprep.subr.bf16.mxu0 0
        %7190 = vmatpush2.bf16.msra.mxu0 0
        %7191 = vmatprep.subr.bf16.mxu0 0
        %7192 = vmatpush2.bf16.msra.mxu0 0
        %7193 = vmatprep.subr.bf16.mxu0 0
        %7194 = vmatpush2.bf16.msra.mxu0 0
        %7195 = vmatprep.subr.bf16.mxu0 0
        %7196 = vmatpush2.bf16.msra.mxu0 0
        %7197 = vmatprep.subr.bf16.mxu0 0
        %7198 = vmatpush2.bf16.msra.mxu0 0
        %7199 = vmatprep.subr.bf16.mxu0 0
        %7200 = vmatpush2.bf16.msra.mxu0 0
        %7201 = vmatprep.mubr.bf16.mxu0 0
        %7202 = vmatmul.mubr.bf16.gmra.mxu0 %v7105
        %v7203 = vpop.f32.mrf.mxu0
        %v7204 = vadd.f32 0.0, %v7203
        %v7205 = vpop.f32.mrf.mxu0
        %v7206 = vpop.f32.mrf.mxu0
        %v7207 = vadd.f32 0.0, %v7206
        %v7208 = vpop.f32.mrf.mxu0
        %7209 = vmatprep.mubr.bf16.mxu0 0
        %7210 = vmatmul.mubr.bf16.gmra.mxu0 %v7106
        %v7211 = vpop.f32.mrf.mxu0
        %v7212 = vadd.f32 0.0, %v7211
        %v7213 = vpop.f32.mrf.mxu0
        %v7214 = vpop.f32.mrf.mxu0
        %v7215 = vadd.f32 0.0, %v7214
        %v7216 = vpop.f32.mrf.mxu0
        %7217 = vmatprep.mubr.bf16.mxu0 0
        %7218 = vmatmul.mubr.bf16.gmra.mxu0 %v7107
        %v7219 = vpop.f32.mrf.mxu0
        %v7220 = vadd.f32 0.0, %v7219
        %v7221 = vpop.f32.mrf.mxu0
        %v7222 = vpop.f32.mrf.mxu0
        %v7223 = vadd.f32 0.0, %v7222
        %v7224 = vpop.f32.mrf.mxu0
        %7225 = vmatprep.mubr.bf16.mxu0 0
        %7226 = vmatmul.mubr.bf16.gmra.mxu0 %v7108
        %v7227 = vpop.f32.mrf.mxu0
        %v7228 = vadd.f32 0.0, %v7227
        %v7229 = vpop.f32.mrf.mxu0
        %v7230 = vpop.f32.mrf.mxu0
        %v7231 = vadd.f32 0.0, %v7230
        %v7232 = vpop.f32.mrf.mxu0
        %7233 = vmatprep.mubr.bf16.mxu0 0
        %7234 = vmatmul.mubr.bf16.gmra.mxu0 %v7109
        %v7235 = vpop.f32.mrf.mxu0
        %v7236 = vadd.f32 0.0, %v7235
        %v7237 = vpop.f32.mrf.mxu0
        %v7238 = vpop.f32.mrf.mxu0
        %v7239 = vadd.f32 0.0, %v7238
        %v7240 = vpop.f32.mrf.mxu0
        %7241 = vmatprep.mubr.bf16.mxu0 0
        %7242 = vmatmul.mubr.bf16.gmra.mxu0 %v7110
        %v7243 = vpop.f32.mrf.mxu0
        %v7244 = vadd.f32 0.0, %v7243
        %v7245 = vpop.f32.mrf.mxu0
        %v7246 = vpop.f32.mrf.mxu0
        %v7247 = vadd.f32 0.0, %v7246
        %v7248 = vpop.f32.mrf.mxu0
        %7249 = vmatprep.mubr.bf16.mxu0 0
        %7250 = vmatmul.mubr.bf16.gmra.mxu0 %v7111
        %v7251 = vpop.f32.mrf.mxu0
        %v7252 = vadd.f32 0.0, %v7251
        %v7253 = vpop.f32.mrf.mxu0
        %v7254 = vpop.f32.mrf.mxu0
        %v7255 = vadd.f32 0.0, %v7254
        %v7256 = vpop.f32.mrf.mxu0
        %7257 = vmatprep.mubr.bf16.mxu0 0
        %7258 = vmatmul.mubr.bf16.gmra.mxu0 %v7112
        %v7259 = vpop.f32.mrf.mxu0
        %v7260 = vadd.f32 0.0, %v7259
        %v7261 = vpop.f32.mrf.mxu0
        %v7262 = vpop.f32.mrf.mxu0
        %v7263 = vadd.f32 0.0, %v7262
        %v7264 = vpop.f32.mrf.mxu0
        %7265 = vdwg.mxu0
        %v7266 = vadd.f32 %v6968, %v7204
        %v7267 = vadd.f32 %v6969, %v7207
        %v7268 = vadd.f32 %v6970, %v7212
        %v7269 = vadd.f32 %v6971, %v7215
        %v7270 = vadd.f32 %v6972, %v7220
        %v7271 = vadd.f32 %v6973, %v7223
        %v7272 = vadd.f32 %v6974, %v7228
        %v7273 = vadd.f32 %v6975, %v7231
        %v7274 = vadd.f32 %v6976, %v7236
        %v7275 = vadd.f32 %v6977, %v7239
        %v7276 = vadd.f32 %v6978, %v7244
        %v7277 = vadd.f32 %v6979, %v7247
        %v7278 = vadd.f32 %v6980, %v7252
        %v7279 = vadd.f32 %v6981, %v7255
        %v7280 = vadd.f32 %v6982, %v7260
        %v7281 = vadd.f32 %v6983, %v7263
        %s7282 = scalar_lea.vmem %s3, 1408
        %v7283 = vld [vmem:[%s7282] sm:$0xf]
        %v7284 = vld [vmem:[%s7282 + $0x4] sm:$0xf]
        %v7285 = vld [vmem:[%s7282 + $0x8] sm:$0xf]
        %v7286 = vld [vmem:[%s7282 + $0xc] sm:$0xf]
        %v7287 = vld [vmem:[%s7282 + $0x10] sm:$0xf]
        %v7288 = vld [vmem:[%s7282 + $0x14] sm:$0xf]
        %v7289 = vld [vmem:[%s7282 + $0x18] sm:$0xf]
        %v7290 = vld [vmem:[%s7282 + $0x1c] sm:$0xf]
        %v7291 = vld [vmem:[%s7282 + $0x20] sm:$0xf]
        %v7292 = vld [vmem:[%s7282 + $0x24] sm:$0xf]
        %v7293 = vld [vmem:[%s7282 + $0x28] sm:$0xf]
        %v7294 = vld [vmem:[%s7282 + $0x2c] sm:$0xf]
        %v7295 = vld [vmem:[%s7282 + $0x30] sm:$0xf]
        %v7296 = vld [vmem:[%s7282 + $0x34] sm:$0xf]
        %v7297 = vld [vmem:[%s7282 + $0x38] sm:$0xf]
        %v7298 = vld [vmem:[%s7282 + $0x3c] sm:$0xf]
        %v7315 = vunpack.c.l.b16 %v7283
        %v7316 = vunpack.c.l.b16 %v7284
        %v7317 = vunpack.c.l.b16 %v7285
        %v7318 = vunpack.c.l.b16 %v7286
        %v7319 = vunpack.c.l.b16 %v7287
        %v7320 = vunpack.c.l.b16 %v7288
        %v7321 = vunpack.c.l.b16 %v7289
        %v7322 = vunpack.c.l.b16 %v7290
        %v7323 = vunpack.c.l.b16 %v7291
        %v7324 = vunpack.c.l.b16 %v7292
        %v7325 = vunpack.c.l.b16 %v7293
        %v7326 = vunpack.c.l.b16 %v7294
        %v7327 = vunpack.c.l.b16 %v7295
        %v7328 = vunpack.c.l.b16 %v7296
        %v7329 = vunpack.c.l.b16 %v7297
        %v7330 = vunpack.c.l.b16 %v7298
        %v7331 = vpack.c.b16 %v7316, %v7315
        %v7332 = vpack.c.b16 %v7318, %v7317
        %v7333 = vpack.c.b16 %v7320, %v7319
        %v7334 = vpack.c.b16 %v7322, %v7321
        %v7335 = vpack.c.b16 %v7324, %v7323
        %v7336 = vpack.c.b16 %v7326, %v7325
        %v7337 = vpack.c.b16 %v7328, %v7327
        %v7338 = vpack.c.b16 %v7330, %v7329
        %7347 = vmatprep.subr.bf16.mxu0 0
        %7348 = vmatpush1.bf16.msra.mxu0 %v7338
        %7349 = vmatprep.subr.bf16.mxu0 0
        %7350 = vmatpush1.bf16.msra.mxu0 %v7337
        %7351 = vmatprep.subr.bf16.mxu0 0
        %7352 = vmatpush1.bf16.msra.mxu0 %v7336
        %7353 = vmatprep.subr.bf16.mxu0 0
        %7354 = vmatpush1.bf16.msra.mxu0 %v7335
        %7355 = vmatprep.subr.bf16.mxu0 0
        %7356 = vmatpush1.bf16.msra.mxu0 %v7334
        %7357 = vmatprep.subr.bf16.mxu0 0
        %7358 = vmatpush1.bf16.msra.mxu0 %v7333
        %7359 = vmatprep.subr.bf16.mxu0 0
        %7360 = vmatpush1.bf16.msra.mxu0 %v7332
        %7361 = vmatprep.subr.bf16.mxu0 0
        %7362 = vmatpush1.bf16.msra.mxu0 %v7331
        %7363 = vmatprep.subr.bf16.mxu0 0
        %7364 = vmatpush2.bf16.msra.mxu0 0
        %7365 = vmatprep.subr.bf16.mxu0 0
        %7366 = vmatpush2.bf16.msra.mxu0 0
        %7367 = vmatprep.subr.bf16.mxu0 0
        %7368 = vmatpush2.bf16.msra.mxu0 0
        %7369 = vmatprep.subr.bf16.mxu0 0
        %7370 = vmatpush2.bf16.msra.mxu0 0
        %7371 = vmatprep.subr.bf16.mxu0 0
        %7372 = vmatpush2.bf16.msra.mxu0 0
        %7373 = vmatprep.subr.bf16.mxu0 0
        %7374 = vmatpush2.bf16.msra.mxu0 0
        %7375 = vmatprep.subr.bf16.mxu0 0
        %7376 = vmatpush2.bf16.msra.mxu0 0
        %7377 = vmatprep.subr.bf16.mxu0 0
        %7378 = vmatpush2.bf16.msra.mxu0 0
        %7379 = vmatprep.mubr.bf16.mxu0 0
        %7380 = vmatmul.mubr.bf16.gmra.mxu0 %v438
        %v7381 = vpop.f32.mrf.mxu0
        %v7382 = vadd.f32 0.0, %v7381
        %v7383 = vpop.f32.mrf.mxu0
        %v7384 = vpop.f32.mrf.mxu0
        %v7385 = vadd.f32 0.0, %v7384
        %v7386 = vpop.f32.mrf.mxu0
        %7387 = vmatprep.mubr.bf16.mxu0 0
        %7388 = vmatmul.mubr.bf16.gmra.mxu0 %v439
        %v7389 = vpop.f32.mrf.mxu0
        %v7390 = vadd.f32 0.0, %v7389
        %v7391 = vpop.f32.mrf.mxu0
        %v7392 = vpop.f32.mrf.mxu0
        %v7393 = vadd.f32 0.0, %v7392
        %v7394 = vpop.f32.mrf.mxu0
        %7395 = vmatprep.mubr.bf16.mxu0 0
        %7396 = vmatmul.mubr.bf16.gmra.mxu0 %v440
        %v7397 = vpop.f32.mrf.mxu0
        %v7398 = vadd.f32 0.0, %v7397
        %v7399 = vpop.f32.mrf.mxu0
        %v7400 = vpop.f32.mrf.mxu0
        %v7401 = vadd.f32 0.0, %v7400
        %v7402 = vpop.f32.mrf.mxu0
        %7403 = vmatprep.mubr.bf16.mxu0 0
        %7404 = vmatmul.mubr.bf16.gmra.mxu0 %v441
        %v7405 = vpop.f32.mrf.mxu0
        %v7406 = vadd.f32 0.0, %v7405
        %v7407 = vpop.f32.mrf.mxu0
        %v7408 = vpop.f32.mrf.mxu0
        %v7409 = vadd.f32 0.0, %v7408
        %v7410 = vpop.f32.mrf.mxu0
        %7411 = vmatprep.mubr.bf16.mxu0 0
        %7412 = vmatmul.mubr.bf16.gmra.mxu0 %v442
        %v7413 = vpop.f32.mrf.mxu0
        %v7414 = vadd.f32 0.0, %v7413
        %v7415 = vpop.f32.mrf.mxu0
        %v7416 = vpop.f32.mrf.mxu0
        %v7417 = vadd.f32 0.0, %v7416
        %v7418 = vpop.f32.mrf.mxu0
        %7419 = vmatprep.mubr.bf16.mxu0 0
        %7420 = vmatmul.mubr.bf16.gmra.mxu0 %v443
        %v7421 = vpop.f32.mrf.mxu0
        %v7422 = vadd.f32 0.0, %v7421
        %v7423 = vpop.f32.mrf.mxu0
        %v7424 = vpop.f32.mrf.mxu0
        %v7425 = vadd.f32 0.0, %v7424
        %v7426 = vpop.f32.mrf.mxu0
        %7427 = vmatprep.mubr.bf16.mxu0 0
        %7428 = vmatmul.mubr.bf16.gmra.mxu0 %v444
        %v7429 = vpop.f32.mrf.mxu0
        %v7430 = vadd.f32 0.0, %v7429
        %v7431 = vpop.f32.mrf.mxu0
        %v7432 = vpop.f32.mrf.mxu0
        %v7433 = vadd.f32 0.0, %v7432
        %v7434 = vpop.f32.mrf.mxu0
        %7435 = vmatprep.mubr.bf16.mxu0 0
        %7436 = vmatmul.mubr.bf16.gmra.mxu0 %v445
        %v7437 = vpop.f32.mrf.mxu0
        %v7438 = vadd.f32 0.0, %v7437
        %v7439 = vpop.f32.mrf.mxu0
        %v7440 = vpop.f32.mrf.mxu0
        %v7441 = vadd.f32 0.0, %v7440
        %v7442 = vpop.f32.mrf.mxu0
        %7443 = vdwg.mxu0
        %v7444 = vadd.f32 %v7266, %v7382
        %v7445 = vadd.f32 %v7267, %v7385
        %v7446 = vadd.f32 %v7268, %v7390
        %v7447 = vadd.f32 %v7269, %v7393
        %v7448 = vadd.f32 %v7270, %v7398
        %v7449 = vadd.f32 %v7271, %v7401
        %v7450 = vadd.f32 %v7272, %v7406
        %v7451 = vadd.f32 %v7273, %v7409
        %v7452 = vadd.f32 %v7274, %v7414
        %v7453 = vadd.f32 %v7275, %v7417
        %v7454 = vadd.f32 %v7276, %v7422
        %v7455 = vadd.f32 %v7277, %v7425
        %v7456 = vadd.f32 %v7278, %v7430
        %v7457 = vadd.f32 %v7279, %v7433
        %v7458 = vadd.f32 %v7280, %v7438
        %v7459 = vadd.f32 %v7281, %v7441
        %v7460 = vld [vmem:[%s366 + $0x4] sm:$0x8]
        %v7461 = vld [vmem:[%s366 + $0xc] sm:$0x7]
        %v7462 = vld [vmem:[%s366 + $0x14] sm:$0x8]
        %v7463 = vld [vmem:[%s366 + $0x1c] sm:$0x7]
        %v7464 = vld [vmem:[%s366 + $0x24] sm:$0x8]
        %v7465 = vld [vmem:[%s366 + $0x2c] sm:$0x7]
        %v7466 = vld [vmem:[%s366 + $0x34] sm:$0x8]
        %v7467 = vld [vmem:[%s366 + $0x3c] sm:$0x7]
        %v7468 = vld [vmem:[%s366 + $0x44] sm:$0x8]
        %v7469 = vld [vmem:[%s366 + $0x4c] sm:$0x7]
        %v7470 = vld [vmem:[%s366 + $0x54] sm:$0x8]
        %v7471 = vld [vmem:[%s366 + $0x5c] sm:$0x7]
        %v7472 = vld [vmem:[%s366 + $0x64] sm:$0x8]
        %v7473 = vld [vmem:[%s366 + $0x6c] sm:$0x7]
        %v7474 = vld [vmem:[%s366 + $0x74] sm:$0x8]
        %v7475 = vld [vmem:[%s366 + $0x7c] sm:$0x7]
        %v7492 = vrot.slane %v7460, 7
        %v7493 = vrot.slane %v7492, 4
        %v7494 = vrot.slane %v1947, 7
        %v7495 = vsel %vm693, %v7493, %v7494
        %v7496 = vrot.slane %v7494, 4
        %v7497 = vrot.slane %v7461, 7
        %v7498 = vsel %vm693, %v7496, %v7497
        %v7499 = vrot.slane %v7462, 7
        %v7500 = vrot.slane %v7499, 4
        %v7501 = vrot.slane %v1950, 7
        %v7502 = vsel %vm693, %v7500, %v7501
        %v7503 = vrot.slane %v7501, 4
        %v7504 = vrot.slane %v7463, 7
        %v7505 = vsel %vm693, %v7503, %v7504
        %v7506 = vrot.slane %v7464, 7
        %v7507 = vrot.slane %v7506, 4
        %v7508 = vrot.slane %v1953, 7
        %v7509 = vsel %vm693, %v7507, %v7508
        %v7510 = vrot.slane %v7508, 4
        %v7511 = vrot.slane %v7465, 7
        %v7512 = vsel %vm693, %v7510, %v7511
        %v7513 = vrot.slane %v7466, 7
        %v7514 = vrot.slane %v7513, 4
        %v7515 = vrot.slane %v1956, 7
        %v7516 = vsel %vm693, %v7514, %v7515
        %v7517 = vrot.slane %v7515, 4
        %v7518 = vrot.slane %v7467, 7
        %v7519 = vsel %vm693, %v7517, %v7518
        %v7520 = vrot.slane %v7468, 7
        %v7521 = vrot.slane %v7520, 4
        %v7522 = vrot.slane %v1959, 7
        %v7523 = vsel %vm693, %v7521, %v7522
        %v7524 = vrot.slane %v7522, 4
        %v7525 = vrot.slane %v7469, 7
        %v7526 = vsel %vm693, %v7524, %v7525
        %v7527 = vrot.slane %v7470, 7
        %v7528 = vrot.slane %v7527, 4
        %v7529 = vrot.slane %v1962, 7
        %v7530 = vsel %vm693, %v7528, %v7529
        %v7531 = vrot.slane %v7529, 4
        %v7532 = vrot.slane %v7471, 7
        %v7533 = vsel %vm693, %v7531, %v7532
        %v7534 = vrot.slane %v7472, 7
        %v7535 = vrot.slane %v7534, 4
        %v7536 = vrot.slane %v1965, 7
        %v7537 = vsel %vm693, %v7535, %v7536
        %v7538 = vrot.slane %v7536, 4
        %v7539 = vrot.slane %v7473, 7
        %v7540 = vsel %vm693, %v7538, %v7539
        %v7541 = vrot.slane %v7474, 7
        %v7542 = vrot.slane %v7541, 4
        %v7543 = vrot.slane %v1968, 7
        %v7544 = vsel %vm693, %v7542, %v7543
        %v7545 = vrot.slane %v7543, 4
        %v7546 = vrot.slane %v7475, 7
        %v7547 = vsel %vm693, %v7545, %v7546
        %s7548 = scalar_lea.vmem %s3, 1472
        %v7549 = vld [vmem:[%s7548] sm:$0xf]
        %v7550 = vld [vmem:[%s7548 + $0x4] sm:$0xf]
        %v7551 = vld [vmem:[%s7548 + $0x8] sm:$0xf]
        %v7552 = vld [vmem:[%s7548 + $0xc] sm:$0xf]
        %v7553 = vld [vmem:[%s7548 + $0x10] sm:$0xf]
        %v7554 = vld [vmem:[%s7548 + $0x14] sm:$0xf]
        %v7555 = vld [vmem:[%s7548 + $0x18] sm:$0xf]
        %v7556 = vld [vmem:[%s7548 + $0x1c] sm:$0xf]
        %v7557 = vld [vmem:[%s7548 + $0x20] sm:$0xf]
        %v7558 = vld [vmem:[%s7548 + $0x24] sm:$0xf]
        %v7559 = vld [vmem:[%s7548 + $0x28] sm:$0xf]
        %v7560 = vld [vmem:[%s7548 + $0x2c] sm:$0xf]
        %v7561 = vld [vmem:[%s7548 + $0x30] sm:$0xf]
        %v7562 = vld [vmem:[%s7548 + $0x34] sm:$0xf]
        %v7563 = vld [vmem:[%s7548 + $0x38] sm:$0xf]
        %v7564 = vld [vmem:[%s7548 + $0x3c] sm:$0xf]
        %v7565 = vunpack.c.l.b16 %v7495
        %v7566 = vunpack.c.l.b16 %v7498
        %v7567 = vunpack.c.l.b16 %v7502
        %v7568 = vunpack.c.l.b16 %v7505
        %v7569 = vunpack.c.l.b16 %v7509
        %v7570 = vunpack.c.l.b16 %v7512
        %v7571 = vunpack.c.l.b16 %v7516
        %v7572 = vunpack.c.l.b16 %v7519
        %v7573 = vunpack.c.l.b16 %v7523
        %v7574 = vunpack.c.l.b16 %v7526
        %v7575 = vunpack.c.l.b16 %v7530
        %v7576 = vunpack.c.l.b16 %v7533
        %v7577 = vunpack.c.l.b16 %v7537
        %v7578 = vunpack.c.l.b16 %v7540
        %v7579 = vunpack.c.l.b16 %v7544
        %v7580 = vunpack.c.l.b16 %v7547
        %v7581 = vpack.c.b16 %v7566, %v7565
        %v7582 = vpack.c.b16 %v7568, %v7567
        %v7583 = vpack.c.b16 %v7570, %v7569
        %v7584 = vpack.c.b16 %v7572, %v7571
        %v7585 = vpack.c.b16 %v7574, %v7573
        %v7586 = vpack.c.b16 %v7576, %v7575
        %v7587 = vpack.c.b16 %v7578, %v7577
        %v7588 = vpack.c.b16 %v7580, %v7579
        %v7613 = vunpack.c.l.b16 %v7549
        %v7614 = vunpack.c.l.b16 %v7550
        %v7615 = vunpack.c.l.b16 %v7551
        %v7616 = vunpack.c.l.b16 %v7552
        %v7617 = vunpack.c.l.b16 %v7553
        %v7618 = vunpack.c.l.b16 %v7554
        %v7619 = vunpack.c.l.b16 %v7555
        %v7620 = vunpack.c.l.b16 %v7556
        %v7621 = vunpack.c.l.b16 %v7557
        %v7622 = vunpack.c.l.b16 %v7558
        %v7623 = vunpack.c.l.b16 %v7559
        %v7624 = vunpack.c.l.b16 %v7560
        %v7625 = vunpack.c.l.b16 %v7561
        %v7626 = vunpack.c.l.b16 %v7562
        %v7627 = vunpack.c.l.b16 %v7563
        %v7628 = vunpack.c.l.b16 %v7564
        %v7629 = vpack.c.b16 %v7614, %v7613
        %v7630 = vpack.c.b16 %v7616, %v7615
        %v7631 = vpack.c.b16 %v7618, %v7617
        %v7632 = vpack.c.b16 %v7620, %v7619
        %v7633 = vpack.c.b16 %v7622, %v7621
        %v7634 = vpack.c.b16 %v7624, %v7623
        %v7635 = vpack.c.b16 %v7626, %v7625
        %v7636 = vpack.c.b16 %v7628, %v7627
        %7645 = vmatprep.subr.bf16.mxu0 0
        %7646 = vmatpush1.bf16.msra.mxu0 %v7636
        %7647 = vmatprep.subr.bf16.mxu0 0
        %7648 = vmatpush1.bf16.msra.mxu0 %v7635
        %7649 = vmatprep.subr.bf16.mxu0 0
        %7650 = vmatpush1.bf16.msra.mxu0 %v7634
        %7651 = vmatprep.subr.bf16.mxu0 0
        %7652 = vmatpush1.bf16.msra.mxu0 %v7633
        %7653 = vmatprep.subr.bf16.mxu0 0
        %7654 = vmatpush1.bf16.msra.mxu0 %v7632
        %7655 = vmatprep.subr.bf16.mxu0 0
        %7656 = vmatpush1.bf16.msra.mxu0 %v7631
        %7657 = vmatprep.subr.bf16.mxu0 0
        %7658 = vmatpush1.bf16.msra.mxu0 %v7630
        %7659 = vmatprep.subr.bf16.mxu0 0
        %7660 = vmatpush1.bf16.msra.mxu0 %v7629
        %7661 = vmatprep.subr.bf16.mxu0 0
        %7662 = vmatpush2.bf16.msra.mxu0 0
        %7663 = vmatprep.subr.bf16.mxu0 0
        %7664 = vmatpush2.bf16.msra.mxu0 0
        %7665 = vmatprep.subr.bf16.mxu0 0
        %7666 = vmatpush2.bf16.msra.mxu0 0
        %7667 = vmatprep.subr.bf16.mxu0 0
        %7668 = vmatpush2.bf16.msra.mxu0 0
        %7669 = vmatprep.subr.bf16.mxu0 0
        %7670 = vmatpush2.bf16.msra.mxu0 0
        %7671 = vmatprep.subr.bf16.mxu0 0
        %7672 = vmatpush2.bf16.msra.mxu0 0
        %7673 = vmatprep.subr.bf16.mxu0 0
        %7674 = vmatpush2.bf16.msra.mxu0 0
        %7675 = vmatprep.subr.bf16.mxu0 0
        %7676 = vmatpush2.bf16.msra.mxu0 0
        %7677 = vmatprep.mubr.bf16.mxu0 0
        %7678 = vmatmul.mubr.bf16.gmra.mxu0 %v7581
        %v7679 = vpop.f32.mrf.mxu0
        %v7680 = vadd.f32 0.0, %v7679
        %v7681 = vpop.f32.mrf.mxu0
        %v7682 = vpop.f32.mrf.mxu0
        %v7683 = vadd.f32 0.0, %v7682
        %v7684 = vpop.f32.mrf.mxu0
        %7685 = vmatprep.mubr.bf16.mxu0 0
        %7686 = vmatmul.mubr.bf16.gmra.mxu0 %v7582
        %v7687 = vpop.f32.mrf.mxu0
        %v7688 = vadd.f32 0.0, %v7687
        %v7689 = vpop.f32.mrf.mxu0
        %v7690 = vpop.f32.mrf.mxu0
        %v7691 = vadd.f32 0.0, %v7690
        %v7692 = vpop.f32.mrf.mxu0
        %7693 = vmatprep.mubr.bf16.mxu0 0
        %7694 = vmatmul.mubr.bf16.gmra.mxu0 %v7583
        %v7695 = vpop.f32.mrf.mxu0
        %v7696 = vadd.f32 0.0, %v7695
        %v7697 = vpop.f32.mrf.mxu0
        %v7698 = vpop.f32.mrf.mxu0
        %v7699 = vadd.f32 0.0, %v7698
        %v7700 = vpop.f32.mrf.mxu0
        %7701 = vmatprep.mubr.bf16.mxu0 0
        %7702 = vmatmul.mubr.bf16.gmra.mxu0 %v7584
        %v7703 = vpop.f32.mrf.mxu0
        %v7704 = vadd.f32 0.0, %v7703
        %v7705 = vpop.f32.mrf.mxu0
        %v7706 = vpop.f32.mrf.mxu0
        %v7707 = vadd.f32 0.0, %v7706
        %v7708 = vpop.f32.mrf.mxu0
        %7709 = vmatprep.mubr.bf16.mxu0 0
        %7710 = vmatmul.mubr.bf16.gmra.mxu0 %v7585
        %v7711 = vpop.f32.mrf.mxu0
        %v7712 = vadd.f32 0.0, %v7711
        %v7713 = vpop.f32.mrf.mxu0
        %v7714 = vpop.f32.mrf.mxu0
        %v7715 = vadd.f32 0.0, %v7714
        %v7716 = vpop.f32.mrf.mxu0
        %7717 = vmatprep.mubr.bf16.mxu0 0
        %7718 = vmatmul.mubr.bf16.gmra.mxu0 %v7586
        %v7719 = vpop.f32.mrf.mxu0
        %v7720 = vadd.f32 0.0, %v7719
        %v7721 = vpop.f32.mrf.mxu0
        %v7722 = vpop.f32.mrf.mxu0
        %v7723 = vadd.f32 0.0, %v7722
        %v7724 = vpop.f32.mrf.mxu0
        %7725 = vmatprep.mubr.bf16.mxu0 0
        %7726 = vmatmul.mubr.bf16.gmra.mxu0 %v7587
        %v7727 = vpop.f32.mrf.mxu0
        %v7728 = vadd.f32 0.0, %v7727
        %v7729 = vpop.f32.mrf.mxu0
        %v7730 = vpop.f32.mrf.mxu0
        %v7731 = vadd.f32 0.0, %v7730
        %v7732 = vpop.f32.mrf.mxu0
        %7733 = vmatprep.mubr.bf16.mxu0 0
        %7734 = vmatmul.mubr.bf16.gmra.mxu0 %v7588
        %v7735 = vpop.f32.mrf.mxu0
        %v7736 = vadd.f32 0.0, %v7735
        %v7737 = vpop.f32.mrf.mxu0
        %v7738 = vpop.f32.mrf.mxu0
        %v7739 = vadd.f32 0.0, %v7738
        %v7740 = vpop.f32.mrf.mxu0
        %7741 = vdwg.mxu0
        %v7742 = vadd.f32 %v7444, %v7680
        %v7743 = vadd.f32 %v7445, %v7683
        %v7744 = vadd.f32 %v7446, %v7688
        %v7745 = vadd.f32 %v7447, %v7691
        %v7746 = vadd.f32 %v7448, %v7696
        %v7747 = vadd.f32 %v7449, %v7699
        %v7748 = vadd.f32 %v7450, %v7704
        %v7749 = vadd.f32 %v7451, %v7707
        %v7750 = vadd.f32 %v7452, %v7712
        %v7751 = vadd.f32 %v7453, %v7715
        %v7752 = vadd.f32 %v7454, %v7720
        %v7753 = vadd.f32 %v7455, %v7723
        %v7754 = vadd.f32 %v7456, %v7728
        %v7755 = vadd.f32 %v7457, %v7731
        %v7756 = vadd.f32 %v7458, %v7736
        %v7757 = vadd.f32 %v7459, %v7739
        %s7758 = sadd.s32 %s362, 12
        %s7759 = smul.u32 %s7758, 4
        %s7760 = smul.addr %s7759, 4
        %s7761 = scalar_lea.vmem %s359, %s7760
        %v7762 = vld [vmem:[%s7761] sm:$0xe]
        %v7763 = vld [vmem:[%s7761 + $0x4] sm:$0xf]
        %v7764 = vld [vmem:[%s7761 + $0x8] sm:$0x1]
        %v7765 = vld [vmem:[%s7761 + $0x10] sm:$0xe]
        %v7766 = vld [vmem:[%s7761 + $0x14] sm:$0xf]
        %v7767 = vld [vmem:[%s7761 + $0x18] sm:$0x1]
        %v7768 = vld [vmem:[%s7761 + $0x20] sm:$0xe]
        %v7769 = vld [vmem:[%s7761 + $0x24] sm:$0xf]
        %v7770 = vld [vmem:[%s7761 + $0x28] sm:$0x1]
        %v7771 = vld [vmem:[%s7761 + $0x30] sm:$0xe]
        %v7772 = vld [vmem:[%s7761 + $0x34] sm:$0xf]
        %v7773 = vld [vmem:[%s7761 + $0x38] sm:$0x1]
        %v7774 = vld [vmem:[%s7761 + $0x40] sm:$0xe]
        %v7775 = vld [vmem:[%s7761 + $0x44] sm:$0xf]
        %v7776 = vld [vmem:[%s7761 + $0x48] sm:$0x1]
        %v7777 = vld [vmem:[%s7761 + $0x50] sm:$0xe]
        %v7778 = vld [vmem:[%s7761 + $0x54] sm:$0xf]
        %v7779 = vld [vmem:[%s7761 + $0x58] sm:$0x1]
        %v7780 = vld [vmem:[%s7761 + $0x60] sm:$0xe]
        %v7781 = vld [vmem:[%s7761 + $0x64] sm:$0xf]
        %v7782 = vld [vmem:[%s7761 + $0x68] sm:$0x1]
        %v7783 = vld [vmem:[%s7761 + $0x70] sm:$0xe]
        %v7784 = vld [vmem:[%s7761 + $0x74] sm:$0xf]
        %v7785 = vld [vmem:[%s7761 + $0x78] sm:$0x1]
        %v7810 = vrot.slane %v7762, 5
        %v7811 = vrot.slane %v7810, 4
        %v7812 = vrot.slane %v7763, 5
        %v7813 = vsel %vm1203, %v7811, %v7812
        %v7814 = vrot.slane %v7812, 4
        %v7815 = vrot.slane %v7764, 5
        %v7816 = vsel %vm1203, %v7814, %v7815
        %v7817 = vrot.slane %v7765, 5
        %v7818 = vrot.slane %v7817, 4
        %v7819 = vrot.slane %v7766, 5
        %v7820 = vsel %vm1203, %v7818, %v7819
        %v7821 = vrot.slane %v7819, 4
        %v7822 = vrot.slane %v7767, 5
        %v7823 = vsel %vm1203, %v7821, %v7822
        %v7824 = vrot.slane %v7768, 5
        %v7825 = vrot.slane %v7824, 4
        %v7826 = vrot.slane %v7769, 5
        %v7827 = vsel %vm1203, %v7825, %v7826
        %v7828 = vrot.slane %v7826, 4
        %v7829 = vrot.slane %v7770, 5
        %v7830 = vsel %vm1203, %v7828, %v7829
        %v7831 = vrot.slane %v7771, 5
        %v7832 = vrot.slane %v7831, 4
        %v7833 = vrot.slane %v7772, 5
        %v7834 = vsel %vm1203, %v7832, %v7833
        %v7835 = vrot.slane %v7833, 4
        %v7836 = vrot.slane %v7773, 5
        %v7837 = vsel %vm1203, %v7835, %v7836
        %v7838 = vrot.slane %v7774, 5
        %v7839 = vrot.slane %v7838, 4
        %v7840 = vrot.slane %v7775, 5
        %v7841 = vsel %vm1203, %v7839, %v7840
        %v7842 = vrot.slane %v7840, 4
        %v7843 = vrot.slane %v7776, 5
        %v7844 = vsel %vm1203, %v7842, %v7843
        %v7845 = vrot.slane %v7777, 5
        %v7846 = vrot.slane %v7845, 4
        %v7847 = vrot.slane %v7778, 5
        %v7848 = vsel %vm1203, %v7846, %v7847
        %v7849 = vrot.slane %v7847, 4
        %v7850 = vrot.slane %v7779, 5
        %v7851 = vsel %vm1203, %v7849, %v7850
        %v7852 = vrot.slane %v7780, 5
        %v7853 = vrot.slane %v7852, 4
        %v7854 = vrot.slane %v7781, 5
        %v7855 = vsel %vm1203, %v7853, %v7854
        %v7856 = vrot.slane %v7854, 4
        %v7857 = vrot.slane %v7782, 5
        %v7858 = vsel %vm1203, %v7856, %v7857
        %v7859 = vrot.slane %v7783, 5
        %v7860 = vrot.slane %v7859, 4
        %v7861 = vrot.slane %v7784, 5
        %v7862 = vsel %vm1203, %v7860, %v7861
        %v7863 = vrot.slane %v7861, 4
        %v7864 = vrot.slane %v7785, 5
        %v7865 = vsel %vm1203, %v7863, %v7864
        %s7866 = scalar_lea.vmem %s3, 1536
        %v7867 = vld [vmem:[%s7866] sm:$0xf]
        %v7868 = vld [vmem:[%s7866 + $0x4] sm:$0xf]
        %v7869 = vld [vmem:[%s7866 + $0x8] sm:$0xf]
        %v7870 = vld [vmem:[%s7866 + $0xc] sm:$0xf]
        %v7871 = vld [vmem:[%s7866 + $0x10] sm:$0xf]
        %v7872 = vld [vmem:[%s7866 + $0x14] sm:$0xf]
        %v7873 = vld [vmem:[%s7866 + $0x18] sm:$0xf]
        %v7874 = vld [vmem:[%s7866 + $0x1c] sm:$0xf]
        %v7875 = vld [vmem:[%s7866 + $0x20] sm:$0xf]
        %v7876 = vld [vmem:[%s7866 + $0x24] sm:$0xf]
        %v7877 = vld [vmem:[%s7866 + $0x28] sm:$0xf]
        %v7878 = vld [vmem:[%s7866 + $0x2c] sm:$0xf]
        %v7879 = vld [vmem:[%s7866 + $0x30] sm:$0xf]
        %v7880 = vld [vmem:[%s7866 + $0x34] sm:$0xf]
        %v7881 = vld [vmem:[%s7866 + $0x38] sm:$0xf]
        %v7882 = vld [vmem:[%s7866 + $0x3c] sm:$0xf]
        %v7883 = vunpack.c.l.b16 %v7813
        %v7884 = vunpack.c.l.b16 %v7816
        %v7885 = vunpack.c.l.b16 %v7820
        %v7886 = vunpack.c.l.b16 %v7823
        %v7887 = vunpack.c.l.b16 %v7827
        %v7888 = vunpack.c.l.b16 %v7830
        %v7889 = vunpack.c.l.b16 %v7834
        %v7890 = vunpack.c.l.b16 %v7837
        %v7891 = vunpack.c.l.b16 %v7841
        %v7892 = vunpack.c.l.b16 %v7844
        %v7893 = vunpack.c.l.b16 %v7848
        %v7894 = vunpack.c.l.b16 %v7851
        %v7895 = vunpack.c.l.b16 %v7855
        %v7896 = vunpack.c.l.b16 %v7858
        %v7897 = vunpack.c.l.b16 %v7862
        %v7898 = vunpack.c.l.b16 %v7865
        %v7899 = vpack.c.b16 %v7884, %v7883
        %v7900 = vpack.c.b16 %v7886, %v7885
        %v7901 = vpack.c.b16 %v7888, %v7887
        %v7902 = vpack.c.b16 %v7890, %v7889
        %v7903 = vpack.c.b16 %v7892, %v7891
        %v7904 = vpack.c.b16 %v7894, %v7893
        %v7905 = vpack.c.b16 %v7896, %v7895
        %v7906 = vpack.c.b16 %v7898, %v7897
        %v7931 = vunpack.c.l.b16 %v7867
        %v7932 = vunpack.c.l.b16 %v7868
        %v7933 = vunpack.c.l.b16 %v7869
        %v7934 = vunpack.c.l.b16 %v7870
        %v7935 = vunpack.c.l.b16 %v7871
        %v7936 = vunpack.c.l.b16 %v7872
        %v7937 = vunpack.c.l.b16 %v7873
        %v7938 = vunpack.c.l.b16 %v7874
        %v7939 = vunpack.c.l.b16 %v7875
        %v7940 = vunpack.c.l.b16 %v7876
        %v7941 = vunpack.c.l.b16 %v7877
        %v7942 = vunpack.c.l.b16 %v7878
        %v7943 = vunpack.c.l.b16 %v7879
        %v7944 = vunpack.c.l.b16 %v7880
        %v7945 = vunpack.c.l.b16 %v7881
        %v7946 = vunpack.c.l.b16 %v7882
        %v7947 = vpack.c.b16 %v7932, %v7931
        %v7948 = vpack.c.b16 %v7934, %v7933
        %v7949 = vpack.c.b16 %v7936, %v7935
        %v7950 = vpack.c.b16 %v7938, %v7937
        %v7951 = vpack.c.b16 %v7940, %v7939
        %v7952 = vpack.c.b16 %v7942, %v7941
        %v7953 = vpack.c.b16 %v7944, %v7943
        %v7954 = vpack.c.b16 %v7946, %v7945
        %7963 = vmatprep.subr.bf16.mxu0 0
        %7964 = vmatpush1.bf16.msra.mxu0 %v7954
        %7965 = vmatprep.subr.bf16.mxu0 0
        %7966 = vmatpush1.bf16.msra.mxu0 %v7953
        %7967 = vmatprep.subr.bf16.mxu0 0
        %7968 = vmatpush1.bf16.msra.mxu0 %v7952
        %7969 = vmatprep.subr.bf16.mxu0 0
        %7970 = vmatpush1.bf16.msra.mxu0 %v7951
        %7971 = vmatprep.subr.bf16.mxu0 0
        %7972 = vmatpush1.bf16.msra.mxu0 %v7950
        %7973 = vmatprep.subr.bf16.mxu0 0
        %7974 = vmatpush1.bf16.msra.mxu0 %v7949
        %7975 = vmatprep.subr.bf16.mxu0 0
        %7976 = vmatpush1.bf16.msra.mxu0 %v7948
        %7977 = vmatprep.subr.bf16.mxu0 0
        %7978 = vmatpush1.bf16.msra.mxu0 %v7947
        %7979 = vmatprep.subr.bf16.mxu0 0
        %7980 = vmatpush2.bf16.msra.mxu0 0
        %7981 = vmatprep.subr.bf16.mxu0 0
        %7982 = vmatpush2.bf16.msra.mxu0 0
        %7983 = vmatprep.subr.bf16.mxu0 0
        %7984 = vmatpush2.bf16.msra.mxu0 0
        %7985 = vmatprep.subr.bf16.mxu0 0
        %7986 = vmatpush2.bf16.msra.mxu0 0
        %7987 = vmatprep.subr.bf16.mxu0 0
        %7988 = vmatpush2.bf16.msra.mxu0 0
        %7989 = vmatprep.subr.bf16.mxu0 0
        %7990 = vmatpush2.bf16.msra.mxu0 0
        %7991 = vmatprep.subr.bf16.mxu0 0
        %7992 = vmatpush2.bf16.msra.mxu0 0
        %7993 = vmatprep.subr.bf16.mxu0 0
        %7994 = vmatpush2.bf16.msra.mxu0 0
        %7995 = vmatprep.mubr.bf16.mxu0 0
        %7996 = vmatmul.mubr.bf16.gmra.mxu0 %v7899
        %v7997 = vpop.f32.mrf.mxu0
        %v7998 = vadd.f32 0.0, %v7997
        %v7999 = vpop.f32.mrf.mxu0
        %v8000 = vpop.f32.mrf.mxu0
        %v8001 = vadd.f32 0.0, %v8000
        %v8002 = vpop.f32.mrf.mxu0
        %8003 = vmatprep.mubr.bf16.mxu0 0
        %8004 = vmatmul.mubr.bf16.gmra.mxu0 %v7900
        %v8005 = vpop.f32.mrf.mxu0
        %v8006 = vadd.f32 0.0, %v8005
        %v8007 = vpop.f32.mrf.mxu0
        %v8008 = vpop.f32.mrf.mxu0
        %v8009 = vadd.f32 0.0, %v8008
        %v8010 = vpop.f32.mrf.mxu0
        %8011 = vmatprep.mubr.bf16.mxu0 0
        %8012 = vmatmul.mubr.bf16.gmra.mxu0 %v7901
        %v8013 = vpop.f32.mrf.mxu0
        %v8014 = vadd.f32 0.0, %v8013
        %v8015 = vpop.f32.mrf.mxu0
        %v8016 = vpop.f32.mrf.mxu0
        %v8017 = vadd.f32 0.0, %v8016
        %v8018 = vpop.f32.mrf.mxu0
        %8019 = vmatprep.mubr.bf16.mxu0 0
        %8020 = vmatmul.mubr.bf16.gmra.mxu0 %v7902
        %v8021 = vpop.f32.mrf.mxu0
        %v8022 = vadd.f32 0.0, %v8021
        %v8023 = vpop.f32.mrf.mxu0
        %v8024 = vpop.f32.mrf.mxu0
        %v8025 = vadd.f32 0.0, %v8024
        %v8026 = vpop.f32.mrf.mxu0
        %8027 = vmatprep.mubr.bf16.mxu0 0
        %8028 = vmatmul.mubr.bf16.gmra.mxu0 %v7903
        %v8029 = vpop.f32.mrf.mxu0
        %v8030 = vadd.f32 0.0, %v8029
        %v8031 = vpop.f32.mrf.mxu0
        %v8032 = vpop.f32.mrf.mxu0
        %v8033 = vadd.f32 0.0, %v8032
        %v8034 = vpop.f32.mrf.mxu0
        %8035 = vmatprep.mubr.bf16.mxu0 0
        %8036 = vmatmul.mubr.bf16.gmra.mxu0 %v7904
        %v8037 = vpop.f32.mrf.mxu0
        %v8038 = vadd.f32 0.0, %v8037
        %v8039 = vpop.f32.mrf.mxu0
        %v8040 = vpop.f32.mrf.mxu0
        %v8041 = vadd.f32 0.0, %v8040
        %v8042 = vpop.f32.mrf.mxu0
        %8043 = vmatprep.mubr.bf16.mxu0 0
        %8044 = vmatmul.mubr.bf16.gmra.mxu0 %v7905
        %v8045 = vpop.f32.mrf.mxu0
        %v8046 = vadd.f32 0.0, %v8045
        %v8047 = vpop.f32.mrf.mxu0
        %v8048 = vpop.f32.mrf.mxu0
        %v8049 = vadd.f32 0.0, %v8048
        %v8050 = vpop.f32.mrf.mxu0
        %8051 = vmatprep.mubr.bf16.mxu0 0
        %8052 = vmatmul.mubr.bf16.gmra.mxu0 %v7906
        %v8053 = vpop.f32.mrf.mxu0
        %v8054 = vadd.f32 0.0, %v8053
        %v8055 = vpop.f32.mrf.mxu0
        %v8056 = vpop.f32.mrf.mxu0
        %v8057 = vadd.f32 0.0, %v8056
        %v8058 = vpop.f32.mrf.mxu0
        %8059 = vdwg.mxu0
        %v8060 = vadd.f32 %v7742, %v7998
        %v8061 = vadd.f32 %v7743, %v8001
        %v8062 = vadd.f32 %v7744, %v8006
        %v8063 = vadd.f32 %v7745, %v8009
        %v8064 = vadd.f32 %v7746, %v8014
        %v8065 = vadd.f32 %v7747, %v8017
        %v8066 = vadd.f32 %v7748, %v8022
        %v8067 = vadd.f32 %v7749, %v8025
        %v8068 = vadd.f32 %v7750, %v8030
        %v8069 = vadd.f32 %v7751, %v8033
        %v8070 = vadd.f32 %v7752, %v8038
        %v8071 = vadd.f32 %v7753, %v8041
        %v8072 = vadd.f32 %v7754, %v8046
        %v8073 = vadd.f32 %v7755, %v8049
        %v8074 = vadd.f32 %v7756, %v8054
        %v8075 = vadd.f32 %v7757, %v8057
        %v8076 = vld [vmem:[%s7761 + $0x8] sm:$0xf]
        %v8077 = vld [vmem:[%s7761 + $0x18] sm:$0xf]
        %v8078 = vld [vmem:[%s7761 + $0x28] sm:$0xf]
        %v8079 = vld [vmem:[%s7761 + $0x38] sm:$0xf]
        %v8080 = vld [vmem:[%s7761 + $0x48] sm:$0xf]
        %v8081 = vld [vmem:[%s7761 + $0x58] sm:$0xf]
        %v8082 = vld [vmem:[%s7761 + $0x68] sm:$0xf]
        %v8083 = vld [vmem:[%s7761 + $0x78] sm:$0xf]
        %s8084 = scalar_lea.vmem %s3, 1600
        %v8085 = vld [vmem:[%s8084] sm:$0xf]
        %v8086 = vld [vmem:[%s8084 + $0x4] sm:$0xf]
        %v8087 = vld [vmem:[%s8084 + $0x8] sm:$0xf]
        %v8088 = vld [vmem:[%s8084 + $0xc] sm:$0xf]
        %v8089 = vld [vmem:[%s8084 + $0x10] sm:$0xf]
        %v8090 = vld [vmem:[%s8084 + $0x14] sm:$0xf]
        %v8091 = vld [vmem:[%s8084 + $0x18] sm:$0xf]
        %v8092 = vld [vmem:[%s8084 + $0x1c] sm:$0xf]
        %v8093 = vld [vmem:[%s8084 + $0x20] sm:$0xf]
        %v8094 = vld [vmem:[%s8084 + $0x24] sm:$0xf]
        %v8095 = vld [vmem:[%s8084 + $0x28] sm:$0xf]
        %v8096 = vld [vmem:[%s8084 + $0x2c] sm:$0xf]
        %v8097 = vld [vmem:[%s8084 + $0x30] sm:$0xf]
        %v8098 = vld [vmem:[%s8084 + $0x34] sm:$0xf]
        %v8099 = vld [vmem:[%s8084 + $0x38] sm:$0xf]
        %v8100 = vld [vmem:[%s8084 + $0x3c] sm:$0xf]
        %v8109 = vunpack.c.l.b16 %v7763
        %v8110 = vunpack.c.l.b16 %v8076
        %v8111 = vunpack.c.l.b16 %v7766
        %v8112 = vunpack.c.l.b16 %v8077
        %v8113 = vunpack.c.l.b16 %v7769
        %v8114 = vunpack.c.l.b16 %v8078
        %v8115 = vunpack.c.l.b16 %v7772
        %v8116 = vunpack.c.l.b16 %v8079
        %v8117 = vunpack.c.l.b16 %v7775
        %v8118 = vunpack.c.l.b16 %v8080
        %v8119 = vunpack.c.l.b16 %v7778
        %v8120 = vunpack.c.l.b16 %v8081
        %v8121 = vunpack.c.l.b16 %v7781
        %v8122 = vunpack.c.l.b16 %v8082
        %v8123 = vunpack.c.l.b16 %v7784
        %v8124 = vunpack.c.l.b16 %v8083
        %v8125 = vpack.c.b16 %v8110, %v8109
        %v8126 = vpack.c.b16 %v8112, %v8111
        %v8127 = vpack.c.b16 %v8114, %v8113
        %v8128 = vpack.c.b16 %v8116, %v8115
        %v8129 = vpack.c.b16 %v8118, %v8117
        %v8130 = vpack.c.b16 %v8120, %v8119
        %v8131 = vpack.c.b16 %v8122, %v8121
        %v8132 = vpack.c.b16 %v8124, %v8123
        %v8157 = vunpack.c.l.b16 %v8085
        %v8158 = vunpack.c.l.b16 %v8086
        %v8159 = vunpack.c.l.b16 %v8087
        %v8160 = vunpack.c.l.b16 %v8088
        %v8161 = vunpack.c.l.b16 %v8089
        %v8162 = vunpack.c.l.b16 %v8090
        %v8163 = vunpack.c.l.b16 %v8091
        %v8164 = vunpack.c.l.b16 %v8092
        %v8165 = vunpack.c.l.b16 %v8093
        %v8166 = vunpack.c.l.b16 %v8094
        %v8167 = vunpack.c.l.b16 %v8095
        %v8168 = vunpack.c.l.b16 %v8096
        %v8169 = vunpack.c.l.b16 %v8097
        %v8170 = vunpack.c.l.b16 %v8098
        %v8171 = vunpack.c.l.b16 %v8099
        %v8172 = vunpack.c.l.b16 %v8100
        %v8173 = vpack.c.b16 %v8158, %v8157
        %v8174 = vpack.c.b16 %v8160, %v8159
        %v8175 = vpack.c.b16 %v8162, %v8161
        %v8176 = vpack.c.b16 %v8164, %v8163
        %v8177 = vpack.c.b16 %v8166, %v8165
        %v8178 = vpack.c.b16 %v8168, %v8167
        %v8179 = vpack.c.b16 %v8170, %v8169
        %v8180 = vpack.c.b16 %v8172, %v8171
        %8189 = vmatprep.subr.bf16.mxu0 0
        %8190 = vmatpush1.bf16.msra.mxu0 %v8180
        %8191 = vmatprep.subr.bf16.mxu0 0
        %8192 = vmatpush1.bf16.msra.mxu0 %v8179
        %8193 = vmatprep.subr.bf16.mxu0 0
        %8194 = vmatpush1.bf16.msra.mxu0 %v8178
        %8195 = vmatprep.subr.bf16.mxu0 0
        %8196 = vmatpush1.bf16.msra.mxu0 %v8177
        %8197 = vmatprep.subr.bf16.mxu0 0
        %8198 = vmatpush1.bf16.msra.mxu0 %v8176
        %8199 = vmatprep.subr.bf16.mxu0 0
        %8200 = vmatpush1.bf16.msra.mxu0 %v8175
        %8201 = vmatprep.subr.bf16.mxu0 0
        %8202 = vmatpush1.bf16.msra.mxu0 %v8174
        %8203 = vmatprep.subr.bf16.mxu0 0
        %8204 = vmatpush1.bf16.msra.mxu0 %v8173
        %8205 = vmatprep.subr.bf16.mxu0 0
        %8206 = vmatpush2.bf16.msra.mxu0 0
        %8207 = vmatprep.subr.bf16.mxu0 0
        %8208 = vmatpush2.bf16.msra.mxu0 0
        %8209 = vmatprep.subr.bf16.mxu0 0
        %8210 = vmatpush2.bf16.msra.mxu0 0
        %8211 = vmatprep.subr.bf16.mxu0 0
        %8212 = vmatpush2.bf16.msra.mxu0 0
        %8213 = vmatprep.subr.bf16.mxu0 0
        %8214 = vmatpush2.bf16.msra.mxu0 0
        %8215 = vmatprep.subr.bf16.mxu0 0
        %8216 = vmatpush2.bf16.msra.mxu0 0
        %8217 = vmatprep.subr.bf16.mxu0 0
        %8218 = vmatpush2.bf16.msra.mxu0 0
        %8219 = vmatprep.subr.bf16.mxu0 0
        %8220 = vmatpush2.bf16.msra.mxu0 0
        %8221 = vmatprep.mubr.bf16.mxu0 0
        %8222 = vmatmul.mubr.bf16.gmra.mxu0 %v8125
        %v8223 = vpop.f32.mrf.mxu0
        %v8224 = vadd.f32 0.0, %v8223
        %v8225 = vpop.f32.mrf.mxu0
        %v8226 = vpop.f32.mrf.mxu0
        %v8227 = vadd.f32 0.0, %v8226
        %v8228 = vpop.f32.mrf.mxu0
        %8229 = vmatprep.mubr.bf16.mxu0 0
        %8230 = vmatmul.mubr.bf16.gmra.mxu0 %v8126
        %v8231 = vpop.f32.mrf.mxu0
        %v8232 = vadd.f32 0.0, %v8231
        %v8233 = vpop.f32.mrf.mxu0
        %v8234 = vpop.f32.mrf.mxu0
        %v8235 = vadd.f32 0.0, %v8234
        %v8236 = vpop.f32.mrf.mxu0
        %8237 = vmatprep.mubr.bf16.mxu0 0
        %8238 = vmatmul.mubr.bf16.gmra.mxu0 %v8127
        %v8239 = vpop.f32.mrf.mxu0
        %v8240 = vadd.f32 0.0, %v8239
        %v8241 = vpop.f32.mrf.mxu0
        %v8242 = vpop.f32.mrf.mxu0
        %v8243 = vadd.f32 0.0, %v8242
        %v8244 = vpop.f32.mrf.mxu0
        %8245 = vmatprep.mubr.bf16.mxu0 0
        %8246 = vmatmul.mubr.bf16.gmra.mxu0 %v8128
        %v8247 = vpop.f32.mrf.mxu0
        %v8248 = vadd.f32 0.0, %v8247
        %v8249 = vpop.f32.mrf.mxu0
        %v8250 = vpop.f32.mrf.mxu0
        %v8251 = vadd.f32 0.0, %v8250
        %v8252 = vpop.f32.mrf.mxu0
        %8253 = vmatprep.mubr.bf16.mxu0 0
        %8254 = vmatmul.mubr.bf16.gmra.mxu0 %v8129
        %v8255 = vpop.f32.mrf.mxu0
        %v8256 = vadd.f32 0.0, %v8255
        %v8257 = vpop.f32.mrf.mxu0
        %v8258 = vpop.f32.mrf.mxu0
        %v8259 = vadd.f32 0.0, %v8258
        %v8260 = vpop.f32.mrf.mxu0
        %8261 = vmatprep.mubr.bf16.mxu0 0
        %8262 = vmatmul.mubr.bf16.gmra.mxu0 %v8130
        %v8263 = vpop.f32.mrf.mxu0
        %v8264 = vadd.f32 0.0, %v8263
        %v8265 = vpop.f32.mrf.mxu0
        %v8266 = vpop.f32.mrf.mxu0
        %v8267 = vadd.f32 0.0, %v8266
        %v8268 = vpop.f32.mrf.mxu0
        %8269 = vmatprep.mubr.bf16.mxu0 0
        %8270 = vmatmul.mubr.bf16.gmra.mxu0 %v8131
        %v8271 = vpop.f32.mrf.mxu0
        %v8272 = vadd.f32 0.0, %v8271
        %v8273 = vpop.f32.mrf.mxu0
        %v8274 = vpop.f32.mrf.mxu0
        %v8275 = vadd.f32 0.0, %v8274
        %v8276 = vpop.f32.mrf.mxu0
        %8277 = vmatprep.mubr.bf16.mxu0 0
        %8278 = vmatmul.mubr.bf16.gmra.mxu0 %v8132
        %v8279 = vpop.f32.mrf.mxu0
        %v8280 = vadd.f32 0.0, %v8279
        %v8281 = vpop.f32.mrf.mxu0
        %v8282 = vpop.f32.mrf.mxu0
        %v8283 = vadd.f32 0.0, %v8282
        %v8284 = vpop.f32.mrf.mxu0
        %8285 = vdwg.mxu0
        %v8286 = vadd.f32 %v8060, %v8224
        %v8287 = vadd.f32 %v8061, %v8227
        %v8288 = vadd.f32 %v8062, %v8232
        %v8289 = vadd.f32 %v8063, %v8235
        %v8290 = vadd.f32 %v8064, %v8240
        %v8291 = vadd.f32 %v8065, %v8243
        %v8292 = vadd.f32 %v8066, %v8248
        %v8293 = vadd.f32 %v8067, %v8251
        %v8294 = vadd.f32 %v8068, %v8256
        %v8295 = vadd.f32 %v8069, %v8259
        %v8296 = vadd.f32 %v8070, %v8264
        %v8297 = vadd.f32 %v8071, %v8267
        %v8298 = vadd.f32 %v8072, %v8272
        %v8299 = vadd.f32 %v8073, %v8275
        %v8300 = vadd.f32 %v8074, %v8280
        %v8301 = vadd.f32 %v8075, %v8283
        %v8302 = vld [vmem:[%s7761 + $0x4] sm:$0x8]
        %v8303 = vld [vmem:[%s7761 + $0x8] sm:$0xf]
        %v8304 = vld [vmem:[%s7761 + $0xc] sm:$0x7]
        %v8305 = vld [vmem:[%s7761 + $0x14] sm:$0x8]
        %v8306 = vld [vmem:[%s7761 + $0x18] sm:$0xf]
        %v8307 = vld [vmem:[%s7761 + $0x1c] sm:$0x7]
        %v8308 = vld [vmem:[%s7761 + $0x24] sm:$0x8]
        %v8309 = vld [vmem:[%s7761 + $0x28] sm:$0xf]
        %v8310 = vld [vmem:[%s7761 + $0x2c] sm:$0x7]
        %v8311 = vld [vmem:[%s7761 + $0x34] sm:$0x8]
        %v8312 = vld [vmem:[%s7761 + $0x38] sm:$0xf]
        %v8313 = vld [vmem:[%s7761 + $0x3c] sm:$0x7]
        %v8314 = vld [vmem:[%s7761 + $0x44] sm:$0x8]
        %v8315 = vld [vmem:[%s7761 + $0x48] sm:$0xf]
        %v8316 = vld [vmem:[%s7761 + $0x4c] sm:$0x7]
        %v8317 = vld [vmem:[%s7761 + $0x54] sm:$0x8]
        %v8318 = vld [vmem:[%s7761 + $0x58] sm:$0xf]
        %v8319 = vld [vmem:[%s7761 + $0x5c] sm:$0x7]
        %v8320 = vld [vmem:[%s7761 + $0x64] sm:$0x8]
        %v8321 = vld [vmem:[%s7761 + $0x68] sm:$0xf]
        %v8322 = vld [vmem:[%s7761 + $0x6c] sm:$0x7]
        %v8323 = vld [vmem:[%s7761 + $0x74] sm:$0x8]
        %v8324 = vld [vmem:[%s7761 + $0x78] sm:$0xf]
        %v8325 = vld [vmem:[%s7761 + $0x7c] sm:$0x7]
        %v8350 = vrot.slane %v8302, 7
        %v8351 = vrot.slane %v8350, 4
        %v8352 = vrot.slane %v8303, 7
        %v8353 = vsel %vm693, %v8351, %v8352
        %v8354 = vrot.slane %v8352, 4
        %v8355 = vrot.slane %v8304, 7
        %v8356 = vsel %vm693, %v8354, %v8355
        %v8357 = vrot.slane %v8305, 7
        %v8358 = vrot.slane %v8357, 4
        %v8359 = vrot.slane %v8306, 7
        %v8360 = vsel %vm693, %v8358, %v8359
        %v8361 = vrot.slane %v8359, 4
        %v8362 = vrot.slane %v8307, 7
        %v8363 = vsel %vm693, %v8361, %v8362
        %v8364 = vrot.slane %v8308, 7
        %v8365 = vrot.slane %v8364, 4
        %v8366 = vrot.slane %v8309, 7
        %v8367 = vsel %vm693, %v8365, %v8366
        %v8368 = vrot.slane %v8366, 4
        %v8369 = vrot.slane %v8310, 7
        %v8370 = vsel %vm693, %v8368, %v8369
        %v8371 = vrot.slane %v8311, 7
        %v8372 = vrot.slane %v8371, 4
        %v8373 = vrot.slane %v8312, 7
        %v8374 = vsel %vm693, %v8372, %v8373
        %v8375 = vrot.slane %v8373, 4
        %v8376 = vrot.slane %v8313, 7
        %v8377 = vsel %vm693, %v8375, %v8376
        %v8378 = vrot.slane %v8314, 7
        %v8379 = vrot.slane %v8378, 4
        %v8380 = vrot.slane %v8315, 7
        %v8381 = vsel %vm693, %v8379, %v8380
        %v8382 = vrot.slane %v8380, 4
        %v8383 = vrot.slane %v8316, 7
        %v8384 = vsel %vm693, %v8382, %v8383
        %v8385 = vrot.slane %v8317, 7
        %v8386 = vrot.slane %v8385, 4
        %v8387 = vrot.slane %v8318, 7
        %v8388 = vsel %vm693, %v8386, %v8387
        %v8389 = vrot.slane %v8387, 4
        %v8390 = vrot.slane %v8319, 7
        %v8391 = vsel %vm693, %v8389, %v8390
        %v8392 = vrot.slane %v8320, 7
        %v8393 = vrot.slane %v8392, 4
        %v8394 = vrot.slane %v8321, 7
        %v8395 = vsel %vm693, %v8393, %v8394
        %v8396 = vrot.slane %v8394, 4
        %v8397 = vrot.slane %v8322, 7
        %v8398 = vsel %vm693, %v8396, %v8397
        %v8399 = vrot.slane %v8323, 7
        %v8400 = vrot.slane %v8399, 4
        %v8401 = vrot.slane %v8324, 7
        %v8402 = vsel %vm693, %v8400, %v8401
        %v8403 = vrot.slane %v8401, 4
        %v8404 = vrot.slane %v8325, 7
        %v8405 = vsel %vm693, %v8403, %v8404
        %s8406 = scalar_lea.vmem %s3, 1664
        %v8407 = vld [vmem:[%s8406] sm:$0xf]
        %v8408 = vld [vmem:[%s8406 + $0x4] sm:$0xf]
        %v8409 = vld [vmem:[%s8406 + $0x8] sm:$0xf]
        %v8410 = vld [vmem:[%s8406 + $0xc] sm:$0xf]
        %v8411 = vld [vmem:[%s8406 + $0x10] sm:$0xf]
        %v8412 = vld [vmem:[%s8406 + $0x14] sm:$0xf]
        %v8413 = vld [vmem:[%s8406 + $0x18] sm:$0xf]
        %v8414 = vld [vmem:[%s8406 + $0x1c] sm:$0xf]
        %v8415 = vld [vmem:[%s8406 + $0x20] sm:$0xf]
        %v8416 = vld [vmem:[%s8406 + $0x24] sm:$0xf]
        %v8417 = vld [vmem:[%s8406 + $0x28] sm:$0xf]
        %v8418 = vld [vmem:[%s8406 + $0x2c] sm:$0xf]
        %v8419 = vld [vmem:[%s8406 + $0x30] sm:$0xf]
        %v8420 = vld [vmem:[%s8406 + $0x34] sm:$0xf]
        %v8421 = vld [vmem:[%s8406 + $0x38] sm:$0xf]
        %v8422 = vld [vmem:[%s8406 + $0x3c] sm:$0xf]
        %v8423 = vunpack.c.l.b16 %v8353
        %v8424 = vunpack.c.l.b16 %v8356
        %v8425 = vunpack.c.l.b16 %v8360
        %v8426 = vunpack.c.l.b16 %v8363
        %v8427 = vunpack.c.l.b16 %v8367
        %v8428 = vunpack.c.l.b16 %v8370
        %v8429 = vunpack.c.l.b16 %v8374
        %v8430 = vunpack.c.l.b16 %v8377
        %v8431 = vunpack.c.l.b16 %v8381
        %v8432 = vunpack.c.l.b16 %v8384
        %v8433 = vunpack.c.l.b16 %v8388
        %v8434 = vunpack.c.l.b16 %v8391
        %v8435 = vunpack.c.l.b16 %v8395
        %v8436 = vunpack.c.l.b16 %v8398
        %v8437 = vunpack.c.l.b16 %v8402
        %v8438 = vunpack.c.l.b16 %v8405
        %v8439 = vpack.c.b16 %v8424, %v8423
        %v8440 = vpack.c.b16 %v8426, %v8425
        %v8441 = vpack.c.b16 %v8428, %v8427
        %v8442 = vpack.c.b16 %v8430, %v8429
        %v8443 = vpack.c.b16 %v8432, %v8431
        %v8444 = vpack.c.b16 %v8434, %v8433
        %v8445 = vpack.c.b16 %v8436, %v8435
        %v8446 = vpack.c.b16 %v8438, %v8437
        %v8471 = vunpack.c.l.b16 %v8407
        %v8472 = vunpack.c.l.b16 %v8408
        %v8473 = vunpack.c.l.b16 %v8409
        %v8474 = vunpack.c.l.b16 %v8410
        %v8475 = vunpack.c.l.b16 %v8411
        %v8476 = vunpack.c.l.b16 %v8412
        %v8477 = vunpack.c.l.b16 %v8413
        %v8478 = vunpack.c.l.b16 %v8414
        %v8479 = vunpack.c.l.b16 %v8415
        %v8480 = vunpack.c.l.b16 %v8416
        %v8481 = vunpack.c.l.b16 %v8417
        %v8482 = vunpack.c.l.b16 %v8418
        %v8483 = vunpack.c.l.b16 %v8419
        %v8484 = vunpack.c.l.b16 %v8420
        %v8485 = vunpack.c.l.b16 %v8421
        %v8486 = vunpack.c.l.b16 %v8422
        %v8487 = vpack.c.b16 %v8472, %v8471
        %v8488 = vpack.c.b16 %v8474, %v8473
        %v8489 = vpack.c.b16 %v8476, %v8475
        %v8490 = vpack.c.b16 %v8478, %v8477
        %v8491 = vpack.c.b16 %v8480, %v8479
        %v8492 = vpack.c.b16 %v8482, %v8481
        %v8493 = vpack.c.b16 %v8484, %v8483
        %v8494 = vpack.c.b16 %v8486, %v8485
        %8503 = vmatprep.subr.bf16.mxu0 0
        %8504 = vmatpush1.bf16.msra.mxu0 %v8494
        %8505 = vmatprep.subr.bf16.mxu0 0
        %8506 = vmatpush1.bf16.msra.mxu0 %v8493
        %8507 = vmatprep.subr.bf16.mxu0 0
        %8508 = vmatpush1.bf16.msra.mxu0 %v8492
        %8509 = vmatprep.subr.bf16.mxu0 0
        %8510 = vmatpush1.bf16.msra.mxu0 %v8491
        %8511 = vmatprep.subr.bf16.mxu0 0
        %8512 = vmatpush1.bf16.msra.mxu0 %v8490
        %8513 = vmatprep.subr.bf16.mxu0 0
        %8514 = vmatpush1.bf16.msra.mxu0 %v8489
        %8515 = vmatprep.subr.bf16.mxu0 0
        %8516 = vmatpush1.bf16.msra.mxu0 %v8488
        %8517 = vmatprep.subr.bf16.mxu0 0
        %8518 = vmatpush1.bf16.msra.mxu0 %v8487
        %8519 = vmatprep.subr.bf16.mxu0 0
        %8520 = vmatpush2.bf16.msra.mxu0 0
        %8521 = vmatprep.subr.bf16.mxu0 0
        %8522 = vmatpush2.bf16.msra.mxu0 0
        %8523 = vmatprep.subr.bf16.mxu0 0
        %8524 = vmatpush2.bf16.msra.mxu0 0
        %8525 = vmatprep.subr.bf16.mxu0 0
        %8526 = vmatpush2.bf16.msra.mxu0 0
        %8527 = vmatprep.subr.bf16.mxu0 0
        %8528 = vmatpush2.bf16.msra.mxu0 0
        %8529 = vmatprep.subr.bf16.mxu0 0
        %8530 = vmatpush2.bf16.msra.mxu0 0
        %8531 = vmatprep.subr.bf16.mxu0 0
        %8532 = vmatpush2.bf16.msra.mxu0 0
        %8533 = vmatprep.subr.bf16.mxu0 0
        %8534 = vmatpush2.bf16.msra.mxu0 0
        %8535 = vmatprep.mubr.bf16.mxu0 0
        %8536 = vmatmul.mubr.bf16.gmra.mxu0 %v8439
        %v8537 = vpop.f32.mrf.mxu0
        %v8538 = vadd.f32 0.0, %v8537
        %v8539 = vpop.f32.mrf.mxu0
        %v8540 = vpop.f32.mrf.mxu0
        %v8541 = vadd.f32 0.0, %v8540
        %v8542 = vpop.f32.mrf.mxu0
        %8543 = vmatprep.mubr.bf16.mxu0 0
        %8544 = vmatmul.mubr.bf16.gmra.mxu0 %v8440
        %v8545 = vpop.f32.mrf.mxu0
        %v8546 = vadd.f32 0.0, %v8545
        %v8547 = vpop.f32.mrf.mxu0
        %v8548 = vpop.f32.mrf.mxu0
        %v8549 = vadd.f32 0.0, %v8548
        %v8550 = vpop.f32.mrf.mxu0
        %8551 = vmatprep.mubr.bf16.mxu0 0
        %8552 = vmatmul.mubr.bf16.gmra.mxu0 %v8441
        %v8553 = vpop.f32.mrf.mxu0
        %v8554 = vadd.f32 0.0, %v8553
        %v8555 = vpop.f32.mrf.mxu0
        %v8556 = vpop.f32.mrf.mxu0
        %v8557 = vadd.f32 0.0, %v8556
        %v8558 = vpop.f32.mrf.mxu0
        %8559 = vmatprep.mubr.bf16.mxu0 0
        %8560 = vmatmul.mubr.bf16.gmra.mxu0 %v8442
        %v8561 = vpop.f32.mrf.mxu0
        %v8562 = vadd.f32 0.0, %v8561
        %v8563 = vpop.f32.mrf.mxu0
        %v8564 = vpop.f32.mrf.mxu0
        %v8565 = vadd.f32 0.0, %v8564
        %v8566 = vpop.f32.mrf.mxu0
        %8567 = vmatprep.mubr.bf16.mxu0 0
        %8568 = vmatmul.mubr.bf16.gmra.mxu0 %v8443
        %v8569 = vpop.f32.mrf.mxu0
        %v8570 = vadd.f32 0.0, %v8569
        %v8571 = vpop.f32.mrf.mxu0
        %v8572 = vpop.f32.mrf.mxu0
        %v8573 = vadd.f32 0.0, %v8572
        %v8574 = vpop.f32.mrf.mxu0
        %8575 = vmatprep.mubr.bf16.mxu0 0
        %8576 = vmatmul.mubr.bf16.gmra.mxu0 %v8444
        %v8577 = vpop.f32.mrf.mxu0
        %v8578 = vadd.f32 0.0, %v8577
        %v8579 = vpop.f32.mrf.mxu0
        %v8580 = vpop.f32.mrf.mxu0
        %v8581 = vadd.f32 0.0, %v8580
        %v8582 = vpop.f32.mrf.mxu0
        %8583 = vmatprep.mubr.bf16.mxu0 0
        %8584 = vmatmul.mubr.bf16.gmra.mxu0 %v8445
        %v8585 = vpop.f32.mrf.mxu0
        %v8586 = vadd.f32 0.0, %v8585
        %v8587 = vpop.f32.mrf.mxu0
        %v8588 = vpop.f32.mrf.mxu0
        %v8589 = vadd.f32 0.0, %v8588
        %v8590 = vpop.f32.mrf.mxu0
        %8591 = vmatprep.mubr.bf16.mxu0 0
        %8592 = vmatmul.mubr.bf16.gmra.mxu0 %v8446
        %v8593 = vpop.f32.mrf.mxu0
        %v8594 = vadd.f32 0.0, %v8593
        %v8595 = vpop.f32.mrf.mxu0
        %v8596 = vpop.f32.mrf.mxu0
        %v8597 = vadd.f32 0.0, %v8596
        %v8598 = vpop.f32.mrf.mxu0
        %8599 = vdwg.mxu0
        %v8600 = vadd.f32 %v8286, %v8538
        %v8601 = vadd.f32 %v8287, %v8541
        %v8602 = vadd.f32 %v8288, %v8546
        %v8603 = vadd.f32 %v8289, %v8549
        %v8604 = vadd.f32 %v8290, %v8554
        %v8605 = vadd.f32 %v8291, %v8557
        %v8606 = vadd.f32 %v8292, %v8562
        %v8607 = vadd.f32 %v8293, %v8565
        %v8608 = vadd.f32 %v8294, %v8570
        %v8609 = vadd.f32 %v8295, %v8573
        %v8610 = vadd.f32 %v8296, %v8578
        %v8611 = vadd.f32 %v8297, %v8581
        %v8612 = vadd.f32 %v8298, %v8586
        %v8613 = vadd.f32 %v8299, %v8589
        %v8614 = vadd.f32 %v8300, %v8594
        %v8615 = vadd.f32 %v8301, %v8597
        %s8616 = scalar_lea.vmem %s4, 2
        %v8617 = vld [vmem:[%s8616] sm:$0x1]
        %v8619 = vlaneseq
        %v8620 = vshrl.u32 %v8619, 7
        %v8621 = vsub.s32 0, %v8620
        %v8622 = vrot.slane %v8617, %v8621
        %v8624 = vadd.f32 %v8600, %v8622
        %v8625 = vadd.f32 %v8601, %v8622
        %v8626 = vadd.f32 %v8602, %v8622
        %v8627 = vadd.f32 %v8603, %v8622
        %v8628 = vadd.f32 %v8604, %v8622
        %v8629 = vadd.f32 %v8605, %v8622
        %v8630 = vadd.f32 %v8606, %v8622
        %v8631 = vadd.f32 %v8607, %v8622
        %v8632 = vadd.f32 %v8608, %v8622
        %v8633 = vadd.f32 %v8609, %v8622
        %v8634 = vadd.f32 %v8610, %v8622
        %v8635 = vadd.f32 %v8611, %v8622
        %v8636 = vadd.f32 %v8612, %v8622
        %v8637 = vadd.f32 %v8613, %v8622
        %v8638 = vadd.f32 %v8614, %v8622
        %v8639 = vadd.f32 %v8615, %v8622
        %v8640 = vmax.f32 %v8624, 0.0
        %v8641 = vmax.f32 %v8625, 0.0
        %v8642 = vmax.f32 %v8626, 0.0
        %v8643 = vmax.f32 %v8627, 0.0
        %v8644 = vmax.f32 %v8628, 0.0
        %v8645 = vmax.f32 %v8629, 0.0
        %v8646 = vmax.f32 %v8630, 0.0
        %v8647 = vmax.f32 %v8631, 0.0
        %v8648 = vmax.f32 %v8632, 0.0
        %v8649 = vmax.f32 %v8633, 0.0
        %v8650 = vmax.f32 %v8634, 0.0
        %v8651 = vmax.f32 %v8635, 0.0
        %v8652 = vmax.f32 %v8636, 0.0
        %v8653 = vmax.f32 %v8637, 0.0
        %v8654 = vmax.f32 %v8638, 0.0
        %v8655 = vmax.f32 %v8639, 0.0
        %v8656 = vpack.c.bf16 %v8641, %v8640
        %v8657 = vpack.c.bf16 %v8643, %v8642
        %v8658 = vpack.c.bf16 %v8645, %v8644
        %v8659 = vpack.c.bf16 %v8647, %v8646
        %v8660 = vpack.c.bf16 %v8649, %v8648
        %v8661 = vpack.c.bf16 %v8651, %v8650
        %v8662 = vpack.c.bf16 %v8653, %v8652
        %v8663 = vpack.c.bf16 %v8655, %v8654
        %s8664 = scalar_lea.vmem [#allocation2], 192
        %v8665 = vld [vmem:[%s8664] sm:$0xf]
        %v8666 = vld [vmem:[%s8664 + $0x4] sm:$0xf]
        %v8667 = vld [vmem:[%s8664 + $0x8] sm:$0xf]
        %v8668 = vld [vmem:[%s8664 + $0xc] sm:$0xf]
        %v8669 = vld [vmem:[%s8664 + $0x10] sm:$0xf]
        %v8670 = vld [vmem:[%s8664 + $0x14] sm:$0xf]
        %v8671 = vld [vmem:[%s8664 + $0x18] sm:$0xf]
        %v8672 = vld [vmem:[%s8664 + $0x1c] sm:$0xf]
        %v8673 = vld [vmem:[%s8664 + $0x20] sm:$0xf]
        %v8674 = vld [vmem:[%s8664 + $0x24] sm:$0xf]
        %v8675 = vld [vmem:[%s8664 + $0x28] sm:$0xf]
        %v8676 = vld [vmem:[%s8664 + $0x2c] sm:$0xf]
        %v8677 = vld [vmem:[%s8664 + $0x30] sm:$0xf]
        %v8678 = vld [vmem:[%s8664 + $0x34] sm:$0xf]
        %v8679 = vld [vmem:[%s8664 + $0x38] sm:$0xf]
        %v8680 = vld [vmem:[%s8664 + $0x3c] sm:$0xf]
        %v8697 = vunpack.c.l.b16 %v8665
        %v8698 = vunpack.c.l.b16 %v8666
        %v8699 = vunpack.c.l.b16 %v8667
        %v8700 = vunpack.c.l.b16 %v8668
        %v8701 = vunpack.c.l.b16 %v8669
        %v8702 = vunpack.c.l.b16 %v8670
        %v8703 = vunpack.c.l.b16 %v8671
        %v8704 = vunpack.c.l.b16 %v8672
        %v8705 = vunpack.c.l.b16 %v8673
        %v8706 = vunpack.c.l.b16 %v8674
        %v8707 = vunpack.c.l.b16 %v8675
        %v8708 = vunpack.c.l.b16 %v8676
        %v8709 = vunpack.c.l.b16 %v8677
        %v8710 = vunpack.c.l.b16 %v8678
        %v8711 = vunpack.c.l.b16 %v8679
        %v8712 = vunpack.c.l.b16 %v8680
        %v8713 = vpack.c.b16 %v8698, %v8697
        %v8714 = vpack.c.b16 %v8700, %v8699
        %v8715 = vpack.c.b16 %v8702, %v8701
        %v8716 = vpack.c.b16 %v8704, %v8703
        %v8717 = vpack.c.b16 %v8706, %v8705
        %v8718 = vpack.c.b16 %v8708, %v8707
        %v8719 = vpack.c.b16 %v8710, %v8709
        %v8720 = vpack.c.b16 %v8712, %v8711
        %8729 = vmatprep.subr.bf16.mxu0 0
        %8730 = vmatpush1.bf16.msra.mxu0 %v8720
        %8731 = vmatprep.subr.bf16.mxu0 0
        %8732 = vmatpush1.bf16.msra.mxu0 %v8719
        %8733 = vmatprep.subr.bf16.mxu0 0
        %8734 = vmatpush1.bf16.msra.mxu0 %v8718
        %8735 = vmatprep.subr.bf16.mxu0 0
        %8736 = vmatpush1.bf16.msra.mxu0 %v8717
        %8737 = vmatprep.subr.bf16.mxu0 0
        %8738 = vmatpush1.bf16.msra.mxu0 %v8716
        %8739 = vmatprep.subr.bf16.mxu0 0
        %8740 = vmatpush1.bf16.msra.mxu0 %v8715
        %8741 = vmatprep.subr.bf16.mxu0 0
        %8742 = vmatpush1.bf16.msra.mxu0 %v8714
        %8743 = vmatprep.subr.bf16.mxu0 0
        %8744 = vmatpush1.bf16.msra.mxu0 %v8713
        %8745 = vmatprep.subr.bf16.mxu0 0
        %8746 = vmatpush2.bf16.msra.mxu0 0
        %8747 = vmatprep.subr.bf16.mxu0 0
        %8748 = vmatpush2.bf16.msra.mxu0 0
        %8749 = vmatprep.subr.bf16.mxu0 0
        %8750 = vmatpush2.bf16.msra.mxu0 0
        %8751 = vmatprep.subr.bf16.mxu0 0
        %8752 = vmatpush2.bf16.msra.mxu0 0
        %8753 = vmatprep.subr.bf16.mxu0 0
        %8754 = vmatpush2.bf16.msra.mxu0 0
        %8755 = vmatprep.subr.bf16.mxu0 0
        %8756 = vmatpush2.bf16.msra.mxu0 0
        %8757 = vmatprep.subr.bf16.mxu0 0
        %8758 = vmatpush2.bf16.msra.mxu0 0
        %8759 = vmatprep.subr.bf16.mxu0 0
        %8760 = vmatpush2.bf16.msra.mxu0 0
        %8761 = vmatprep.mubr.bf16.mxu0 0
        %8762 = vmatmul.mubr.bf16.gmra.mxu0 %v8656
        %v8763 = vpop.f32.mrf.mxu0
        %v8764 = vadd.f32 0.0, %v8763
        %v8765 = vpop.f32.mrf.mxu0
        %v8766 = vpop.f32.mrf.mxu0
        %v8767 = vadd.f32 0.0, %v8766
        %v8768 = vpop.f32.mrf.mxu0
        %8769 = vmatprep.mubr.bf16.mxu0 0
        %8770 = vmatmul.mubr.bf16.gmra.mxu0 %v8657
        %v8771 = vpop.f32.mrf.mxu0
        %v8772 = vadd.f32 0.0, %v8771
        %v8773 = vpop.f32.mrf.mxu0
        %v8774 = vpop.f32.mrf.mxu0
        %v8775 = vadd.f32 0.0, %v8774
        %v8776 = vpop.f32.mrf.mxu0
        %8777 = vmatprep.mubr.bf16.mxu0 0
        %8778 = vmatmul.mubr.bf16.gmra.mxu0 %v8658
        %v8779 = vpop.f32.mrf.mxu0
        %v8780 = vadd.f32 0.0, %v8779
        %v8781 = vpop.f32.mrf.mxu0
        %v8782 = vpop.f32.mrf.mxu0
        %v8783 = vadd.f32 0.0, %v8782
        %v8784 = vpop.f32.mrf.mxu0
        %8785 = vmatprep.mubr.bf16.mxu0 0
        %8786 = vmatmul.mubr.bf16.gmra.mxu0 %v8659
        %v8787 = vpop.f32.mrf.mxu0
        %v8788 = vadd.f32 0.0, %v8787
        %v8789 = vpop.f32.mrf.mxu0
        %v8790 = vpop.f32.mrf.mxu0
        %v8791 = vadd.f32 0.0, %v8790
        %v8792 = vpop.f32.mrf.mxu0
        %8793 = vmatprep.mubr.bf16.mxu0 0
        %8794 = vmatmul.mubr.bf16.gmra.mxu0 %v8660
        %v8795 = vpop.f32.mrf.mxu0
        %v8796 = vadd.f32 0.0, %v8795
        %v8797 = vpop.f32.mrf.mxu0
        %v8798 = vpop.f32.mrf.mxu0
        %v8799 = vadd.f32 0.0, %v8798
        %v8800 = vpop.f32.mrf.mxu0
        %8801 = vmatprep.mubr.bf16.mxu0 0
        %8802 = vmatmul.mubr.bf16.gmra.mxu0 %v8661
        %v8803 = vpop.f32.mrf.mxu0
        %v8804 = vadd.f32 0.0, %v8803
        %v8805 = vpop.f32.mrf.mxu0
        %v8806 = vpop.f32.mrf.mxu0
        %v8807 = vadd.f32 0.0, %v8806
        %v8808 = vpop.f32.mrf.mxu0
        %8809 = vmatprep.mubr.bf16.mxu0 0
        %8810 = vmatmul.mubr.bf16.gmra.mxu0 %v8662
        %v8811 = vpop.f32.mrf.mxu0
        %v8812 = vadd.f32 0.0, %v8811
        %v8813 = vpop.f32.mrf.mxu0
        %v8814 = vpop.f32.mrf.mxu0
        %v8815 = vadd.f32 0.0, %v8814
        %v8816 = vpop.f32.mrf.mxu0
        %8817 = vmatprep.mubr.bf16.mxu0 0
        %8818 = vmatmul.mubr.bf16.gmra.mxu0 %v8663
        %v8819 = vpop.f32.mrf.mxu0
        %v8820 = vadd.f32 0.0, %v8819
        %v8821 = vpop.f32.mrf.mxu0
        %v8822 = vpop.f32.mrf.mxu0
        %v8823 = vadd.f32 0.0, %v8822
        %v8824 = vpop.f32.mrf.mxu0
        %8825 = vdwg.mxu0
        %v8826 = vadd.f32 %v6143, %v8764
        %v8827 = vadd.f32 %v6144, %v8767
        %v8828 = vadd.f32 %v6145, %v8772
        %v8829 = vadd.f32 %v6146, %v8775
        %v8830 = vadd.f32 %v6147, %v8780
        %v8831 = vadd.f32 %v6148, %v8783
        %v8832 = vadd.f32 %v6149, %v8788
        %v8833 = vadd.f32 %v6150, %v8791
        %v8834 = vadd.f32 %v6151, %v8796
        %v8835 = vadd.f32 %v6152, %v8799
        %v8836 = vadd.f32 %v6153, %v8804
        %v8837 = vadd.f32 %v6154, %v8807
        %v8838 = vadd.f32 %v6155, %v8812
        %v8839 = vadd.f32 %v6156, %v8815
        %v8840 = vadd.f32 %v6157, %v8820
        %v8841 = vadd.f32 %v6158, %v8823
        %s8842 = scalar_lea.vmem %s359, 96
        %v8843 = vld [vmem:[%s8842 + $0x4] sm:$0xf]
        %v8844 = vld [vmem:[%s8842 + $0x8] sm:$0xf]
        %v8845 = vld [vmem:[%s8842 + $0x14] sm:$0xf]
        %v8846 = vld [vmem:[%s8842 + $0x18] sm:$0xf]
        %v8847 = vld [vmem:[%s8842 + $0x24] sm:$0xf]
        %v8848 = vld [vmem:[%s8842 + $0x28] sm:$0xf]
        %v8849 = vld [vmem:[%s8842 + $0x34] sm:$0xf]
        %v8850 = vld [vmem:[%s8842 + $0x38] sm:$0xf]
        %v8851 = vld [vmem:[%s8842 + $0x44] sm:$0xf]
        %v8852 = vld [vmem:[%s8842 + $0x48] sm:$0xf]
        %v8853 = vld [vmem:[%s8842 + $0x54] sm:$0xf]
        %v8854 = vld [vmem:[%s8842 + $0x58] sm:$0xf]
        %v8855 = vld [vmem:[%s8842 + $0x64] sm:$0xf]
        %v8856 = vld [vmem:[%s8842 + $0x68] sm:$0xf]
        %v8857 = vld [vmem:[%s8842 + $0x74] sm:$0xf]
        %v8858 = vld [vmem:[%s8842 + $0x78] sm:$0xf]
        %v8859 = vld [vmem:[%s8842 + $0x84] sm:$0xf]
        %v8860 = vld [vmem:[%s8842 + $0x88] sm:$0xf]
        %v8861 = vld [vmem:[%s8842 + $0x94] sm:$0xf]
        %v8862 = vld [vmem:[%s8842 + $0x98] sm:$0xf]
        %v8863 = vld [vmem:[%s8842 + $0xa4] sm:$0xf]
        %v8864 = vld [vmem:[%s8842 + $0xa8] sm:$0xf]
        %v8865 = vld [vmem:[%s8842 + $0xb4] sm:$0xf]
        %v8866 = vld [vmem:[%s8842 + $0xb8] sm:$0xf]
        %v8867 = vld [vmem:[%s8842 + $0xc4] sm:$0xf]
        %v8868 = vld [vmem:[%s8842 + $0xc8] sm:$0xf]
        %v8869 = vld [vmem:[%s8842 + $0xd4] sm:$0xf]
        %v8870 = vld [vmem:[%s8842 + $0xd8] sm:$0xf]
        %v8871 = vld [vmem:[%s8842 + $0xe4] sm:$0xf]
        %v8872 = vld [vmem:[%s8842 + $0xe8] sm:$0xf]
        %v8873 = vld [vmem:[%s8842 + $0xf4] sm:$0xf]
        %v8874 = vld [vmem:[%s8842 + $0xf8] sm:$0xf]
        %v8875 = vunpack.c.l.bf16 %v8843
        %v8876 = vunpack.c.l.bf16 %v8844
        %v8877 = vunpack.c.l.bf16 %v8845
        %v8878 = vunpack.c.l.bf16 %v8846
        %v8879 = vunpack.c.l.bf16 %v8847
        %v8880 = vunpack.c.l.bf16 %v8848
        %v8881 = vunpack.c.l.bf16 %v8849
        %v8882 = vunpack.c.l.bf16 %v8850
        %v8883 = vunpack.c.l.bf16 %v8851
        %v8884 = vunpack.c.l.bf16 %v8852
        %v8885 = vunpack.c.l.bf16 %v8853
        %v8886 = vunpack.c.l.bf16 %v8854
        %v8887 = vunpack.c.l.bf16 %v8855
        %v8888 = vunpack.c.l.bf16 %v8856
        %v8889 = vunpack.c.l.bf16 %v8857
        %v8890 = vunpack.c.l.bf16 %v8858
        %v8891 = vunpack.c.l.bf16 %v8859
        %v8892 = vunpack.c.l.bf16 %v8860
        %v8893 = vunpack.c.l.bf16 %v8861
        %v8894 = vunpack.c.l.bf16 %v8862
        %v8895 = vunpack.c.l.bf16 %v8863
        %v8896 = vunpack.c.l.bf16 %v8864
        %v8897 = vunpack.c.l.bf16 %v8865
        %v8898 = vunpack.c.l.bf16 %v8866
        %v8899 = vunpack.c.l.bf16 %v8867
        %v8900 = vunpack.c.l.bf16 %v8868
        %v8901 = vunpack.c.l.bf16 %v8869
        %v8902 = vunpack.c.l.bf16 %v8870
        %v8903 = vunpack.c.l.bf16 %v8871
        %v8904 = vunpack.c.l.bf16 %v8872
        %v8905 = vunpack.c.l.bf16 %v8873
        %v8906 = vunpack.c.l.bf16 %v8874
        %v8907 = vadd.f32 %v8875, %v8876
        %v8908 = vadd.f32 %v8907, %v8877
        %v8909 = vadd.f32 %v8908, %v8878
        %v8910 = vadd.f32 %v8909, %v8879
        %v8911 = vadd.f32 %v8910, %v8880
        %v8912 = vadd.f32 %v8911, %v8881
        %v8913 = vadd.f32 %v8912, %v8882
        %v8914 = vadd.f32 %v8913, %v8883
        %v8915 = vadd.f32 %v8914, %v8884
        %v8916 = vadd.f32 %v8915, %v8885
        %v8917 = vadd.f32 %v8916, %v8886
        %v8918 = vadd.f32 %v8917, %v8887
        %v8919 = vadd.f32 %v8918, %v8888
        %v8920 = vadd.f32 %v8919, %v8889
        %v8921 = vadd.f32 %v8920, %v8890
        %v8922 = vadd.f32 %v8921, %v8891
        %v8923 = vadd.f32 %v8922, %v8892
        %v8924 = vadd.f32 %v8923, %v8893
        %v8925 = vadd.f32 %v8924, %v8894
        %v8926 = vadd.f32 %v8925, %v8895
        %v8927 = vadd.f32 %v8926, %v8896
        %v8928 = vadd.f32 %v8927, %v8897
        %v8929 = vadd.f32 %v8928, %v8898
        %v8930 = vadd.f32 %v8929, %v8899
        %v8931 = vadd.f32 %v8930, %v8900
        %v8932 = vadd.f32 %v8931, %v8901
        %v8933 = vadd.f32 %v8932, %v8902
        %v8934 = vadd.f32 %v8933, %v8903
        %v8935 = vadd.f32 %v8934, %v8904
        %v8936 = vadd.f32 %v8935, %v8905
        %v8937 = vadd.f32 %v8936, %v8906
        %v8938 = vrot.slane %v8937, 4
        %v8939 = vadd.f32 %v8937, %v8938
        %v8940 = vrot.slane %v8939, 2
        %v8941 = vadd.f32 %v8939, %v8940
        %v8942 = vrot.slane %v8941, 1
        %v8943 = vadd.f32 %v8941, %v8942
        %v8944 = vrcp.pop 256.0
        %v8945 = vmul.f32 %v8943, %v8944
        %v8946 = vpack.c.bf16 %v8945, %v8945
        %v8947 = vld [vmem:[%s5] sm:$0xf]
        %v8948 = vld [vmem:[%s5 + $0x4] sm:$0xf]
        %v8949 = vld [vmem:[%s5 + $0x8] sm:$0xf]
        %v8950 = vld [vmem:[%s5 + $0xc] sm:$0xf]
        %v8951 = vld [vmem:[%s5 + $0x10] sm:$0xf]
        %v8952 = vld [vmem:[%s5 + $0x14] sm:$0xf]
        %v8953 = vld [vmem:[%s5 + $0x18] sm:$0xf]
        %v8954 = vld [vmem:[%s5 + $0x1c] sm:$0xf]
        %v8955 = vld [vmem:[%s5 + $0x20] sm:$0xf]
        %v8956 = vld [vmem:[%s5 + $0x24] sm:$0xf]
        %v8957 = vld [vmem:[%s5 + $0x28] sm:$0xf]
        %v8958 = vld [vmem:[%s5 + $0x2c] sm:$0xf]
        %v8959 = vld [vmem:[%s5 + $0x30] sm:$0xf]
        %v8960 = vld [vmem:[%s5 + $0x34] sm:$0xf]
        %v8961 = vld [vmem:[%s5 + $0x38] sm:$0xf]
        %v8962 = vld [vmem:[%s5 + $0x3c] sm:$0xf]
        %v8963 = vld [vmem:[%s6] sm:$0x1]
        %v8980 = vunpack.c.l.b16 %v8947
        %v8981 = vunpack.c.l.b16 %v8948
        %v8982 = vunpack.c.l.b16 %v8949
        %v8983 = vunpack.c.l.b16 %v8950
        %v8984 = vunpack.c.l.b16 %v8951
        %v8985 = vunpack.c.l.b16 %v8952
        %v8986 = vunpack.c.l.b16 %v8953
        %v8987 = vunpack.c.l.b16 %v8954
        %v8988 = vunpack.c.l.b16 %v8955
        %v8989 = vunpack.c.l.b16 %v8956
        %v8990 = vunpack.c.l.b16 %v8957
        %v8991 = vunpack.c.l.b16 %v8958
        %v8992 = vunpack.c.l.b16 %v8959
        %v8993 = vunpack.c.l.b16 %v8960
        %v8994 = vunpack.c.l.b16 %v8961
        %v8995 = vunpack.c.l.b16 %v8962
        %v8996 = vpack.c.b16 %v8981, %v8980
        %v8997 = vpack.c.b16 %v8983, %v8982
        %v8998 = vpack.c.b16 %v8985, %v8984
        %v8999 = vpack.c.b16 %v8987, %v8986
        %v9000 = vpack.c.b16 %v8989, %v8988
        %v9001 = vpack.c.b16 %v8991, %v8990
        %v9002 = vpack.c.b16 %v8993, %v8992
        %v9003 = vpack.c.b16 %v8995, %v8994
        %9012 = vmatprep.subr.bf16.mxu0 0
        %9013 = vmatpush1.bf16.msra.mxu0 %v9003
        %9014 = vmatprep.subr.bf16.mxu0 0
        %9015 = vmatpush1.bf16.msra.mxu0 %v9002
        %9016 = vmatprep.subr.bf16.mxu0 0
        %9017 = vmatpush1.bf16.msra.mxu0 %v9001
        %9018 = vmatprep.subr.bf16.mxu0 0
        %9019 = vmatpush1.bf16.msra.mxu0 %v9000
        %9020 = vmatprep.subr.bf16.mxu0 0
        %9021 = vmatpush1.bf16.msra.mxu0 %v8999
        %9022 = vmatprep.subr.bf16.mxu0 0
        %9023 = vmatpush1.bf16.msra.mxu0 %v8998
        %9024 = vmatprep.subr.bf16.mxu0 0
        %9025 = vmatpush1.bf16.msra.mxu0 %v8997
        %9026 = vmatprep.subr.bf16.mxu0 0
        %9027 = vmatpush1.bf16.msra.mxu0 %v8996
        %9028 = vmatprep.subr.bf16.mxu0 0
        %9029 = vmatpush2.bf16.msra.mxu0 0
        %9030 = vmatprep.subr.bf16.mxu0 0
        %9031 = vmatpush2.bf16.msra.mxu0 0
        %9032 = vmatprep.subr.bf16.mxu0 0
        %9033 = vmatpush2.bf16.msra.mxu0 0
        %9034 = vmatprep.subr.bf16.mxu0 0
        %9035 = vmatpush2.bf16.msra.mxu0 0
        %9036 = vmatprep.subr.bf16.mxu0 0
        %9037 = vmatpush2.bf16.msra.mxu0 0
        %9038 = vmatprep.subr.bf16.mxu0 0
        %9039 = vmatpush2.bf16.msra.mxu0 0
        %9040 = vmatprep.subr.bf16.mxu0 0
        %9041 = vmatpush2.bf16.msra.mxu0 0
        %9042 = vmatprep.subr.bf16.mxu0 0
        %9043 = vmatpush2.bf16.msra.mxu0 0
        %9044 = vmatprep.mubr.bf16.mxu0 0
        %9045 = vmatmul.mubr.bf16.gmra.mxu0 %v8946
        %v9046 = vpop.f32.mrf.mxu0
        %v9047 = vadd.f32 %v8963, %v9046
        %v9048 = vpop.f32.mrf.mxu0
        %v9049 = vpop.f32.mrf.mxu0
        %v9050 = vpop.f32.mrf.mxu0
        %9051 = vdwg.mxu0
        %v9052 = vmax.f32 %v9047, 0.0
        %v9053 = vpack.c.bf16 %v9052, %v9052
        %s9054 = scalar_lea.vmem [#allocation2], 256
        %v9055 = vld [vmem:[%s9054] sm:$0xf]
        %v9056 = vld [vmem:[%s9054 + $0x4] sm:$0xf]
        %v9057 = vld [vmem:[%s9054 + $0x8] sm:$0xf]
        %v9058 = vld [vmem:[%s9054 + $0xc] sm:$0xf]
        %v9059 = vld [vmem:[%s9054 + $0x10] sm:$0xf]
        %v9060 = vld [vmem:[%s9054 + $0x14] sm:$0xf]
        %v9061 = vld [vmem:[%s9054 + $0x18] sm:$0xf]
        %v9062 = vld [vmem:[%s9054 + $0x1c] sm:$0xf]
        %v9063 = vld [vmem:[%s9054 + $0x20] sm:$0xf]
        %v9064 = vld [vmem:[%s9054 + $0x24] sm:$0xf]
        %v9065 = vld [vmem:[%s9054 + $0x28] sm:$0xf]
        %v9066 = vld [vmem:[%s9054 + $0x2c] sm:$0xf]
        %v9067 = vld [vmem:[%s9054 + $0x30] sm:$0xf]
        %v9068 = vld [vmem:[%s9054 + $0x34] sm:$0xf]
        %v9069 = vld [vmem:[%s9054 + $0x38] sm:$0xf]
        %v9070 = vld [vmem:[%s9054 + $0x3c] sm:$0xf]
        %v9087 = vunpack.c.l.b16 %v9055
        %v9088 = vunpack.c.l.b16 %v9056
        %v9089 = vunpack.c.l.b16 %v9057
        %v9090 = vunpack.c.l.b16 %v9058
        %v9091 = vunpack.c.l.b16 %v9059
        %v9092 = vunpack.c.l.b16 %v9060
        %v9093 = vunpack.c.l.b16 %v9061
        %v9094 = vunpack.c.l.b16 %v9062
        %v9095 = vunpack.c.l.b16 %v9063
        %v9096 = vunpack.c.l.b16 %v9064
        %v9097 = vunpack.c.l.b16 %v9065
        %v9098 = vunpack.c.l.b16 %v9066
        %v9099 = vunpack.c.l.b16 %v9067
        %v9100 = vunpack.c.l.b16 %v9068
        %v9101 = vunpack.c.l.b16 %v9069
        %v9102 = vunpack.c.l.b16 %v9070
        %v9103 = vpack.c.b16 %v9088, %v9087
        %v9104 = vpack.c.b16 %v9090, %v9089
        %v9105 = vpack.c.b16 %v9092, %v9091
        %v9106 = vpack.c.b16 %v9094, %v9093
        %v9107 = vpack.c.b16 %v9096, %v9095
        %v9108 = vpack.c.b16 %v9098, %v9097
        %v9109 = vpack.c.b16 %v9100, %v9099
        %v9110 = vpack.c.b16 %v9102, %v9101
        %9119 = vmatprep.subr.bf16.mxu0 0
        %9120 = vmatpush1.bf16.msra.mxu0 %v9110
        %9121 = vmatprep.subr.bf16.mxu0 0
        %9122 = vmatpush1.bf16.msra.mxu0 %v9109
        %9123 = vmatprep.subr.bf16.mxu0 0
        %9124 = vmatpush1.bf16.msra.mxu0 %v9108
        %9125 = vmatprep.subr.bf16.mxu0 0
        %9126 = vmatpush1.bf16.msra.mxu0 %v9107
        %9127 = vmatprep.subr.bf16.mxu0 0
        %9128 = vmatpush1.bf16.msra.mxu0 %v9106
        %9129 = vmatprep.subr.bf16.mxu0 0
        %9130 = vmatpush1.bf16.msra.mxu0 %v9105
        %9131 = vmatprep.subr.bf16.mxu0 0
        %9132 = vmatpush1.bf16.msra.mxu0 %v9104
        %9133 = vmatprep.subr.bf16.mxu0 0
        %9134 = vmatpush1.bf16.msra.mxu0 %v9103
        %9135 = vmatprep.subr.bf16.mxu0 0
        %9136 = vmatpush2.bf16.msra.mxu0 0
        %9137 = vmatprep.subr.bf16.mxu0 0
        %9138 = vmatpush2.bf16.msra.mxu0 0
        %9139 = vmatprep.subr.bf16.mxu0 0
        %9140 = vmatpush2.bf16.msra.mxu0 0
        %9141 = vmatprep.subr.bf16.mxu0 0
        %9142 = vmatpush2.bf16.msra.mxu0 0
        %9143 = vmatprep.subr.bf16.mxu0 0
        %9144 = vmatpush2.bf16.msra.mxu0 0
        %9145 = vmatprep.subr.bf16.mxu0 0
        %9146 = vmatpush2.bf16.msra.mxu0 0
        %9147 = vmatprep.subr.bf16.mxu0 0
        %9148 = vmatpush2.bf16.msra.mxu0 0
        %9149 = vmatprep.subr.bf16.mxu0 0
        %9150 = vmatpush2.bf16.msra.mxu0 0
        %9151 = vmatprep.mubr.bf16.mxu0 0
        %9152 = vmatmul.mubr.bf16.gmra.mxu0 %v9053
        %v9153 = vpop.f32.mrf.mxu0
        %v9154 = vadd.f32 0.0, %v9153
        %v9155 = vpop.f32.mrf.mxu0
        %v9156 = vpop.f32.mrf.mxu0
        %v9157 = vpop.f32.mrf.mxu0
        %9158 = vdwg.mxu0
        %v9159 = vld [vmem:[%s8] sm:$0x1]
        %v9160 = vadd.f32 %v9159, %v9154
        %v9162 = vlaneseq
        %v9163 = vshrl.u32 %v9162, 7
        %v9164 = vsub.s32 0, %v9163
        %v9165 = vrot.slane %v9160, %v9164
        %v9167 = vadd.f32 %v8826, %v9165
        %v9168 = vadd.f32 %v8827, %v9165
        %v9169 = vadd.f32 %v8828, %v9165
        %v9170 = vadd.f32 %v8829, %v9165
        %v9171 = vadd.f32 %v8830, %v9165
        %v9172 = vadd.f32 %v8831, %v9165
        %v9173 = vadd.f32 %v8832, %v9165
        %v9174 = vadd.f32 %v8833, %v9165
        %v9175 = vadd.f32 %v8834, %v9165
        %v9176 = vadd.f32 %v8835, %v9165
        %v9177 = vadd.f32 %v8836, %v9165
        %v9178 = vadd.f32 %v8837, %v9165
        %v9179 = vadd.f32 %v8838, %v9165
        %v9180 = vadd.f32 %v8839, %v9165
        %v9181 = vadd.f32 %v8840, %v9165
        %v9182 = vadd.f32 %v8841, %v9165
        %v9183 = vmax.f32 %v9167, 0.0
        %v9184 = vmax.f32 %v9168, 0.0
        %v9185 = vmax.f32 %v9169, 0.0
        %v9186 = vmax.f32 %v9170, 0.0
        %v9187 = vmax.f32 %v9171, 0.0
        %v9188 = vmax.f32 %v9172, 0.0
        %v9189 = vmax.f32 %v9173, 0.0
        %v9190 = vmax.f32 %v9174, 0.0
        %v9191 = vmax.f32 %v9175, 0.0
        %v9192 = vmax.f32 %v9176, 0.0
        %v9193 = vmax.f32 %v9177, 0.0
        %v9194 = vmax.f32 %v9178, 0.0
        %v9195 = vmax.f32 %v9179, 0.0
        %v9196 = vmax.f32 %v9180, 0.0
        %v9197 = vmax.f32 %v9181, 0.0
        %v9198 = vmax.f32 %v9182, 0.0
        %9199 = vst [vmem:[%s354] sm:$0xff] %v9183
        %9200 = vst [vmem:[%s354 + $0x8] sm:$0xff] %v9184
        %9201 = vst [vmem:[%s354 + $0x10] sm:$0xff] %v9185
        %9202 = vst [vmem:[%s354 + $0x18] sm:$0xff] %v9186
        %9203 = vst [vmem:[%s354 + $0x20] sm:$0xff] %v9187
        %9204 = vst [vmem:[%s354 + $0x28] sm:$0xff] %v9188
        %9205 = vst [vmem:[%s354 + $0x30] sm:$0xff] %v9189
        %9206 = vst [vmem:[%s354 + $0x38] sm:$0xff] %v9190
        %9207 = vst [vmem:[%s354 + $0x40] sm:$0xff] %v9191
        %9208 = vst [vmem:[%s354 + $0x48] sm:$0xff] %v9192
        %9209 = vst [vmem:[%s354 + $0x50] sm:$0xff] %v9193
        %9210 = vst [vmem:[%s354 + $0x58] sm:$0xff] %v9194
        %9211 = vst [vmem:[%s354 + $0x60] sm:$0xff] %v9195
        %9212 = vst [vmem:[%s354 + $0x68] sm:$0xff] %v9196
        %9213 = vst [vmem:[%s354 + $0x70] sm:$0xff] %v9197
        %9214 = vst [vmem:[%s354 + $0x78] sm:$0xff] %v9198
        %s9215 = sand.u32 %s240, 1
        %s9216 = scalar_lea.sflag [#allocation4], %s9215
        %s9217 = sand.u32 %s240, 1
        %s9218 = smul.addr %s9217, 128
        %s9219 = scalar_lea.vmem [#allocation5], %s9218
        // Predicated region
        $region61: #{aspp_forward.1} parent=55 // pred_check
          %p9220 = pneg %p250
        $region62: #{aspp_forward.1} parent=55 // pred_check_branch
          %9222 = sbr.rel (%p9220) target = $region64
        $region63: #{aspp_forward.1} parent=55 // pred_region
          %s9223 = smul.u32 8, %s29
          %s9225 = ssub.s32 2048, 2048
          %9226 = vsyncadd %s9216, %s9225
          %s9227 = smul.addr %s9223, 2
          %s9228 = smul.addr %s28, 32
          %s9229 = sadd.s32 %s9227, %s9228
          %s9230 = smul.addr %s9229, 128
          %s9231 = scalar_lea.hbm %s9, %s9230
          %s9232 = sshll.u32 %s9219, 4
          %s9233 = int_to_ptr.vmem [resolvable:$true] %s9232
          %9238 = dma.vmem_to_hbm [thread:$0]  %s9233, 2048, %s9231, %s9216, 128, 128, 8
        $region64: #{aspp_forward.1} parent=55 // pred_fallthru
          _
      $region56: #{aspp_forward.1} parent=5 // pred_fallthru
        _
      %p9239 = scmp.le.s32.totalorder 2, %s19
      // Predicated region
      $region65: #{aspp_forward.1} parent=5 // pred_check
        %p9240 = pneg %p9239
      $region66: #{aspp_forward.1} parent=5 // pred_check_branch
        %9242 = sbr.rel (%p9240) target = $region68
      $region67: #{aspp_forward.1} parent=5 // pred_region
        %s9243 = ssub.s32 %s19, 2
        // Predicated region
        $region69: #{aspp_forward.1} parent=67 // pred_check
          %p9244 = pneg %p256
        $region70: #{aspp_forward.1} parent=67 // pred_check_branch
          %9246 = sbr.rel (%p9244) target = $region72
        $region71: #{aspp_forward.1} parent=67 // pred_region
          %s9247 = sand.u32 %s241, 1
          %s9248 = scalar_lea.sflag [#allocation4], %s9247
          %s9249 = sand.u32 %s241, 1
          %s9250 = smul.addr %s9249, 128
          %s9251 = scalar_lea.vmem [#allocation5], %s9250
          %9252 = dma.done %s9248, 2048
        $region72: #{aspp_forward.1} parent=67 // pred_fallthru
          _
      $region68: #{aspp_forward.1} parent=5 // pred_fallthru
        _
    $region6: #{aspp_forward.1} parent=1 // loop_footer
      %s23 = sadd.s32 1, %s19
    $region7: #{aspp_forward.1} parent=1 // loop_footer_branch
      %18 = sbr.rel target = $region3
    $region8: #{aspp_forward.1} parent=1 // loop_exit
      _
    %9253 = vsyncpa [#allocation3], 1
    %s9254 = scalar_lea.sflag [#allocation3], 1
    %9255 = vsyncpa %s9254, 1
    %9256 = vsyncpa [#allocation4], 1
    %s9257 = scalar_lea.sflag [#allocation4], 1
    %9258 = vsyncpa %s9257, 1

</llo_original>
